<compile_context>
chip_gen: v7x
topology: tpu7x:2x2x1
jax: 0.10.0
libtpu: 0.0.40
codegen_flags: <defaults>
</compile_context>

<pallas_src>
import functools

import jax
import jax.numpy as jnp
from jax import lax
from jax.experimental import pallas as pl
from jax.experimental.pallas import tpu as pltpu


# ---------------------------------------------------------------------------
# LeNetConvPoolLayer: Conv2d(valid, stride=1) -> ReLU -> MaxPool2d(pool)
# ---------------------------------------------------------------------------
def _conv_relu_pool_kernel(x_ref, w_ref, o_ref, patches_ref, *, ksize, pool):
    """One grid step handles `nb` whole images (NHWC).

    x_ref:       (nb, H, W, Cin)            f32
    w_ref:       (KH*KW*Cin + 1, Cout)      bf16   (last row = bias)
    o_ref:       (nb, 1, PH*PW*Cout)        f32    lane-dense output slab
    patches_ref: (nb*OH*OW, KH*KW*Cin + 1)  f32    VMEM scratch (im2col)
    """
    kh, kw = ksize
    nb, h, w, cin = x_ref.shape
    kp1, cout = w_ref.shape
    oh, ow = h - kh + 1, w - kw + 1
    ph, pw = oh // pool, ow // pool
    rows = nb * oh * ow
    assert kp1 == kh * kw * cin + 1

    x = x_ref[...]

    # --- im2col (feedback #1): one patch matrix; trailing ones column folds
    # the bias (feedback #6) so there is no separate broadcast+add.
    for i in range(kh):
        for j in range(kw):
            col = (i * kw + j) * cin
            patches_ref[:, col:col + cin] = (
                x[:, i:i + oh, j:j + ow, :].reshape(rows, cin))
    patches_ref[:, kp1 - 1:kp1] = jnp.ones((rows, 1), jnp.float32)

    # --- single MXU matmul, bf16 operands / f32 accumulation (feedback #7),
    # then ReLU on the VPU.
    acc = jnp.dot(patches_ref[...].astype(jnp.bfloat16), w_ref[...],
                  preferred_element_type=jnp.float32)            # (rows, Cout)
    y = jnp.maximum(acc, 0.0)

    # --- MaxPool2d(pool), floor mode (feedback #5): pairwise VPU maxima of
    # the pool*pool window-offset slices (no cross-lane jnp.max reductions).
    y = y.reshape(nb, oh, ow, cout)[:, :ph * pool, :pw * pool, :]
    y = y.reshape(nb, ph, pool, pw, pool, cout)
    z = None
    for dh in range(pool):
        for dw in range(pool):
            win = y[:, :, dh:dh + 1, :, dw:dw + 1, :].reshape(nb, ph, pw, cout)
            z = win if z is None else jnp.maximum(z, win)

    # --- lane-dense store (feedback #3): scatter each pooled pixel's Cout
    # channels into a flat (nb, 1, PH*PW*Cout) slab so the out_spec's last
    # dim is PH*PW*Cout wide instead of Cout.  The per-window stores are
    # VMEM-local; a value-level flatten reshape is deliberately avoided for
    # robust Mosaic lowering.
    for pi in range(ph):
        for pj in range(pw):
            col = (pi * pw + pj) * cout
            o_ref[:, 0:1, col:col + cout] = (
                z[:, pi:pi + 1, pj:pj + 1, :].reshape(nb, 1, cout)
                .astype(o_ref.dtype))


def lenet_conv_pool_nhwc(x_nhwc, w_oihw, bias, pool, *, num_batch_blocks=1):
    """Conv2d(valid, stride=1) + ReLU + MaxPool2d(pool) on an NHWC batch.

    Returns pooled activations in NHWC, shape (N, PH, PW, Cout).
    """
    n, h, w, cin = x_nhwc.shape
    cout, cin_w, kh, kw = w_oihw.shape
    assert cin_w == cin
    assert n % num_batch_blocks == 0
    nb = n // num_batch_blocks
    oh, ow = h - kh + 1, w - kw + 1
    ph, pw = oh // pool, ow // pool
    feat = ph * pw * cout
    kp1 = kh * kw * cin + 1

    # One-off host-side *weight* prep (activations are never transposed,
    # feedback #4):  (Cout,Cin,KH,KW) -> (KH*KW*Cin, Cout), bias appended as
    # the last row, cast to bf16 for the MXU.
    w2d = jnp.transpose(w_oihw, (2, 3, 1, 0)).reshape(kh * kw * cin, cout)
    w_aug = jnp.concatenate([w2d, bias.reshape(1, cout)], axis=0)
    w_aug = w_aug.astype(jnp.bfloat16)

    kernel = functools.partial(_conv_relu_pool_kernel, ksize=(kh, kw), pool=pool)

    out = pl.pallas_call(
        kernel,
        out_shape=jax.ShapeDtypeStruct((n, 1, feat), x_nhwc.dtype),
        grid_spec=pltpu.PrefetchScalarGridSpec(
            num_scalar_prefetch=0,
            # Feedback #2: whole batch folded into one grid step by default
            # (grid steps are a sequential loop, ~0.35us each).  On v7x pass
            # num_batch_blocks=2 so both TensorCores get a "parallel" step.
            grid=(num_batch_blocks,),
            in_specs=[
                pl.BlockSpec((nb, h, w, cin), lambda b: (b, 0, 0, 0)),
                pl.BlockSpec((kp1, cout), lambda b: (0, 0)),
            ],
            out_specs=pl.BlockSpec((nb, 1, feat), lambda b: (b, 0, 0)),
            scratch_shapes=[pltpu.VMEM((nb * oh * ow, kp1), jnp.float32)],
        ),
        compiler_params=pltpu.CompilerParams(
            # At these shapes VMEM use is a few tens of KiB.  When scaling
            # H/W/Cin, re-derive the (nb, H, W, Cin) block against v7x's
            # 64 MiB VMEM (inputs are double-buffered) and set
            # vmem_limit_bytes explicitly if the scoped default is exceeded.
            dimension_semantics=("parallel",),
        ),
    )(x_nhwc, w_aug)

    # Free metadata reshape back to NHWC for the next layer / flatten.
    return out.reshape(n, ph, pw, cout)


# ---------------------------------------------------------------------------
# LogisticRegression: sigmoid(Linear(F, hidden)).flatten()
# ---------------------------------------------------------------------------
def _linear_sigmoid_kernel(x_ref, w_ref, b_ref, o_ref):
    # x: (N, F), w: (F, H), b: (1, H)
    z = jnp.dot(x_ref[...], w_ref[...], preferred_element_type=jnp.float32)
    z = z + b_ref[...]
    o_ref[...] = (1.0 / (1.0 + jnp.exp(-z))).astype(o_ref.dtype)


def logistic_regression(feat, w_fo, bias):
    """sigmoid(feat @ w_fo + bias), flattened like torch `.flatten()`."""
    n, f = feat.shape
    out_dim = w_fo.shape[1]
    res = pl.pallas_call(
        _linear_sigmoid_kernel,
        out_shape=jax.ShapeDtypeStruct((n, out_dim), feat.dtype),
        grid_spec=pltpu.PrefetchScalarGridSpec(
            num_scalar_prefetch=0,
            grid=(1,),
            in_specs=[
                pl.BlockSpec((n, f), lambda i: (0, 0)),
                pl.BlockSpec((f, out_dim), lambda i: (0, 0)),
                pl.BlockSpec((1, out_dim), lambda i: (0, 0)),
            ],
            out_specs=pl.BlockSpec((n, out_dim), lambda i: (0, 0)),
        ),
    )(feat, w_fo, bias.reshape(1, out_dim))
    return res.reshape(-1)


# ---------------------------------------------------------------------------
# Full CNN forward
# ---------------------------------------------------------------------------
def cnn_forward(x_bhw, params, *, num_batch_blocks=1):
    """Pallas forward of `CNN`: view -> layer0 -> layer1 -> flatten -> head."""
    # torch: x.view(-1, 1, H, W).  We keep the singleton channel LAST (NHWC),
    # so no activation transpose is ever materialized (feedback #4).
    x = x_bhw[..., None].astype(jnp.float32)                      # (B, H, W, 1)
    y = lenet_conv_pool_nhwc(x, params["w0"], params["b0"], params["pool0"],
                             num_batch_blocks=num_batch_blocks)
    y = lenet_conv_pool_nhwc(y, params["w1"], params["b1"], params["pool1"],
                             num_batch_blocks=num_batch_blocks)
    n, ph, pw, c = y.shape
    feat = y.reshape(n, ph * pw * c)                              # NHWC flatten

    # nn.Linear's weight is (hidden, C*PH*PW) over the NCHW flatten order;
    # permute its columns once (host-side, parameters only) to the NHWC
    # flatten order and pre-transpose so the kernel computes feat @ W.
    w_lin = params["w_lin"]
    hidden = w_lin.shape[0]
    # TODO(synk): the original CNN.__init__ sizes layer2_input_dim without
    # accounting for pooling (only consistent when poolsize == 1); we size the
    # head from the actual flattened feature count instead.
    w_lin_hwc = (w_lin.reshape(hidden, c, ph, pw)
                 .transpose(0, 2, 3, 1).reshape(hidden, ph * pw * c))
    return logistic_regression(feat, w_lin_hwc.T, params["b_lin"])


# ---------------------------------------------------------------------------
# Pure-JAX reference (mirrors the PyTorch forward, NCHW)
# ---------------------------------------------------------------------------
def _ref_conv_pool(x_nchw, w_oihw, bias, pool):
    y = lax.conv_general_dilated(
        x_nchw, w_oihw, window_strides=(1, 1), padding="VALID",
        dimension_numbers=("NCHW", "OIHW", "NCHW"))
    y = jnp.maximum(y + bias[None, :, None, None], 0.0)
    return lax.reduce_window(
        y, -jnp.inf, lax.max,
        window_dimensions=(1, 1, pool, pool),
        window_strides=(1, 1, pool, pool), padding="VALID")


def _ref_cnn(x_bhw, params):
    x = x_bhw[:, None, :, :].astype(jnp.float32)                  # NCHW
    y = _ref_conv_pool(x, params["w0"], params["b0"], params["pool0"])
    y = _ref_conv_pool(y, params["w1"], params["b1"], params["pool1"])
    feat = y.reshape(y.shape[0], -1)                              # (c,h,w) order
    z = feat @ params["w_lin"].T + params["b_lin"]
    return jax.nn.sigmoid(z).reshape(-1)


if __name__ == "__main__":
    # CNN(in_dim=(16,16), nkerns=(4,8), filtsize=((3,3),(3,3)),
    #     poolsize=(2,2), hidden=32), batch = 2.
    B, H, W = 2, 16, 16
    NK0, NK1, FILT, POOL, HIDDEN = 4, 8, 3, 2, 32

    d1 = (H - FILT + 1) // POOL          # 7
    d2 = (d1 - FILT + 1) // POOL         # 2
    feat_dim = NK1 * d2 * d2             # 32 (actual flattened feature count)

    key = jax.random.PRNGKey(0)
    k0, k1, k2, k3, k4, k5, k6 = jax.random.split(key, 7)
    x = jax.random.normal(k0, (B, H, W), dtype=jnp.float32)
    params = dict(
        w0=jax.random.normal(k1, (NK0, 1, FILT, FILT), jnp.float32) * 0.1,
        b0=jax.random.normal(k2, (NK0,), jnp.float32) * 0.1,
        pool0=POOL,
        w1=jax.random.normal(k3, (NK1, NK0, FILT, FILT), jnp.float32) * 0.1,
        b1=jax.random.normal(k4, (NK1,), jnp.float32) * 0.1,
        pool1=POOL,
        w_lin=jax.random.normal(k5, (HIDDEN, feat_dim), jnp.float32) * 0.1,
        b_lin=jax.random.normal(k6, (HIDDEN,), jnp.float32) * 0.1,
    )

    # --- check the optimized conv+relu+pool kernel on its own (layer0) ------
    l0 = jax.block_until_ready(
        lenet_conv_pool_nhwc(x[..., None], params["w0"], params["b0"], POOL))
    l0_ref = jnp.transpose(
        _ref_conv_pool(x[:, None], params["w0"], params["b0"], POOL),
        (0, 2, 3, 1))
    assert l0.shape == (B, d1, d1, NK0), l0.shape
    # bf16 MXU operands with f32 accumulation -> allow ~1e-2 level tolerance.
    assert jnp.allclose(l0, l0_ref, rtol=2e-2, atol=2e-2)

    # --- full CNN forward ----------------------------------------------------
    out = jax.block_until_ready(cnn_forward(x, params))
    ref = jax.block_until_ready(_ref_cnn(x, params))
    assert out.shape == (B * HIDDEN,), out.shape
    assert jnp.allclose(out, ref, rtol=1e-2, atol=1e-2)

    print("KERNEL_OK")
</pallas_src>

<mosaic_0001>
module attributes {stable_mosaic.version = 11 : i64} {
  func.func @_conv_relu_pool_kernel(%arg0: i32, %arg1: memref<2x16x16x1xf32, #tpu.memory_space<vmem>>, %arg2: memref<10x4xbf16, #tpu.memory_space<vmem>>, %arg3: memref<2x1x196xf32, #tpu.memory_space<vmem>>, %arg4: memref<392x10xf32, #tpu.memory_space<vmem>>) attributes {dimension_semantics = [#tpu.dimension_semantics<parallel>], iteration_bounds = array<i64: 1>, scalar_prefetch = 0 : i64, scratch_operands = 1 : i64, tpu.core_type = #tpu.core_type<tc>, window_params = [{transform_indices = @transform_0, window_bounds = array<i64: 2, 16, 16, 1>}, {pipeline_mode = #tpu.pipeline_mode<synchronous>, transform_indices = @transform_1, window_bounds = array<i64: 10, 4>}, {transform_indices = @transform_2, window_bounds = array<i64: 2, 1, 196>}]} {
    %c0 = arith.constant 0 : index
    %c0_0 = arith.constant 0 : index
    %c0_1 = arith.constant 0 : index
    %c0_2 = arith.constant 0 : index
    %0 = vector.load %arg1[%c0, %c0_0, %c0_1, %c0_2] : memref<2x16x16x1xf32, #tpu.memory_space<vmem>>, vector<2x16x16x1xf32>
    %1 = vector.extract_strided_slice %0 {offsets = [0, 0, 0, 0], sizes = [2, 14, 14, 1], strides = [1, 1, 1, 1]} : vector<2x16x16x1xf32> to vector<2x14x14x1xf32>
    %2 = vector.shape_cast %1 : vector<2x14x14x1xf32> to vector<392x1xf32>
    %c0_3 = arith.constant 0 : index
    %c0_4 = arith.constant 0 : index
    %3 = vector.load %arg4[%c0_3, %c0_4] : memref<392x10xf32, #tpu.memory_space<vmem>>, vector<392x1xf32>
    tpu.vector_store %arg4[%c0_3, %c0_4], %2 {strides = array<i32>} : memref<392x10xf32, #tpu.memory_space<vmem>>, vector<392x1xf32>,
    %4 = vector.extract_strided_slice %0 {offsets = [0, 0, 1, 0], sizes = [2, 14, 14, 1], strides = [1, 1, 1, 1]} : vector<2x16x16x1xf32> to vector<2x14x14x1xf32>
    %5 = vector.shape_cast %4 : vector<2x14x14x1xf32> to vector<392x1xf32>
    %c0_5 = arith.constant 0 : index
    %c1 = arith.constant 1 : index
    %6 = vector.load %arg4[%c0_5, %c1] : memref<392x10xf32, #tpu.memory_space<vmem>>, vector<392x1xf32>
    tpu.vector_store %arg4[%c0_5, %c1], %5 {strides = array<i32>} : memref<392x10xf32, #tpu.memory_space<vmem>>, vector<392x1xf32>,
    %7 = vector.extract_strided_slice %0 {offsets = [0, 0, 2, 0], sizes = [2, 14, 14, 1], strides = [1, 1, 1, 1]} : vector<2x16x16x1xf32> to vector<2x14x14x1xf32>
    %8 = vector.shape_cast %7 : vector<2x14x14x1xf32> to vector<392x1xf32>
    %c0_6 = arith.constant 0 : index
    %c2 = arith.constant 2 : index
    %9 = vector.load %arg4[%c0_6, %c2] : memref<392x10xf32, #tpu.memory_space<vmem>>, vector<392x1xf32>
    tpu.vector_store %arg4[%c0_6, %c2], %8 {strides = array<i32>} : memref<392x10xf32, #tpu.memory_space<vmem>>, vector<392x1xf32>,
    %10 = vector.extract_strided_slice %0 {offsets = [0, 1, 0, 0], sizes = [2, 14, 14, 1], strides = [1, 1, 1, 1]} : vector<2x16x16x1xf32> to vector<2x14x14x1xf32>
    %11 = vector.shape_cast %10 : vector<2x14x14x1xf32> to vector<392x1xf32>
    %c0_7 = arith.constant 0 : index
    %c3 = arith.constant 3 : index
    %12 = vector.load %arg4[%c0_7, %c3] : memref<392x10xf32, #tpu.memory_space<vmem>>, vector<392x1xf32>
    tpu.vector_store %arg4[%c0_7, %c3], %11 {strides = array<i32>} : memref<392x10xf32, #tpu.memory_space<vmem>>, vector<392x1xf32>,
    %13 = vector.extract_strided_slice %0 {offsets = [0, 1, 1, 0], sizes = [2, 14, 14, 1], strides = [1, 1, 1, 1]} : vector<2x16x16x1xf32> to vector<2x14x14x1xf32>
    %14 = vector.shape_cast %13 : vector<2x14x14x1xf32> to vector<392x1xf32>
    %c0_8 = arith.constant 0 : index
    %c4 = arith.constant 4 : index
    %15 = vector.load %arg4[%c0_8, %c4] : memref<392x10xf32, #tpu.memory_space<vmem>>, vector<392x1xf32>
    tpu.vector_store %arg4[%c0_8, %c4], %14 {strides = array<i32>} : memref<392x10xf32, #tpu.memory_space<vmem>>, vector<392x1xf32>,
    %16 = vector.extract_strided_slice %0 {offsets = [0, 1, 2, 0], sizes = [2, 14, 14, 1], strides = [1, 1, 1, 1]} : vector<2x16x16x1xf32> to vector<2x14x14x1xf32>
    %17 = vector.shape_cast %16 : vector<2x14x14x1xf32> to vector<392x1xf32>
    %c0_9 = arith.constant 0 : index
    %c5 = arith.constant 5 : index
    %18 = vector.load %arg4[%c0_9, %c5] : memref<392x10xf32, #tpu.memory_space<vmem>>, vector<392x1xf32>
    tpu.vector_store %arg4[%c0_9, %c5], %17 {strides = array<i32>} : memref<392x10xf32, #tpu.memory_space<vmem>>, vector<392x1xf32>,
    %19 = vector.extract_strided_slice %0 {offsets = [0, 2, 0, 0], sizes = [2, 14, 14, 1], strides = [1, 1, 1, 1]} : vector<2x16x16x1xf32> to vector<2x14x14x1xf32>
    %20 = vector.shape_cast %19 : vector<2x14x14x1xf32> to vector<392x1xf32>
    %c0_10 = arith.constant 0 : index
    %c6 = arith.constant 6 : index
    %21 = vector.load %arg4[%c0_10, %c6] : memref<392x10xf32, #tpu.memory_space<vmem>>, vector<392x1xf32>
    tpu.vector_store %arg4[%c0_10, %c6], %20 {strides = array<i32>} : memref<392x10xf32, #tpu.memory_space<vmem>>, vector<392x1xf32>,
    %22 = vector.extract_strided_slice %0 {offsets = [0, 2, 1, 0], sizes = [2, 14, 14, 1], strides = [1, 1, 1, 1]} : vector<2x16x16x1xf32> to vector<2x14x14x1xf32>
    %23 = vector.shape_cast %22 : vector<2x14x14x1xf32> to vector<392x1xf32>
    %c0_11 = arith.constant 0 : index
    %c7 = arith.constant 7 : index
    %24 = vector.load %arg4[%c0_11, %c7] : memref<392x10xf32, #tpu.memory_space<vmem>>, vector<392x1xf32>
    tpu.vector_store %arg4[%c0_11, %c7], %23 {strides = array<i32>} : memref<392x10xf32, #tpu.memory_space<vmem>>, vector<392x1xf32>,
    %25 = vector.extract_strided_slice %0 {offsets = [0, 2, 2, 0], sizes = [2, 14, 14, 1], strides = [1, 1, 1, 1]} : vector<2x16x16x1xf32> to vector<2x14x14x1xf32>
    %26 = vector.shape_cast %25 : vector<2x14x14x1xf32> to vector<392x1xf32>
    %c0_12 = arith.constant 0 : index
    %c8 = arith.constant 8 : index
    %27 = vector.load %arg4[%c0_12, %c8] : memref<392x10xf32, #tpu.memory_space<vmem>>, vector<392x1xf32>
    tpu.vector_store %arg4[%c0_12, %c8], %26 {strides = array<i32>} : memref<392x10xf32, #tpu.memory_space<vmem>>, vector<392x1xf32>,
    %cst = arith.constant 1.000000e+00 : f32
    %28 = vector.broadcast %cst : f32 to vector<392x1xf32>
    %c0_13 = arith.constant 0 : index
    %c9 = arith.constant 9 : index
    %29 = vector.load %arg4[%c0_13, %c9] : memref<392x10xf32, #tpu.memory_space<vmem>>, vector<392x1xf32>
    tpu.vector_store %arg4[%c0_13, %c9], %28 {strides = array<i32>} : memref<392x10xf32, #tpu.memory_space<vmem>>, vector<392x1xf32>,
    %c0_14 = arith.constant 0 : index
    %c0_15 = arith.constant 0 : index
    %30 = vector.load %arg4[%c0_14, %c0_15] : memref<392x10xf32, #tpu.memory_space<vmem>>, vector<392x10xf32>
    %31 = arith.truncf %30 : vector<392x10xf32> to vector<392x10xbf16>
    %c0_16 = arith.constant 0 : index
    %c0_17 = arith.constant 0 : index
    %32 = vector.load %arg2[%c0_16, %c0_17] : memref<10x4xbf16, #tpu.memory_space<vmem>>, vector<10x4xbf16>
    %cst_18 = arith.constant dense<0.000000e+00> : vector<392x4xf32>
    %33 = tpu.matmul %31, %32, %cst_18 {dimension_numbers = #tpu.dot_dimension_numbers<[1], [0], [0], [1], [0, 0, 1, 1], [], []>} : vector<392x10xbf16>, vector<10x4xbf16>, vector<392x4xf32> -> vector<392x4xf32>
    %cst_19 = arith.constant 0.000000e+00 : f32
    %34 = vector.broadcast %cst_19 : f32 to vector<392x4xf32>
    %35 = arith.maximumf %33, %34 : vector<392x4xf32>
    %36 = vector.shape_cast %35 : vector<392x4xf32> to vector<2x14x14x4xf32>
    %37 = vector.shape_cast %36 : vector<2x14x14x4xf32> to vector<2x7x2x7x2x4xf32>
    %38 = vector.extract_strided_slice %37 {offsets = [0, 0, 0, 0, 0, 0], sizes = [2, 7, 1, 7, 1, 4], strides = [1, 1, 1, 1, 1, 1]} : vector<2x7x2x7x2x4xf32> to vector<2x7x1x7x1x4xf32>
    %39 = vector.shape_cast %38 : vector<2x7x1x7x1x4xf32> to vector<2x7x7x4xf32>
    %40 = vector.extract_strided_slice %37 {offsets = [0, 0, 0, 0, 1, 0], sizes = [2, 7, 1, 7, 1, 4], strides = [1, 1, 1, 1, 1, 1]} : vector<2x7x2x7x2x4xf32> to vector<2x7x1x7x1x4xf32>
    %41 = vector.shape_cast %40 : vector<2x7x1x7x1x4xf32> to vector<2x7x7x4xf32>
    %42 = arith.maximumf %39, %41 : vector<2x7x7x4xf32>
    %43 = vector.extract_strided_slice %37 {offsets = [0, 0, 1, 0, 0, 0], sizes = [2, 7, 1, 7, 1, 4], strides = [1, 1, 1, 1, 1, 1]} : vector<2x7x2x7x2x4xf32> to vector<2x7x1x7x1x4xf32>
    %44 = vector.shape_cast %43 : vector<2x7x1x7x1x4xf32> to vector<2x7x7x4xf32>
    %45 = arith.maximumf %42, %44 : vector<2x7x7x4xf32>
    %46 = vector.extract_strided_slice %37 {offsets = [0, 0, 1, 0, 1, 0], sizes = [2, 7, 1, 7, 1, 4], strides = [1, 1, 1, 1, 1, 1]} : vector<2x7x2x7x2x4xf32> to vector<2x7x1x7x1x4xf32>
    %47 = vector.shape_cast %46 : vector<2x7x1x7x1x4xf32> to vector<2x7x7x4xf32>
    %48 = arith.maximumf %45, %47 : vector<2x7x7x4xf32>
    %49 = vector.extract_strided_slice %48 {offsets = [0, 0, 0, 0], sizes = [2, 1, 1, 4], strides = [1, 1, 1, 1]} : vector<2x7x7x4xf32> to vector<2x1x1x4xf32>
    %50 = vector.shape_cast %49 : vector<2x1x1x4xf32> to vector<2x1x4xf32>
    %c0_20 = arith.constant 0 : index
    %c0_21 = arith.constant 0 : index
    %c0_22 = arith.constant 0 : index
    %51 = vector.load %arg3[%c0_20, %c0_21, %c0_22] : memref<2x1x196xf32, #tpu.memory_space<vmem>>, vector<2x1x4xf32>
    tpu.vector_store %arg3[%c0_20, %c0_21, %c0_22], %50 {strides = array<i32>} : memref<2x1x196xf32, #tpu.memory_space<vmem>>, vector<2x1x4xf32>,
    %52 = vector.extract_strided_slice %48 {offsets = [0, 0, 1, 0], sizes = [2, 1, 1, 4], strides = [1, 1, 1, 1]} : vector<2x7x7x4xf32> to vector<2x1x1x4xf32>
    %53 = vector.shape_cast %52 : vector<2x1x1x4xf32> to vector<2x1x4xf32>
    %c0_23 = arith.constant 0 : index
    %c0_24 = arith.constant 0 : index
    %c4_25 = arith.constant 4 : index
    %54 = vector.load %arg3[%c0_23, %c0_24, %c4_25] : memref<2x1x196xf32, #tpu.memory_space<vmem>>, vector<2x1x4xf32>
    tpu.vector_store %arg3[%c0_23, %c0_24, %c4_25], %53 {strides = array<i32>} : memref<2x1x196xf32, #tpu.memory_space<vmem>>, vector<2x1x4xf32>,
    %55 = vector.extract_strided_slice %48 {offsets = [0, 0, 2, 0], sizes = [2, 1, 1, 4], strides = [1, 1, 1, 1]} : vector<2x7x7x4xf32> to vector<2x1x1x4xf32>
    %56 = vector.shape_cast %55 : vector<2x1x1x4xf32> to vector<2x1x4xf32>
    %c0_26 = arith.constant 0 : index
    %c0_27 = arith.constant 0 : index
    %c8_28 = arith.constant 8 : index
    %57 = vector.load %arg3[%c0_26, %c0_27, %c8_28] : memref<2x1x196xf32, #tpu.memory_space<vmem>>, vector<2x1x4xf32>
    tpu.vector_store %arg3[%c0_26, %c0_27, %c8_28], %56 {strides = array<i32>} : memref<2x1x196xf32, #tpu.memory_space<vmem>>, vector<2x1x4xf32>,
    %58 = vector.extract_strided_slice %48 {offsets = [0, 0, 3, 0], sizes = [2, 1, 1, 4], strides = [1, 1, 1, 1]} : vector<2x7x7x4xf32> to vector<2x1x1x4xf32>
    %59 = vector.shape_cast %58 : vector<2x1x1x4xf32> to vector<2x1x4xf32>
    %c0_29 = arith.constant 0 : index
    %c0_30 = arith.constant 0 : index
    %c12 = arith.constant 12 : index
    %60 = vector.load %arg3[%c0_29, %c0_30, %c12] : memref<2x1x196xf32, #tpu.memory_space<vmem>>, vector<2x1x4xf32>
    tpu.vector_store %arg3[%c0_29, %c0_30, %c12], %59 {strides = array<i32>} : memref<2x1x196xf32, #tpu.memory_space<vmem>>, vector<2x1x4xf32>,
    %61 = vector.extract_strided_slice %48 {offsets = [0, 0, 4, 0], sizes = [2, 1, 1, 4], strides = [1, 1, 1, 1]} : vector<2x7x7x4xf32> to vector<2x1x1x4xf32>
    %62 = vector.shape_cast %61 : vector<2x1x1x4xf32> to vector<2x1x4xf32>
    %c0_31 = arith.constant 0 : index
    %c0_32 = arith.constant 0 : index
    %c16 = arith.constant 16 : index
    %63 = vector.load %arg3[%c0_31, %c0_32, %c16] : memref<2x1x196xf32, #tpu.memory_space<vmem>>, vector<2x1x4xf32>
    tpu.vector_store %arg3[%c0_31, %c0_32, %c16], %62 {strides = array<i32>} : memref<2x1x196xf32, #tpu.memory_space<vmem>>, vector<2x1x4xf32>,
    %64 = vector.extract_strided_slice %48 {offsets = [0, 0, 5, 0], sizes = [2, 1, 1, 4], strides = [1, 1, 1, 1]} : vector<2x7x7x4xf32> to vector<2x1x1x4xf32>
    %65 = vector.shape_cast %64 : vector<2x1x1x4xf32> to vector<2x1x4xf32>
    %c0_33 = arith.constant 0 : index
    %c0_34 = arith.constant 0 : index
    %c20 = arith.constant 20 : index
    %66 = vector.load %arg3[%c0_33, %c0_34, %c20] : memref<2x1x196xf32, #tpu.memory_space<vmem>>, vector<2x1x4xf32>
    tpu.vector_store %arg3[%c0_33, %c0_34, %c20], %65 {strides = array<i32>} : memref<2x1x196xf32, #tpu.memory_space<vmem>>, vector<2x1x4xf32>,
    %67 = vector.extract_strided_slice %48 {offsets = [0, 0, 6, 0], sizes = [2, 1, 1, 4], strides = [1, 1, 1, 1]} : vector<2x7x7x4xf32> to vector<2x1x1x4xf32>
    %68 = vector.shape_cast %67 : vector<2x1x1x4xf32> to vector<2x1x4xf32>
    %c0_35 = arith.constant 0 : index
    %c0_36 = arith.constant 0 : index
    %c24 = arith.constant 24 : index
    %69 = vector.load %arg3[%c0_35, %c0_36, %c24] : memref<2x1x196xf32, #tpu.memory_space<vmem>>, vector<2x1x4xf32>
    tpu.vector_store %arg3[%c0_35, %c0_36, %c24], %68 {strides = array<i32>} : memref<2x1x196xf32, #tpu.memory_space<vmem>>, vector<2x1x4xf32>,
    %70 = vector.extract_strided_slice %48 {offsets = [0, 1, 0, 0], sizes = [2, 1, 1, 4], strides = [1, 1, 1, 1]} : vector<2x7x7x4xf32> to vector<2x1x1x4xf32>
    %71 = vector.shape_cast %70 : vector<2x1x1x4xf32> to vector<2x1x4xf32>
    %c0_37 = arith.constant 0 : index
    %c0_38 = arith.constant 0 : index
    %c28 = arith.constant 28 : index
    %72 = vector.load %arg3[%c0_37, %c0_38, %c28] : memref<2x1x196xf32, #tpu.memory_space<vmem>>, vector<2x1x4xf32>
    tpu.vector_store %arg3[%c0_37, %c0_38, %c28], %71 {strides = array<i32>} : memref<2x1x196xf32, #tpu.memory_space<vmem>>, vector<2x1x4xf32>,
    %73 = vector.extract_strided_slice %48 {offsets = [0, 1, 1, 0], sizes = [2, 1, 1, 4], strides = [1, 1, 1, 1]} : vector<2x7x7x4xf32> to vector<2x1x1x4xf32>
    %74 = vector.shape_cast %73 : vector<2x1x1x4xf32> to vector<2x1x4xf32>
    %c0_39 = arith.constant 0 : index
    %c0_40 = arith.constant 0 : index
    %c32 = arith.constant 32 : index
    %75 = vector.load %arg3[%c0_39, %c0_40, %c32] : memref<2x1x196xf32, #tpu.memory_space<vmem>>, vector<2x1x4xf32>
    tpu.vector_store %arg3[%c0_39, %c0_40, %c32], %74 {strides = array<i32>} : memref<2x1x196xf32, #tpu.memory_space<vmem>>, vector<2x1x4xf32>,
    %76 = vector.extract_strided_slice %48 {offsets = [0, 1, 2, 0], sizes = [2, 1, 1, 4], strides = [1, 1, 1, 1]} : vector<2x7x7x4xf32> to vector<2x1x1x4xf32>
    %77 = vector.shape_cast %76 : vector<2x1x1x4xf32> to vector<2x1x4xf32>
    %c0_41 = arith.constant 0 : index
    %c0_42 = arith.constant 0 : index
    %c36 = arith.constant 36 : index
    %78 = vector.load %arg3[%c0_41, %c0_42, %c36] : memref<2x1x196xf32, #tpu.memory_space<vmem>>, vector<2x1x4xf32>
    tpu.vector_store %arg3[%c0_41, %c0_42, %c36], %77 {strides = array<i32>} : memref<2x1x196xf32, #tpu.memory_space<vmem>>, vector<2x1x4xf32>,
    %79 = vector.extract_strided_slice %48 {offsets = [0, 1, 3, 0], sizes = [2, 1, 1, 4], strides = [1, 1, 1, 1]} : vector<2x7x7x4xf32> to vector<2x1x1x4xf32>
    %80 = vector.shape_cast %79 : vector<2x1x1x4xf32> to vector<2x1x4xf32>
    %c0_43 = arith.constant 0 : index
    %c0_44 = arith.constant 0 : index
    %c40 = arith.constant 40 : index
    %81 = vector.load %arg3[%c0_43, %c0_44, %c40] : memref<2x1x196xf32, #tpu.memory_space<vmem>>, vector<2x1x4xf32>
    tpu.vector_store %arg3[%c0_43, %c0_44, %c40], %80 {strides = array<i32>} : memref<2x1x196xf32, #tpu.memory_space<vmem>>, vector<2x1x4xf32>,
    %82 = vector.extract_strided_slice %48 {offsets = [0, 1, 4, 0], sizes = [2, 1, 1, 4], strides = [1, 1, 1, 1]} : vector<2x7x7x4xf32> to vector<2x1x1x4xf32>
    %83 = vector.shape_cast %82 : vector<2x1x1x4xf32> to vector<2x1x4xf32>
    %c0_45 = arith.constant 0 : index
    %c0_46 = arith.constant 0 : index
    %c44 = arith.constant 44 : index
    %84 = vector.load %arg3[%c0_45, %c0_46, %c44] : memref<2x1x196xf32, #tpu.memory_space<vmem>>, vector<2x1x4xf32>
    tpu.vector_store %arg3[%c0_45, %c0_46, %c44], %83 {strides = array<i32>} : memref<2x1x196xf32, #tpu.memory_space<vmem>>, vector<2x1x4xf32>,
    %85 = vector.extract_strided_slice %48 {offsets = [0, 1, 5, 0], sizes = [2, 1, 1, 4], strides = [1, 1, 1, 1]} : vector<2x7x7x4xf32> to vector<2x1x1x4xf32>
    %86 = vector.shape_cast %85 : vector<2x1x1x4xf32> to vector<2x1x4xf32>
    %c0_47 = arith.constant 0 : index
    %c0_48 = arith.constant 0 : index
    %c48 = arith.constant 48 : index
    %87 = vector.load %arg3[%c0_47, %c0_48, %c48] : memref<2x1x196xf32, #tpu.memory_space<vmem>>, vector<2x1x4xf32>
    tpu.vector_store %arg3[%c0_47, %c0_48, %c48], %86 {strides = array<i32>} : memref<2x1x196xf32, #tpu.memory_space<vmem>>, vector<2x1x4xf32>,
    %88 = vector.extract_strided_slice %48 {offsets = [0, 1, 6, 0], sizes = [2, 1, 1, 4], strides = [1, 1, 1, 1]} : vector<2x7x7x4xf32> to vector<2x1x1x4xf32>
    %89 = vector.shape_cast %88 : vector<2x1x1x4xf32> to vector<2x1x4xf32>
    %c0_49 = arith.constant 0 : index
    %c0_50 = arith.constant 0 : index
    %c52 = arith.constant 52 : index
    %90 = vector.load %arg3[%c0_49, %c0_50, %c52] : memref<2x1x196xf32, #tpu.memory_space<vmem>>, vector<2x1x4xf32>
    tpu.vector_store %arg3[%c0_49, %c0_50, %c52], %89 {strides = array<i32>} : memref<2x1x196xf32, #tpu.memory_space<vmem>>, vector<2x1x4xf32>,
    %91 = vector.extract_strided_slice %48 {offsets = [0, 2, 0, 0], sizes = [2, 1, 1, 4], strides = [1, 1, 1, 1]} : vector<2x7x7x4xf32> to vector<2x1x1x4xf32>
    %92 = vector.shape_cast %91 : vector<2x1x1x4xf32> to vector<2x1x4xf32>
    %c0_51 = arith.constant 0 : index
    %c0_52 = arith.constant 0 : index
    %c56 = arith.constant 56 : index
    %93 = vector.load %arg3[%c0_51, %c0_52, %c56] : memref<2x1x196xf32, #tpu.memory_space<vmem>>, vector<2x1x4xf32>
    tpu.vector_store %arg3[%c0_51, %c0_52, %c56], %92 {strides = array<i32>} : memref<2x1x196xf32, #tpu.memory_space<vmem>>, vector<2x1x4xf32>,
    %94 = vector.extract_strided_slice %48 {offsets = [0, 2, 1, 0], sizes = [2, 1, 1, 4], strides = [1, 1, 1, 1]} : vector<2x7x7x4xf32> to vector<2x1x1x4xf32>
    %95 = vector.shape_cast %94 : vector<2x1x1x4xf32> to vector<2x1x4xf32>
    %c0_53 = arith.constant 0 : index
    %c0_54 = arith.constant 0 : index
    %c60 = arith.constant 60 : index
    %96 = vector.load %arg3[%c0_53, %c0_54, %c60] : memref<2x1x196xf32, #tpu.memory_space<vmem>>, vector<2x1x4xf32>
    tpu.vector_store %arg3[%c0_53, %c0_54, %c60], %95 {strides = array<i32>} : memref<2x1x196xf32, #tpu.memory_space<vmem>>, vector<2x1x4xf32>,
    %97 = vector.extract_strided_slice %48 {offsets = [0, 2, 2, 0], sizes = [2, 1, 1, 4], strides = [1, 1, 1, 1]} : vector<2x7x7x4xf32> to vector<2x1x1x4xf32>
    %98 = vector.shape_cast %97 : vector<2x1x1x4xf32> to vector<2x1x4xf32>
    %c0_55 = arith.constant 0 : index
    %c0_56 = arith.constant 0 : index
    %c64 = arith.constant 64 : index
    %99 = vector.load %arg3[%c0_55, %c0_56, %c64] : memref<2x1x196xf32, #tpu.memory_space<vmem>>, vector<2x1x4xf32>
    tpu.vector_store %arg3[%c0_55, %c0_56, %c64], %98 {strides = array<i32>} : memref<2x1x196xf32, #tpu.memory_space<vmem>>, vector<2x1x4xf32>,
    %100 = vector.extract_strided_slice %48 {offsets = [0, 2, 3, 0], sizes = [2, 1, 1, 4], strides = [1, 1, 1, 1]} : vector<2x7x7x4xf32> to vector<2x1x1x4xf32>
    %101 = vector.shape_cast %100 : vector<2x1x1x4xf32> to vector<2x1x4xf32>
    %c0_57 = arith.constant 0 : index
    %c0_58 = arith.constant 0 : index
    %c68 = arith.constant 68 : index
    %102 = vector.load %arg3[%c0_57, %c0_58, %c68] : memref<2x1x196xf32, #tpu.memory_space<vmem>>, vector<2x1x4xf32>
    tpu.vector_store %arg3[%c0_57, %c0_58, %c68], %101 {strides = array<i32>} : memref<2x1x196xf32, #tpu.memory_space<vmem>>, vector<2x1x4xf32>,
    %103 = vector.extract_strided_slice %48 {offsets = [0, 2, 4, 0], sizes = [2, 1, 1, 4], strides = [1, 1, 1, 1]} : vector<2x7x7x4xf32> to vector<2x1x1x4xf32>
    %104 = vector.shape_cast %103 : vector<2x1x1x4xf32> to vector<2x1x4xf32>
    %c0_59 = arith.constant 0 : index
    %c0_60 = arith.constant 0 : index
    %c72 = arith.constant 72 : index
    %105 = vector.load %arg3[%c0_59, %c0_60, %c72] : memref<2x1x196xf32, #tpu.memory_space<vmem>>, vector<2x1x4xf32>
    tpu.vector_store %arg3[%c0_59, %c0_60, %c72], %104 {strides = array<i32>} : memref<2x1x196xf32, #tpu.memory_space<vmem>>, vector<2x1x4xf32>,
    %106 = vector.extract_strided_slice %48 {offsets = [0, 2, 5, 0], sizes = [2, 1, 1, 4], strides = [1, 1, 1, 1]} : vector<2x7x7x4xf32> to vector<2x1x1x4xf32>
    %107 = vector.shape_cast %106 : vector<2x1x1x4xf32> to vector<2x1x4xf32>
    %c0_61 = arith.constant 0 : index
    %c0_62 = arith.constant 0 : index
    %c76 = arith.constant 76 : index
    %108 = vector.load %arg3[%c0_61, %c0_62, %c76] : memref<2x1x196xf32, #tpu.memory_space<vmem>>, vector<2x1x4xf32>
    tpu.vector_store %arg3[%c0_61, %c0_62, %c76], %107 {strides = array<i32>} : memref<2x1x196xf32, #tpu.memory_space<vmem>>, vector<2x1x4xf32>,
    %109 = vector.extract_strided_slice %48 {offsets = [0, 2, 6, 0], sizes = [2, 1, 1, 4], strides = [1, 1, 1, 1]} : vector<2x7x7x4xf32> to vector<2x1x1x4xf32>
    %110 = vector.shape_cast %109 : vector<2x1x1x4xf32> to vector<2x1x4xf32>
    %c0_63 = arith.constant 0 : index
    %c0_64 = arith.constant 0 : index
    %c80 = arith.constant 80 : index
    %111 = vector.load %arg3[%c0_63, %c0_64, %c80] : memref<2x1x196xf32, #tpu.memory_space<vmem>>, vector<2x1x4xf32>
    tpu.vector_store %arg3[%c0_63, %c0_64, %c80], %110 {strides = array<i32>} : memref<2x1x196xf32, #tpu.memory_space<vmem>>, vector<2x1x4xf32>,
    %112 = vector.extract_strided_slice %48 {offsets = [0, 3, 0, 0], sizes = [2, 1, 1, 4], strides = [1, 1, 1, 1]} : vector<2x7x7x4xf32> to vector<2x1x1x4xf32>
    %113 = vector.shape_cast %112 : vector<2x1x1x4xf32> to vector<2x1x4xf32>
    %c0_65 = arith.constant 0 : index
    %c0_66 = arith.constant 0 : index
    %c84 = arith.constant 84 : index
    %114 = vector.load %arg3[%c0_65, %c0_66, %c84] : memref<2x1x196xf32, #tpu.memory_space<vmem>>, vector<2x1x4xf32>
    tpu.vector_store %arg3[%c0_65, %c0_66, %c84], %113 {strides = array<i32>} : memref<2x1x196xf32, #tpu.memory_space<vmem>>, vector<2x1x4xf32>,
    %115 = vector.extract_strided_slice %48 {offsets = [0, 3, 1, 0], sizes = [2, 1, 1, 4], strides = [1, 1, 1, 1]} : vector<2x7x7x4xf32> to vector<2x1x1x4xf32>
    %116 = vector.shape_cast %115 : vector<2x1x1x4xf32> to vector<2x1x4xf32>
    %c0_67 = arith.constant 0 : index
    %c0_68 = arith.constant 0 : index
    %c88 = arith.constant 88 : index
    %117 = vector.load %arg3[%c0_67, %c0_68, %c88] : memref<2x1x196xf32, #tpu.memory_space<vmem>>, vector<2x1x4xf32>
    tpu.vector_store %arg3[%c0_67, %c0_68, %c88], %116 {strides = array<i32>} : memref<2x1x196xf32, #tpu.memory_space<vmem>>, vector<2x1x4xf32>,
    %118 = vector.extract_strided_slice %48 {offsets = [0, 3, 2, 0], sizes = [2, 1, 1, 4], strides = [1, 1, 1, 1]} : vector<2x7x7x4xf32> to vector<2x1x1x4xf32>
    %119 = vector.shape_cast %118 : vector<2x1x1x4xf32> to vector<2x1x4xf32>
    %c0_69 = arith.constant 0 : index
    %c0_70 = arith.constant 0 : index
    %c92 = arith.constant 92 : index
    %120 = vector.load %arg3[%c0_69, %c0_70, %c92] : memref<2x1x196xf32, #tpu.memory_space<vmem>>, vector<2x1x4xf32>
    tpu.vector_store %arg3[%c0_69, %c0_70, %c92], %119 {strides = array<i32>} : memref<2x1x196xf32, #tpu.memory_space<vmem>>, vector<2x1x4xf32>,
    %121 = vector.extract_strided_slice %48 {offsets = [0, 3, 3, 0], sizes = [2, 1, 1, 4], strides = [1, 1, 1, 1]} : vector<2x7x7x4xf32> to vector<2x1x1x4xf32>
    %122 = vector.shape_cast %121 : vector<2x1x1x4xf32> to vector<2x1x4xf32>
    %c0_71 = arith.constant 0 : index
    %c0_72 = arith.constant 0 : index
    %c96 = arith.constant 96 : index
    %123 = vector.load %arg3[%c0_71, %c0_72, %c96] : memref<2x1x196xf32, #tpu.memory_space<vmem>>, vector<2x1x4xf32>
    tpu.vector_store %arg3[%c0_71, %c0_72, %c96], %122 {strides = array<i32>} : memref<2x1x196xf32, #tpu.memory_space<vmem>>, vector<2x1x4xf32>,
    %124 = vector.extract_strided_slice %48 {offsets = [0, 3, 4, 0], sizes = [2, 1, 1, 4], strides = [1, 1, 1, 1]} : vector<2x7x7x4xf32> to vector<2x1x1x4xf32>
    %125 = vector.shape_cast %124 : vector<2x1x1x4xf32> to vector<2x1x4xf32>
    %c0_73 = arith.constant 0 : index
    %c0_74 = arith.constant 0 : index
    %c100 = arith.constant 100 : index
    %126 = vector.load %arg3[%c0_73, %c0_74, %c100] : memref<2x1x196xf32, #tpu.memory_space<vmem>>, vector<2x1x4xf32>
    tpu.vector_store %arg3[%c0_73, %c0_74, %c100], %125 {strides = array<i32>} : memref<2x1x196xf32, #tpu.memory_space<vmem>>, vector<2x1x4xf32>,
    %127 = vector.extract_strided_slice %48 {offsets = [0, 3, 5, 0], sizes = [2, 1, 1, 4], strides = [1, 1, 1, 1]} : vector<2x7x7x4xf32> to vector<2x1x1x4xf32>
    %128 = vector.shape_cast %127 : vector<2x1x1x4xf32> to vector<2x1x4xf32>
    %c0_75 = arith.constant 0 : index
    %c0_76 = arith.constant 0 : index
    %c104 = arith.constant 104 : index
    %129 = vector.load %arg3[%c0_75, %c0_76, %c104] : memref<2x1x196xf32, #tpu.memory_space<vmem>>, vector<2x1x4xf32>
    tpu.vector_store %arg3[%c0_75, %c0_76, %c104], %128 {strides = array<i32>} : memref<2x1x196xf32, #tpu.memory_space<vmem>>, vector<2x1x4xf32>,
    %130 = vector.extract_strided_slice %48 {offsets = [0, 3, 6, 0], sizes = [2, 1, 1, 4], strides = [1, 1, 1, 1]} : vector<2x7x7x4xf32> to vector<2x1x1x4xf32>
    %131 = vector.shape_cast %130 : vector<2x1x1x4xf32> to vector<2x1x4xf32>
    %c0_77 = arith.constant 0 : index
    %c0_78 = arith.constant 0 : index
    %c108 = arith.constant 108 : index
    %132 = vector.load %arg3[%c0_77, %c0_78, %c108] : memref<2x1x196xf32, #tpu.memory_space<vmem>>, vector<2x1x4xf32>
    tpu.vector_store %arg3[%c0_77, %c0_78, %c108], %131 {strides = array<i32>} : memref<2x1x196xf32, #tpu.memory_space<vmem>>, vector<2x1x4xf32>,
    %133 = vector.extract_strided_slice %48 {offsets = [0, 4, 0, 0], sizes = [2, 1, 1, 4], strides = [1, 1, 1, 1]} : vector<2x7x7x4xf32> to vector<2x1x1x4xf32>
    %134 = vector.shape_cast %133 : vector<2x1x1x4xf32> to vector<2x1x4xf32>
    %c0_79 = arith.constant 0 : index
    %c0_80 = arith.constant 0 : index
    %c112 = arith.constant 112 : index
    %135 = vector.load %arg3[%c0_79, %c0_80, %c112] : memref<2x1x196xf32, #tpu.memory_space<vmem>>, vector<2x1x4xf32>
    tpu.vector_store %arg3[%c0_79, %c0_80, %c112], %134 {strides = array<i32>} : memref<2x1x196xf32, #tpu.memory_space<vmem>>, vector<2x1x4xf32>,
    %136 = vector.extract_strided_slice %48 {offsets = [0, 4, 1, 0], sizes = [2, 1, 1, 4], strides = [1, 1, 1, 1]} : vector<2x7x7x4xf32> to vector<2x1x1x4xf32>
    %137 = vector.shape_cast %136 : vector<2x1x1x4xf32> to vector<2x1x4xf32>
    %c0_81 = arith.constant 0 : index
    %c0_82 = arith.constant 0 : index
    %c116 = arith.constant 116 : index
    %138 = vector.load %arg3[%c0_81, %c0_82, %c116] : memref<2x1x196xf32, #tpu.memory_space<vmem>>, vector<2x1x4xf32>
    tpu.vector_store %arg3[%c0_81, %c0_82, %c116], %137 {strides = array<i32>} : memref<2x1x196xf32, #tpu.memory_space<vmem>>, vector<2x1x4xf32>,
    %139 = vector.extract_strided_slice %48 {offsets = [0, 4, 2, 0], sizes = [2, 1, 1, 4], strides = [1, 1, 1, 1]} : vector<2x7x7x4xf32> to vector<2x1x1x4xf32>
    %140 = vector.shape_cast %139 : vector<2x1x1x4xf32> to vector<2x1x4xf32>
    %c0_83 = arith.constant 0 : index
    %c0_84 = arith.constant 0 : index
    %c120 = arith.constant 120 : index
    %141 = vector.load %arg3[%c0_83, %c0_84, %c120] : memref<2x1x196xf32, #tpu.memory_space<vmem>>, vector<2x1x4xf32>
    tpu.vector_store %arg3[%c0_83, %c0_84, %c120], %140 {strides = array<i32>} : memref<2x1x196xf32, #tpu.memory_space<vmem>>, vector<2x1x4xf32>,
    %142 = vector.extract_strided_slice %48 {offsets = [0, 4, 3, 0], sizes = [2, 1, 1, 4], strides = [1, 1, 1, 1]} : vector<2x7x7x4xf32> to vector<2x1x1x4xf32>
    %143 = vector.shape_cast %142 : vector<2x1x1x4xf32> to vector<2x1x4xf32>
    %c0_85 = arith.constant 0 : index
    %c0_86 = arith.constant 0 : index
    %c124 = arith.constant 124 : index
    %144 = vector.load %arg3[%c0_85, %c0_86, %c124] : memref<2x1x196xf32, #tpu.memory_space<vmem>>, vector<2x1x4xf32>
    tpu.vector_store %arg3[%c0_85, %c0_86, %c124], %143 {strides = array<i32>} : memref<2x1x196xf32, #tpu.memory_space<vmem>>, vector<2x1x4xf32>,
    %145 = vector.extract_strided_slice %48 {offsets = [0, 4, 4, 0], sizes = [2, 1, 1, 4], strides = [1, 1, 1, 1]} : vector<2x7x7x4xf32> to vector<2x1x1x4xf32>
    %146 = vector.shape_cast %145 : vector<2x1x1x4xf32> to vector<2x1x4xf32>
    %c0_87 = arith.constant 0 : index
    %c0_88 = arith.constant 0 : index
    %c128 = arith.constant 128 : index
    %147 = vector.load %arg3[%c0_87, %c0_88, %c128] : memref<2x1x196xf32, #tpu.memory_space<vmem>>, vector<2x1x4xf32>
    tpu.vector_store %arg3[%c0_87, %c0_88, %c128], %146 {strides = array<i32>} : memref<2x1x196xf32, #tpu.memory_space<vmem>>, vector<2x1x4xf32>,
    %148 = vector.extract_strided_slice %48 {offsets = [0, 4, 5, 0], sizes = [2, 1, 1, 4], strides = [1, 1, 1, 1]} : vector<2x7x7x4xf32> to vector<2x1x1x4xf32>
    %149 = vector.shape_cast %148 : vector<2x1x1x4xf32> to vector<2x1x4xf32>
    %c0_89 = arith.constant 0 : index
    %c0_90 = arith.constant 0 : index
    %c132 = arith.constant 132 : index
    %150 = vector.load %arg3[%c0_89, %c0_90, %c132] : memref<2x1x196xf32, #tpu.memory_space<vmem>>, vector<2x1x4xf32>
    tpu.vector_store %arg3[%c0_89, %c0_90, %c132], %149 {strides = array<i32>} : memref<2x1x196xf32, #tpu.memory_space<vmem>>, vector<2x1x4xf32>,
    %151 = vector.extract_strided_slice %48 {offsets = [0, 4, 6, 0], sizes = [2, 1, 1, 4], strides = [1, 1, 1, 1]} : vector<2x7x7x4xf32> to vector<2x1x1x4xf32>
    %152 = vector.shape_cast %151 : vector<2x1x1x4xf32> to vector<2x1x4xf32>
    %c0_91 = arith.constant 0 : index
    %c0_92 = arith.constant 0 : index
    %c136 = arith.constant 136 : index
    %153 = vector.load %arg3[%c0_91, %c0_92, %c136] : memref<2x1x196xf32, #tpu.memory_space<vmem>>, vector<2x1x4xf32>
    tpu.vector_store %arg3[%c0_91, %c0_92, %c136], %152 {strides = array<i32>} : memref<2x1x196xf32, #tpu.memory_space<vmem>>, vector<2x1x4xf32>,
    %154 = vector.extract_strided_slice %48 {offsets = [0, 5, 0, 0], sizes = [2, 1, 1, 4], strides = [1, 1, 1, 1]} : vector<2x7x7x4xf32> to vector<2x1x1x4xf32>
    %155 = vector.shape_cast %154 : vector<2x1x1x4xf32> to vector<2x1x4xf32>
    %c0_93 = arith.constant 0 : index
    %c0_94 = arith.constant 0 : index
    %c140 = arith.constant 140 : index
    %156 = vector.load %arg3[%c0_93, %c0_94, %c140] : memref<2x1x196xf32, #tpu.memory_space<vmem>>, vector<2x1x4xf32>
    tpu.vector_store %arg3[%c0_93, %c0_94, %c140], %155 {strides = array<i32>} : memref<2x1x196xf32, #tpu.memory_space<vmem>>, vector<2x1x4xf32>,
    %157 = vector.extract_strided_slice %48 {offsets = [0, 5, 1, 0], sizes = [2, 1, 1, 4], strides = [1, 1, 1, 1]} : vector<2x7x7x4xf32> to vector<2x1x1x4xf32>
    %158 = vector.shape_cast %157 : vector<2x1x1x4xf32> to vector<2x1x4xf32>
    %c0_95 = arith.constant 0 : index
    %c0_96 = arith.constant 0 : index
    %c144 = arith.constant 144 : index
    %159 = vector.load %arg3[%c0_95, %c0_96, %c144] : memref<2x1x196xf32, #tpu.memory_space<vmem>>, vector<2x1x4xf32>
    tpu.vector_store %arg3[%c0_95, %c0_96, %c144], %158 {strides = array<i32>} : memref<2x1x196xf32, #tpu.memory_space<vmem>>, vector<2x1x4xf32>,
    %160 = vector.extract_strided_slice %48 {offsets = [0, 5, 2, 0], sizes = [2, 1, 1, 4], strides = [1, 1, 1, 1]} : vector<2x7x7x4xf32> to vector<2x1x1x4xf32>
    %161 = vector.shape_cast %160 : vector<2x1x1x4xf32> to vector<2x1x4xf32>
    %c0_97 = arith.constant 0 : index
    %c0_98 = arith.constant 0 : index
    %c148 = arith.constant 148 : index
    %162 = vector.load %arg3[%c0_97, %c0_98, %c148] : memref<2x1x196xf32, #tpu.memory_space<vmem>>, vector<2x1x4xf32>
    tpu.vector_store %arg3[%c0_97, %c0_98, %c148], %161 {strides = array<i32>} : memref<2x1x196xf32, #tpu.memory_space<vmem>>, vector<2x1x4xf32>,
    %163 = vector.extract_strided_slice %48 {offsets = [0, 5, 3, 0], sizes = [2, 1, 1, 4], strides = [1, 1, 1, 1]} : vector<2x7x7x4xf32> to vector<2x1x1x4xf32>
    %164 = vector.shape_cast %163 : vector<2x1x1x4xf32> to vector<2x1x4xf32>
    %c0_99 = arith.constant 0 : index
    %c0_100 = arith.constant 0 : index
    %c152 = arith.constant 152 : index
    %165 = vector.load %arg3[%c0_99, %c0_100, %c152] : memref<2x1x196xf32, #tpu.memory_space<vmem>>, vector<2x1x4xf32>
    tpu.vector_store %arg3[%c0_99, %c0_100, %c152], %164 {strides = array<i32>} : memref<2x1x196xf32, #tpu.memory_space<vmem>>, vector<2x1x4xf32>,
    %166 = vector.extract_strided_slice %48 {offsets = [0, 5, 4, 0], sizes = [2, 1, 1, 4], strides = [1, 1, 1, 1]} : vector<2x7x7x4xf32> to vector<2x1x1x4xf32>
    %167 = vector.shape_cast %166 : vector<2x1x1x4xf32> to vector<2x1x4xf32>
    %c0_101 = arith.constant 0 : index
    %c0_102 = arith.constant 0 : index
    %c156 = arith.constant 156 : index
    %168 = vector.load %arg3[%c0_101, %c0_102, %c156] : memref<2x1x196xf32, #tpu.memory_space<vmem>>, vector<2x1x4xf32>
    tpu.vector_store %arg3[%c0_101, %c0_102, %c156], %167 {strides = array<i32>} : memref<2x1x196xf32, #tpu.memory_space<vmem>>, vector<2x1x4xf32>,
    %169 = vector.extract_strided_slice %48 {offsets = [0, 5, 5, 0], sizes = [2, 1, 1, 4], strides = [1, 1, 1, 1]} : vector<2x7x7x4xf32> to vector<2x1x1x4xf32>
    %170 = vector.shape_cast %169 : vector<2x1x1x4xf32> to vector<2x1x4xf32>
    %c0_103 = arith.constant 0 : index
    %c0_104 = arith.constant 0 : index
    %c160 = arith.constant 160 : index
    %171 = vector.load %arg3[%c0_103, %c0_104, %c160] : memref<2x1x196xf32, #tpu.memory_space<vmem>>, vector<2x1x4xf32>
    tpu.vector_store %arg3[%c0_103, %c0_104, %c160], %170 {strides = array<i32>} : memref<2x1x196xf32, #tpu.memory_space<vmem>>, vector<2x1x4xf32>,
    %172 = vector.extract_strided_slice %48 {offsets = [0, 5, 6, 0], sizes = [2, 1, 1, 4], strides = [1, 1, 1, 1]} : vector<2x7x7x4xf32> to vector<2x1x1x4xf32>
    %173 = vector.shape_cast %172 : vector<2x1x1x4xf32> to vector<2x1x4xf32>
    %c0_105 = arith.constant 0 : index
    %c0_106 = arith.constant 0 : index
    %c164 = arith.constant 164 : index
    %174 = vector.load %arg3[%c0_105, %c0_106, %c164] : memref<2x1x196xf32, #tpu.memory_space<vmem>>, vector<2x1x4xf32>
    tpu.vector_store %arg3[%c0_105, %c0_106, %c164], %173 {strides = array<i32>} : memref<2x1x196xf32, #tpu.memory_space<vmem>>, vector<2x1x4xf32>,
    %175 = vector.extract_strided_slice %48 {offsets = [0, 6, 0, 0], sizes = [2, 1, 1, 4], strides = [1, 1, 1, 1]} : vector<2x7x7x4xf32> to vector<2x1x1x4xf32>
    %176 = vector.shape_cast %175 : vector<2x1x1x4xf32> to vector<2x1x4xf32>
    %c0_107 = arith.constant 0 : index
    %c0_108 = arith.constant 0 : index
    %c168 = arith.constant 168 : index
    %177 = vector.load %arg3[%c0_107, %c0_108, %c168] : memref<2x1x196xf32, #tpu.memory_space<vmem>>, vector<2x1x4xf32>
    tpu.vector_store %arg3[%c0_107, %c0_108, %c168], %176 {strides = array<i32>} : memref<2x1x196xf32, #tpu.memory_space<vmem>>, vector<2x1x4xf32>,
    %178 = vector.extract_strided_slice %48 {offsets = [0, 6, 1, 0], sizes = [2, 1, 1, 4], strides = [1, 1, 1, 1]} : vector<2x7x7x4xf32> to vector<2x1x1x4xf32>
    %179 = vector.shape_cast %178 : vector<2x1x1x4xf32> to vector<2x1x4xf32>
    %c0_109 = arith.constant 0 : index
    %c0_110 = arith.constant 0 : index
    %c172 = arith.constant 172 : index
    %180 = vector.load %arg3[%c0_109, %c0_110, %c172] : memref<2x1x196xf32, #tpu.memory_space<vmem>>, vector<2x1x4xf32>
    tpu.vector_store %arg3[%c0_109, %c0_110, %c172], %179 {strides = array<i32>} : memref<2x1x196xf32, #tpu.memory_space<vmem>>, vector<2x1x4xf32>,
    %181 = vector.extract_strided_slice %48 {offsets = [0, 6, 2, 0], sizes = [2, 1, 1, 4], strides = [1, 1, 1, 1]} : vector<2x7x7x4xf32> to vector<2x1x1x4xf32>
    %182 = vector.shape_cast %181 : vector<2x1x1x4xf32> to vector<2x1x4xf32>
    %c0_111 = arith.constant 0 : index
    %c0_112 = arith.constant 0 : index
    %c176 = arith.constant 176 : index
    %183 = vector.load %arg3[%c0_111, %c0_112, %c176] : memref<2x1x196xf32, #tpu.memory_space<vmem>>, vector<2x1x4xf32>
    tpu.vector_store %arg3[%c0_111, %c0_112, %c176], %182 {strides = array<i32>} : memref<2x1x196xf32, #tpu.memory_space<vmem>>, vector<2x1x4xf32>,
    %184 = vector.extract_strided_slice %48 {offsets = [0, 6, 3, 0], sizes = [2, 1, 1, 4], strides = [1, 1, 1, 1]} : vector<2x7x7x4xf32> to vector<2x1x1x4xf32>
    %185 = vector.shape_cast %184 : vector<2x1x1x4xf32> to vector<2x1x4xf32>
    %c0_113 = arith.constant 0 : index
    %c0_114 = arith.constant 0 : index
    %c180 = arith.constant 180 : index
    %186 = vector.load %arg3[%c0_113, %c0_114, %c180] : memref<2x1x196xf32, #tpu.memory_space<vmem>>, vector<2x1x4xf32>
    tpu.vector_store %arg3[%c0_113, %c0_114, %c180], %185 {strides = array<i32>} : memref<2x1x196xf32, #tpu.memory_space<vmem>>, vector<2x1x4xf32>,
    %187 = vector.extract_strided_slice %48 {offsets = [0, 6, 4, 0], sizes = [2, 1, 1, 4], strides = [1, 1, 1, 1]} : vector<2x7x7x4xf32> to vector<2x1x1x4xf32>
    %188 = vector.shape_cast %187 : vector<2x1x1x4xf32> to vector<2x1x4xf32>
    %c0_115 = arith.constant 0 : index
    %c0_116 = arith.constant 0 : index
    %c184 = arith.constant 184 : index
    %189 = vector.load %arg3[%c0_115, %c0_116, %c184] : memref<2x1x196xf32, #tpu.memory_space<vmem>>, vector<2x1x4xf32>
    tpu.vector_store %arg3[%c0_115, %c0_116, %c184], %188 {strides = array<i32>} : memref<2x1x196xf32, #tpu.memory_space<vmem>>, vector<2x1x4xf32>,
    %190 = vector.extract_strided_slice %48 {offsets = [0, 6, 5, 0], sizes = [2, 1, 1, 4], strides = [1, 1, 1, 1]} : vector<2x7x7x4xf32> to vector<2x1x1x4xf32>
    %191 = vector.shape_cast %190 : vector<2x1x1x4xf32> to vector<2x1x4xf32>
    %c0_117 = arith.constant 0 : index
    %c0_118 = arith.constant 0 : index
    %c188 = arith.constant 188 : index
    %192 = vector.load %arg3[%c0_117, %c0_118, %c188] : memref<2x1x196xf32, #tpu.memory_space<vmem>>, vector<2x1x4xf32>
    tpu.vector_store %arg3[%c0_117, %c0_118, %c188], %191 {strides = array<i32>} : memref<2x1x196xf32, #tpu.memory_space<vmem>>, vector<2x1x4xf32>,
    %193 = vector.extract_strided_slice %48 {offsets = [0, 6, 6, 0], sizes = [2, 1, 1, 4], strides = [1, 1, 1, 1]} : vector<2x7x7x4xf32> to vector<2x1x1x4xf32>
    %194 = vector.shape_cast %193 : vector<2x1x1x4xf32> to vector<2x1x4xf32>
    %c0_119 = arith.constant 0 : index
    %c0_120 = arith.constant 0 : index
    %c192 = arith.constant 192 : index
    %195 = vector.load %arg3[%c0_119, %c0_120, %c192] : memref<2x1x196xf32, #tpu.memory_space<vmem>>, vector<2x1x4xf32>
    tpu.vector_store %arg3[%c0_119, %c0_120, %c192], %194 {strides = array<i32>} : memref<2x1x196xf32, #tpu.memory_space<vmem>>, vector<2x1x4xf32>,
    return
  }
  func.func @transform_0(%arg0: i32) -> (i32, i32, i32, i32) {
    %c0_i32 = arith.constant 0 : i32
    %c0_i32_0 = arith.constant 0 : i32
    %c0_i32_1 = arith.constant 0 : i32
    %c0_i32_2 = arith.constant 0 : i32
    return %arg0, %c0_i32, %c0_i32_0, %c0_i32_1 : i32, i32, i32, i32
  }
  func.func @transform_1(%arg0: i32) -> (i32, i32) {
    %c0_i32 = arith.constant 0 : i32
    %c0_i32_0 = arith.constant 0 : i32
    %c0_i32_1 = arith.constant 0 : i32
    return %c0_i32, %c0_i32_0 : i32, i32
  }
  func.func @transform_2(%arg0: i32) -> (i32, i32, i32) {
    %c0_i32 = arith.constant 0 : i32
    %c0_i32_0 = arith.constant 0 : i32
    %c0_i32_1 = arith.constant 0 : i32
    return %arg0, %c0_i32, %c0_i32_0 : i32, i32, i32
  }
}

</mosaic_0001>

<llo_original>
// kernel: tpu_custom_call.1
$region0: #{tpu_custom_call.1}
  #allocation0 [shape = 'u32[]', space=smem, size = 0x4, offset = 0x4, fixed_abs, tag = 'smem constant byte address 0x4 - core index']
  #allocation1 [shape = 'u32[144,128]{1,0:T(1,128)}', space=vmem, size = 0x12000, scoped, tag = 'internal scratch']
  #allocation2 [shape = 'f32[392,10]{1,0:T(8,128)}', space=vmem, size = 0x31000, scoped, tag = 'scratch operand']
  %s0 = inlined_call_operand.vmem [shape: f32[2,16,16,1], index: 0, kind: input, shape index: {}]
  %s1 = inlined_call_operand.vmem [shape: bf16[10,4], index: 1, kind: input, shape index: {}]
  %s2 = inlined_call_operand.hbm [shape: f32[2,1,196], index: 2, kind: output, shape index: {}]
  %s3 = sld [smem:[#allocation0]]
  $region18: #{tpu_custom_call.1} parent=0
    _
  %s5 = ssub.s32 1, %s3
  %s6 = scalar_select 0, %s5, %s3
  $region1: #{tpu_custom_call.1} parent=0
    #allocation3 [shape = 'u8[2048]{0}', space=vmem, size = 0x800, scoped, tag = 'output window, operand 0, single buffered']
    #allocation4 [shape = 's32[1]{0}', space=sflag, size = 0x4, scoped, tag = 'scoped memory for tpu_custom_call.1']
    %7 = vsyncpa [#allocation4], 0
    // Predicated region
    $region2: #{tpu_custom_call.1} parent=1 // pred_check
      _
    $region3: #{tpu_custom_call.1} parent=1 // pred_check_branch
      %9 = sbr.rel (0) target = $region5
    $region4: #{tpu_custom_call.1} parent=1 // pred_region
      _
    $region5: #{tpu_custom_call.1} parent=1 // pred_fallthru
      _
    // Predicated region
    $region6: #{tpu_custom_call.1} parent=1 // pred_check
      _
    $region7: #{tpu_custom_call.1} parent=1 // pred_check_branch
      %11 = sbr.rel (0) target = $region9
    $region8: #{tpu_custom_call.1} parent=1 // pred_region
      _
    $region9: #{tpu_custom_call.1} parent=1 // pred_fallthru
      _
    %v13 = vld [vmem:[%s0] sm:$0xff]
    %v14 = vld [vmem:[%s0 + $0x8] sm:$0xff]
    %v15 = vld [vmem:[%s0 + $0x10] sm:$0xff]
    %v16 = vld [vmem:[%s0 + $0x18] sm:$0xff]
    %v17 = vld [vmem:[%s0 + $0x20] sm:$0xff]
    %v18 = vld [vmem:[%s0 + $0x28] sm:$0xff]
    %v19 = vld [vmem:[%s0 + $0x30] sm:$0xff]
    %v20 = vld [vmem:[%s0 + $0x38] sm:$0xff]
    %v21 = vld [vmem:[%s0 + $0x40] sm:$0xff]
    %v22 = vld [vmem:[%s0 + $0x48] sm:$0xff]
    %v23 = vld [vmem:[%s0 + $0x50] sm:$0xff]
    %v24 = vld [vmem:[%s0 + $0x58] sm:$0xff]
    %v25 = vld [vmem:[%s0 + $0x60] sm:$0xff]
    %v26 = vld [vmem:[%s0 + $0x68] sm:$0xff]
    %v27 = vld [vmem:[%s0 + $0x70] sm:$0xff]
    %v28 = vld [vmem:[%s0 + $0x78] sm:$0xff]
    %v29 = vld [vmem:[%s0 + $0x80] sm:$0xff]
    %v30 = vld [vmem:[%s0 + $0x88] sm:$0xff]
    %v31 = vld [vmem:[%s0 + $0x90] sm:$0xff]
    %v32 = vld [vmem:[%s0 + $0x98] sm:$0xff]
    %v33 = vld [vmem:[%s0 + $0xa0] sm:$0xff]
    %v34 = vld [vmem:[%s0 + $0xa8] sm:$0xff]
    %v35 = vld [vmem:[%s0 + $0xb0] sm:$0xff]
    %v36 = vld [vmem:[%s0 + $0xb8] sm:$0xff]
    %v37 = vld [vmem:[%s0 + $0xc0] sm:$0xff]
    %v38 = vld [vmem:[%s0 + $0xc8] sm:$0xff]
    %v39 = vld [vmem:[%s0 + $0xd0] sm:$0xff]
    %v40 = vld [vmem:[%s0 + $0xd8] sm:$0xff]
    %v41 = vld [vmem:[%s0 + $0xe0] sm:$0xff]
    %v42 = vld [vmem:[%s0 + $0xe8] sm:$0xff]
    %v43 = vld [vmem:[%s0 + $0xf0] sm:$0xff]
    %v44 = vld [vmem:[%s0 + $0xf8] sm:$0xff]
    %v45 = vld [vmem:[%s0 + $0x100] sm:$0xff]
    %v46 = vld [vmem:[%s0 + $0x108] sm:$0xff]
    %v47 = vld [vmem:[%s0 + $0x110] sm:$0xff]
    %v48 = vld [vmem:[%s0 + $0x118] sm:$0xff]
    %v49 = vld [vmem:[%s0 + $0x120] sm:$0xff]
    %v50 = vld [vmem:[%s0 + $0x128] sm:$0xff]
    %v51 = vld [vmem:[%s0 + $0x130] sm:$0xff]
    %v52 = vld [vmem:[%s0 + $0x138] sm:$0xff]
    %v53 = vld [vmem:[%s0 + $0x140] sm:$0xff]
    %v54 = vld [vmem:[%s0 + $0x148] sm:$0xff]
    %v55 = vld [vmem:[%s0 + $0x150] sm:$0xff]
    %v56 = vld [vmem:[%s0 + $0x158] sm:$0xff]
    %v57 = vld [vmem:[%s0 + $0x160] sm:$0xff]
    %v58 = vld [vmem:[%s0 + $0x168] sm:$0xff]
    %v59 = vld [vmem:[%s0 + $0x170] sm:$0xff]
    %v60 = vld [vmem:[%s0 + $0x178] sm:$0xff]
    %v61 = vld [vmem:[%s0 + $0x180] sm:$0xff]
    %v62 = vld [vmem:[%s0 + $0x188] sm:$0xff]
    %v63 = vld [vmem:[%s0 + $0x190] sm:$0xff]
    %v64 = vld [vmem:[%s0 + $0x198] sm:$0xff]
    %v65 = vld [vmem:[%s0 + $0x1a0] sm:$0xff]
    %v66 = vld [vmem:[%s0 + $0x1a8] sm:$0xff]
    %v67 = vld [vmem:[%s0 + $0x1b0] sm:$0xff]
    %v68 = vld [vmem:[%s0 + $0x1b8] sm:$0xff]
    %v69 = vld [vmem:[%s0 + $0x1c0] sm:$0xff]
    %v70 = vld [vmem:[%s0 + $0x1c8] sm:$0xff]
    %v71 = vld [vmem:[%s0 + $0x1d0] sm:$0xff]
    %v72 = vld [vmem:[%s0 + $0x1d8] sm:$0xff]
    %v73 = vld [vmem:[%s0 + $0x1e0] sm:$0xff]
    %v74 = vld [vmem:[%s0 + $0x1e8] sm:$0xff]
    %v75 = vld [vmem:[%s0 + $0x1f0] sm:$0xff]
    %v76 = vld [vmem:[%s0 + $0x1f8] sm:$0xff]
    %v133 = vcombine.high %v13, %v13
    %v135 = vunpack.c.l.s4 1983009808
    %v136 = vunpack.c.0.s8 %v135
    %v137 = vlaneseq
    %v138 = vshrl.u32 %v137, 7
    %v139 = vsub.s32 %v136, %v138
    %v140 = vrot.slane %v13, %v139
    %v142 = vunpack.c.l.s4 1983009808
    %v143 = vunpack.c.0.s8 %v142
    %v144 = vlaneseq
    %v145 = vshrl.u32 %v144, 7
    %v146 = vsub.s32 %v143, %v145
    %v147 = vrot.slane %v133, %v146
    %v148 = vcombine.high %v140, %v140
    %v149 = vcombine.high %v147, %v147
    %v150 = vcombine.high %v14, %v14
    %v152 = vunpack.c.l.s4 1983009808
    %v153 = vunpack.c.0.s8 %v152
    %v154 = vlaneseq
    %v155 = vshrl.u32 %v154, 7
    %v156 = vsub.s32 %v153, %v155
    %v157 = vrot.slane %v14, %v156
    %v159 = vunpack.c.l.s4 1983009808
    %v160 = vunpack.c.0.s8 %v159
    %v161 = vlaneseq
    %v162 = vshrl.u32 %v161, 7
    %v163 = vsub.s32 %v160, %v162
    %v164 = vrot.slane %v150, %v163
    %v165 = vcombine.high %v157, %v157
    %v166 = vcombine.high %v15, %v15
    %v168 = vunpack.c.l.s4 1983009808
    %v169 = vunpack.c.0.s8 %v168
    %v170 = vlaneseq
    %v171 = vshrl.u32 %v170, 7
    %v172 = vsub.s32 %v169, %v171
    %v173 = vrot.slane %v15, %v172
    %v175 = vunpack.c.l.s4 1983009808
    %v176 = vunpack.c.0.s8 %v175
    %v177 = vlaneseq
    %v178 = vshrl.u32 %v177, 7
    %v179 = vsub.s32 %v176, %v178
    %v180 = vrot.slane %v166, %v179
    %v181 = vcombine.high %v173, %v173
    %v182 = vcombine.high %v180, %v180
    %v183 = vcombine.high %v16, %v16
    %v185 = vunpack.c.l.s4 1983009808
    %v186 = vunpack.c.0.s8 %v185
    %v187 = vlaneseq
    %v188 = vshrl.u32 %v187, 7
    %v189 = vsub.s32 %v186, %v188
    %v190 = vrot.slane %v16, %v189
    %v192 = vunpack.c.l.s4 1983009808
    %v193 = vunpack.c.0.s8 %v192
    %v194 = vlaneseq
    %v195 = vshrl.u32 %v194, 7
    %v196 = vsub.s32 %v193, %v195
    %v197 = vrot.slane %v183, %v196
    %v198 = vcombine.high %v190, %v190
    %v199 = vcombine.high %v17, %v17
    %v201 = vunpack.c.l.s4 1983009808
    %v202 = vunpack.c.0.s8 %v201
    %v203 = vlaneseq
    %v204 = vshrl.u32 %v203, 7
    %v205 = vsub.s32 %v202, %v204
    %v206 = vrot.slane %v17, %v205
    %v208 = vunpack.c.l.s4 1983009808
    %v209 = vunpack.c.0.s8 %v208
    %v210 = vlaneseq
    %v211 = vshrl.u32 %v210, 7
    %v212 = vsub.s32 %v209, %v211
    %v213 = vrot.slane %v199, %v212
    %v214 = vcombine.high %v206, %v206
    %v215 = vcombine.high %v213, %v213
    %v216 = vcombine.high %v18, %v18
    %v218 = vunpack.c.l.s4 1983009808
    %v219 = vunpack.c.0.s8 %v218
    %v220 = vlaneseq
    %v221 = vshrl.u32 %v220, 7
    %v222 = vsub.s32 %v219, %v221
    %v223 = vrot.slane %v18, %v222
    %v225 = vunpack.c.l.s4 1983009808
    %v226 = vunpack.c.0.s8 %v225
    %v227 = vlaneseq
    %v228 = vshrl.u32 %v227, 7
    %v229 = vsub.s32 %v226, %v228
    %v230 = vrot.slane %v216, %v229
    %v231 = vcombine.high %v223, %v223
    %v232 = vcombine.high %v19, %v19
    %v234 = vunpack.c.l.s4 1983009808
    %v235 = vunpack.c.0.s8 %v234
    %v236 = vlaneseq
    %v237 = vshrl.u32 %v236, 7
    %v238 = vsub.s32 %v235, %v237
    %v239 = vrot.slane %v19, %v238
    %v241 = vunpack.c.l.s4 1983009808
    %v242 = vunpack.c.0.s8 %v241
    %v243 = vlaneseq
    %v244 = vshrl.u32 %v243, 7
    %v245 = vsub.s32 %v242, %v244
    %v246 = vrot.slane %v232, %v245
    %v247 = vcombine.high %v239, %v239
    %v248 = vcombine.high %v246, %v246
    %v249 = vcombine.high %v20, %v20
    %v251 = vunpack.c.l.s4 1983009808
    %v252 = vunpack.c.0.s8 %v251
    %v253 = vlaneseq
    %v254 = vshrl.u32 %v253, 7
    %v255 = vsub.s32 %v252, %v254
    %v256 = vrot.slane %v20, %v255
    %v258 = vunpack.c.l.s4 1983009808
    %v259 = vunpack.c.0.s8 %v258
    %v260 = vlaneseq
    %v261 = vshrl.u32 %v260, 7
    %v262 = vsub.s32 %v259, %v261
    %v263 = vrot.slane %v249, %v262
    %v264 = vcombine.high %v256, %v256
    %v265 = vcombine.high %v21, %v21
    %v267 = vunpack.c.l.s4 1983009808
    %v268 = vunpack.c.0.s8 %v267
    %v269 = vlaneseq
    %v270 = vshrl.u32 %v269, 7
    %v271 = vsub.s32 %v268, %v270
    %v272 = vrot.slane %v21, %v271
    %v274 = vunpack.c.l.s4 1983009808
    %v275 = vunpack.c.0.s8 %v274
    %v276 = vlaneseq
    %v277 = vshrl.u32 %v276, 7
    %v278 = vsub.s32 %v275, %v277
    %v279 = vrot.slane %v265, %v278
    %v280 = vcombine.high %v272, %v272
    %v281 = vcombine.high %v279, %v279
    %v282 = vcombine.high %v22, %v22
    %v284 = vunpack.c.l.s4 1983009808
    %v285 = vunpack.c.0.s8 %v284
    %v286 = vlaneseq
    %v287 = vshrl.u32 %v286, 7
    %v288 = vsub.s32 %v285, %v287
    %v289 = vrot.slane %v22, %v288
    %v291 = vunpack.c.l.s4 1983009808
    %v292 = vunpack.c.0.s8 %v291
    %v293 = vlaneseq
    %v294 = vshrl.u32 %v293, 7
    %v295 = vsub.s32 %v292, %v294
    %v296 = vrot.slane %v282, %v295
    %v297 = vcombine.high %v289, %v289
    %v298 = vcombine.high %v23, %v23
    %v300 = vunpack.c.l.s4 1983009808
    %v301 = vunpack.c.0.s8 %v300
    %v302 = vlaneseq
    %v303 = vshrl.u32 %v302, 7
    %v304 = vsub.s32 %v301, %v303
    %v305 = vrot.slane %v23, %v304
    %v307 = vunpack.c.l.s4 1983009808
    %v308 = vunpack.c.0.s8 %v307
    %v309 = vlaneseq
    %v310 = vshrl.u32 %v309, 7
    %v311 = vsub.s32 %v308, %v310
    %v312 = vrot.slane %v298, %v311
    %v313 = vcombine.high %v305, %v305
    %v314 = vcombine.high %v312, %v312
    %v315 = vcombine.high %v24, %v24
    %v317 = vunpack.c.l.s4 1983009808
    %v318 = vunpack.c.0.s8 %v317
    %v319 = vlaneseq
    %v320 = vshrl.u32 %v319, 7
    %v321 = vsub.s32 %v318, %v320
    %v322 = vrot.slane %v24, %v321
    %v324 = vunpack.c.l.s4 1983009808
    %v325 = vunpack.c.0.s8 %v324
    %v326 = vlaneseq
    %v327 = vshrl.u32 %v326, 7
    %v328 = vsub.s32 %v325, %v327
    %v329 = vrot.slane %v315, %v328
    %v330 = vcombine.high %v322, %v322
    %v331 = vcombine.high %v25, %v25
    %v333 = vunpack.c.l.s4 1983009808
    %v334 = vunpack.c.0.s8 %v333
    %v335 = vlaneseq
    %v336 = vshrl.u32 %v335, 7
    %v337 = vsub.s32 %v334, %v336
    %v338 = vrot.slane %v25, %v337
    %v340 = vunpack.c.l.s4 1983009808
    %v341 = vunpack.c.0.s8 %v340
    %v342 = vlaneseq
    %v343 = vshrl.u32 %v342, 7
    %v344 = vsub.s32 %v341, %v343
    %v345 = vrot.slane %v331, %v344
    %v346 = vcombine.high %v338, %v338
    %v347 = vcombine.high %v345, %v345
    %v348 = vcombine.high %v26, %v26
    %v350 = vunpack.c.l.s4 1983009808
    %v351 = vunpack.c.0.s8 %v350
    %v352 = vlaneseq
    %v353 = vshrl.u32 %v352, 7
    %v354 = vsub.s32 %v351, %v353
    %v355 = vrot.slane %v26, %v354
    %v357 = vunpack.c.l.s4 1983009808
    %v358 = vunpack.c.0.s8 %v357
    %v359 = vlaneseq
    %v360 = vshrl.u32 %v359, 7
    %v361 = vsub.s32 %v358, %v360
    %v362 = vrot.slane %v348, %v361
    %v363 = vcombine.high %v355, %v355
    %v364 = vcombine.high %v27, %v27
    %v366 = vunpack.c.l.s4 1983009808
    %v367 = vunpack.c.0.s8 %v366
    %v368 = vlaneseq
    %v369 = vshrl.u32 %v368, 7
    %v370 = vsub.s32 %v367, %v369
    %v371 = vrot.slane %v27, %v370
    %v373 = vunpack.c.l.s4 1983009808
    %v374 = vunpack.c.0.s8 %v373
    %v375 = vlaneseq
    %v376 = vshrl.u32 %v375, 7
    %v377 = vsub.s32 %v374, %v376
    %v378 = vrot.slane %v364, %v377
    %v379 = vcombine.high %v371, %v371
    %v380 = vcombine.high %v378, %v378
    %v381 = vcombine.high %v28, %v28
    %v383 = vunpack.c.l.s4 1983009808
    %v384 = vunpack.c.0.s8 %v383
    %v385 = vlaneseq
    %v386 = vshrl.u32 %v385, 7
    %v387 = vsub.s32 %v384, %v386
    %v388 = vrot.slane %v28, %v387
    %v390 = vunpack.c.l.s4 1983009808
    %v391 = vunpack.c.0.s8 %v390
    %v392 = vlaneseq
    %v393 = vshrl.u32 %v392, 7
    %v394 = vsub.s32 %v391, %v393
    %v395 = vrot.slane %v381, %v394
    %v396 = vcombine.high %v388, %v388
    %v397 = vcombine.high %v29, %v29
    %v399 = vunpack.c.l.s4 1983009808
    %v400 = vunpack.c.0.s8 %v399
    %v401 = vlaneseq
    %v402 = vshrl.u32 %v401, 7
    %v403 = vsub.s32 %v400, %v402
    %v404 = vrot.slane %v29, %v403
    %v406 = vunpack.c.l.s4 1983009808
    %v407 = vunpack.c.0.s8 %v406
    %v408 = vlaneseq
    %v409 = vshrl.u32 %v408, 7
    %v410 = vsub.s32 %v407, %v409
    %v411 = vrot.slane %v397, %v410
    %v412 = vcombine.high %v404, %v404
    %v413 = vcombine.high %v411, %v411
    %v414 = vcombine.high %v30, %v30
    %v416 = vunpack.c.l.s4 1983009808
    %v417 = vunpack.c.0.s8 %v416
    %v418 = vlaneseq
    %v419 = vshrl.u32 %v418, 7
    %v420 = vsub.s32 %v417, %v419
    %v421 = vrot.slane %v30, %v420
    %v423 = vunpack.c.l.s4 1983009808
    %v424 = vunpack.c.0.s8 %v423
    %v425 = vlaneseq
    %v426 = vshrl.u32 %v425, 7
    %v427 = vsub.s32 %v424, %v426
    %v428 = vrot.slane %v414, %v427
    %v429 = vcombine.high %v421, %v421
    %v430 = vcombine.high %v31, %v31
    %v432 = vunpack.c.l.s4 1983009808
    %v433 = vunpack.c.0.s8 %v432
    %v434 = vlaneseq
    %v435 = vshrl.u32 %v434, 7
    %v436 = vsub.s32 %v433, %v435
    %v437 = vrot.slane %v31, %v436
    %v439 = vunpack.c.l.s4 1983009808
    %v440 = vunpack.c.0.s8 %v439
    %v441 = vlaneseq
    %v442 = vshrl.u32 %v441, 7
    %v443 = vsub.s32 %v440, %v442
    %v444 = vrot.slane %v430, %v443
    %v445 = vcombine.high %v437, %v437
    %v446 = vcombine.high %v444, %v444
    %v447 = vcombine.high %v32, %v32
    %v449 = vunpack.c.l.s4 1983009808
    %v450 = vunpack.c.0.s8 %v449
    %v451 = vlaneseq
    %v452 = vshrl.u32 %v451, 7
    %v453 = vsub.s32 %v450, %v452
    %v454 = vrot.slane %v32, %v453
    %v456 = vunpack.c.l.s4 1983009808
    %v457 = vunpack.c.0.s8 %v456
    %v458 = vlaneseq
    %v459 = vshrl.u32 %v458, 7
    %v460 = vsub.s32 %v457, %v459
    %v461 = vrot.slane %v447, %v460
    %v462 = vcombine.high %v454, %v454
    %v463 = vcombine.high %v33, %v33
    %v465 = vunpack.c.l.s4 1983009808
    %v466 = vunpack.c.0.s8 %v465
    %v467 = vlaneseq
    %v468 = vshrl.u32 %v467, 7
    %v469 = vsub.s32 %v466, %v468
    %v470 = vrot.slane %v33, %v469
    %v472 = vunpack.c.l.s4 1983009808
    %v473 = vunpack.c.0.s8 %v472
    %v474 = vlaneseq
    %v475 = vshrl.u32 %v474, 7
    %v476 = vsub.s32 %v473, %v475
    %v477 = vrot.slane %v463, %v476
    %v478 = vcombine.high %v470, %v470
    %v479 = vcombine.high %v477, %v477
    %v480 = vcombine.high %v34, %v34
    %v482 = vunpack.c.l.s4 1983009808
    %v483 = vunpack.c.0.s8 %v482
    %v484 = vlaneseq
    %v485 = vshrl.u32 %v484, 7
    %v486 = vsub.s32 %v483, %v485
    %v487 = vrot.slane %v34, %v486
    %v489 = vunpack.c.l.s4 1983009808
    %v490 = vunpack.c.0.s8 %v489
    %v491 = vlaneseq
    %v492 = vshrl.u32 %v491, 7
    %v493 = vsub.s32 %v490, %v492
    %v494 = vrot.slane %v480, %v493
    %v495 = vcombine.high %v487, %v487
    %v496 = vcombine.high %v35, %v35
    %v498 = vunpack.c.l.s4 1983009808
    %v499 = vunpack.c.0.s8 %v498
    %v500 = vlaneseq
    %v501 = vshrl.u32 %v500, 7
    %v502 = vsub.s32 %v499, %v501
    %v503 = vrot.slane %v35, %v502
    %v505 = vunpack.c.l.s4 1983009808
    %v506 = vunpack.c.0.s8 %v505
    %v507 = vlaneseq
    %v508 = vshrl.u32 %v507, 7
    %v509 = vsub.s32 %v506, %v508
    %v510 = vrot.slane %v496, %v509
    %v511 = vcombine.high %v503, %v503
    %v512 = vcombine.high %v510, %v510
    %v513 = vcombine.high %v36, %v36
    %v515 = vunpack.c.l.s4 1983009808
    %v516 = vunpack.c.0.s8 %v515
    %v517 = vlaneseq
    %v518 = vshrl.u32 %v517, 7
    %v519 = vsub.s32 %v516, %v518
    %v520 = vrot.slane %v36, %v519
    %v522 = vunpack.c.l.s4 1983009808
    %v523 = vunpack.c.0.s8 %v522
    %v524 = vlaneseq
    %v525 = vshrl.u32 %v524, 7
    %v526 = vsub.s32 %v523, %v525
    %v527 = vrot.slane %v513, %v526
    %v528 = vcombine.high %v520, %v520
    %v529 = vcombine.high %v37, %v37
    %v531 = vunpack.c.l.s4 1983009808
    %v532 = vunpack.c.0.s8 %v531
    %v533 = vlaneseq
    %v534 = vshrl.u32 %v533, 7
    %v535 = vsub.s32 %v532, %v534
    %v536 = vrot.slane %v37, %v535
    %v538 = vunpack.c.l.s4 1983009808
    %v539 = vunpack.c.0.s8 %v538
    %v540 = vlaneseq
    %v541 = vshrl.u32 %v540, 7
    %v542 = vsub.s32 %v539, %v541
    %v543 = vrot.slane %v529, %v542
    %v544 = vcombine.high %v536, %v536
    %v545 = vcombine.high %v543, %v543
    %v546 = vcombine.high %v38, %v38
    %v548 = vunpack.c.l.s4 1983009808
    %v549 = vunpack.c.0.s8 %v548
    %v550 = vlaneseq
    %v551 = vshrl.u32 %v550, 7
    %v552 = vsub.s32 %v549, %v551
    %v553 = vrot.slane %v38, %v552
    %v555 = vunpack.c.l.s4 1983009808
    %v556 = vunpack.c.0.s8 %v555
    %v557 = vlaneseq
    %v558 = vshrl.u32 %v557, 7
    %v559 = vsub.s32 %v556, %v558
    %v560 = vrot.slane %v546, %v559
    %v561 = vcombine.high %v553, %v553
    %v562 = vcombine.high %v39, %v39
    %v564 = vunpack.c.l.s4 1983009808
    %v565 = vunpack.c.0.s8 %v564
    %v566 = vlaneseq
    %v567 = vshrl.u32 %v566, 7
    %v568 = vsub.s32 %v565, %v567
    %v569 = vrot.slane %v39, %v568
    %v571 = vunpack.c.l.s4 1983009808
    %v572 = vunpack.c.0.s8 %v571
    %v573 = vlaneseq
    %v574 = vshrl.u32 %v573, 7
    %v575 = vsub.s32 %v572, %v574
    %v576 = vrot.slane %v562, %v575
    %v577 = vcombine.high %v569, %v569
    %v578 = vcombine.high %v576, %v576
    %v579 = vcombine.high %v40, %v40
    %v581 = vunpack.c.l.s4 1983009808
    %v582 = vunpack.c.0.s8 %v581
    %v583 = vlaneseq
    %v584 = vshrl.u32 %v583, 7
    %v585 = vsub.s32 %v582, %v584
    %v586 = vrot.slane %v40, %v585
    %v588 = vunpack.c.l.s4 1983009808
    %v589 = vunpack.c.0.s8 %v588
    %v590 = vlaneseq
    %v591 = vshrl.u32 %v590, 7
    %v592 = vsub.s32 %v589, %v591
    %v593 = vrot.slane %v579, %v592
    %v594 = vcombine.high %v586, %v586
    %v595 = vcombine.high %v45, %v45
    %v597 = vunpack.c.l.s4 1983009808
    %v598 = vunpack.c.0.s8 %v597
    %v599 = vlaneseq
    %v600 = vshrl.u32 %v599, 7
    %v601 = vsub.s32 %v598, %v600
    %v602 = vrot.slane %v45, %v601
    %v604 = vunpack.c.l.s4 1983009808
    %v605 = vunpack.c.0.s8 %v604
    %v606 = vlaneseq
    %v607 = vshrl.u32 %v606, 7
    %v608 = vsub.s32 %v605, %v607
    %v609 = vrot.slane %v595, %v608
    %v610 = vcombine.high %v602, %v602
    %v611 = vcombine.high %v609, %v609
    %v612 = vcombine.high %v46, %v46
    %v614 = vunpack.c.l.s4 1983009808
    %v615 = vunpack.c.0.s8 %v614
    %v616 = vlaneseq
    %v617 = vshrl.u32 %v616, 7
    %v618 = vsub.s32 %v615, %v617
    %v619 = vrot.slane %v46, %v618
    %v621 = vunpack.c.l.s4 1983009808
    %v622 = vunpack.c.0.s8 %v621
    %v623 = vlaneseq
    %v624 = vshrl.u32 %v623, 7
    %v625 = vsub.s32 %v622, %v624
    %v626 = vrot.slane %v612, %v625
    %v627 = vcombine.high %v619, %v619
    %v628 = vcombine.high %v47, %v47
    %v630 = vunpack.c.l.s4 1983009808
    %v631 = vunpack.c.0.s8 %v630
    %v632 = vlaneseq
    %v633 = vshrl.u32 %v632, 7
    %v634 = vsub.s32 %v631, %v633
    %v635 = vrot.slane %v47, %v634
    %v637 = vunpack.c.l.s4 1983009808
    %v638 = vunpack.c.0.s8 %v637
    %v639 = vlaneseq
    %v640 = vshrl.u32 %v639, 7
    %v641 = vsub.s32 %v638, %v640
    %v642 = vrot.slane %v628, %v641
    %v643 = vcombine.high %v635, %v635
    %v644 = vcombine.high %v642, %v642
    %v645 = vcombine.high %v48, %v48
    %v647 = vunpack.c.l.s4 1983009808
    %v648 = vunpack.c.0.s8 %v647
    %v649 = vlaneseq
    %v650 = vshrl.u32 %v649, 7
    %v651 = vsub.s32 %v648, %v650
    %v652 = vrot.slane %v48, %v651
    %v654 = vunpack.c.l.s4 1983009808
    %v655 = vunpack.c.0.s8 %v654
    %v656 = vlaneseq
    %v657 = vshrl.u32 %v656, 7
    %v658 = vsub.s32 %v655, %v657
    %v659 = vrot.slane %v645, %v658
    %v660 = vcombine.high %v652, %v652
    %v661 = vcombine.high %v49, %v49
    %v663 = vunpack.c.l.s4 1983009808
    %v664 = vunpack.c.0.s8 %v663
    %v665 = vlaneseq
    %v666 = vshrl.u32 %v665, 7
    %v667 = vsub.s32 %v664, %v666
    %v668 = vrot.slane %v49, %v667
    %v670 = vunpack.c.l.s4 1983009808
    %v671 = vunpack.c.0.s8 %v670
    %v672 = vlaneseq
    %v673 = vshrl.u32 %v672, 7
    %v674 = vsub.s32 %v671, %v673
    %v675 = vrot.slane %v661, %v674
    %v676 = vcombine.high %v668, %v668
    %v677 = vcombine.high %v675, %v675
    %v678 = vcombine.high %v50, %v50
    %v680 = vunpack.c.l.s4 1983009808
    %v681 = vunpack.c.0.s8 %v680
    %v682 = vlaneseq
    %v683 = vshrl.u32 %v682, 7
    %v684 = vsub.s32 %v681, %v683
    %v685 = vrot.slane %v50, %v684
    %v687 = vunpack.c.l.s4 1983009808
    %v688 = vunpack.c.0.s8 %v687
    %v689 = vlaneseq
    %v690 = vshrl.u32 %v689, 7
    %v691 = vsub.s32 %v688, %v690
    %v692 = vrot.slane %v678, %v691
    %v693 = vcombine.high %v685, %v685
    %v694 = vcombine.high %v51, %v51
    %v696 = vunpack.c.l.s4 1983009808
    %v697 = vunpack.c.0.s8 %v696
    %v698 = vlaneseq
    %v699 = vshrl.u32 %v698, 7
    %v700 = vsub.s32 %v697, %v699
    %v701 = vrot.slane %v51, %v700
    %v703 = vunpack.c.l.s4 1983009808
    %v704 = vunpack.c.0.s8 %v703
    %v705 = vlaneseq
    %v706 = vshrl.u32 %v705, 7
    %v707 = vsub.s32 %v704, %v706
    %v708 = vrot.slane %v694, %v707
    %v709 = vcombine.high %v701, %v701
    %v710 = vcombine.high %v708, %v708
    %v711 = vcombine.high %v52, %v52
    %v713 = vunpack.c.l.s4 1983009808
    %v714 = vunpack.c.0.s8 %v713
    %v715 = vlaneseq
    %v716 = vshrl.u32 %v715, 7
    %v717 = vsub.s32 %v714, %v716
    %v718 = vrot.slane %v52, %v717
    %v720 = vunpack.c.l.s4 1983009808
    %v721 = vunpack.c.0.s8 %v720
    %v722 = vlaneseq
    %v723 = vshrl.u32 %v722, 7
    %v724 = vsub.s32 %v721, %v723
    %v725 = vrot.slane %v711, %v724
    %v726 = vcombine.high %v718, %v718
    %v727 = vcombine.high %v53, %v53
    %v729 = vunpack.c.l.s4 1983009808
    %v730 = vunpack.c.0.s8 %v729
    %v731 = vlaneseq
    %v732 = vshrl.u32 %v731, 7
    %v733 = vsub.s32 %v730, %v732
    %v734 = vrot.slane %v53, %v733
    %v736 = vunpack.c.l.s4 1983009808
    %v737 = vunpack.c.0.s8 %v736
    %v738 = vlaneseq
    %v739 = vshrl.u32 %v738, 7
    %v740 = vsub.s32 %v737, %v739
    %v741 = vrot.slane %v727, %v740
    %v742 = vcombine.high %v734, %v734
    %v743 = vcombine.high %v741, %v741
    %v744 = vcombine.high %v54, %v54
    %v746 = vunpack.c.l.s4 1983009808
    %v747 = vunpack.c.0.s8 %v746
    %v748 = vlaneseq
    %v749 = vshrl.u32 %v748, 7
    %v750 = vsub.s32 %v747, %v749
    %v751 = vrot.slane %v54, %v750
    %v753 = vunpack.c.l.s4 1983009808
    %v754 = vunpack.c.0.s8 %v753
    %v755 = vlaneseq
    %v756 = vshrl.u32 %v755, 7
    %v757 = vsub.s32 %v754, %v756
    %v758 = vrot.slane %v744, %v757
    %v759 = vcombine.high %v751, %v751
    %v760 = vcombine.high %v55, %v55
    %v762 = vunpack.c.l.s4 1983009808
    %v763 = vunpack.c.0.s8 %v762
    %v764 = vlaneseq
    %v765 = vshrl.u32 %v764, 7
    %v766 = vsub.s32 %v763, %v765
    %v767 = vrot.slane %v55, %v766
    %v769 = vunpack.c.l.s4 1983009808
    %v770 = vunpack.c.0.s8 %v769
    %v771 = vlaneseq
    %v772 = vshrl.u32 %v771, 7
    %v773 = vsub.s32 %v770, %v772
    %v774 = vrot.slane %v760, %v773
    %v775 = vcombine.high %v767, %v767
    %v776 = vcombine.high %v774, %v774
    %v777 = vcombine.high %v56, %v56
    %v779 = vunpack.c.l.s4 1983009808
    %v780 = vunpack.c.0.s8 %v779
    %v781 = vlaneseq
    %v782 = vshrl.u32 %v781, 7
    %v783 = vsub.s32 %v780, %v782
    %v784 = vrot.slane %v56, %v783
    %v786 = vunpack.c.l.s4 1983009808
    %v787 = vunpack.c.0.s8 %v786
    %v788 = vlaneseq
    %v789 = vshrl.u32 %v788, 7
    %v790 = vsub.s32 %v787, %v789
    %v791 = vrot.slane %v777, %v790
    %v792 = vcombine.high %v784, %v784
    %v793 = vcombine.high %v57, %v57
    %v795 = vunpack.c.l.s4 1983009808
    %v796 = vunpack.c.0.s8 %v795
    %v797 = vlaneseq
    %v798 = vshrl.u32 %v797, 7
    %v799 = vsub.s32 %v796, %v798
    %v800 = vrot.slane %v57, %v799
    %v802 = vunpack.c.l.s4 1983009808
    %v803 = vunpack.c.0.s8 %v802
    %v804 = vlaneseq
    %v805 = vshrl.u32 %v804, 7
    %v806 = vsub.s32 %v803, %v805
    %v807 = vrot.slane %v793, %v806
    %v808 = vcombine.high %v800, %v800
    %v809 = vcombine.high %v807, %v807
    %v810 = vcombine.high %v58, %v58
    %v812 = vunpack.c.l.s4 1983009808
    %v813 = vunpack.c.0.s8 %v812
    %v814 = vlaneseq
    %v815 = vshrl.u32 %v814, 7
    %v816 = vsub.s32 %v813, %v815
    %v817 = vrot.slane %v58, %v816
    %v819 = vunpack.c.l.s4 1983009808
    %v820 = vunpack.c.0.s8 %v819
    %v821 = vlaneseq
    %v822 = vshrl.u32 %v821, 7
    %v823 = vsub.s32 %v820, %v822
    %v824 = vrot.slane %v810, %v823
    %v825 = vcombine.high %v817, %v817
    %v826 = vcombine.high %v59, %v59
    %v828 = vunpack.c.l.s4 1983009808
    %v829 = vunpack.c.0.s8 %v828
    %v830 = vlaneseq
    %v831 = vshrl.u32 %v830, 7
    %v832 = vsub.s32 %v829, %v831
    %v833 = vrot.slane %v59, %v832
    %v835 = vunpack.c.l.s4 1983009808
    %v836 = vunpack.c.0.s8 %v835
    %v837 = vlaneseq
    %v838 = vshrl.u32 %v837, 7
    %v839 = vsub.s32 %v836, %v838
    %v840 = vrot.slane %v826, %v839
    %v841 = vcombine.high %v833, %v833
    %v842 = vcombine.high %v840, %v840
    %v843 = vcombine.high %v60, %v60
    %v845 = vunpack.c.l.s4 1983009808
    %v846 = vunpack.c.0.s8 %v845
    %v847 = vlaneseq
    %v848 = vshrl.u32 %v847, 7
    %v849 = vsub.s32 %v846, %v848
    %v850 = vrot.slane %v60, %v849
    %v852 = vunpack.c.l.s4 1983009808
    %v853 = vunpack.c.0.s8 %v852
    %v854 = vlaneseq
    %v855 = vshrl.u32 %v854, 7
    %v856 = vsub.s32 %v853, %v855
    %v857 = vrot.slane %v843, %v856
    %v858 = vcombine.high %v850, %v850
    %v859 = vcombine.high %v61, %v61
    %v861 = vunpack.c.l.s4 1983009808
    %v862 = vunpack.c.0.s8 %v861
    %v863 = vlaneseq
    %v864 = vshrl.u32 %v863, 7
    %v865 = vsub.s32 %v862, %v864
    %v866 = vrot.slane %v61, %v865
    %v868 = vunpack.c.l.s4 1983009808
    %v869 = vunpack.c.0.s8 %v868
    %v870 = vlaneseq
    %v871 = vshrl.u32 %v870, 7
    %v872 = vsub.s32 %v869, %v871
    %v873 = vrot.slane %v859, %v872
    %v874 = vcombine.high %v866, %v866
    %v875 = vcombine.high %v873, %v873
    %v876 = vcombine.high %v62, %v62
    %v878 = vunpack.c.l.s4 1983009808
    %v879 = vunpack.c.0.s8 %v878
    %v880 = vlaneseq
    %v881 = vshrl.u32 %v880, 7
    %v882 = vsub.s32 %v879, %v881
    %v883 = vrot.slane %v62, %v882
    %v885 = vunpack.c.l.s4 1983009808
    %v886 = vunpack.c.0.s8 %v885
    %v887 = vlaneseq
    %v888 = vshrl.u32 %v887, 7
    %v889 = vsub.s32 %v886, %v888
    %v890 = vrot.slane %v876, %v889
    %v891 = vcombine.high %v883, %v883
    %v892 = vcombine.high %v63, %v63
    %v894 = vunpack.c.l.s4 1983009808
    %v895 = vunpack.c.0.s8 %v894
    %v896 = vlaneseq
    %v897 = vshrl.u32 %v896, 7
    %v898 = vsub.s32 %v895, %v897
    %v899 = vrot.slane %v63, %v898
    %v901 = vunpack.c.l.s4 1983009808
    %v902 = vunpack.c.0.s8 %v901
    %v903 = vlaneseq
    %v904 = vshrl.u32 %v903, 7
    %v905 = vsub.s32 %v902, %v904
    %v906 = vrot.slane %v892, %v905
    %v907 = vcombine.high %v899, %v899
    %v908 = vcombine.high %v906, %v906
    %v909 = vcombine.high %v64, %v64
    %v911 = vunpack.c.l.s4 1983009808
    %v912 = vunpack.c.0.s8 %v911
    %v913 = vlaneseq
    %v914 = vshrl.u32 %v913, 7
    %v915 = vsub.s32 %v912, %v914
    %v916 = vrot.slane %v64, %v915
    %v918 = vunpack.c.l.s4 1983009808
    %v919 = vunpack.c.0.s8 %v918
    %v920 = vlaneseq
    %v921 = vshrl.u32 %v920, 7
    %v922 = vsub.s32 %v919, %v921
    %v923 = vrot.slane %v909, %v922
    %v924 = vcombine.high %v916, %v916
    %v925 = vcombine.high %v65, %v65
    %v927 = vunpack.c.l.s4 1983009808
    %v928 = vunpack.c.0.s8 %v927
    %v929 = vlaneseq
    %v930 = vshrl.u32 %v929, 7
    %v931 = vsub.s32 %v928, %v930
    %v932 = vrot.slane %v65, %v931
    %v934 = vunpack.c.l.s4 1983009808
    %v935 = vunpack.c.0.s8 %v934
    %v936 = vlaneseq
    %v937 = vshrl.u32 %v936, 7
    %v938 = vsub.s32 %v935, %v937
    %v939 = vrot.slane %v925, %v938
    %v940 = vcombine.high %v932, %v932
    %v941 = vcombine.high %v939, %v939
    %v942 = vcombine.high %v66, %v66
    %v944 = vunpack.c.l.s4 1983009808
    %v945 = vunpack.c.0.s8 %v944
    %v946 = vlaneseq
    %v947 = vshrl.u32 %v946, 7
    %v948 = vsub.s32 %v945, %v947
    %v949 = vrot.slane %v66, %v948
    %v951 = vunpack.c.l.s4 1983009808
    %v952 = vunpack.c.0.s8 %v951
    %v953 = vlaneseq
    %v954 = vshrl.u32 %v953, 7
    %v955 = vsub.s32 %v952, %v954
    %v956 = vrot.slane %v942, %v955
    %v957 = vcombine.high %v949, %v949
    %v958 = vcombine.high %v67, %v67
    %v960 = vunpack.c.l.s4 1983009808
    %v961 = vunpack.c.0.s8 %v960
    %v962 = vlaneseq
    %v963 = vshrl.u32 %v962, 7
    %v964 = vsub.s32 %v961, %v963
    %v965 = vrot.slane %v67, %v964
    %v967 = vunpack.c.l.s4 1983009808
    %v968 = vunpack.c.0.s8 %v967
    %v969 = vlaneseq
    %v970 = vshrl.u32 %v969, 7
    %v971 = vsub.s32 %v968, %v970
    %v972 = vrot.slane %v958, %v971
    %v973 = vcombine.high %v965, %v965
    %v974 = vcombine.high %v972, %v972
    %v975 = vcombine.high %v68, %v68
    %v977 = vunpack.c.l.s4 1983009808
    %v978 = vunpack.c.0.s8 %v977
    %v979 = vlaneseq
    %v980 = vshrl.u32 %v979, 7
    %v981 = vsub.s32 %v978, %v980
    %v982 = vrot.slane %v68, %v981
    %v984 = vunpack.c.l.s4 1983009808
    %v985 = vunpack.c.0.s8 %v984
    %v986 = vlaneseq
    %v987 = vshrl.u32 %v986, 7
    %v988 = vsub.s32 %v985, %v987
    %v989 = vrot.slane %v975, %v988
    %v990 = vcombine.high %v982, %v982
    %v991 = vcombine.high %v69, %v69
    %v993 = vunpack.c.l.s4 1983009808
    %v994 = vunpack.c.0.s8 %v993
    %v995 = vlaneseq
    %v996 = vshrl.u32 %v995, 7
    %v997 = vsub.s32 %v994, %v996
    %v998 = vrot.slane %v69, %v997
    %v1000 = vunpack.c.l.s4 1983009808
    %v1001 = vunpack.c.0.s8 %v1000
    %v1002 = vlaneseq
    %v1003 = vshrl.u32 %v1002, 7
    %v1004 = vsub.s32 %v1001, %v1003
    %v1005 = vrot.slane %v991, %v1004
    %v1006 = vcombine.high %v998, %v998
    %v1007 = vcombine.high %v1005, %v1005
    %v1008 = vcombine.high %v70, %v70
    %v1010 = vunpack.c.l.s4 1983009808
    %v1011 = vunpack.c.0.s8 %v1010
    %v1012 = vlaneseq
    %v1013 = vshrl.u32 %v1012, 7
    %v1014 = vsub.s32 %v1011, %v1013
    %v1015 = vrot.slane %v70, %v1014
    %v1017 = vunpack.c.l.s4 1983009808
    %v1018 = vunpack.c.0.s8 %v1017
    %v1019 = vlaneseq
    %v1020 = vshrl.u32 %v1019, 7
    %v1021 = vsub.s32 %v1018, %v1020
    %v1022 = vrot.slane %v1008, %v1021
    %v1023 = vcombine.high %v1015, %v1015
    %v1024 = vcombine.high %v71, %v71
    %v1026 = vunpack.c.l.s4 1983009808
    %v1027 = vunpack.c.0.s8 %v1026
    %v1028 = vlaneseq
    %v1029 = vshrl.u32 %v1028, 7
    %v1030 = vsub.s32 %v1027, %v1029
    %v1031 = vrot.slane %v71, %v1030
    %v1033 = vunpack.c.l.s4 1983009808
    %v1034 = vunpack.c.0.s8 %v1033
    %v1035 = vlaneseq
    %v1036 = vshrl.u32 %v1035, 7
    %v1037 = vsub.s32 %v1034, %v1036
    %v1038 = vrot.slane %v1024, %v1037
    %v1039 = vcombine.high %v1031, %v1031
    %v1040 = vcombine.high %v1038, %v1038
    %v1041 = vcombine.high %v72, %v72
    %v1043 = vunpack.c.l.s4 1983009808
    %v1044 = vunpack.c.0.s8 %v1043
    %v1045 = vlaneseq
    %v1046 = vshrl.u32 %v1045, 7
    %v1047 = vsub.s32 %v1044, %v1046
    %v1048 = vrot.slane %v72, %v1047
    %v1050 = vunpack.c.l.s4 1983009808
    %v1051 = vunpack.c.0.s8 %v1050
    %v1052 = vlaneseq
    %v1053 = vshrl.u32 %v1052, 7
    %v1054 = vsub.s32 %v1051, %v1053
    %v1055 = vrot.slane %v1041, %v1054
    %v1056 = vcombine.high %v1048, %v1048
    %v1057 = vcombine.low %v140, %v148
    %v1058 = vcombine.low %v147, %v149
    %v1060 = vunpack.c.l.s4 1983009808
    %v1061 = vunpack.c.0.s8 %v1060
    %v1062 = vlaneseq
    %v1063 = vshrl.u32 %v1062, 7
    %v1064 = vsub.s32 %v1061, %v1063
    %v1065 = vrot.slane %v1057, %v1064
    %v1067 = vunpack.c.l.s4 1983009808
    %v1068 = vunpack.c.0.s8 %v1067
    %v1069 = vlaneseq
    %v1070 = vshrl.u32 %v1069, 7
    %v1071 = vsub.s32 %v1068, %v1070
    %v1072 = vrot.slane %v1058, %v1071
    %v1073 = vcombine.low %v1065, %v1072
    %v1074 = vcombine.low %v157, %v165
    %v1075 = vcombine.low %v164, %v173
    %v1077 = vunpack.c.l.s4 1983009808
    %v1078 = vunpack.c.0.s8 %v1077
    %v1079 = vlaneseq
    %v1080 = vshrl.u32 %v1079, 7
    %v1081 = vsub.s32 %v1078, %v1080
    %v1082 = vrot.slane %v1074, %v1081
    %v1084 = vunpack.c.l.s4 1983009808
    %v1085 = vunpack.c.0.s8 %v1084
    %v1086 = vlaneseq
    %v1087 = vshrl.u32 %v1086, 7
    %v1088 = vsub.s32 %v1085, %v1087
    %v1089 = vrot.slane %v1075, %v1088
    %v1090 = vcombine.low %v1082, %v1089
    %v1091 = vcombine.low %v181, %v180
    %v1092 = vcombine.low %v182, %v190
    %v1094 = vunpack.c.l.s4 1983009808
    %v1095 = vunpack.c.0.s8 %v1094
    %v1096 = vlaneseq
    %v1097 = vshrl.u32 %v1096, 7
    %v1098 = vsub.s32 %v1095, %v1097
    %v1099 = vrot.slane %v1091, %v1098
    %v1101 = vunpack.c.l.s4 1983009808
    %v1102 = vunpack.c.0.s8 %v1101
    %v1103 = vlaneseq
    %v1104 = vshrl.u32 %v1103, 7
    %v1105 = vsub.s32 %v1102, %v1104
    %v1106 = vrot.slane %v1092, %v1105
    %v1107 = vcombine.low %v1099, %v1106
    %v1108 = vcombine.low %v198, %v197
    %v1109 = vcombine.low %v206, %v214
    %v1111 = vunpack.c.l.s4 1983009808
    %v1112 = vunpack.c.0.s8 %v1111
    %v1113 = vlaneseq
    %v1114 = vshrl.u32 %v1113, 7
    %v1115 = vsub.s32 %v1112, %v1114
    %v1116 = vrot.slane %v1108, %v1115
    %v1118 = vunpack.c.l.s4 1983009808
    %v1119 = vunpack.c.0.s8 %v1118
    %v1120 = vlaneseq
    %v1121 = vshrl.u32 %v1120, 7
    %v1122 = vsub.s32 %v1119, %v1121
    %v1123 = vrot.slane %v1109, %v1122
    %v1124 = vcombine.low %v1116, %v1123
    %v1125 = vcombine.low %v213, %v215
    %v1126 = vcombine.low %v223, %v231
    %v1128 = vunpack.c.l.s4 1983009808
    %v1129 = vunpack.c.0.s8 %v1128
    %v1130 = vlaneseq
    %v1131 = vshrl.u32 %v1130, 7
    %v1132 = vsub.s32 %v1129, %v1131
    %v1133 = vrot.slane %v1125, %v1132
    %v1135 = vunpack.c.l.s4 1983009808
    %v1136 = vunpack.c.0.s8 %v1135
    %v1137 = vlaneseq
    %v1138 = vshrl.u32 %v1137, 7
    %v1139 = vsub.s32 %v1136, %v1138
    %v1140 = vrot.slane %v1126, %v1139
    %v1141 = vcombine.low %v1133, %v1140
    %v1142 = vcombine.low %v230, %v239
    %v1143 = vcombine.low %v247, %v246
    %v1145 = vunpack.c.l.s4 1983009808
    %v1146 = vunpack.c.0.s8 %v1145
    %v1147 = vlaneseq
    %v1148 = vshrl.u32 %v1147, 7
    %v1149 = vsub.s32 %v1146, %v1148
    %v1150 = vrot.slane %v1142, %v1149
    %v1152 = vunpack.c.l.s4 1983009808
    %v1153 = vunpack.c.0.s8 %v1152
    %v1154 = vlaneseq
    %v1155 = vshrl.u32 %v1154, 7
    %v1156 = vsub.s32 %v1153, %v1155
    %v1157 = vrot.slane %v1143, %v1156
    %v1158 = vcombine.low %v1150, %v1157
    %v1159 = vcombine.low %v248, %v256
    %v1160 = vcombine.low %v264, %v263
    %v1162 = vunpack.c.l.s4 1983009808
    %v1163 = vunpack.c.0.s8 %v1162
    %v1164 = vlaneseq
    %v1165 = vshrl.u32 %v1164, 7
    %v1166 = vsub.s32 %v1163, %v1165
    %v1167 = vrot.slane %v1159, %v1166
    %v1169 = vunpack.c.l.s4 1983009808
    %v1170 = vunpack.c.0.s8 %v1169
    %v1171 = vlaneseq
    %v1172 = vshrl.u32 %v1171, 7
    %v1173 = vsub.s32 %v1170, %v1172
    %v1174 = vrot.slane %v1160, %v1173
    %v1175 = vcombine.low %v1167, %v1174
    %v1176 = vcombine.low %v272, %v280
    %v1177 = vcombine.low %v279, %v281
    %v1179 = vunpack.c.l.s4 1983009808
    %v1180 = vunpack.c.0.s8 %v1179
    %v1181 = vlaneseq
    %v1182 = vshrl.u32 %v1181, 7
    %v1183 = vsub.s32 %v1180, %v1182
    %v1184 = vrot.slane %v1176, %v1183
    %v1186 = vunpack.c.l.s4 1983009808
    %v1187 = vunpack.c.0.s8 %v1186
    %v1188 = vlaneseq
    %v1189 = vshrl.u32 %v1188, 7
    %v1190 = vsub.s32 %v1187, %v1189
    %v1191 = vrot.slane %v1177, %v1190
    %v1192 = vcombine.low %v1184, %v1191
    %v1193 = vcombine.low %v289, %v297
    %v1194 = vcombine.low %v296, %v305
    %v1196 = vunpack.c.l.s4 1983009808
    %v1197 = vunpack.c.0.s8 %v1196
    %v1198 = vlaneseq
    %v1199 = vshrl.u32 %v1198, 7
    %v1200 = vsub.s32 %v1197, %v1199
    %v1201 = vrot.slane %v1193, %v1200
    %v1203 = vunpack.c.l.s4 1983009808
    %v1204 = vunpack.c.0.s8 %v1203
    %v1205 = vlaneseq
    %v1206 = vshrl.u32 %v1205, 7
    %v1207 = vsub.s32 %v1204, %v1206
    %v1208 = vrot.slane %v1194, %v1207
    %v1209 = vcombine.low %v1201, %v1208
    %v1210 = vcombine.low %v313, %v312
    %v1211 = vcombine.low %v314, %v322
    %v1213 = vunpack.c.l.s4 1983009808
    %v1214 = vunpack.c.0.s8 %v1213
    %v1215 = vlaneseq
    %v1216 = vshrl.u32 %v1215, 7
    %v1217 = vsub.s32 %v1214, %v1216
    %v1218 = vrot.slane %v1210, %v1217
    %v1220 = vunpack.c.l.s4 1983009808
    %v1221 = vunpack.c.0.s8 %v1220
    %v1222 = vlaneseq
    %v1223 = vshrl.u32 %v1222, 7
    %v1224 = vsub.s32 %v1221, %v1223
    %v1225 = vrot.slane %v1211, %v1224
    %v1226 = vcombine.low %v1218, %v1225
    %v1227 = vcombine.low %v330, %v329
    %v1228 = vcombine.low %v338, %v346
    %v1230 = vunpack.c.l.s4 1983009808
    %v1231 = vunpack.c.0.s8 %v1230
    %v1232 = vlaneseq
    %v1233 = vshrl.u32 %v1232, 7
    %v1234 = vsub.s32 %v1231, %v1233
    %v1235 = vrot.slane %v1227, %v1234
    %v1237 = vunpack.c.l.s4 1983009808
    %v1238 = vunpack.c.0.s8 %v1237
    %v1239 = vlaneseq
    %v1240 = vshrl.u32 %v1239, 7
    %v1241 = vsub.s32 %v1238, %v1240
    %v1242 = vrot.slane %v1228, %v1241
    %v1243 = vcombine.low %v1235, %v1242
    %v1244 = vcombine.low %v345, %v347
    %v1245 = vcombine.low %v355, %v363
    %v1247 = vunpack.c.l.s4 1983009808
    %v1248 = vunpack.c.0.s8 %v1247
    %v1249 = vlaneseq
    %v1250 = vshrl.u32 %v1249, 7
    %v1251 = vsub.s32 %v1248, %v1250
    %v1252 = vrot.slane %v1244, %v1251
    %v1254 = vunpack.c.l.s4 1983009808
    %v1255 = vunpack.c.0.s8 %v1254
    %v1256 = vlaneseq
    %v1257 = vshrl.u32 %v1256, 7
    %v1258 = vsub.s32 %v1255, %v1257
    %v1259 = vrot.slane %v1245, %v1258
    %v1260 = vcombine.low %v1252, %v1259
    %v1261 = vcombine.low %v362, %v371
    %v1262 = vcombine.low %v379, %v378
    %v1264 = vunpack.c.l.s4 1983009808
    %v1265 = vunpack.c.0.s8 %v1264
    %v1266 = vlaneseq
    %v1267 = vshrl.u32 %v1266, 7
    %v1268 = vsub.s32 %v1265, %v1267
    %v1269 = vrot.slane %v1261, %v1268
    %v1271 = vunpack.c.l.s4 1983009808
    %v1272 = vunpack.c.0.s8 %v1271
    %v1273 = vlaneseq
    %v1274 = vshrl.u32 %v1273, 7
    %v1275 = vsub.s32 %v1272, %v1274
    %v1276 = vrot.slane %v1262, %v1275
    %v1277 = vcombine.low %v1269, %v1276
    %v1278 = vcombine.low %v380, %v388
    %v1279 = vcombine.low %v396, %v395
    %v1281 = vunpack.c.l.s4 1983009808
    %v1282 = vunpack.c.0.s8 %v1281
    %v1283 = vlaneseq
    %v1284 = vshrl.u32 %v1283, 7
    %v1285 = vsub.s32 %v1282, %v1284
    %v1286 = vrot.slane %v1278, %v1285
    %v1288 = vunpack.c.l.s4 1983009808
    %v1289 = vunpack.c.0.s8 %v1288
    %v1290 = vlaneseq
    %v1291 = vshrl.u32 %v1290, 7
    %v1292 = vsub.s32 %v1289, %v1291
    %v1293 = vrot.slane %v1279, %v1292
    %v1294 = vcombine.low %v1286, %v1293
    %v1295 = vcombine.low %v404, %v412
    %v1296 = vcombine.low %v411, %v413
    %v1298 = vunpack.c.l.s4 1983009808
    %v1299 = vunpack.c.0.s8 %v1298
    %v1300 = vlaneseq
    %v1301 = vshrl.u32 %v1300, 7
    %v1302 = vsub.s32 %v1299, %v1301
    %v1303 = vrot.slane %v1295, %v1302
    %v1305 = vunpack.c.l.s4 1983009808
    %v1306 = vunpack.c.0.s8 %v1305
    %v1307 = vlaneseq
    %v1308 = vshrl.u32 %v1307, 7
    %v1309 = vsub.s32 %v1306, %v1308
    %v1310 = vrot.slane %v1296, %v1309
    %v1311 = vcombine.low %v1303, %v1310
    %v1312 = vcombine.low %v421, %v429
    %v1313 = vcombine.low %v428, %v437
    %v1315 = vunpack.c.l.s4 1983009808
    %v1316 = vunpack.c.0.s8 %v1315
    %v1317 = vlaneseq
    %v1318 = vshrl.u32 %v1317, 7
    %v1319 = vsub.s32 %v1316, %v1318
    %v1320 = vrot.slane %v1312, %v1319
    %v1322 = vunpack.c.l.s4 1983009808
    %v1323 = vunpack.c.0.s8 %v1322
    %v1324 = vlaneseq
    %v1325 = vshrl.u32 %v1324, 7
    %v1326 = vsub.s32 %v1323, %v1325
    %v1327 = vrot.slane %v1313, %v1326
    %v1328 = vcombine.low %v1320, %v1327
    %v1329 = vcombine.low %v445, %v444
    %v1330 = vcombine.low %v446, %v454
    %v1332 = vunpack.c.l.s4 1983009808
    %v1333 = vunpack.c.0.s8 %v1332
    %v1334 = vlaneseq
    %v1335 = vshrl.u32 %v1334, 7
    %v1336 = vsub.s32 %v1333, %v1335
    %v1337 = vrot.slane %v1329, %v1336
    %v1339 = vunpack.c.l.s4 1983009808
    %v1340 = vunpack.c.0.s8 %v1339
    %v1341 = vlaneseq
    %v1342 = vshrl.u32 %v1341, 7
    %v1343 = vsub.s32 %v1340, %v1342
    %v1344 = vrot.slane %v1330, %v1343
    %v1345 = vcombine.low %v1337, %v1344
    %v1346 = vcombine.low %v462, %v461
    %v1347 = vcombine.low %v470, %v478
    %v1349 = vunpack.c.l.s4 1983009808
    %v1350 = vunpack.c.0.s8 %v1349
    %v1351 = vlaneseq
    %v1352 = vshrl.u32 %v1351, 7
    %v1353 = vsub.s32 %v1350, %v1352
    %v1354 = vrot.slane %v1346, %v1353
    %v1356 = vunpack.c.l.s4 1983009808
    %v1357 = vunpack.c.0.s8 %v1356
    %v1358 = vlaneseq
    %v1359 = vshrl.u32 %v1358, 7
    %v1360 = vsub.s32 %v1357, %v1359
    %v1361 = vrot.slane %v1347, %v1360
    %v1362 = vcombine.low %v1354, %v1361
    %v1363 = vcombine.low %v477, %v479
    %v1364 = vcombine.low %v487, %v495
    %v1366 = vunpack.c.l.s4 1983009808
    %v1367 = vunpack.c.0.s8 %v1366
    %v1368 = vlaneseq
    %v1369 = vshrl.u32 %v1368, 7
    %v1370 = vsub.s32 %v1367, %v1369
    %v1371 = vrot.slane %v1363, %v1370
    %v1373 = vunpack.c.l.s4 1983009808
    %v1374 = vunpack.c.0.s8 %v1373
    %v1375 = vlaneseq
    %v1376 = vshrl.u32 %v1375, 7
    %v1377 = vsub.s32 %v1374, %v1376
    %v1378 = vrot.slane %v1364, %v1377
    %v1379 = vcombine.low %v1371, %v1378
    %v1380 = vcombine.low %v494, %v503
    %v1381 = vcombine.low %v511, %v510
    %v1383 = vunpack.c.l.s4 1983009808
    %v1384 = vunpack.c.0.s8 %v1383
    %v1385 = vlaneseq
    %v1386 = vshrl.u32 %v1385, 7
    %v1387 = vsub.s32 %v1384, %v1386
    %v1388 = vrot.slane %v1380, %v1387
    %v1390 = vunpack.c.l.s4 1983009808
    %v1391 = vunpack.c.0.s8 %v1390
    %v1392 = vlaneseq
    %v1393 = vshrl.u32 %v1392, 7
    %v1394 = vsub.s32 %v1391, %v1393
    %v1395 = vrot.slane %v1381, %v1394
    %v1396 = vcombine.low %v1388, %v1395
    %v1397 = vcombine.low %v512, %v520
    %v1398 = vcombine.low %v528, %v527
    %v1400 = vunpack.c.l.s4 1983009808
    %v1401 = vunpack.c.0.s8 %v1400
    %v1402 = vlaneseq
    %v1403 = vshrl.u32 %v1402, 7
    %v1404 = vsub.s32 %v1401, %v1403
    %v1405 = vrot.slane %v1397, %v1404
    %v1407 = vunpack.c.l.s4 1983009808
    %v1408 = vunpack.c.0.s8 %v1407
    %v1409 = vlaneseq
    %v1410 = vshrl.u32 %v1409, 7
    %v1411 = vsub.s32 %v1408, %v1410
    %v1412 = vrot.slane %v1398, %v1411
    %v1413 = vcombine.low %v1405, %v1412
    %v1414 = vcombine.low %v536, %v544
    %v1415 = vcombine.low %v543, %v545
    %v1417 = vunpack.c.l.s4 1983009808
    %v1418 = vunpack.c.0.s8 %v1417
    %v1419 = vlaneseq
    %v1420 = vshrl.u32 %v1419, 7
    %v1421 = vsub.s32 %v1418, %v1420
    %v1422 = vrot.slane %v1414, %v1421
    %v1424 = vunpack.c.l.s4 1983009808
    %v1425 = vunpack.c.0.s8 %v1424
    %v1426 = vlaneseq
    %v1427 = vshrl.u32 %v1426, 7
    %v1428 = vsub.s32 %v1425, %v1427
    %v1429 = vrot.slane %v1415, %v1428
    %v1430 = vcombine.low %v1422, %v1429
    %v1431 = vcombine.low %v553, %v561
    %v1432 = vcombine.low %v560, %v569
    %v1434 = vunpack.c.l.s4 1983009808
    %v1435 = vunpack.c.0.s8 %v1434
    %v1436 = vlaneseq
    %v1437 = vshrl.u32 %v1436, 7
    %v1438 = vsub.s32 %v1435, %v1437
    %v1439 = vrot.slane %v1431, %v1438
    %v1441 = vunpack.c.l.s4 1983009808
    %v1442 = vunpack.c.0.s8 %v1441
    %v1443 = vlaneseq
    %v1444 = vshrl.u32 %v1443, 7
    %v1445 = vsub.s32 %v1442, %v1444
    %v1446 = vrot.slane %v1432, %v1445
    %v1447 = vcombine.low %v1439, %v1446
    %v1448 = vcombine.low %v577, %v576
    %v1449 = vcombine.low %v578, %v586
    %v1451 = vunpack.c.l.s4 1983009808
    %v1452 = vunpack.c.0.s8 %v1451
    %v1453 = vlaneseq
    %v1454 = vshrl.u32 %v1453, 7
    %v1455 = vsub.s32 %v1452, %v1454
    %v1456 = vrot.slane %v1448, %v1455
    %v1458 = vunpack.c.l.s4 1983009808
    %v1459 = vunpack.c.0.s8 %v1458
    %v1460 = vlaneseq
    %v1461 = vshrl.u32 %v1460, 7
    %v1462 = vsub.s32 %v1459, %v1461
    %v1463 = vrot.slane %v1449, %v1462
    %v1464 = vcombine.low %v1456, %v1463
    %v1465 = vcombine.low %v594, %v593
    %v1466 = vcombine.low %v602, %v610
    %v1468 = vunpack.c.l.s4 1983009808
    %v1469 = vunpack.c.0.s8 %v1468
    %v1470 = vlaneseq
    %v1471 = vshrl.u32 %v1470, 7
    %v1472 = vsub.s32 %v1469, %v1471
    %v1473 = vrot.slane %v1465, %v1472
    %v1475 = vunpack.c.l.s4 1983009808
    %v1476 = vunpack.c.0.s8 %v1475
    %v1477 = vlaneseq
    %v1478 = vshrl.u32 %v1477, 7
    %v1479 = vsub.s32 %v1476, %v1478
    %v1480 = vrot.slane %v1466, %v1479
    %v1481 = vcombine.low %v1473, %v1480
    %v1482 = vcombine.low %v609, %v611
    %v1483 = vcombine.low %v619, %v627
    %v1485 = vunpack.c.l.s4 1983009808
    %v1486 = vunpack.c.0.s8 %v1485
    %v1487 = vlaneseq
    %v1488 = vshrl.u32 %v1487, 7
    %v1489 = vsub.s32 %v1486, %v1488
    %v1490 = vrot.slane %v1482, %v1489
    %v1492 = vunpack.c.l.s4 1983009808
    %v1493 = vunpack.c.0.s8 %v1492
    %v1494 = vlaneseq
    %v1495 = vshrl.u32 %v1494, 7
    %v1496 = vsub.s32 %v1493, %v1495
    %v1497 = vrot.slane %v1483, %v1496
    %v1498 = vcombine.low %v1490, %v1497
    %v1499 = vcombine.low %v626, %v635
    %v1500 = vcombine.low %v643, %v642
    %v1502 = vunpack.c.l.s4 1983009808
    %v1503 = vunpack.c.0.s8 %v1502
    %v1504 = vlaneseq
    %v1505 = vshrl.u32 %v1504, 7
    %v1506 = vsub.s32 %v1503, %v1505
    %v1507 = vrot.slane %v1499, %v1506
    %v1509 = vunpack.c.l.s4 1983009808
    %v1510 = vunpack.c.0.s8 %v1509
    %v1511 = vlaneseq
    %v1512 = vshrl.u32 %v1511, 7
    %v1513 = vsub.s32 %v1510, %v1512
    %v1514 = vrot.slane %v1500, %v1513
    %v1515 = vcombine.low %v1507, %v1514
    %v1516 = vcombine.low %v644, %v652
    %v1517 = vcombine.low %v660, %v659
    %v1519 = vunpack.c.l.s4 1983009808
    %v1520 = vunpack.c.0.s8 %v1519
    %v1521 = vlaneseq
    %v1522 = vshrl.u32 %v1521, 7
    %v1523 = vsub.s32 %v1520, %v1522
    %v1524 = vrot.slane %v1516, %v1523
    %v1526 = vunpack.c.l.s4 1983009808
    %v1527 = vunpack.c.0.s8 %v1526
    %v1528 = vlaneseq
    %v1529 = vshrl.u32 %v1528, 7
    %v1530 = vsub.s32 %v1527, %v1529
    %v1531 = vrot.slane %v1517, %v1530
    %v1532 = vcombine.low %v1524, %v1531
    %v1533 = vcombine.low %v668, %v676
    %v1534 = vcombine.low %v675, %v677
    %v1536 = vunpack.c.l.s4 1983009808
    %v1537 = vunpack.c.0.s8 %v1536
    %v1538 = vlaneseq
    %v1539 = vshrl.u32 %v1538, 7
    %v1540 = vsub.s32 %v1537, %v1539
    %v1541 = vrot.slane %v1533, %v1540
    %v1543 = vunpack.c.l.s4 1983009808
    %v1544 = vunpack.c.0.s8 %v1543
    %v1545 = vlaneseq
    %v1546 = vshrl.u32 %v1545, 7
    %v1547 = vsub.s32 %v1544, %v1546
    %v1548 = vrot.slane %v1534, %v1547
    %v1549 = vcombine.low %v1541, %v1548
    %v1550 = vcombine.low %v685, %v693
    %v1551 = vcombine.low %v692, %v701
    %v1553 = vunpack.c.l.s4 1983009808
    %v1554 = vunpack.c.0.s8 %v1553
    %v1555 = vlaneseq
    %v1556 = vshrl.u32 %v1555, 7
    %v1557 = vsub.s32 %v1554, %v1556
    %v1558 = vrot.slane %v1550, %v1557
    %v1560 = vunpack.c.l.s4 1983009808
    %v1561 = vunpack.c.0.s8 %v1560
    %v1562 = vlaneseq
    %v1563 = vshrl.u32 %v1562, 7
    %v1564 = vsub.s32 %v1561, %v1563
    %v1565 = vrot.slane %v1551, %v1564
    %v1566 = vcombine.low %v1558, %v1565
    %v1567 = vcombine.low %v709, %v708
    %v1568 = vcombine.low %v710, %v718
    %v1570 = vunpack.c.l.s4 1983009808
    %v1571 = vunpack.c.0.s8 %v1570
    %v1572 = vlaneseq
    %v1573 = vshrl.u32 %v1572, 7
    %v1574 = vsub.s32 %v1571, %v1573
    %v1575 = vrot.slane %v1567, %v1574
    %v1577 = vunpack.c.l.s4 1983009808
    %v1578 = vunpack.c.0.s8 %v1577
    %v1579 = vlaneseq
    %v1580 = vshrl.u32 %v1579, 7
    %v1581 = vsub.s32 %v1578, %v1580
    %v1582 = vrot.slane %v1568, %v1581
    %v1583 = vcombine.low %v1575, %v1582
    %v1584 = vcombine.low %v726, %v725
    %v1585 = vcombine.low %v734, %v742
    %v1587 = vunpack.c.l.s4 1983009808
    %v1588 = vunpack.c.0.s8 %v1587
    %v1589 = vlaneseq
    %v1590 = vshrl.u32 %v1589, 7
    %v1591 = vsub.s32 %v1588, %v1590
    %v1592 = vrot.slane %v1584, %v1591
    %v1594 = vunpack.c.l.s4 1983009808
    %v1595 = vunpack.c.0.s8 %v1594
    %v1596 = vlaneseq
    %v1597 = vshrl.u32 %v1596, 7
    %v1598 = vsub.s32 %v1595, %v1597
    %v1599 = vrot.slane %v1585, %v1598
    %v1600 = vcombine.low %v1592, %v1599
    %v1601 = vcombine.low %v741, %v743
    %v1602 = vcombine.low %v751, %v759
    %v1604 = vunpack.c.l.s4 1983009808
    %v1605 = vunpack.c.0.s8 %v1604
    %v1606 = vlaneseq
    %v1607 = vshrl.u32 %v1606, 7
    %v1608 = vsub.s32 %v1605, %v1607
    %v1609 = vrot.slane %v1601, %v1608
    %v1611 = vunpack.c.l.s4 1983009808
    %v1612 = vunpack.c.0.s8 %v1611
    %v1613 = vlaneseq
    %v1614 = vshrl.u32 %v1613, 7
    %v1615 = vsub.s32 %v1612, %v1614
    %v1616 = vrot.slane %v1602, %v1615
    %v1617 = vcombine.low %v1609, %v1616
    %v1618 = vcombine.low %v758, %v767
    %v1619 = vcombine.low %v775, %v774
    %v1621 = vunpack.c.l.s4 1983009808
    %v1622 = vunpack.c.0.s8 %v1621
    %v1623 = vlaneseq
    %v1624 = vshrl.u32 %v1623, 7
    %v1625 = vsub.s32 %v1622, %v1624
    %v1626 = vrot.slane %v1618, %v1625
    %v1628 = vunpack.c.l.s4 1983009808
    %v1629 = vunpack.c.0.s8 %v1628
    %v1630 = vlaneseq
    %v1631 = vshrl.u32 %v1630, 7
    %v1632 = vsub.s32 %v1629, %v1631
    %v1633 = vrot.slane %v1619, %v1632
    %v1634 = vcombine.low %v1626, %v1633
    %v1635 = vcombine.low %v776, %v784
    %v1636 = vcombine.low %v792, %v791
    %v1638 = vunpack.c.l.s4 1983009808
    %v1639 = vunpack.c.0.s8 %v1638
    %v1640 = vlaneseq
    %v1641 = vshrl.u32 %v1640, 7
    %v1642 = vsub.s32 %v1639, %v1641
    %v1643 = vrot.slane %v1635, %v1642
    %v1645 = vunpack.c.l.s4 1983009808
    %v1646 = vunpack.c.0.s8 %v1645
    %v1647 = vlaneseq
    %v1648 = vshrl.u32 %v1647, 7
    %v1649 = vsub.s32 %v1646, %v1648
    %v1650 = vrot.slane %v1636, %v1649
    %v1651 = vcombine.low %v1643, %v1650
    %v1652 = vcombine.low %v800, %v808
    %v1653 = vcombine.low %v807, %v809
    %v1655 = vunpack.c.l.s4 1983009808
    %v1656 = vunpack.c.0.s8 %v1655
    %v1657 = vlaneseq
    %v1658 = vshrl.u32 %v1657, 7
    %v1659 = vsub.s32 %v1656, %v1658
    %v1660 = vrot.slane %v1652, %v1659
    %v1662 = vunpack.c.l.s4 1983009808
    %v1663 = vunpack.c.0.s8 %v1662
    %v1664 = vlaneseq
    %v1665 = vshrl.u32 %v1664, 7
    %v1666 = vsub.s32 %v1663, %v1665
    %v1667 = vrot.slane %v1653, %v1666
    %v1668 = vcombine.low %v1660, %v1667
    %v1669 = vcombine.low %v817, %v825
    %v1670 = vcombine.low %v824, %v833
    %v1672 = vunpack.c.l.s4 1983009808
    %v1673 = vunpack.c.0.s8 %v1672
    %v1674 = vlaneseq
    %v1675 = vshrl.u32 %v1674, 7
    %v1676 = vsub.s32 %v1673, %v1675
    %v1677 = vrot.slane %v1669, %v1676
    %v1679 = vunpack.c.l.s4 1983009808
    %v1680 = vunpack.c.0.s8 %v1679
    %v1681 = vlaneseq
    %v1682 = vshrl.u32 %v1681, 7
    %v1683 = vsub.s32 %v1680, %v1682
    %v1684 = vrot.slane %v1670, %v1683
    %v1685 = vcombine.low %v1677, %v1684
    %v1686 = vcombine.low %v841, %v840
    %v1687 = vcombine.low %v842, %v850
    %v1689 = vunpack.c.l.s4 1983009808
    %v1690 = vunpack.c.0.s8 %v1689
    %v1691 = vlaneseq
    %v1692 = vshrl.u32 %v1691, 7
    %v1693 = vsub.s32 %v1690, %v1692
    %v1694 = vrot.slane %v1686, %v1693
    %v1696 = vunpack.c.l.s4 1983009808
    %v1697 = vunpack.c.0.s8 %v1696
    %v1698 = vlaneseq
    %v1699 = vshrl.u32 %v1698, 7
    %v1700 = vsub.s32 %v1697, %v1699
    %v1701 = vrot.slane %v1687, %v1700
    %v1702 = vcombine.low %v1694, %v1701
    %v1703 = vcombine.low %v858, %v857
    %v1704 = vcombine.low %v866, %v874
    %v1706 = vunpack.c.l.s4 1983009808
    %v1707 = vunpack.c.0.s8 %v1706
    %v1708 = vlaneseq
    %v1709 = vshrl.u32 %v1708, 7
    %v1710 = vsub.s32 %v1707, %v1709
    %v1711 = vrot.slane %v1703, %v1710
    %v1713 = vunpack.c.l.s4 1983009808
    %v1714 = vunpack.c.0.s8 %v1713
    %v1715 = vlaneseq
    %v1716 = vshrl.u32 %v1715, 7
    %v1717 = vsub.s32 %v1714, %v1716
    %v1718 = vrot.slane %v1704, %v1717
    %v1719 = vcombine.low %v1711, %v1718
    %v1720 = vcombine.low %v873, %v875
    %v1721 = vcombine.low %v883, %v891
    %v1723 = vunpack.c.l.s4 1983009808
    %v1724 = vunpack.c.0.s8 %v1723
    %v1725 = vlaneseq
    %v1726 = vshrl.u32 %v1725, 7
    %v1727 = vsub.s32 %v1724, %v1726
    %v1728 = vrot.slane %v1720, %v1727
    %v1730 = vunpack.c.l.s4 1983009808
    %v1731 = vunpack.c.0.s8 %v1730
    %v1732 = vlaneseq
    %v1733 = vshrl.u32 %v1732, 7
    %v1734 = vsub.s32 %v1731, %v1733
    %v1735 = vrot.slane %v1721, %v1734
    %v1736 = vcombine.low %v1728, %v1735
    %v1737 = vcombine.low %v890, %v899
    %v1738 = vcombine.low %v907, %v906
    %v1740 = vunpack.c.l.s4 1983009808
    %v1741 = vunpack.c.0.s8 %v1740
    %v1742 = vlaneseq
    %v1743 = vshrl.u32 %v1742, 7
    %v1744 = vsub.s32 %v1741, %v1743
    %v1745 = vrot.slane %v1737, %v1744
    %v1747 = vunpack.c.l.s4 1983009808
    %v1748 = vunpack.c.0.s8 %v1747
    %v1749 = vlaneseq
    %v1750 = vshrl.u32 %v1749, 7
    %v1751 = vsub.s32 %v1748, %v1750
    %v1752 = vrot.slane %v1738, %v1751
    %v1753 = vcombine.low %v1745, %v1752
    %v1754 = vcombine.low %v908, %v916
    %v1755 = vcombine.low %v924, %v923
    %v1757 = vunpack.c.l.s4 1983009808
    %v1758 = vunpack.c.0.s8 %v1757
    %v1759 = vlaneseq
    %v1760 = vshrl.u32 %v1759, 7
    %v1761 = vsub.s32 %v1758, %v1760
    %v1762 = vrot.slane %v1754, %v1761
    %v1764 = vunpack.c.l.s4 1983009808
    %v1765 = vunpack.c.0.s8 %v1764
    %v1766 = vlaneseq
    %v1767 = vshrl.u32 %v1766, 7
    %v1768 = vsub.s32 %v1765, %v1767
    %v1769 = vrot.slane %v1755, %v1768
    %v1770 = vcombine.low %v1762, %v1769
    %v1771 = vcombine.low %v932, %v940
    %v1772 = vcombine.low %v939, %v941
    %v1774 = vunpack.c.l.s4 1983009808
    %v1775 = vunpack.c.0.s8 %v1774
    %v1776 = vlaneseq
    %v1777 = vshrl.u32 %v1776, 7
    %v1778 = vsub.s32 %v1775, %v1777
    %v1779 = vrot.slane %v1771, %v1778
    %v1781 = vunpack.c.l.s4 1983009808
    %v1782 = vunpack.c.0.s8 %v1781
    %v1783 = vlaneseq
    %v1784 = vshrl.u32 %v1783, 7
    %v1785 = vsub.s32 %v1782, %v1784
    %v1786 = vrot.slane %v1772, %v1785
    %v1787 = vcombine.low %v1779, %v1786
    %v1788 = vcombine.low %v949, %v957
    %v1789 = vcombine.low %v956, %v965
    %v1791 = vunpack.c.l.s4 1983009808
    %v1792 = vunpack.c.0.s8 %v1791
    %v1793 = vlaneseq
    %v1794 = vshrl.u32 %v1793, 7
    %v1795 = vsub.s32 %v1792, %v1794
    %v1796 = vrot.slane %v1788, %v1795
    %v1798 = vunpack.c.l.s4 1983009808
    %v1799 = vunpack.c.0.s8 %v1798
    %v1800 = vlaneseq
    %v1801 = vshrl.u32 %v1800, 7
    %v1802 = vsub.s32 %v1799, %v1801
    %v1803 = vrot.slane %v1789, %v1802
    %v1804 = vcombine.low %v1796, %v1803
    %v1805 = vcombine.low %v973, %v972
    %v1806 = vcombine.low %v974, %v982
    %v1808 = vunpack.c.l.s4 1983009808
    %v1809 = vunpack.c.0.s8 %v1808
    %v1810 = vlaneseq
    %v1811 = vshrl.u32 %v1810, 7
    %v1812 = vsub.s32 %v1809, %v1811
    %v1813 = vrot.slane %v1805, %v1812
    %v1815 = vunpack.c.l.s4 1983009808
    %v1816 = vunpack.c.0.s8 %v1815
    %v1817 = vlaneseq
    %v1818 = vshrl.u32 %v1817, 7
    %v1819 = vsub.s32 %v1816, %v1818
    %v1820 = vrot.slane %v1806, %v1819
    %v1821 = vcombine.low %v1813, %v1820
    %v1822 = vcombine.low %v990, %v989
    %v1823 = vcombine.low %v998, %v1006
    %v1825 = vunpack.c.l.s4 1983009808
    %v1826 = vunpack.c.0.s8 %v1825
    %v1827 = vlaneseq
    %v1828 = vshrl.u32 %v1827, 7
    %v1829 = vsub.s32 %v1826, %v1828
    %v1830 = vrot.slane %v1822, %v1829
    %v1832 = vunpack.c.l.s4 1983009808
    %v1833 = vunpack.c.0.s8 %v1832
    %v1834 = vlaneseq
    %v1835 = vshrl.u32 %v1834, 7
    %v1836 = vsub.s32 %v1833, %v1835
    %v1837 = vrot.slane %v1823, %v1836
    %v1838 = vcombine.low %v1830, %v1837
    %v1839 = vcombine.low %v1005, %v1007
    %v1840 = vcombine.low %v1015, %v1023
    %v1842 = vunpack.c.l.s4 1983009808
    %v1843 = vunpack.c.0.s8 %v1842
    %v1844 = vlaneseq
    %v1845 = vshrl.u32 %v1844, 7
    %v1846 = vsub.s32 %v1843, %v1845
    %v1847 = vrot.slane %v1839, %v1846
    %v1849 = vunpack.c.l.s4 1983009808
    %v1850 = vunpack.c.0.s8 %v1849
    %v1851 = vlaneseq
    %v1852 = vshrl.u32 %v1851, 7
    %v1853 = vsub.s32 %v1850, %v1852
    %v1854 = vrot.slane %v1840, %v1853
    %v1855 = vcombine.low %v1847, %v1854
    %v1856 = vcombine.low %v1022, %v1031
    %v1857 = vcombine.low %v1039, %v1038
    %v1859 = vunpack.c.l.s4 1983009808
    %v1860 = vunpack.c.0.s8 %v1859
    %v1861 = vlaneseq
    %v1862 = vshrl.u32 %v1861, 7
    %v1863 = vsub.s32 %v1860, %v1862
    %v1864 = vrot.slane %v1856, %v1863
    %v1866 = vunpack.c.l.s4 1983009808
    %v1867 = vunpack.c.0.s8 %v1866
    %v1868 = vlaneseq
    %v1869 = vshrl.u32 %v1868, 7
    %v1870 = vsub.s32 %v1867, %v1869
    %v1871 = vrot.slane %v1857, %v1870
    %v1872 = vcombine.low %v1864, %v1871
    %v1873 = vcombine.low %v1040, %v1048
    %v1874 = vcombine.low %v1056, %v1055
    %v1876 = vunpack.c.l.s4 1983009808
    %v1877 = vunpack.c.0.s8 %v1876
    %v1878 = vlaneseq
    %v1879 = vshrl.u32 %v1878, 7
    %v1880 = vsub.s32 %v1877, %v1879
    %v1881 = vrot.slane %v1873, %v1880
    %v1883 = vunpack.c.l.s4 1983009808
    %v1884 = vunpack.c.0.s8 %v1883
    %v1885 = vlaneseq
    %v1886 = vshrl.u32 %v1885, 7
    %v1887 = vsub.s32 %v1884, %v1886
    %v1888 = vrot.slane %v1874, %v1887
    %v1889 = vcombine.low %v1881, %v1888
    %vm1939 = vcmask 7168
    %1940 = vst.msk [vmem:[#allocation2] sm:$0xff] %vm1939, %v1073
    %1941 = vst.msk [vmem:[#allocation2 + $0x8] sm:$0xff] %vm1939, %v1090
    %1942 = vst.msk [vmem:[#allocation2 + $0x10] sm:$0xff] %vm1939, %v1107
    %1943 = vst.msk [vmem:[#allocation2 + $0x18] sm:$0xff] %vm1939, %v1124
    %1944 = vst.msk [vmem:[#allocation2 + $0x20] sm:$0xff] %vm1939, %v1141
    %1945 = vst.msk [vmem:[#allocation2 + $0x28] sm:$0xff] %vm1939, %v1158
    %1946 = vst.msk [vmem:[#allocation2 + $0x30] sm:$0xff] %vm1939, %v1175
    %1947 = vst.msk [vmem:[#allocation2 + $0x38] sm:$0xff] %vm1939, %v1192
    %1948 = vst.msk [vmem:[#allocation2 + $0x40] sm:$0xff] %vm1939, %v1209
    %1949 = vst.msk [vmem:[#allocation2 + $0x48] sm:$0xff] %vm1939, %v1226
    %1950 = vst.msk [vmem:[#allocation2 + $0x50] sm:$0xff] %vm1939, %v1243
    %1951 = vst.msk [vmem:[#allocation2 + $0x58] sm:$0xff] %vm1939, %v1260
    %1952 = vst.msk [vmem:[#allocation2 + $0x60] sm:$0xff] %vm1939, %v1277
    %1953 = vst.msk [vmem:[#allocation2 + $0x68] sm:$0xff] %vm1939, %v1294
    %1954 = vst.msk [vmem:[#allocation2 + $0x70] sm:$0xff] %vm1939, %v1311
    %1955 = vst.msk [vmem:[#allocation2 + $0x78] sm:$0xff] %vm1939, %v1328
    %1956 = vst.msk [vmem:[#allocation2 + $0x80] sm:$0xff] %vm1939, %v1345
    %1957 = vst.msk [vmem:[#allocation2 + $0x88] sm:$0xff] %vm1939, %v1362
    %1958 = vst.msk [vmem:[#allocation2 + $0x90] sm:$0xff] %vm1939, %v1379
    %1959 = vst.msk [vmem:[#allocation2 + $0x98] sm:$0xff] %vm1939, %v1396
    %1960 = vst.msk [vmem:[#allocation2 + $0xa0] sm:$0xff] %vm1939, %v1413
    %1961 = vst.msk [vmem:[#allocation2 + $0xa8] sm:$0xff] %vm1939, %v1430
    %1962 = vst.msk [vmem:[#allocation2 + $0xb0] sm:$0xff] %vm1939, %v1447
    %1963 = vst.msk [vmem:[#allocation2 + $0xb8] sm:$0xff] %vm1939, %v1464
    %1964 = vst.msk [vmem:[#allocation2 + $0xc0] sm:$0xff] %vm1939, %v1481
    %1965 = vst.msk [vmem:[#allocation2 + $0xc8] sm:$0xff] %vm1939, %v1498
    %1966 = vst.msk [vmem:[#allocation2 + $0xd0] sm:$0xff] %vm1939, %v1515
    %1967 = vst.msk [vmem:[#allocation2 + $0xd8] sm:$0xff] %vm1939, %v1532
    %1968 = vst.msk [vmem:[#allocation2 + $0xe0] sm:$0xff] %vm1939, %v1549
    %1969 = vst.msk [vmem:[#allocation2 + $0xe8] sm:$0xff] %vm1939, %v1566
    %1970 = vst.msk [vmem:[#allocation2 + $0xf0] sm:$0xff] %vm1939, %v1583
    %1971 = vst.msk [vmem:[#allocation2 + $0xf8] sm:$0xff] %vm1939, %v1600
    %1972 = vst.msk [vmem:[#allocation2 + $0x100] sm:$0xff] %vm1939, %v1617
    %1973 = vst.msk [vmem:[#allocation2 + $0x108] sm:$0xff] %vm1939, %v1634
    %1974 = vst.msk [vmem:[#allocation2 + $0x110] sm:$0xff] %vm1939, %v1651
    %1975 = vst.msk [vmem:[#allocation2 + $0x118] sm:$0xff] %vm1939, %v1668
    %1976 = vst.msk [vmem:[#allocation2 + $0x120] sm:$0xff] %vm1939, %v1685
    %1977 = vst.msk [vmem:[#allocation2 + $0x128] sm:$0xff] %vm1939, %v1702
    %1978 = vst.msk [vmem:[#allocation2 + $0x130] sm:$0xff] %vm1939, %v1719
    %1979 = vst.msk [vmem:[#allocation2 + $0x138] sm:$0xff] %vm1939, %v1736
    %1980 = vst.msk [vmem:[#allocation2 + $0x140] sm:$0xff] %vm1939, %v1753
    %1981 = vst.msk [vmem:[#allocation2 + $0x148] sm:$0xff] %vm1939, %v1770
    %1982 = vst.msk [vmem:[#allocation2 + $0x150] sm:$0xff] %vm1939, %v1787
    %1983 = vst.msk [vmem:[#allocation2 + $0x158] sm:$0xff] %vm1939, %v1804
    %1984 = vst.msk [vmem:[#allocation2 + $0x160] sm:$0xff] %vm1939, %v1821
    %1985 = vst.msk [vmem:[#allocation2 + $0x168] sm:$0xff] %vm1939, %v1838
    %1986 = vst.msk [vmem:[#allocation2 + $0x170] sm:$0xff] %vm1939, %v1855
    %1987 = vst.msk [vmem:[#allocation2 + $0x178] sm:$0xff] %vm1939, %v1872
    %1988 = vst.msk [vmem:[#allocation2 + $0x180] sm:$0xff] %vm1939, %v1889
    %v1989 = vcombine.high %v164, %v164
    %v1990 = vcombine.high %v197, %v197
    %v1991 = vcombine.high %v230, %v230
    %v1992 = vcombine.high %v263, %v263
    %v1993 = vcombine.high %v296, %v296
    %v1994 = vcombine.high %v329, %v329
    %v1995 = vcombine.high %v362, %v362
    %v1996 = vcombine.high %v395, %v395
    %v1997 = vcombine.high %v428, %v428
    %v1998 = vcombine.high %v461, %v461
    %v1999 = vcombine.high %v494, %v494
    %v2000 = vcombine.high %v527, %v527
    %v2001 = vcombine.high %v560, %v560
    %v2002 = vcombine.high %v593, %v593
    %v2003 = vcombine.high %v626, %v626
    %v2004 = vcombine.high %v659, %v659
    %v2005 = vcombine.high %v692, %v692
    %v2006 = vcombine.high %v725, %v725
    %v2007 = vcombine.high %v758, %v758
    %v2008 = vcombine.high %v791, %v791
    %v2009 = vcombine.high %v824, %v824
    %v2010 = vcombine.high %v857, %v857
    %v2011 = vcombine.high %v890, %v890
    %v2012 = vcombine.high %v923, %v923
    %v2013 = vcombine.high %v956, %v956
    %v2014 = vcombine.high %v989, %v989
    %v2015 = vcombine.high %v1022, %v1022
    %v2016 = vcombine.high %v1055, %v1055
    %vm2017 = vcmask 1040384
    %vm2018 = vcmask 1042434
    %vm2019 = vmor %vm2017, %vm2018
    %vm2020 = vcmask 1044484
    %vm2021 = vmor %vm2019, %vm2020
    %vm2022 = vcmask 1046534
    %vm2023 = vmor %vm2021, %vm2022
    %v2024 = vrot.slane %v140, 7
    %v2025 = vrot.slane %v2024, 2
    %v2026 = vrot.slane %v148, 7
    %v2027 = vsel %vm2023, %v2025, %v2026
    %v2028 = vrot.slane %v2026, 2
    %v2029 = vrot.slane %v147, 7
    %v2030 = vsel %vm2023, %v2028, %v2029
    %v2031 = vrot.slane %v2029, 2
    %v2032 = vrot.slane %v149, 7
    %v2033 = vsel %vm2023, %v2031, %v2032
    %v2034 = vrot.slane %v2032, 2
    %v2035 = vrot.slane %v157, 7
    %v2036 = vsel %vm2023, %v2034, %v2035
    %v2037 = vrot.slane %v2035, 2
    %v2038 = vrot.slane %v165, 7
    %v2039 = vsel %vm2023, %v2037, %v2038
    %v2040 = vrot.slane %v2038, 2
    %v2041 = vrot.slane %v164, 7
    %v2042 = vsel %vm2023, %v2040, %v2041
    %v2043 = vrot.slane %v2041, 2
    %v2044 = vrot.slane %v1989, 7
    %v2045 = vsel %vm2023, %v2043, %v2044
    %v2046 = vrot.slane %v173, 7
    %v2047 = vrot.slane %v2046, 2
    %v2048 = vrot.slane %v181, 7
    %v2049 = vsel %vm2023, %v2047, %v2048
    %v2050 = vrot.slane %v2048, 2
    %v2051 = vrot.slane %v180, 7
    %v2052 = vsel %vm2023, %v2050, %v2051
    %v2053 = vrot.slane %v2051, 2
    %v2054 = vrot.slane %v182, 7
    %v2055 = vsel %vm2023, %v2053, %v2054
    %v2056 = vrot.slane %v2054, 2
    %v2057 = vrot.slane %v190, 7
    %v2058 = vsel %vm2023, %v2056, %v2057
    %v2059 = vrot.slane %v2057, 2
    %v2060 = vrot.slane %v198, 7
    %v2061 = vsel %vm2023, %v2059, %v2060
    %v2062 = vrot.slane %v2060, 2
    %v2063 = vrot.slane %v197, 7
    %v2064 = vsel %vm2023, %v2062, %v2063
    %v2065 = vrot.slane %v2063, 2
    %v2066 = vrot.slane %v1990, 7
    %v2067 = vsel %vm2023, %v2065, %v2066
    %v2068 = vrot.slane %v206, 7
    %v2069 = vrot.slane %v2068, 2
    %v2070 = vrot.slane %v214, 7
    %v2071 = vsel %vm2023, %v2069, %v2070
    %v2072 = vrot.slane %v2070, 2
    %v2073 = vrot.slane %v213, 7
    %v2074 = vsel %vm2023, %v2072, %v2073
    %v2075 = vrot.slane %v2073, 2
    %v2076 = vrot.slane %v215, 7
    %v2077 = vsel %vm2023, %v2075, %v2076
    %v2078 = vrot.slane %v2076, 2
    %v2079 = vrot.slane %v223, 7
    %v2080 = vsel %vm2023, %v2078, %v2079
    %v2081 = vrot.slane %v2079, 2
    %v2082 = vrot.slane %v231, 7
    %v2083 = vsel %vm2023, %v2081, %v2082
    %v2084 = vrot.slane %v2082, 2
    %v2085 = vrot.slane %v230, 7
    %v2086 = vsel %vm2023, %v2084, %v2085
    %v2087 = vrot.slane %v2085, 2
    %v2088 = vrot.slane %v1991, 7
    %v2089 = vsel %vm2023, %v2087, %v2088
    %v2090 = vrot.slane %v239, 7
    %v2091 = vrot.slane %v2090, 2
    %v2092 = vrot.slane %v247, 7
    %v2093 = vsel %vm2023, %v2091, %v2092
    %v2094 = vrot.slane %v2092, 2
    %v2095 = vrot.slane %v246, 7
    %v2096 = vsel %vm2023, %v2094, %v2095
    %v2097 = vrot.slane %v2095, 2
    %v2098 = vrot.slane %v248, 7
    %v2099 = vsel %vm2023, %v2097, %v2098
    %v2100 = vrot.slane %v2098, 2
    %v2101 = vrot.slane %v256, 7
    %v2102 = vsel %vm2023, %v2100, %v2101
    %v2103 = vrot.slane %v2101, 2
    %v2104 = vrot.slane %v264, 7
    %v2105 = vsel %vm2023, %v2103, %v2104
    %v2106 = vrot.slane %v2104, 2
    %v2107 = vrot.slane %v263, 7
    %v2108 = vsel %vm2023, %v2106, %v2107
    %v2109 = vrot.slane %v2107, 2
    %v2110 = vrot.slane %v1992, 7
    %v2111 = vsel %vm2023, %v2109, %v2110
    %v2112 = vrot.slane %v272, 7
    %v2113 = vrot.slane %v2112, 2
    %v2114 = vrot.slane %v280, 7
    %v2115 = vsel %vm2023, %v2113, %v2114
    %v2116 = vrot.slane %v2114, 2
    %v2117 = vrot.slane %v279, 7
    %v2118 = vsel %vm2023, %v2116, %v2117
    %v2119 = vrot.slane %v2117, 2
    %v2120 = vrot.slane %v281, 7
    %v2121 = vsel %vm2023, %v2119, %v2120
    %v2122 = vrot.slane %v2120, 2
    %v2123 = vrot.slane %v289, 7
    %v2124 = vsel %vm2023, %v2122, %v2123
    %v2125 = vrot.slane %v2123, 2
    %v2126 = vrot.slane %v297, 7
    %v2127 = vsel %vm2023, %v2125, %v2126
    %v2128 = vrot.slane %v2126, 2
    %v2129 = vrot.slane %v296, 7
    %v2130 = vsel %vm2023, %v2128, %v2129
    %v2131 = vrot.slane %v2129, 2
    %v2132 = vrot.slane %v1993, 7
    %v2133 = vsel %vm2023, %v2131, %v2132
    %v2134 = vrot.slane %v305, 7
    %v2135 = vrot.slane %v2134, 2
    %v2136 = vrot.slane %v313, 7
    %v2137 = vsel %vm2023, %v2135, %v2136
    %v2138 = vrot.slane %v2136, 2
    %v2139 = vrot.slane %v312, 7
    %v2140 = vsel %vm2023, %v2138, %v2139
    %v2141 = vrot.slane %v2139, 2
    %v2142 = vrot.slane %v314, 7
    %v2143 = vsel %vm2023, %v2141, %v2142
    %v2144 = vrot.slane %v2142, 2
    %v2145 = vrot.slane %v322, 7
    %v2146 = vsel %vm2023, %v2144, %v2145
    %v2147 = vrot.slane %v2145, 2
    %v2148 = vrot.slane %v330, 7
    %v2149 = vsel %vm2023, %v2147, %v2148
    %v2150 = vrot.slane %v2148, 2
    %v2151 = vrot.slane %v329, 7
    %v2152 = vsel %vm2023, %v2150, %v2151
    %v2153 = vrot.slane %v2151, 2
    %v2154 = vrot.slane %v1994, 7
    %v2155 = vsel %vm2023, %v2153, %v2154
    %v2156 = vrot.slane %v338, 7
    %v2157 = vrot.slane %v2156, 2
    %v2158 = vrot.slane %v346, 7
    %v2159 = vsel %vm2023, %v2157, %v2158
    %v2160 = vrot.slane %v2158, 2
    %v2161 = vrot.slane %v345, 7
    %v2162 = vsel %vm2023, %v2160, %v2161
    %v2163 = vrot.slane %v2161, 2
    %v2164 = vrot.slane %v347, 7
    %v2165 = vsel %vm2023, %v2163, %v2164
    %v2166 = vrot.slane %v2164, 2
    %v2167 = vrot.slane %v355, 7
    %v2168 = vsel %vm2023, %v2166, %v2167
    %v2169 = vrot.slane %v2167, 2
    %v2170 = vrot.slane %v363, 7
    %v2171 = vsel %vm2023, %v2169, %v2170
    %v2172 = vrot.slane %v2170, 2
    %v2173 = vrot.slane %v362, 7
    %v2174 = vsel %vm2023, %v2172, %v2173
    %v2175 = vrot.slane %v2173, 2
    %v2176 = vrot.slane %v1995, 7
    %v2177 = vsel %vm2023, %v2175, %v2176
    %v2178 = vrot.slane %v371, 7
    %v2179 = vrot.slane %v2178, 2
    %v2180 = vrot.slane %v379, 7
    %v2181 = vsel %vm2023, %v2179, %v2180
    %v2182 = vrot.slane %v2180, 2
    %v2183 = vrot.slane %v378, 7
    %v2184 = vsel %vm2023, %v2182, %v2183
    %v2185 = vrot.slane %v2183, 2
    %v2186 = vrot.slane %v380, 7
    %v2187 = vsel %vm2023, %v2185, %v2186
    %v2188 = vrot.slane %v2186, 2
    %v2189 = vrot.slane %v388, 7
    %v2190 = vsel %vm2023, %v2188, %v2189
    %v2191 = vrot.slane %v2189, 2
    %v2192 = vrot.slane %v396, 7
    %v2193 = vsel %vm2023, %v2191, %v2192
    %v2194 = vrot.slane %v2192, 2
    %v2195 = vrot.slane %v395, 7
    %v2196 = vsel %vm2023, %v2194, %v2195
    %v2197 = vrot.slane %v2195, 2
    %v2198 = vrot.slane %v1996, 7
    %v2199 = vsel %vm2023, %v2197, %v2198
    %v2200 = vrot.slane %v404, 7
    %v2201 = vrot.slane %v2200, 2
    %v2202 = vrot.slane %v412, 7
    %v2203 = vsel %vm2023, %v2201, %v2202
    %v2204 = vrot.slane %v2202, 2
    %v2205 = vrot.slane %v411, 7
    %v2206 = vsel %vm2023, %v2204, %v2205
    %v2207 = vrot.slane %v2205, 2
    %v2208 = vrot.slane %v413, 7
    %v2209 = vsel %vm2023, %v2207, %v2208
    %v2210 = vrot.slane %v2208, 2
    %v2211 = vrot.slane %v421, 7
    %v2212 = vsel %vm2023, %v2210, %v2211
    %v2213 = vrot.slane %v2211, 2
    %v2214 = vrot.slane %v429, 7
    %v2215 = vsel %vm2023, %v2213, %v2214
    %v2216 = vrot.slane %v2214, 2
    %v2217 = vrot.slane %v428, 7
    %v2218 = vsel %vm2023, %v2216, %v2217
    %v2219 = vrot.slane %v2217, 2
    %v2220 = vrot.slane %v1997, 7
    %v2221 = vsel %vm2023, %v2219, %v2220
    %v2222 = vrot.slane %v437, 7
    %v2223 = vrot.slane %v2222, 2
    %v2224 = vrot.slane %v445, 7
    %v2225 = vsel %vm2023, %v2223, %v2224
    %v2226 = vrot.slane %v2224, 2
    %v2227 = vrot.slane %v444, 7
    %v2228 = vsel %vm2023, %v2226, %v2227
    %v2229 = vrot.slane %v2227, 2
    %v2230 = vrot.slane %v446, 7
    %v2231 = vsel %vm2023, %v2229, %v2230
    %v2232 = vrot.slane %v2230, 2
    %v2233 = vrot.slane %v454, 7
    %v2234 = vsel %vm2023, %v2232, %v2233
    %v2235 = vrot.slane %v2233, 2
    %v2236 = vrot.slane %v462, 7
    %v2237 = vsel %vm2023, %v2235, %v2236
    %v2238 = vrot.slane %v2236, 2
    %v2239 = vrot.slane %v461, 7
    %v2240 = vsel %vm2023, %v2238, %v2239
    %v2241 = vrot.slane %v2239, 2
    %v2242 = vrot.slane %v1998, 7
    %v2243 = vsel %vm2023, %v2241, %v2242
    %v2244 = vrot.slane %v470, 7
    %v2245 = vrot.slane %v2244, 2
    %v2246 = vrot.slane %v478, 7
    %v2247 = vsel %vm2023, %v2245, %v2246
    %v2248 = vrot.slane %v2246, 2
    %v2249 = vrot.slane %v477, 7
    %v2250 = vsel %vm2023, %v2248, %v2249
    %v2251 = vrot.slane %v2249, 2
    %v2252 = vrot.slane %v479, 7
    %v2253 = vsel %vm2023, %v2251, %v2252
    %v2254 = vrot.slane %v2252, 2
    %v2255 = vrot.slane %v487, 7
    %v2256 = vsel %vm2023, %v2254, %v2255
    %v2257 = vrot.slane %v2255, 2
    %v2258 = vrot.slane %v495, 7
    %v2259 = vsel %vm2023, %v2257, %v2258
    %v2260 = vrot.slane %v2258, 2
    %v2261 = vrot.slane %v494, 7
    %v2262 = vsel %vm2023, %v2260, %v2261
    %v2263 = vrot.slane %v2261, 2
    %v2264 = vrot.slane %v1999, 7
    %v2265 = vsel %vm2023, %v2263, %v2264
    %v2266 = vrot.slane %v503, 7
    %v2267 = vrot.slane %v2266, 2
    %v2268 = vrot.slane %v511, 7
    %v2269 = vsel %vm2023, %v2267, %v2268
    %v2270 = vrot.slane %v2268, 2
    %v2271 = vrot.slane %v510, 7
    %v2272 = vsel %vm2023, %v2270, %v2271
    %v2273 = vrot.slane %v2271, 2
    %v2274 = vrot.slane %v512, 7
    %v2275 = vsel %vm2023, %v2273, %v2274
    %v2276 = vrot.slane %v2274, 2
    %v2277 = vrot.slane %v520, 7
    %v2278 = vsel %vm2023, %v2276, %v2277
    %v2279 = vrot.slane %v2277, 2
    %v2280 = vrot.slane %v528, 7
    %v2281 = vsel %vm2023, %v2279, %v2280
    %v2282 = vrot.slane %v2280, 2
    %v2283 = vrot.slane %v527, 7
    %v2284 = vsel %vm2023, %v2282, %v2283
    %v2285 = vrot.slane %v2283, 2
    %v2286 = vrot.slane %v2000, 7
    %v2287 = vsel %vm2023, %v2285, %v2286
    %v2288 = vrot.slane %v536, 7
    %v2289 = vrot.slane %v2288, 2
    %v2290 = vrot.slane %v544, 7
    %v2291 = vsel %vm2023, %v2289, %v2290
    %v2292 = vrot.slane %v2290, 2
    %v2293 = vrot.slane %v543, 7
    %v2294 = vsel %vm2023, %v2292, %v2293
    %v2295 = vrot.slane %v2293, 2
    %v2296 = vrot.slane %v545, 7
    %v2297 = vsel %vm2023, %v2295, %v2296
    %v2298 = vrot.slane %v2296, 2
    %v2299 = vrot.slane %v553, 7
    %v2300 = vsel %vm2023, %v2298, %v2299
    %v2301 = vrot.slane %v2299, 2
    %v2302 = vrot.slane %v561, 7
    %v2303 = vsel %vm2023, %v2301, %v2302
    %v2304 = vrot.slane %v2302, 2
    %v2305 = vrot.slane %v560, 7
    %v2306 = vsel %vm2023, %v2304, %v2305
    %v2307 = vrot.slane %v2305, 2
    %v2308 = vrot.slane %v2001, 7
    %v2309 = vsel %vm2023, %v2307, %v2308
    %v2310 = vrot.slane %v569, 7
    %v2311 = vrot.slane %v2310, 2
    %v2312 = vrot.slane %v577, 7
    %v2313 = vsel %vm2023, %v2311, %v2312
    %v2314 = vrot.slane %v2312, 2
    %v2315 = vrot.slane %v576, 7
    %v2316 = vsel %vm2023, %v2314, %v2315
    %v2317 = vrot.slane %v2315, 2
    %v2318 = vrot.slane %v578, 7
    %v2319 = vsel %vm2023, %v2317, %v2318
    %v2320 = vrot.slane %v2318, 2
    %v2321 = vrot.slane %v586, 7
    %v2322 = vsel %vm2023, %v2320, %v2321
    %v2323 = vrot.slane %v2321, 2
    %v2324 = vrot.slane %v594, 7
    %v2325 = vsel %vm2023, %v2323, %v2324
    %v2326 = vrot.slane %v2324, 2
    %v2327 = vrot.slane %v593, 7
    %v2328 = vsel %vm2023, %v2326, %v2327
    %v2329 = vrot.slane %v2327, 2
    %v2330 = vrot.slane %v2002, 7
    %v2331 = vsel %vm2023, %v2329, %v2330
    %v2332 = vrot.slane %v602, 7
    %v2333 = vrot.slane %v2332, 2
    %v2334 = vrot.slane %v610, 7
    %v2335 = vsel %vm2023, %v2333, %v2334
    %v2336 = vrot.slane %v2334, 2
    %v2337 = vrot.slane %v609, 7
    %v2338 = vsel %vm2023, %v2336, %v2337
    %v2339 = vrot.slane %v2337, 2
    %v2340 = vrot.slane %v611, 7
    %v2341 = vsel %vm2023, %v2339, %v2340
    %v2342 = vrot.slane %v2340, 2
    %v2343 = vrot.slane %v619, 7
    %v2344 = vsel %vm2023, %v2342, %v2343
    %v2345 = vrot.slane %v2343, 2
    %v2346 = vrot.slane %v627, 7
    %v2347 = vsel %vm2023, %v2345, %v2346
    %v2348 = vrot.slane %v2346, 2
    %v2349 = vrot.slane %v626, 7
    %v2350 = vsel %vm2023, %v2348, %v2349
    %v2351 = vrot.slane %v2349, 2
    %v2352 = vrot.slane %v2003, 7
    %v2353 = vsel %vm2023, %v2351, %v2352
    %v2354 = vrot.slane %v635, 7
    %v2355 = vrot.slane %v2354, 2
    %v2356 = vrot.slane %v643, 7
    %v2357 = vsel %vm2023, %v2355, %v2356
    %v2358 = vrot.slane %v2356, 2
    %v2359 = vrot.slane %v642, 7
    %v2360 = vsel %vm2023, %v2358, %v2359
    %v2361 = vrot.slane %v2359, 2
    %v2362 = vrot.slane %v644, 7
    %v2363 = vsel %vm2023, %v2361, %v2362
    %v2364 = vrot.slane %v2362, 2
    %v2365 = vrot.slane %v652, 7
    %v2366 = vsel %vm2023, %v2364, %v2365
    %v2367 = vrot.slane %v2365, 2
    %v2368 = vrot.slane %v660, 7
    %v2369 = vsel %vm2023, %v2367, %v2368
    %v2370 = vrot.slane %v2368, 2
    %v2371 = vrot.slane %v659, 7
    %v2372 = vsel %vm2023, %v2370, %v2371
    %v2373 = vrot.slane %v2371, 2
    %v2374 = vrot.slane %v2004, 7
    %v2375 = vsel %vm2023, %v2373, %v2374
    %v2376 = vrot.slane %v668, 7
    %v2377 = vrot.slane %v2376, 2
    %v2378 = vrot.slane %v676, 7
    %v2379 = vsel %vm2023, %v2377, %v2378
    %v2380 = vrot.slane %v2378, 2
    %v2381 = vrot.slane %v675, 7
    %v2382 = vsel %vm2023, %v2380, %v2381
    %v2383 = vrot.slane %v2381, 2
    %v2384 = vrot.slane %v677, 7
    %v2385 = vsel %vm2023, %v2383, %v2384
    %v2386 = vrot.slane %v2384, 2
    %v2387 = vrot.slane %v685, 7
    %v2388 = vsel %vm2023, %v2386, %v2387
    %v2389 = vrot.slane %v2387, 2
    %v2390 = vrot.slane %v693, 7
    %v2391 = vsel %vm2023, %v2389, %v2390
    %v2392 = vrot.slane %v2390, 2
    %v2393 = vrot.slane %v692, 7
    %v2394 = vsel %vm2023, %v2392, %v2393
    %v2395 = vrot.slane %v2393, 2
    %v2396 = vrot.slane %v2005, 7
    %v2397 = vsel %vm2023, %v2395, %v2396
    %v2398 = vrot.slane %v701, 7
    %v2399 = vrot.slane %v2398, 2
    %v2400 = vrot.slane %v709, 7
    %v2401 = vsel %vm2023, %v2399, %v2400
    %v2402 = vrot.slane %v2400, 2
    %v2403 = vrot.slane %v708, 7
    %v2404 = vsel %vm2023, %v2402, %v2403
    %v2405 = vrot.slane %v2403, 2
    %v2406 = vrot.slane %v710, 7
    %v2407 = vsel %vm2023, %v2405, %v2406
    %v2408 = vrot.slane %v2406, 2
    %v2409 = vrot.slane %v718, 7
    %v2410 = vsel %vm2023, %v2408, %v2409
    %v2411 = vrot.slane %v2409, 2
    %v2412 = vrot.slane %v726, 7
    %v2413 = vsel %vm2023, %v2411, %v2412
    %v2414 = vrot.slane %v2412, 2
    %v2415 = vrot.slane %v725, 7
    %v2416 = vsel %vm2023, %v2414, %v2415
    %v2417 = vrot.slane %v2415, 2
    %v2418 = vrot.slane %v2006, 7
    %v2419 = vsel %vm2023, %v2417, %v2418
    %v2420 = vrot.slane %v734, 7
    %v2421 = vrot.slane %v2420, 2
    %v2422 = vrot.slane %v742, 7
    %v2423 = vsel %vm2023, %v2421, %v2422
    %v2424 = vrot.slane %v2422, 2
    %v2425 = vrot.slane %v741, 7
    %v2426 = vsel %vm2023, %v2424, %v2425
    %v2427 = vrot.slane %v2425, 2
    %v2428 = vrot.slane %v743, 7
    %v2429 = vsel %vm2023, %v2427, %v2428
    %v2430 = vrot.slane %v2428, 2
    %v2431 = vrot.slane %v751, 7
    %v2432 = vsel %vm2023, %v2430, %v2431
    %v2433 = vrot.slane %v2431, 2
    %v2434 = vrot.slane %v759, 7
    %v2435 = vsel %vm2023, %v2433, %v2434
    %v2436 = vrot.slane %v2434, 2
    %v2437 = vrot.slane %v758, 7
    %v2438 = vsel %vm2023, %v2436, %v2437
    %v2439 = vrot.slane %v2437, 2
    %v2440 = vrot.slane %v2007, 7
    %v2441 = vsel %vm2023, %v2439, %v2440
    %v2442 = vrot.slane %v767, 7
    %v2443 = vrot.slane %v2442, 2
    %v2444 = vrot.slane %v775, 7
    %v2445 = vsel %vm2023, %v2443, %v2444
    %v2446 = vrot.slane %v2444, 2
    %v2447 = vrot.slane %v774, 7
    %v2448 = vsel %vm2023, %v2446, %v2447
    %v2449 = vrot.slane %v2447, 2
    %v2450 = vrot.slane %v776, 7
    %v2451 = vsel %vm2023, %v2449, %v2450
    %v2452 = vrot.slane %v2450, 2
    %v2453 = vrot.slane %v784, 7
    %v2454 = vsel %vm2023, %v2452, %v2453
    %v2455 = vrot.slane %v2453, 2
    %v2456 = vrot.slane %v792, 7
    %v2457 = vsel %vm2023, %v2455, %v2456
    %v2458 = vrot.slane %v2456, 2
    %v2459 = vrot.slane %v791, 7
    %v2460 = vsel %vm2023, %v2458, %v2459
    %v2461 = vrot.slane %v2459, 2
    %v2462 = vrot.slane %v2008, 7
    %v2463 = vsel %vm2023, %v2461, %v2462
    %v2464 = vrot.slane %v800, 7
    %v2465 = vrot.slane %v2464, 2
    %v2466 = vrot.slane %v808, 7
    %v2467 = vsel %vm2023, %v2465, %v2466
    %v2468 = vrot.slane %v2466, 2
    %v2469 = vrot.slane %v807, 7
    %v2470 = vsel %vm2023, %v2468, %v2469
    %v2471 = vrot.slane %v2469, 2
    %v2472 = vrot.slane %v809, 7
    %v2473 = vsel %vm2023, %v2471, %v2472
    %v2474 = vrot.slane %v2472, 2
    %v2475 = vrot.slane %v817, 7
    %v2476 = vsel %vm2023, %v2474, %v2475
    %v2477 = vrot.slane %v2475, 2
    %v2478 = vrot.slane %v825, 7
    %v2479 = vsel %vm2023, %v2477, %v2478
    %v2480 = vrot.slane %v2478, 2
    %v2481 = vrot.slane %v824, 7
    %v2482 = vsel %vm2023, %v2480, %v2481
    %v2483 = vrot.slane %v2481, 2
    %v2484 = vrot.slane %v2009, 7
    %v2485 = vsel %vm2023, %v2483, %v2484
    %v2486 = vrot.slane %v833, 7
    %v2487 = vrot.slane %v2486, 2
    %v2488 = vrot.slane %v841, 7
    %v2489 = vsel %vm2023, %v2487, %v2488
    %v2490 = vrot.slane %v2488, 2
    %v2491 = vrot.slane %v840, 7
    %v2492 = vsel %vm2023, %v2490, %v2491
    %v2493 = vrot.slane %v2491, 2
    %v2494 = vrot.slane %v842, 7
    %v2495 = vsel %vm2023, %v2493, %v2494
    %v2496 = vrot.slane %v2494, 2
    %v2497 = vrot.slane %v850, 7
    %v2498 = vsel %vm2023, %v2496, %v2497
    %v2499 = vrot.slane %v2497, 2
    %v2500 = vrot.slane %v858, 7
    %v2501 = vsel %vm2023, %v2499, %v2500
    %v2502 = vrot.slane %v2500, 2
    %v2503 = vrot.slane %v857, 7
    %v2504 = vsel %vm2023, %v2502, %v2503
    %v2505 = vrot.slane %v2503, 2
    %v2506 = vrot.slane %v2010, 7
    %v2507 = vsel %vm2023, %v2505, %v2506
    %v2508 = vrot.slane %v866, 7
    %v2509 = vrot.slane %v2508, 2
    %v2510 = vrot.slane %v874, 7
    %v2511 = vsel %vm2023, %v2509, %v2510
    %v2512 = vrot.slane %v2510, 2
    %v2513 = vrot.slane %v873, 7
    %v2514 = vsel %vm2023, %v2512, %v2513
    %v2515 = vrot.slane %v2513, 2
    %v2516 = vrot.slane %v875, 7
    %v2517 = vsel %vm2023, %v2515, %v2516
    %v2518 = vrot.slane %v2516, 2
    %v2519 = vrot.slane %v883, 7
    %v2520 = vsel %vm2023, %v2518, %v2519
    %v2521 = vrot.slane %v2519, 2
    %v2522 = vrot.slane %v891, 7
    %v2523 = vsel %vm2023, %v2521, %v2522
    %v2524 = vrot.slane %v2522, 2
    %v2525 = vrot.slane %v890, 7
    %v2526 = vsel %vm2023, %v2524, %v2525
    %v2527 = vrot.slane %v2525, 2
    %v2528 = vrot.slane %v2011, 7
    %v2529 = vsel %vm2023, %v2527, %v2528
    %v2530 = vrot.slane %v899, 7
    %v2531 = vrot.slane %v2530, 2
    %v2532 = vrot.slane %v907, 7
    %v2533 = vsel %vm2023, %v2531, %v2532
    %v2534 = vrot.slane %v2532, 2
    %v2535 = vrot.slane %v906, 7
    %v2536 = vsel %vm2023, %v2534, %v2535
    %v2537 = vrot.slane %v2535, 2
    %v2538 = vrot.slane %v908, 7
    %v2539 = vsel %vm2023, %v2537, %v2538
    %v2540 = vrot.slane %v2538, 2
    %v2541 = vrot.slane %v916, 7
    %v2542 = vsel %vm2023, %v2540, %v2541
    %v2543 = vrot.slane %v2541, 2
    %v2544 = vrot.slane %v924, 7
    %v2545 = vsel %vm2023, %v2543, %v2544
    %v2546 = vrot.slane %v2544, 2
    %v2547 = vrot.slane %v923, 7
    %v2548 = vsel %vm2023, %v2546, %v2547
    %v2549 = vrot.slane %v2547, 2
    %v2550 = vrot.slane %v2012, 7
    %v2551 = vsel %vm2023, %v2549, %v2550
    %v2552 = vrot.slane %v932, 7
    %v2553 = vrot.slane %v2552, 2
    %v2554 = vrot.slane %v940, 7
    %v2555 = vsel %vm2023, %v2553, %v2554
    %v2556 = vrot.slane %v2554, 2
    %v2557 = vrot.slane %v939, 7
    %v2558 = vsel %vm2023, %v2556, %v2557
    %v2559 = vrot.slane %v2557, 2
    %v2560 = vrot.slane %v941, 7
    %v2561 = vsel %vm2023, %v2559, %v2560
    %v2562 = vrot.slane %v2560, 2
    %v2563 = vrot.slane %v949, 7
    %v2564 = vsel %vm2023, %v2562, %v2563
    %v2565 = vrot.slane %v2563, 2
    %v2566 = vrot.slane %v957, 7
    %v2567 = vsel %vm2023, %v2565, %v2566
    %v2568 = vrot.slane %v2566, 2
    %v2569 = vrot.slane %v956, 7
    %v2570 = vsel %vm2023, %v2568, %v2569
    %v2571 = vrot.slane %v2569, 2
    %v2572 = vrot.slane %v2013, 7
    %v2573 = vsel %vm2023, %v2571, %v2572
    %v2574 = vrot.slane %v965, 7
    %v2575 = vrot.slane %v2574, 2
    %v2576 = vrot.slane %v973, 7
    %v2577 = vsel %vm2023, %v2575, %v2576
    %v2578 = vrot.slane %v2576, 2
    %v2579 = vrot.slane %v972, 7
    %v2580 = vsel %vm2023, %v2578, %v2579
    %v2581 = vrot.slane %v2579, 2
    %v2582 = vrot.slane %v974, 7
    %v2583 = vsel %vm2023, %v2581, %v2582
    %v2584 = vrot.slane %v2582, 2
    %v2585 = vrot.slane %v982, 7
    %v2586 = vsel %vm2023, %v2584, %v2585
    %v2587 = vrot.slane %v2585, 2
    %v2588 = vrot.slane %v990, 7
    %v2589 = vsel %vm2023, %v2587, %v2588
    %v2590 = vrot.slane %v2588, 2
    %v2591 = vrot.slane %v989, 7
    %v2592 = vsel %vm2023, %v2590, %v2591
    %v2593 = vrot.slane %v2591, 2
    %v2594 = vrot.slane %v2014, 7
    %v2595 = vsel %vm2023, %v2593, %v2594
    %v2596 = vrot.slane %v998, 7
    %v2597 = vrot.slane %v2596, 2
    %v2598 = vrot.slane %v1006, 7
    %v2599 = vsel %vm2023, %v2597, %v2598
    %v2600 = vrot.slane %v2598, 2
    %v2601 = vrot.slane %v1005, 7
    %v2602 = vsel %vm2023, %v2600, %v2601
    %v2603 = vrot.slane %v2601, 2
    %v2604 = vrot.slane %v1007, 7
    %v2605 = vsel %vm2023, %v2603, %v2604
    %v2606 = vrot.slane %v2604, 2
    %v2607 = vrot.slane %v1015, 7
    %v2608 = vsel %vm2023, %v2606, %v2607
    %v2609 = vrot.slane %v2607, 2
    %v2610 = vrot.slane %v1023, 7
    %v2611 = vsel %vm2023, %v2609, %v2610
    %v2612 = vrot.slane %v2610, 2
    %v2613 = vrot.slane %v1022, 7
    %v2614 = vsel %vm2023, %v2612, %v2613
    %v2615 = vrot.slane %v2613, 2
    %v2616 = vrot.slane %v2015, 7
    %v2617 = vsel %vm2023, %v2615, %v2616
    %v2618 = vrot.slane %v1031, 7
    %v2619 = vrot.slane %v2618, 2
    %v2620 = vrot.slane %v1039, 7
    %v2621 = vsel %vm2023, %v2619, %v2620
    %v2622 = vrot.slane %v2620, 2
    %v2623 = vrot.slane %v1038, 7
    %v2624 = vsel %vm2023, %v2622, %v2623
    %v2625 = vrot.slane %v2623, 2
    %v2626 = vrot.slane %v1040, 7
    %v2627 = vsel %vm2023, %v2625, %v2626
    %v2628 = vrot.slane %v2626, 2
    %v2629 = vrot.slane %v1048, 7
    %v2630 = vsel %vm2023, %v2628, %v2629
    %v2631 = vrot.slane %v2629, 2
    %v2632 = vrot.slane %v1056, 7
    %v2633 = vsel %vm2023, %v2631, %v2632
    %v2634 = vrot.slane %v2632, 2
    %v2635 = vrot.slane %v1055, 7
    %v2636 = vsel %vm2023, %v2634, %v2635
    %v2637 = vrot.slane %v2635, 2
    %v2638 = vrot.slane %v2016, 7
    %v2639 = vsel %vm2023, %v2637, %v2638
    %v2640 = vcombine.low %v2027, %v2030
    %v2641 = vcombine.low %v2033, %v2036
    %v2643 = vunpack.c.l.s4 1983009808
    %v2644 = vunpack.c.0.s8 %v2643
    %v2645 = vlaneseq
    %v2646 = vshrl.u32 %v2645, 7
    %v2647 = vsub.s32 %v2644, %v2646
    %v2648 = vrot.slane %v2640, %v2647
    %v2650 = vunpack.c.l.s4 1983009808
    %v2651 = vunpack.c.0.s8 %v2650
    %v2652 = vlaneseq
    %v2653 = vshrl.u32 %v2652, 7
    %v2654 = vsub.s32 %v2651, %v2653
    %v2655 = vrot.slane %v2641, %v2654
    %v2656 = vcombine.low %v2648, %v2655
    %v2657 = vcombine.low %v2039, %v2042
    %v2658 = vcombine.low %v2045, %v2049
    %v2660 = vunpack.c.l.s4 1983009808
    %v2661 = vunpack.c.0.s8 %v2660
    %v2662 = vlaneseq
    %v2663 = vshrl.u32 %v2662, 7
    %v2664 = vsub.s32 %v2661, %v2663
    %v2665 = vrot.slane %v2657, %v2664
    %v2667 = vunpack.c.l.s4 1983009808
    %v2668 = vunpack.c.0.s8 %v2667
    %v2669 = vlaneseq
    %v2670 = vshrl.u32 %v2669, 7
    %v2671 = vsub.s32 %v2668, %v2670
    %v2672 = vrot.slane %v2658, %v2671
    %v2673 = vcombine.low %v2665, %v2672
    %v2674 = vcombine.low %v2052, %v2055
    %v2675 = vcombine.low %v2058, %v2061
    %v2677 = vunpack.c.l.s4 1983009808
    %v2678 = vunpack.c.0.s8 %v2677
    %v2679 = vlaneseq
    %v2680 = vshrl.u32 %v2679, 7
    %v2681 = vsub.s32 %v2678, %v2680
    %v2682 = vrot.slane %v2674, %v2681
    %v2684 = vunpack.c.l.s4 1983009808
    %v2685 = vunpack.c.0.s8 %v2684
    %v2686 = vlaneseq
    %v2687 = vshrl.u32 %v2686, 7
    %v2688 = vsub.s32 %v2685, %v2687
    %v2689 = vrot.slane %v2675, %v2688
    %v2690 = vcombine.low %v2682, %v2689
    %v2691 = vcombine.low %v2064, %v2067
    %v2692 = vcombine.low %v2071, %v2074
    %v2694 = vunpack.c.l.s4 1983009808
    %v2695 = vunpack.c.0.s8 %v2694
    %v2696 = vlaneseq
    %v2697 = vshrl.u32 %v2696, 7
    %v2698 = vsub.s32 %v2695, %v2697
    %v2699 = vrot.slane %v2691, %v2698
    %v2701 = vunpack.c.l.s4 1983009808
    %v2702 = vunpack.c.0.s8 %v2701
    %v2703 = vlaneseq
    %v2704 = vshrl.u32 %v2703, 7
    %v2705 = vsub.s32 %v2702, %v2704
    %v2706 = vrot.slane %v2692, %v2705
    %v2707 = vcombine.low %v2699, %v2706
    %v2708 = vcombine.low %v2077, %v2080
    %v2709 = vcombine.low %v2083, %v2086
    %v2711 = vunpack.c.l.s4 1983009808
    %v2712 = vunpack.c.0.s8 %v2711
    %v2713 = vlaneseq
    %v2714 = vshrl.u32 %v2713, 7
    %v2715 = vsub.s32 %v2712, %v2714
    %v2716 = vrot.slane %v2708, %v2715
    %v2718 = vunpack.c.l.s4 1983009808
    %v2719 = vunpack.c.0.s8 %v2718
    %v2720 = vlaneseq
    %v2721 = vshrl.u32 %v2720, 7
    %v2722 = vsub.s32 %v2719, %v2721
    %v2723 = vrot.slane %v2709, %v2722
    %v2724 = vcombine.low %v2716, %v2723
    %v2725 = vcombine.low %v2089, %v2093
    %v2726 = vcombine.low %v2096, %v2099
    %v2728 = vunpack.c.l.s4 1983009808
    %v2729 = vunpack.c.0.s8 %v2728
    %v2730 = vlaneseq
    %v2731 = vshrl.u32 %v2730, 7
    %v2732 = vsub.s32 %v2729, %v2731
    %v2733 = vrot.slane %v2725, %v2732
    %v2735 = vunpack.c.l.s4 1983009808
    %v2736 = vunpack.c.0.s8 %v2735
    %v2737 = vlaneseq
    %v2738 = vshrl.u32 %v2737, 7
    %v2739 = vsub.s32 %v2736, %v2738
    %v2740 = vrot.slane %v2726, %v2739
    %v2741 = vcombine.low %v2733, %v2740
    %v2742 = vcombine.low %v2102, %v2105
    %v2743 = vcombine.low %v2108, %v2111
    %v2745 = vunpack.c.l.s4 1983009808
    %v2746 = vunpack.c.0.s8 %v2745
    %v2747 = vlaneseq
    %v2748 = vshrl.u32 %v2747, 7
    %v2749 = vsub.s32 %v2746, %v2748
    %v2750 = vrot.slane %v2742, %v2749
    %v2752 = vunpack.c.l.s4 1983009808
    %v2753 = vunpack.c.0.s8 %v2752
    %v2754 = vlaneseq
    %v2755 = vshrl.u32 %v2754, 7
    %v2756 = vsub.s32 %v2753, %v2755
    %v2757 = vrot.slane %v2743, %v2756
    %v2758 = vcombine.low %v2750, %v2757
    %v2759 = vcombine.low %v2115, %v2118
    %v2760 = vcombine.low %v2121, %v2124
    %v2762 = vunpack.c.l.s4 1983009808
    %v2763 = vunpack.c.0.s8 %v2762
    %v2764 = vlaneseq
    %v2765 = vshrl.u32 %v2764, 7
    %v2766 = vsub.s32 %v2763, %v2765
    %v2767 = vrot.slane %v2759, %v2766
    %v2769 = vunpack.c.l.s4 1983009808
    %v2770 = vunpack.c.0.s8 %v2769
    %v2771 = vlaneseq
    %v2772 = vshrl.u32 %v2771, 7
    %v2773 = vsub.s32 %v2770, %v2772
    %v2774 = vrot.slane %v2760, %v2773
    %v2775 = vcombine.low %v2767, %v2774
    %v2776 = vcombine.low %v2127, %v2130
    %v2777 = vcombine.low %v2133, %v2137
    %v2779 = vunpack.c.l.s4 1983009808
    %v2780 = vunpack.c.0.s8 %v2779
    %v2781 = vlaneseq
    %v2782 = vshrl.u32 %v2781, 7
    %v2783 = vsub.s32 %v2780, %v2782
    %v2784 = vrot.slane %v2776, %v2783
    %v2786 = vunpack.c.l.s4 1983009808
    %v2787 = vunpack.c.0.s8 %v2786
    %v2788 = vlaneseq
    %v2789 = vshrl.u32 %v2788, 7
    %v2790 = vsub.s32 %v2787, %v2789
    %v2791 = vrot.slane %v2777, %v2790
    %v2792 = vcombine.low %v2784, %v2791
    %v2793 = vcombine.low %v2140, %v2143
    %v2794 = vcombine.low %v2146, %v2149
    %v2796 = vunpack.c.l.s4 1983009808
    %v2797 = vunpack.c.0.s8 %v2796
    %v2798 = vlaneseq
    %v2799 = vshrl.u32 %v2798, 7
    %v2800 = vsub.s32 %v2797, %v2799
    %v2801 = vrot.slane %v2793, %v2800
    %v2803 = vunpack.c.l.s4 1983009808
    %v2804 = vunpack.c.0.s8 %v2803
    %v2805 = vlaneseq
    %v2806 = vshrl.u32 %v2805, 7
    %v2807 = vsub.s32 %v2804, %v2806
    %v2808 = vrot.slane %v2794, %v2807
    %v2809 = vcombine.low %v2801, %v2808
    %v2810 = vcombine.low %v2152, %v2155
    %v2811 = vcombine.low %v2159, %v2162
    %v2813 = vunpack.c.l.s4 1983009808
    %v2814 = vunpack.c.0.s8 %v2813
    %v2815 = vlaneseq
    %v2816 = vshrl.u32 %v2815, 7
    %v2817 = vsub.s32 %v2814, %v2816
    %v2818 = vrot.slane %v2810, %v2817
    %v2820 = vunpack.c.l.s4 1983009808
    %v2821 = vunpack.c.0.s8 %v2820
    %v2822 = vlaneseq
    %v2823 = vshrl.u32 %v2822, 7
    %v2824 = vsub.s32 %v2821, %v2823
    %v2825 = vrot.slane %v2811, %v2824
    %v2826 = vcombine.low %v2818, %v2825
    %v2827 = vcombine.low %v2165, %v2168
    %v2828 = vcombine.low %v2171, %v2174
    %v2830 = vunpack.c.l.s4 1983009808
    %v2831 = vunpack.c.0.s8 %v2830
    %v2832 = vlaneseq
    %v2833 = vshrl.u32 %v2832, 7
    %v2834 = vsub.s32 %v2831, %v2833
    %v2835 = vrot.slane %v2827, %v2834
    %v2837 = vunpack.c.l.s4 1983009808
    %v2838 = vunpack.c.0.s8 %v2837
    %v2839 = vlaneseq
    %v2840 = vshrl.u32 %v2839, 7
    %v2841 = vsub.s32 %v2838, %v2840
    %v2842 = vrot.slane %v2828, %v2841
    %v2843 = vcombine.low %v2835, %v2842
    %v2844 = vcombine.low %v2177, %v2181
    %v2845 = vcombine.low %v2184, %v2187
    %v2847 = vunpack.c.l.s4 1983009808
    %v2848 = vunpack.c.0.s8 %v2847
    %v2849 = vlaneseq
    %v2850 = vshrl.u32 %v2849, 7
    %v2851 = vsub.s32 %v2848, %v2850
    %v2852 = vrot.slane %v2844, %v2851
    %v2854 = vunpack.c.l.s4 1983009808
    %v2855 = vunpack.c.0.s8 %v2854
    %v2856 = vlaneseq
    %v2857 = vshrl.u32 %v2856, 7
    %v2858 = vsub.s32 %v2855, %v2857
    %v2859 = vrot.slane %v2845, %v2858
    %v2860 = vcombine.low %v2852, %v2859
    %v2861 = vcombine.low %v2190, %v2193
    %v2862 = vcombine.low %v2196, %v2199
    %v2864 = vunpack.c.l.s4 1983009808
    %v2865 = vunpack.c.0.s8 %v2864
    %v2866 = vlaneseq
    %v2867 = vshrl.u32 %v2866, 7
    %v2868 = vsub.s32 %v2865, %v2867
    %v2869 = vrot.slane %v2861, %v2868
    %v2871 = vunpack.c.l.s4 1983009808
    %v2872 = vunpack.c.0.s8 %v2871
    %v2873 = vlaneseq
    %v2874 = vshrl.u32 %v2873, 7
    %v2875 = vsub.s32 %v2872, %v2874
    %v2876 = vrot.slane %v2862, %v2875
    %v2877 = vcombine.low %v2869, %v2876
    %v2878 = vcombine.low %v2203, %v2206
    %v2879 = vcombine.low %v2209, %v2212
    %v2881 = vunpack.c.l.s4 1983009808
    %v2882 = vunpack.c.0.s8 %v2881
    %v2883 = vlaneseq
    %v2884 = vshrl.u32 %v2883, 7
    %v2885 = vsub.s32 %v2882, %v2884
    %v2886 = vrot.slane %v2878, %v2885
    %v2888 = vunpack.c.l.s4 1983009808
    %v2889 = vunpack.c.0.s8 %v2888
    %v2890 = vlaneseq
    %v2891 = vshrl.u32 %v2890, 7
    %v2892 = vsub.s32 %v2889, %v2891
    %v2893 = vrot.slane %v2879, %v2892
    %v2894 = vcombine.low %v2886, %v2893
    %v2895 = vcombine.low %v2215, %v2218
    %v2896 = vcombine.low %v2221, %v2225
    %v2898 = vunpack.c.l.s4 1983009808
    %v2899 = vunpack.c.0.s8 %v2898
    %v2900 = vlaneseq
    %v2901 = vshrl.u32 %v2900, 7
    %v2902 = vsub.s32 %v2899, %v2901
    %v2903 = vrot.slane %v2895, %v2902
    %v2905 = vunpack.c.l.s4 1983009808
    %v2906 = vunpack.c.0.s8 %v2905
    %v2907 = vlaneseq
    %v2908 = vshrl.u32 %v2907, 7
    %v2909 = vsub.s32 %v2906, %v2908
    %v2910 = vrot.slane %v2896, %v2909
    %v2911 = vcombine.low %v2903, %v2910
    %v2912 = vcombine.low %v2228, %v2231
    %v2913 = vcombine.low %v2234, %v2237
    %v2915 = vunpack.c.l.s4 1983009808
    %v2916 = vunpack.c.0.s8 %v2915
    %v2917 = vlaneseq
    %v2918 = vshrl.u32 %v2917, 7
    %v2919 = vsub.s32 %v2916, %v2918
    %v2920 = vrot.slane %v2912, %v2919
    %v2922 = vunpack.c.l.s4 1983009808
    %v2923 = vunpack.c.0.s8 %v2922
    %v2924 = vlaneseq
    %v2925 = vshrl.u32 %v2924, 7
    %v2926 = vsub.s32 %v2923, %v2925
    %v2927 = vrot.slane %v2913, %v2926
    %v2928 = vcombine.low %v2920, %v2927
    %v2929 = vcombine.low %v2240, %v2243
    %v2930 = vcombine.low %v2247, %v2250
    %v2932 = vunpack.c.l.s4 1983009808
    %v2933 = vunpack.c.0.s8 %v2932
    %v2934 = vlaneseq
    %v2935 = vshrl.u32 %v2934, 7
    %v2936 = vsub.s32 %v2933, %v2935
    %v2937 = vrot.slane %v2929, %v2936
    %v2939 = vunpack.c.l.s4 1983009808
    %v2940 = vunpack.c.0.s8 %v2939
    %v2941 = vlaneseq
    %v2942 = vshrl.u32 %v2941, 7
    %v2943 = vsub.s32 %v2940, %v2942
    %v2944 = vrot.slane %v2930, %v2943
    %v2945 = vcombine.low %v2937, %v2944
    %v2946 = vcombine.low %v2253, %v2256
    %v2947 = vcombine.low %v2259, %v2262
    %v2949 = vunpack.c.l.s4 1983009808
    %v2950 = vunpack.c.0.s8 %v2949
    %v2951 = vlaneseq
    %v2952 = vshrl.u32 %v2951, 7
    %v2953 = vsub.s32 %v2950, %v2952
    %v2954 = vrot.slane %v2946, %v2953
    %v2956 = vunpack.c.l.s4 1983009808
    %v2957 = vunpack.c.0.s8 %v2956
    %v2958 = vlaneseq
    %v2959 = vshrl.u32 %v2958, 7
    %v2960 = vsub.s32 %v2957, %v2959
    %v2961 = vrot.slane %v2947, %v2960
    %v2962 = vcombine.low %v2954, %v2961
    %v2963 = vcombine.low %v2265, %v2269
    %v2964 = vcombine.low %v2272, %v2275
    %v2966 = vunpack.c.l.s4 1983009808
    %v2967 = vunpack.c.0.s8 %v2966
    %v2968 = vlaneseq
    %v2969 = vshrl.u32 %v2968, 7
    %v2970 = vsub.s32 %v2967, %v2969
    %v2971 = vrot.slane %v2963, %v2970
    %v2973 = vunpack.c.l.s4 1983009808
    %v2974 = vunpack.c.0.s8 %v2973
    %v2975 = vlaneseq
    %v2976 = vshrl.u32 %v2975, 7
    %v2977 = vsub.s32 %v2974, %v2976
    %v2978 = vrot.slane %v2964, %v2977
    %v2979 = vcombine.low %v2971, %v2978
    %v2980 = vcombine.low %v2278, %v2281
    %v2981 = vcombine.low %v2284, %v2287
    %v2983 = vunpack.c.l.s4 1983009808
    %v2984 = vunpack.c.0.s8 %v2983
    %v2985 = vlaneseq
    %v2986 = vshrl.u32 %v2985, 7
    %v2987 = vsub.s32 %v2984, %v2986
    %v2988 = vrot.slane %v2980, %v2987
    %v2990 = vunpack.c.l.s4 1983009808
    %v2991 = vunpack.c.0.s8 %v2990
    %v2992 = vlaneseq
    %v2993 = vshrl.u32 %v2992, 7
    %v2994 = vsub.s32 %v2991, %v2993
    %v2995 = vrot.slane %v2981, %v2994
    %v2996 = vcombine.low %v2988, %v2995
    %v2997 = vcombine.low %v2291, %v2294
    %v2998 = vcombine.low %v2297, %v2300
    %v3000 = vunpack.c.l.s4 1983009808
    %v3001 = vunpack.c.0.s8 %v3000
    %v3002 = vlaneseq
    %v3003 = vshrl.u32 %v3002, 7
    %v3004 = vsub.s32 %v3001, %v3003
    %v3005 = vrot.slane %v2997, %v3004
    %v3007 = vunpack.c.l.s4 1983009808
    %v3008 = vunpack.c.0.s8 %v3007
    %v3009 = vlaneseq
    %v3010 = vshrl.u32 %v3009, 7
    %v3011 = vsub.s32 %v3008, %v3010
    %v3012 = vrot.slane %v2998, %v3011
    %v3013 = vcombine.low %v3005, %v3012
    %v3014 = vcombine.low %v2303, %v2306
    %v3015 = vcombine.low %v2309, %v2313
    %v3017 = vunpack.c.l.s4 1983009808
    %v3018 = vunpack.c.0.s8 %v3017
    %v3019 = vlaneseq
    %v3020 = vshrl.u32 %v3019, 7
    %v3021 = vsub.s32 %v3018, %v3020
    %v3022 = vrot.slane %v3014, %v3021
    %v3024 = vunpack.c.l.s4 1983009808
    %v3025 = vunpack.c.0.s8 %v3024
    %v3026 = vlaneseq
    %v3027 = vshrl.u32 %v3026, 7
    %v3028 = vsub.s32 %v3025, %v3027
    %v3029 = vrot.slane %v3015, %v3028
    %v3030 = vcombine.low %v3022, %v3029
    %v3031 = vcombine.low %v2316, %v2319
    %v3032 = vcombine.low %v2322, %v2325
    %v3034 = vunpack.c.l.s4 1983009808
    %v3035 = vunpack.c.0.s8 %v3034
    %v3036 = vlaneseq
    %v3037 = vshrl.u32 %v3036, 7
    %v3038 = vsub.s32 %v3035, %v3037
    %v3039 = vrot.slane %v3031, %v3038
    %v3041 = vunpack.c.l.s4 1983009808
    %v3042 = vunpack.c.0.s8 %v3041
    %v3043 = vlaneseq
    %v3044 = vshrl.u32 %v3043, 7
    %v3045 = vsub.s32 %v3042, %v3044
    %v3046 = vrot.slane %v3032, %v3045
    %v3047 = vcombine.low %v3039, %v3046
    %v3048 = vcombine.low %v2328, %v2331
    %v3049 = vcombine.low %v2335, %v2338
    %v3051 = vunpack.c.l.s4 1983009808
    %v3052 = vunpack.c.0.s8 %v3051
    %v3053 = vlaneseq
    %v3054 = vshrl.u32 %v3053, 7
    %v3055 = vsub.s32 %v3052, %v3054
    %v3056 = vrot.slane %v3048, %v3055
    %v3058 = vunpack.c.l.s4 1983009808
    %v3059 = vunpack.c.0.s8 %v3058
    %v3060 = vlaneseq
    %v3061 = vshrl.u32 %v3060, 7
    %v3062 = vsub.s32 %v3059, %v3061
    %v3063 = vrot.slane %v3049, %v3062
    %v3064 = vcombine.low %v3056, %v3063
    %v3065 = vcombine.low %v2341, %v2344
    %v3066 = vcombine.low %v2347, %v2350
    %v3068 = vunpack.c.l.s4 1983009808
    %v3069 = vunpack.c.0.s8 %v3068
    %v3070 = vlaneseq
    %v3071 = vshrl.u32 %v3070, 7
    %v3072 = vsub.s32 %v3069, %v3071
    %v3073 = vrot.slane %v3065, %v3072
    %v3075 = vunpack.c.l.s4 1983009808
    %v3076 = vunpack.c.0.s8 %v3075
    %v3077 = vlaneseq
    %v3078 = vshrl.u32 %v3077, 7
    %v3079 = vsub.s32 %v3076, %v3078
    %v3080 = vrot.slane %v3066, %v3079
    %v3081 = vcombine.low %v3073, %v3080
    %v3082 = vcombine.low %v2353, %v2357
    %v3083 = vcombine.low %v2360, %v2363
    %v3085 = vunpack.c.l.s4 1983009808
    %v3086 = vunpack.c.0.s8 %v3085
    %v3087 = vlaneseq
    %v3088 = vshrl.u32 %v3087, 7
    %v3089 = vsub.s32 %v3086, %v3088
    %v3090 = vrot.slane %v3082, %v3089
    %v3092 = vunpack.c.l.s4 1983009808
    %v3093 = vunpack.c.0.s8 %v3092
    %v3094 = vlaneseq
    %v3095 = vshrl.u32 %v3094, 7
    %v3096 = vsub.s32 %v3093, %v3095
    %v3097 = vrot.slane %v3083, %v3096
    %v3098 = vcombine.low %v3090, %v3097
    %v3099 = vcombine.low %v2366, %v2369
    %v3100 = vcombine.low %v2372, %v2375
    %v3102 = vunpack.c.l.s4 1983009808
    %v3103 = vunpack.c.0.s8 %v3102
    %v3104 = vlaneseq
    %v3105 = vshrl.u32 %v3104, 7
    %v3106 = vsub.s32 %v3103, %v3105
    %v3107 = vrot.slane %v3099, %v3106
    %v3109 = vunpack.c.l.s4 1983009808
    %v3110 = vunpack.c.0.s8 %v3109
    %v3111 = vlaneseq
    %v3112 = vshrl.u32 %v3111, 7
    %v3113 = vsub.s32 %v3110, %v3112
    %v3114 = vrot.slane %v3100, %v3113
    %v3115 = vcombine.low %v3107, %v3114
    %v3116 = vcombine.low %v2379, %v2382
    %v3117 = vcombine.low %v2385, %v2388
    %v3119 = vunpack.c.l.s4 1983009808
    %v3120 = vunpack.c.0.s8 %v3119
    %v3121 = vlaneseq
    %v3122 = vshrl.u32 %v3121, 7
    %v3123 = vsub.s32 %v3120, %v3122
    %v3124 = vrot.slane %v3116, %v3123
    %v3126 = vunpack.c.l.s4 1983009808
    %v3127 = vunpack.c.0.s8 %v3126
    %v3128 = vlaneseq
    %v3129 = vshrl.u32 %v3128, 7
    %v3130 = vsub.s32 %v3127, %v3129
    %v3131 = vrot.slane %v3117, %v3130
    %v3132 = vcombine.low %v3124, %v3131
    %v3133 = vcombine.low %v2391, %v2394
    %v3134 = vcombine.low %v2397, %v2401
    %v3136 = vunpack.c.l.s4 1983009808
    %v3137 = vunpack.c.0.s8 %v3136
    %v3138 = vlaneseq
    %v3139 = vshrl.u32 %v3138, 7
    %v3140 = vsub.s32 %v3137, %v3139
    %v3141 = vrot.slane %v3133, %v3140
    %v3143 = vunpack.c.l.s4 1983009808
    %v3144 = vunpack.c.0.s8 %v3143
    %v3145 = vlaneseq
    %v3146 = vshrl.u32 %v3145, 7
    %v3147 = vsub.s32 %v3144, %v3146
    %v3148 = vrot.slane %v3134, %v3147
    %v3149 = vcombine.low %v3141, %v3148
    %v3150 = vcombine.low %v2404, %v2407
    %v3151 = vcombine.low %v2410, %v2413
    %v3153 = vunpack.c.l.s4 1983009808
    %v3154 = vunpack.c.0.s8 %v3153
    %v3155 = vlaneseq
    %v3156 = vshrl.u32 %v3155, 7
    %v3157 = vsub.s32 %v3154, %v3156
    %v3158 = vrot.slane %v3150, %v3157
    %v3160 = vunpack.c.l.s4 1983009808
    %v3161 = vunpack.c.0.s8 %v3160
    %v3162 = vlaneseq
    %v3163 = vshrl.u32 %v3162, 7
    %v3164 = vsub.s32 %v3161, %v3163
    %v3165 = vrot.slane %v3151, %v3164
    %v3166 = vcombine.low %v3158, %v3165
    %v3167 = vcombine.low %v2416, %v2419
    %v3168 = vcombine.low %v2423, %v2426
    %v3170 = vunpack.c.l.s4 1983009808
    %v3171 = vunpack.c.0.s8 %v3170
    %v3172 = vlaneseq
    %v3173 = vshrl.u32 %v3172, 7
    %v3174 = vsub.s32 %v3171, %v3173
    %v3175 = vrot.slane %v3167, %v3174
    %v3177 = vunpack.c.l.s4 1983009808
    %v3178 = vunpack.c.0.s8 %v3177
    %v3179 = vlaneseq
    %v3180 = vshrl.u32 %v3179, 7
    %v3181 = vsub.s32 %v3178, %v3180
    %v3182 = vrot.slane %v3168, %v3181
    %v3183 = vcombine.low %v3175, %v3182
    %v3184 = vcombine.low %v2429, %v2432
    %v3185 = vcombine.low %v2435, %v2438
    %v3187 = vunpack.c.l.s4 1983009808
    %v3188 = vunpack.c.0.s8 %v3187
    %v3189 = vlaneseq
    %v3190 = vshrl.u32 %v3189, 7
    %v3191 = vsub.s32 %v3188, %v3190
    %v3192 = vrot.slane %v3184, %v3191
    %v3194 = vunpack.c.l.s4 1983009808
    %v3195 = vunpack.c.0.s8 %v3194
    %v3196 = vlaneseq
    %v3197 = vshrl.u32 %v3196, 7
    %v3198 = vsub.s32 %v3195, %v3197
    %v3199 = vrot.slane %v3185, %v3198
    %v3200 = vcombine.low %v3192, %v3199
    %v3201 = vcombine.low %v2441, %v2445
    %v3202 = vcombine.low %v2448, %v2451
    %v3204 = vunpack.c.l.s4 1983009808
    %v3205 = vunpack.c.0.s8 %v3204
    %v3206 = vlaneseq
    %v3207 = vshrl.u32 %v3206, 7
    %v3208 = vsub.s32 %v3205, %v3207
    %v3209 = vrot.slane %v3201, %v3208
    %v3211 = vunpack.c.l.s4 1983009808
    %v3212 = vunpack.c.0.s8 %v3211
    %v3213 = vlaneseq
    %v3214 = vshrl.u32 %v3213, 7
    %v3215 = vsub.s32 %v3212, %v3214
    %v3216 = vrot.slane %v3202, %v3215
    %v3217 = vcombine.low %v3209, %v3216
    %v3218 = vcombine.low %v2454, %v2457
    %v3219 = vcombine.low %v2460, %v2463
    %v3221 = vunpack.c.l.s4 1983009808
    %v3222 = vunpack.c.0.s8 %v3221
    %v3223 = vlaneseq
    %v3224 = vshrl.u32 %v3223, 7
    %v3225 = vsub.s32 %v3222, %v3224
    %v3226 = vrot.slane %v3218, %v3225
    %v3228 = vunpack.c.l.s4 1983009808
    %v3229 = vunpack.c.0.s8 %v3228
    %v3230 = vlaneseq
    %v3231 = vshrl.u32 %v3230, 7
    %v3232 = vsub.s32 %v3229, %v3231
    %v3233 = vrot.slane %v3219, %v3232
    %v3234 = vcombine.low %v3226, %v3233
    %v3235 = vcombine.low %v2467, %v2470
    %v3236 = vcombine.low %v2473, %v2476
    %v3238 = vunpack.c.l.s4 1983009808
    %v3239 = vunpack.c.0.s8 %v3238
    %v3240 = vlaneseq
    %v3241 = vshrl.u32 %v3240, 7
    %v3242 = vsub.s32 %v3239, %v3241
    %v3243 = vrot.slane %v3235, %v3242
    %v3245 = vunpack.c.l.s4 1983009808
    %v3246 = vunpack.c.0.s8 %v3245
    %v3247 = vlaneseq
    %v3248 = vshrl.u32 %v3247, 7
    %v3249 = vsub.s32 %v3246, %v3248
    %v3250 = vrot.slane %v3236, %v3249
    %v3251 = vcombine.low %v3243, %v3250
    %v3252 = vcombine.low %v2479, %v2482
    %v3253 = vcombine.low %v2485, %v2489
    %v3255 = vunpack.c.l.s4 1983009808
    %v3256 = vunpack.c.0.s8 %v3255
    %v3257 = vlaneseq
    %v3258 = vshrl.u32 %v3257, 7
    %v3259 = vsub.s32 %v3256, %v3258
    %v3260 = vrot.slane %v3252, %v3259
    %v3262 = vunpack.c.l.s4 1983009808
    %v3263 = vunpack.c.0.s8 %v3262
    %v3264 = vlaneseq
    %v3265 = vshrl.u32 %v3264, 7
    %v3266 = vsub.s32 %v3263, %v3265
    %v3267 = vrot.slane %v3253, %v3266
    %v3268 = vcombine.low %v3260, %v3267
    %v3269 = vcombine.low %v2492, %v2495
    %v3270 = vcombine.low %v2498, %v2501
    %v3272 = vunpack.c.l.s4 1983009808
    %v3273 = vunpack.c.0.s8 %v3272
    %v3274 = vlaneseq
    %v3275 = vshrl.u32 %v3274, 7
    %v3276 = vsub.s32 %v3273, %v3275
    %v3277 = vrot.slane %v3269, %v3276
    %v3279 = vunpack.c.l.s4 1983009808
    %v3280 = vunpack.c.0.s8 %v3279
    %v3281 = vlaneseq
    %v3282 = vshrl.u32 %v3281, 7
    %v3283 = vsub.s32 %v3280, %v3282
    %v3284 = vrot.slane %v3270, %v3283
    %v3285 = vcombine.low %v3277, %v3284
    %v3286 = vcombine.low %v2504, %v2507
    %v3287 = vcombine.low %v2511, %v2514
    %v3289 = vunpack.c.l.s4 1983009808
    %v3290 = vunpack.c.0.s8 %v3289
    %v3291 = vlaneseq
    %v3292 = vshrl.u32 %v3291, 7
    %v3293 = vsub.s32 %v3290, %v3292
    %v3294 = vrot.slane %v3286, %v3293
    %v3296 = vunpack.c.l.s4 1983009808
    %v3297 = vunpack.c.0.s8 %v3296
    %v3298 = vlaneseq
    %v3299 = vshrl.u32 %v3298, 7
    %v3300 = vsub.s32 %v3297, %v3299
    %v3301 = vrot.slane %v3287, %v3300
    %v3302 = vcombine.low %v3294, %v3301
    %v3303 = vcombine.low %v2517, %v2520
    %v3304 = vcombine.low %v2523, %v2526
    %v3306 = vunpack.c.l.s4 1983009808
    %v3307 = vunpack.c.0.s8 %v3306
    %v3308 = vlaneseq
    %v3309 = vshrl.u32 %v3308, 7
    %v3310 = vsub.s32 %v3307, %v3309
    %v3311 = vrot.slane %v3303, %v3310
    %v3313 = vunpack.c.l.s4 1983009808
    %v3314 = vunpack.c.0.s8 %v3313
    %v3315 = vlaneseq
    %v3316 = vshrl.u32 %v3315, 7
    %v3317 = vsub.s32 %v3314, %v3316
    %v3318 = vrot.slane %v3304, %v3317
    %v3319 = vcombine.low %v3311, %v3318
    %v3320 = vcombine.low %v2529, %v2533
    %v3321 = vcombine.low %v2536, %v2539
    %v3323 = vunpack.c.l.s4 1983009808
    %v3324 = vunpack.c.0.s8 %v3323
    %v3325 = vlaneseq
    %v3326 = vshrl.u32 %v3325, 7
    %v3327 = vsub.s32 %v3324, %v3326
    %v3328 = vrot.slane %v3320, %v3327
    %v3330 = vunpack.c.l.s4 1983009808
    %v3331 = vunpack.c.0.s8 %v3330
    %v3332 = vlaneseq
    %v3333 = vshrl.u32 %v3332, 7
    %v3334 = vsub.s32 %v3331, %v3333
    %v3335 = vrot.slane %v3321, %v3334
    %v3336 = vcombine.low %v3328, %v3335
    %v3337 = vcombine.low %v2542, %v2545
    %v3338 = vcombine.low %v2548, %v2551
    %v3340 = vunpack.c.l.s4 1983009808
    %v3341 = vunpack.c.0.s8 %v3340
    %v3342 = vlaneseq
    %v3343 = vshrl.u32 %v3342, 7
    %v3344 = vsub.s32 %v3341, %v3343
    %v3345 = vrot.slane %v3337, %v3344
    %v3347 = vunpack.c.l.s4 1983009808
    %v3348 = vunpack.c.0.s8 %v3347
    %v3349 = vlaneseq
    %v3350 = vshrl.u32 %v3349, 7
    %v3351 = vsub.s32 %v3348, %v3350
    %v3352 = vrot.slane %v3338, %v3351
    %v3353 = vcombine.low %v3345, %v3352
    %v3354 = vcombine.low %v2555, %v2558
    %v3355 = vcombine.low %v2561, %v2564
    %v3357 = vunpack.c.l.s4 1983009808
    %v3358 = vunpack.c.0.s8 %v3357
    %v3359 = vlaneseq
    %v3360 = vshrl.u32 %v3359, 7
    %v3361 = vsub.s32 %v3358, %v3360
    %v3362 = vrot.slane %v3354, %v3361
    %v3364 = vunpack.c.l.s4 1983009808
    %v3365 = vunpack.c.0.s8 %v3364
    %v3366 = vlaneseq
    %v3367 = vshrl.u32 %v3366, 7
    %v3368 = vsub.s32 %v3365, %v3367
    %v3369 = vrot.slane %v3355, %v3368
    %v3370 = vcombine.low %v3362, %v3369
    %v3371 = vcombine.low %v2567, %v2570
    %v3372 = vcombine.low %v2573, %v2577
    %v3374 = vunpack.c.l.s4 1983009808
    %v3375 = vunpack.c.0.s8 %v3374
    %v3376 = vlaneseq
    %v3377 = vshrl.u32 %v3376, 7
    %v3378 = vsub.s32 %v3375, %v3377
    %v3379 = vrot.slane %v3371, %v3378
    %v3381 = vunpack.c.l.s4 1983009808
    %v3382 = vunpack.c.0.s8 %v3381
    %v3383 = vlaneseq
    %v3384 = vshrl.u32 %v3383, 7
    %v3385 = vsub.s32 %v3382, %v3384
    %v3386 = vrot.slane %v3372, %v3385
    %v3387 = vcombine.low %v3379, %v3386
    %v3388 = vcombine.low %v2580, %v2583
    %v3389 = vcombine.low %v2586, %v2589
    %v3391 = vunpack.c.l.s4 1983009808
    %v3392 = vunpack.c.0.s8 %v3391
    %v3393 = vlaneseq
    %v3394 = vshrl.u32 %v3393, 7
    %v3395 = vsub.s32 %v3392, %v3394
    %v3396 = vrot.slane %v3388, %v3395
    %v3398 = vunpack.c.l.s4 1983009808
    %v3399 = vunpack.c.0.s8 %v3398
    %v3400 = vlaneseq
    %v3401 = vshrl.u32 %v3400, 7
    %v3402 = vsub.s32 %v3399, %v3401
    %v3403 = vrot.slane %v3389, %v3402
    %v3404 = vcombine.low %v3396, %v3403
    %v3405 = vcombine.low %v2592, %v2595
    %v3406 = vcombine.low %v2599, %v2602
    %v3408 = vunpack.c.l.s4 1983009808
    %v3409 = vunpack.c.0.s8 %v3408
    %v3410 = vlaneseq
    %v3411 = vshrl.u32 %v3410, 7
    %v3412 = vsub.s32 %v3409, %v3411
    %v3413 = vrot.slane %v3405, %v3412
    %v3415 = vunpack.c.l.s4 1983009808
    %v3416 = vunpack.c.0.s8 %v3415
    %v3417 = vlaneseq
    %v3418 = vshrl.u32 %v3417, 7
    %v3419 = vsub.s32 %v3416, %v3418
    %v3420 = vrot.slane %v3406, %v3419
    %v3421 = vcombine.low %v3413, %v3420
    %v3422 = vcombine.low %v2605, %v2608
    %v3423 = vcombine.low %v2611, %v2614
    %v3425 = vunpack.c.l.s4 1983009808
    %v3426 = vunpack.c.0.s8 %v3425
    %v3427 = vlaneseq
    %v3428 = vshrl.u32 %v3427, 7
    %v3429 = vsub.s32 %v3426, %v3428
    %v3430 = vrot.slane %v3422, %v3429
    %v3432 = vunpack.c.l.s4 1983009808
    %v3433 = vunpack.c.0.s8 %v3432
    %v3434 = vlaneseq
    %v3435 = vshrl.u32 %v3434, 7
    %v3436 = vsub.s32 %v3433, %v3435
    %v3437 = vrot.slane %v3423, %v3436
    %v3438 = vcombine.low %v3430, %v3437
    %v3439 = vcombine.low %v2617, %v2621
    %v3440 = vcombine.low %v2624, %v2627
    %v3442 = vunpack.c.l.s4 1983009808
    %v3443 = vunpack.c.0.s8 %v3442
    %v3444 = vlaneseq
    %v3445 = vshrl.u32 %v3444, 7
    %v3446 = vsub.s32 %v3443, %v3445
    %v3447 = vrot.slane %v3439, %v3446
    %v3449 = vunpack.c.l.s4 1983009808
    %v3450 = vunpack.c.0.s8 %v3449
    %v3451 = vlaneseq
    %v3452 = vshrl.u32 %v3451, 7
    %v3453 = vsub.s32 %v3450, %v3452
    %v3454 = vrot.slane %v3440, %v3453
    %v3455 = vcombine.low %v3447, %v3454
    %v3456 = vcombine.low %v2630, %v2633
    %v3457 = vcombine.low %v2636, %v2639
    %v3459 = vunpack.c.l.s4 1983009808
    %v3460 = vunpack.c.0.s8 %v3459
    %v3461 = vlaneseq
    %v3462 = vshrl.u32 %v3461, 7
    %v3463 = vsub.s32 %v3460, %v3462
    %v3464 = vrot.slane %v3456, %v3463
    %v3466 = vunpack.c.l.s4 1983009808
    %v3467 = vunpack.c.0.s8 %v3466
    %v3468 = vlaneseq
    %v3469 = vshrl.u32 %v3468, 7
    %v3470 = vsub.s32 %v3467, %v3469
    %v3471 = vrot.slane %v3457, %v3470
    %v3472 = vcombine.low %v3464, %v3471
    %3473 = vrot.lane.b32.xlu0 %v2656, 1
    %v3474 = vpop.permute.xlu0 %3473
    %3475 = vrot.lane.b32.xlu0 %v2673, 1
    %v3476 = vpop.permute.xlu0 %3475
    %3477 = vrot.lane.b32.xlu0 %v2690, 1
    %v3478 = vpop.permute.xlu0 %3477
    %3479 = vrot.lane.b32.xlu0 %v2707, 1
    %v3480 = vpop.permute.xlu0 %3479
    %3481 = vrot.lane.b32.xlu0 %v2724, 1
    %v3482 = vpop.permute.xlu0 %3481
    %3483 = vrot.lane.b32.xlu0 %v2741, 1
    %v3484 = vpop.permute.xlu0 %3483
    %3485 = vrot.lane.b32.xlu0 %v2758, 1
    %v3486 = vpop.permute.xlu0 %3485
    %3487 = vrot.lane.b32.xlu0 %v2775, 1
    %v3488 = vpop.permute.xlu0 %3487
    %3489 = vrot.lane.b32.xlu0 %v2792, 1
    %v3490 = vpop.permute.xlu0 %3489
    %3491 = vrot.lane.b32.xlu0 %v2809, 1
    %v3492 = vpop.permute.xlu0 %3491
    %3493 = vrot.lane.b32.xlu0 %v2826, 1
    %v3494 = vpop.permute.xlu0 %3493
    %3495 = vrot.lane.b32.xlu0 %v2843, 1
    %v3496 = vpop.permute.xlu0 %3495
    %3497 = vrot.lane.b32.xlu0 %v2860, 1
    %v3498 = vpop.permute.xlu0 %3497
    %3499 = vrot.lane.b32.xlu0 %v2877, 1
    %v3500 = vpop.permute.xlu0 %3499
    %3501 = vrot.lane.b32.xlu0 %v2894, 1
    %v3502 = vpop.permute.xlu0 %3501
    %3503 = vrot.lane.b32.xlu0 %v2911, 1
    %v3504 = vpop.permute.xlu0 %3503
    %3505 = vrot.lane.b32.xlu0 %v2928, 1
    %v3506 = vpop.permute.xlu0 %3505
    %3507 = vrot.lane.b32.xlu0 %v2945, 1
    %v3508 = vpop.permute.xlu0 %3507
    %3509 = vrot.lane.b32.xlu0 %v2962, 1
    %v3510 = vpop.permute.xlu0 %3509
    %3511 = vrot.lane.b32.xlu0 %v2979, 1
    %v3512 = vpop.permute.xlu0 %3511
    %3513 = vrot.lane.b32.xlu0 %v2996, 1
    %v3514 = vpop.permute.xlu0 %3513
    %3515 = vrot.lane.b32.xlu0 %v3013, 1
    %v3516 = vpop.permute.xlu0 %3515
    %3517 = vrot.lane.b32.xlu0 %v3030, 1
    %v3518 = vpop.permute.xlu0 %3517
    %3519 = vrot.lane.b32.xlu0 %v3047, 1
    %v3520 = vpop.permute.xlu0 %3519
    %3521 = vrot.lane.b32.xlu0 %v3064, 1
    %v3522 = vpop.permute.xlu0 %3521
    %3523 = vrot.lane.b32.xlu0 %v3081, 1
    %v3524 = vpop.permute.xlu0 %3523
    %3525 = vrot.lane.b32.xlu0 %v3098, 1
    %v3526 = vpop.permute.xlu0 %3525
    %3527 = vrot.lane.b32.xlu0 %v3115, 1
    %v3528 = vpop.permute.xlu0 %3527
    %3529 = vrot.lane.b32.xlu0 %v3132, 1
    %v3530 = vpop.permute.xlu0 %3529
    %3531 = vrot.lane.b32.xlu0 %v3149, 1
    %v3532 = vpop.permute.xlu0 %3531
    %3533 = vrot.lane.b32.xlu0 %v3166, 1
    %v3534 = vpop.permute.xlu0 %3533
    %3535 = vrot.lane.b32.xlu0 %v3183, 1
    %v3536 = vpop.permute.xlu0 %3535
    %3537 = vrot.lane.b32.xlu0 %v3200, 1
    %v3538 = vpop.permute.xlu0 %3537
    %3539 = vrot.lane.b32.xlu0 %v3217, 1
    %v3540 = vpop.permute.xlu0 %3539
    %3541 = vrot.lane.b32.xlu0 %v3234, 1
    %v3542 = vpop.permute.xlu0 %3541
    %3543 = vrot.lane.b32.xlu0 %v3251, 1
    %v3544 = vpop.permute.xlu0 %3543
    %3545 = vrot.lane.b32.xlu0 %v3268, 1
    %v3546 = vpop.permute.xlu0 %3545
    %3547 = vrot.lane.b32.xlu0 %v3285, 1
    %v3548 = vpop.permute.xlu0 %3547
    %3549 = vrot.lane.b32.xlu0 %v3302, 1
    %v3550 = vpop.permute.xlu0 %3549
    %3551 = vrot.lane.b32.xlu0 %v3319, 1
    %v3552 = vpop.permute.xlu0 %3551
    %3553 = vrot.lane.b32.xlu0 %v3336, 1
    %v3554 = vpop.permute.xlu0 %3553
    %3555 = vrot.lane.b32.xlu0 %v3353, 1
    %v3556 = vpop.permute.xlu0 %3555
    %3557 = vrot.lane.b32.xlu0 %v3370, 1
    %v3558 = vpop.permute.xlu0 %3557
    %3559 = vrot.lane.b32.xlu0 %v3387, 1
    %v3560 = vpop.permute.xlu0 %3559
    %3561 = vrot.lane.b32.xlu0 %v3404, 1
    %v3562 = vpop.permute.xlu0 %3561
    %3563 = vrot.lane.b32.xlu0 %v3421, 1
    %v3564 = vpop.permute.xlu0 %3563
    %3565 = vrot.lane.b32.xlu0 %v3438, 1
    %v3566 = vpop.permute.xlu0 %3565
    %3567 = vrot.lane.b32.xlu0 %v3455, 1
    %v3568 = vpop.permute.xlu0 %3567
    %3569 = vrot.lane.b32.xlu0 %v3472, 1
    %v3570 = vpop.permute.xlu0 %3569
    %vm3620 = vcmask 15368
    %3621 = vst.msk [vmem:[#allocation2] sm:$0xff] %vm3620, %v3474
    %3622 = vst.msk [vmem:[#allocation2 + $0x8] sm:$0xff] %vm3620, %v3476
    %3623 = vst.msk [vmem:[#allocation2 + $0x10] sm:$0xff] %vm3620, %v3478
    %3624 = vst.msk [vmem:[#allocation2 + $0x18] sm:$0xff] %vm3620, %v3480
    %3625 = vst.msk [vmem:[#allocation2 + $0x20] sm:$0xff] %vm3620, %v3482
    %3626 = vst.msk [vmem:[#allocation2 + $0x28] sm:$0xff] %vm3620, %v3484
    %3627 = vst.msk [vmem:[#allocation2 + $0x30] sm:$0xff] %vm3620, %v3486
    %3628 = vst.msk [vmem:[#allocation2 + $0x38] sm:$0xff] %vm3620, %v3488
    %3629 = vst.msk [vmem:[#allocation2 + $0x40] sm:$0xff] %vm3620, %v3490
    %3630 = vst.msk [vmem:[#allocation2 + $0x48] sm:$0xff] %vm3620, %v3492
    %3631 = vst.msk [vmem:[#allocation2 + $0x50] sm:$0xff] %vm3620, %v3494
    %3632 = vst.msk [vmem:[#allocation2 + $0x58] sm:$0xff] %vm3620, %v3496
    %3633 = vst.msk [vmem:[#allocation2 + $0x60] sm:$0xff] %vm3620, %v3498
    %3634 = vst.msk [vmem:[#allocation2 + $0x68] sm:$0xff] %vm3620, %v3500
    %3635 = vst.msk [vmem:[#allocation2 + $0x70] sm:$0xff] %vm3620, %v3502
    %3636 = vst.msk [vmem:[#allocation2 + $0x78] sm:$0xff] %vm3620, %v3504
    %3637 = vst.msk [vmem:[#allocation2 + $0x80] sm:$0xff] %vm3620, %v3506
    %3638 = vst.msk [vmem:[#allocation2 + $0x88] sm:$0xff] %vm3620, %v3508
    %3639 = vst.msk [vmem:[#allocation2 + $0x90] sm:$0xff] %vm3620, %v3510
    %3640 = vst.msk [vmem:[#allocation2 + $0x98] sm:$0xff] %vm3620, %v3512
    %3641 = vst.msk [vmem:[#allocation2 + $0xa0] sm:$0xff] %vm3620, %v3514
    %3642 = vst.msk [vmem:[#allocation2 + $0xa8] sm:$0xff] %vm3620, %v3516
    %3643 = vst.msk [vmem:[#allocation2 + $0xb0] sm:$0xff] %vm3620, %v3518
    %3644 = vst.msk [vmem:[#allocation2 + $0xb8] sm:$0xff] %vm3620, %v3520
    %3645 = vst.msk [vmem:[#allocation2 + $0xc0] sm:$0xff] %vm3620, %v3522
    %3646 = vst.msk [vmem:[#allocation2 + $0xc8] sm:$0xff] %vm3620, %v3524
    %3647 = vst.msk [vmem:[#allocation2 + $0xd0] sm:$0xff] %vm3620, %v3526
    %3648 = vst.msk [vmem:[#allocation2 + $0xd8] sm:$0xff] %vm3620, %v3528
    %3649 = vst.msk [vmem:[#allocation2 + $0xe0] sm:$0xff] %vm3620, %v3530
    %3650 = vst.msk [vmem:[#allocation2 + $0xe8] sm:$0xff] %vm3620, %v3532
    %3651 = vst.msk [vmem:[#allocation2 + $0xf0] sm:$0xff] %vm3620, %v3534
    %3652 = vst.msk [vmem:[#allocation2 + $0xf8] sm:$0xff] %vm3620, %v3536
    %3653 = vst.msk [vmem:[#allocation2 + $0x100] sm:$0xff] %vm3620, %v3538
    %3654 = vst.msk [vmem:[#allocation2 + $0x108] sm:$0xff] %vm3620, %v3540
    %3655 = vst.msk [vmem:[#allocation2 + $0x110] sm:$0xff] %vm3620, %v3542
    %3656 = vst.msk [vmem:[#allocation2 + $0x118] sm:$0xff] %vm3620, %v3544
    %3657 = vst.msk [vmem:[#allocation2 + $0x120] sm:$0xff] %vm3620, %v3546
    %3658 = vst.msk [vmem:[#allocation2 + $0x128] sm:$0xff] %vm3620, %v3548
    %3659 = vst.msk [vmem:[#allocation2 + $0x130] sm:$0xff] %vm3620, %v3550
    %3660 = vst.msk [vmem:[#allocation2 + $0x138] sm:$0xff] %vm3620, %v3552
    %3661 = vst.msk [vmem:[#allocation2 + $0x140] sm:$0xff] %vm3620, %v3554
    %3662 = vst.msk [vmem:[#allocation2 + $0x148] sm:$0xff] %vm3620, %v3556
    %3663 = vst.msk [vmem:[#allocation2 + $0x150] sm:$0xff] %vm3620, %v3558
    %3664 = vst.msk [vmem:[#allocation2 + $0x158] sm:$0xff] %vm3620, %v3560
    %3665 = vst.msk [vmem:[#allocation2 + $0x160] sm:$0xff] %vm3620, %v3562
    %3666 = vst.msk [vmem:[#allocation2 + $0x168] sm:$0xff] %vm3620, %v3564
    %3667 = vst.msk [vmem:[#allocation2 + $0x170] sm:$0xff] %vm3620, %v3566
    %3668 = vst.msk [vmem:[#allocation2 + $0x178] sm:$0xff] %vm3620, %v3568
    %3669 = vst.msk [vmem:[#allocation2 + $0x180] sm:$0xff] %vm3620, %v3570
    %v3670 = vcombine.low %v148, %v147
    %v3671 = vcombine.low %v149, %v157
    %v3673 = vunpack.c.l.s4 1983009808
    %v3674 = vunpack.c.0.s8 %v3673
    %v3675 = vlaneseq
    %v3676 = vshrl.u32 %v3675, 7
    %v3677 = vsub.s32 %v3674, %v3676
    %v3678 = vrot.slane %v3670, %v3677
    %v3680 = vunpack.c.l.s4 1983009808
    %v3681 = vunpack.c.0.s8 %v3680
    %v3682 = vlaneseq
    %v3683 = vshrl.u32 %v3682, 7
    %v3684 = vsub.s32 %v3681, %v3683
    %v3685 = vrot.slane %v3671, %v3684
    %v3686 = vcombine.low %v3678, %v3685
    %v3687 = vcombine.low %v165, %v164
    %v3688 = vcombine.low %v1989, %v181
    %v3690 = vunpack.c.l.s4 1983009808
    %v3691 = vunpack.c.0.s8 %v3690
    %v3692 = vlaneseq
    %v3693 = vshrl.u32 %v3692, 7
    %v3694 = vsub.s32 %v3691, %v3693
    %v3695 = vrot.slane %v3687, %v3694
    %v3697 = vunpack.c.l.s4 1983009808
    %v3698 = vunpack.c.0.s8 %v3697
    %v3699 = vlaneseq
    %v3700 = vshrl.u32 %v3699, 7
    %v3701 = vsub.s32 %v3698, %v3700
    %v3702 = vrot.slane %v3688, %v3701
    %v3703 = vcombine.low %v3695, %v3702
    %v3704 = vcombine.low %v180, %v182
    %v3705 = vcombine.low %v190, %v198
    %v3707 = vunpack.c.l.s4 1983009808
    %v3708 = vunpack.c.0.s8 %v3707
    %v3709 = vlaneseq
    %v3710 = vshrl.u32 %v3709, 7
    %v3711 = vsub.s32 %v3708, %v3710
    %v3712 = vrot.slane %v3704, %v3711
    %v3714 = vunpack.c.l.s4 1983009808
    %v3715 = vunpack.c.0.s8 %v3714
    %v3716 = vlaneseq
    %v3717 = vshrl.u32 %v3716, 7
    %v3718 = vsub.s32 %v3715, %v3717
    %v3719 = vrot.slane %v3705, %v3718
    %v3720 = vcombine.low %v3712, %v3719
    %v3721 = vcombine.low %v197, %v1990
    %v3722 = vcombine.low %v214, %v213
    %v3724 = vunpack.c.l.s4 1983009808
    %v3725 = vunpack.c.0.s8 %v3724
    %v3726 = vlaneseq
    %v3727 = vshrl.u32 %v3726, 7
    %v3728 = vsub.s32 %v3725, %v3727
    %v3729 = vrot.slane %v3721, %v3728
    %v3731 = vunpack.c.l.s4 1983009808
    %v3732 = vunpack.c.0.s8 %v3731
    %v3733 = vlaneseq
    %v3734 = vshrl.u32 %v3733, 7
    %v3735 = vsub.s32 %v3732, %v3734
    %v3736 = vrot.slane %v3722, %v3735
    %v3737 = vcombine.low %v3729, %v3736
    %v3738 = vcombine.low %v215, %v223
    %v3739 = vcombine.low %v231, %v230
    %v3741 = vunpack.c.l.s4 1983009808
    %v3742 = vunpack.c.0.s8 %v3741
    %v3743 = vlaneseq
    %v3744 = vshrl.u32 %v3743, 7
    %v3745 = vsub.s32 %v3742, %v3744
    %v3746 = vrot.slane %v3738, %v3745
    %v3748 = vunpack.c.l.s4 1983009808
    %v3749 = vunpack.c.0.s8 %v3748
    %v3750 = vlaneseq
    %v3751 = vshrl.u32 %v3750, 7
    %v3752 = vsub.s32 %v3749, %v3751
    %v3753 = vrot.slane %v3739, %v3752
    %v3754 = vcombine.low %v3746, %v3753
    %v3755 = vcombine.low %v1991, %v247
    %v3756 = vcombine.low %v246, %v248
    %v3758 = vunpack.c.l.s4 1983009808
    %v3759 = vunpack.c.0.s8 %v3758
    %v3760 = vlaneseq
    %v3761 = vshrl.u32 %v3760, 7
    %v3762 = vsub.s32 %v3759, %v3761
    %v3763 = vrot.slane %v3755, %v3762
    %v3765 = vunpack.c.l.s4 1983009808
    %v3766 = vunpack.c.0.s8 %v3765
    %v3767 = vlaneseq
    %v3768 = vshrl.u32 %v3767, 7
    %v3769 = vsub.s32 %v3766, %v3768
    %v3770 = vrot.slane %v3756, %v3769
    %v3771 = vcombine.low %v3763, %v3770
    %v3772 = vcombine.low %v256, %v264
    %v3773 = vcombine.low %v263, %v1992
    %v3775 = vunpack.c.l.s4 1983009808
    %v3776 = vunpack.c.0.s8 %v3775
    %v3777 = vlaneseq
    %v3778 = vshrl.u32 %v3777, 7
    %v3779 = vsub.s32 %v3776, %v3778
    %v3780 = vrot.slane %v3772, %v3779
    %v3782 = vunpack.c.l.s4 1983009808
    %v3783 = vunpack.c.0.s8 %v3782
    %v3784 = vlaneseq
    %v3785 = vshrl.u32 %v3784, 7
    %v3786 = vsub.s32 %v3783, %v3785
    %v3787 = vrot.slane %v3773, %v3786
    %v3788 = vcombine.low %v3780, %v3787
    %v3789 = vcombine.low %v280, %v279
    %v3790 = vcombine.low %v281, %v289
    %v3792 = vunpack.c.l.s4 1983009808
    %v3793 = vunpack.c.0.s8 %v3792
    %v3794 = vlaneseq
    %v3795 = vshrl.u32 %v3794, 7
    %v3796 = vsub.s32 %v3793, %v3795
    %v3797 = vrot.slane %v3789, %v3796
    %v3799 = vunpack.c.l.s4 1983009808
    %v3800 = vunpack.c.0.s8 %v3799
    %v3801 = vlaneseq
    %v3802 = vshrl.u32 %v3801, 7
    %v3803 = vsub.s32 %v3800, %v3802
    %v3804 = vrot.slane %v3790, %v3803
    %v3805 = vcombine.low %v3797, %v3804
    %v3806 = vcombine.low %v297, %v296
    %v3807 = vcombine.low %v1993, %v313
    %v3809 = vunpack.c.l.s4 1983009808
    %v3810 = vunpack.c.0.s8 %v3809
    %v3811 = vlaneseq
    %v3812 = vshrl.u32 %v3811, 7
    %v3813 = vsub.s32 %v3810, %v3812
    %v3814 = vrot.slane %v3806, %v3813
    %v3816 = vunpack.c.l.s4 1983009808
    %v3817 = vunpack.c.0.s8 %v3816
    %v3818 = vlaneseq
    %v3819 = vshrl.u32 %v3818, 7
    %v3820 = vsub.s32 %v3817, %v3819
    %v3821 = vrot.slane %v3807, %v3820
    %v3822 = vcombine.low %v3814, %v3821
    %v3823 = vcombine.low %v312, %v314
    %v3824 = vcombine.low %v322, %v330
    %v3826 = vunpack.c.l.s4 1983009808
    %v3827 = vunpack.c.0.s8 %v3826
    %v3828 = vlaneseq
    %v3829 = vshrl.u32 %v3828, 7
    %v3830 = vsub.s32 %v3827, %v3829
    %v3831 = vrot.slane %v3823, %v3830
    %v3833 = vunpack.c.l.s4 1983009808
    %v3834 = vunpack.c.0.s8 %v3833
    %v3835 = vlaneseq
    %v3836 = vshrl.u32 %v3835, 7
    %v3837 = vsub.s32 %v3834, %v3836
    %v3838 = vrot.slane %v3824, %v3837
    %v3839 = vcombine.low %v3831, %v3838
    %v3840 = vcombine.low %v329, %v1994
    %v3841 = vcombine.low %v346, %v345
    %v3843 = vunpack.c.l.s4 1983009808
    %v3844 = vunpack.c.0.s8 %v3843
    %v3845 = vlaneseq
    %v3846 = vshrl.u32 %v3845, 7
    %v3847 = vsub.s32 %v3844, %v3846
    %v3848 = vrot.slane %v3840, %v3847
    %v3850 = vunpack.c.l.s4 1983009808
    %v3851 = vunpack.c.0.s8 %v3850
    %v3852 = vlaneseq
    %v3853 = vshrl.u32 %v3852, 7
    %v3854 = vsub.s32 %v3851, %v3853
    %v3855 = vrot.slane %v3841, %v3854
    %v3856 = vcombine.low %v3848, %v3855
    %v3857 = vcombine.low %v347, %v355
    %v3858 = vcombine.low %v363, %v362
    %v3860 = vunpack.c.l.s4 1983009808
    %v3861 = vunpack.c.0.s8 %v3860
    %v3862 = vlaneseq
    %v3863 = vshrl.u32 %v3862, 7
    %v3864 = vsub.s32 %v3861, %v3863
    %v3865 = vrot.slane %v3857, %v3864
    %v3867 = vunpack.c.l.s4 1983009808
    %v3868 = vunpack.c.0.s8 %v3867
    %v3869 = vlaneseq
    %v3870 = vshrl.u32 %v3869, 7
    %v3871 = vsub.s32 %v3868, %v3870
    %v3872 = vrot.slane %v3858, %v3871
    %v3873 = vcombine.low %v3865, %v3872
    %v3874 = vcombine.low %v1995, %v379
    %v3875 = vcombine.low %v378, %v380
    %v3877 = vunpack.c.l.s4 1983009808
    %v3878 = vunpack.c.0.s8 %v3877
    %v3879 = vlaneseq
    %v3880 = vshrl.u32 %v3879, 7
    %v3881 = vsub.s32 %v3878, %v3880
    %v3882 = vrot.slane %v3874, %v3881
    %v3884 = vunpack.c.l.s4 1983009808
    %v3885 = vunpack.c.0.s8 %v3884
    %v3886 = vlaneseq
    %v3887 = vshrl.u32 %v3886, 7
    %v3888 = vsub.s32 %v3885, %v3887
    %v3889 = vrot.slane %v3875, %v3888
    %v3890 = vcombine.low %v3882, %v3889
    %v3891 = vcombine.low %v388, %v396
    %v3892 = vcombine.low %v395, %v1996
    %v3894 = vunpack.c.l.s4 1983009808
    %v3895 = vunpack.c.0.s8 %v3894
    %v3896 = vlaneseq
    %v3897 = vshrl.u32 %v3896, 7
    %v3898 = vsub.s32 %v3895, %v3897
    %v3899 = vrot.slane %v3891, %v3898
    %v3901 = vunpack.c.l.s4 1983009808
    %v3902 = vunpack.c.0.s8 %v3901
    %v3903 = vlaneseq
    %v3904 = vshrl.u32 %v3903, 7
    %v3905 = vsub.s32 %v3902, %v3904
    %v3906 = vrot.slane %v3892, %v3905
    %v3907 = vcombine.low %v3899, %v3906
    %v3908 = vcombine.low %v412, %v411
    %v3909 = vcombine.low %v413, %v421
    %v3911 = vunpack.c.l.s4 1983009808
    %v3912 = vunpack.c.0.s8 %v3911
    %v3913 = vlaneseq
    %v3914 = vshrl.u32 %v3913, 7
    %v3915 = vsub.s32 %v3912, %v3914
    %v3916 = vrot.slane %v3908, %v3915
    %v3918 = vunpack.c.l.s4 1983009808
    %v3919 = vunpack.c.0.s8 %v3918
    %v3920 = vlaneseq
    %v3921 = vshrl.u32 %v3920, 7
    %v3922 = vsub.s32 %v3919, %v3921
    %v3923 = vrot.slane %v3909, %v3922
    %v3924 = vcombine.low %v3916, %v3923
    %v3925 = vcombine.low %v429, %v428
    %v3926 = vcombine.low %v1997, %v445
    %v3928 = vunpack.c.l.s4 1983009808
    %v3929 = vunpack.c.0.s8 %v3928
    %v3930 = vlaneseq
    %v3931 = vshrl.u32 %v3930, 7
    %v3932 = vsub.s32 %v3929, %v3931
    %v3933 = vrot.slane %v3925, %v3932
    %v3935 = vunpack.c.l.s4 1983009808
    %v3936 = vunpack.c.0.s8 %v3935
    %v3937 = vlaneseq
    %v3938 = vshrl.u32 %v3937, 7
    %v3939 = vsub.s32 %v3936, %v3938
    %v3940 = vrot.slane %v3926, %v3939
    %v3941 = vcombine.low %v3933, %v3940
    %v3942 = vcombine.low %v444, %v446
    %v3943 = vcombine.low %v454, %v462
    %v3945 = vunpack.c.l.s4 1983009808
    %v3946 = vunpack.c.0.s8 %v3945
    %v3947 = vlaneseq
    %v3948 = vshrl.u32 %v3947, 7
    %v3949 = vsub.s32 %v3946, %v3948
    %v3950 = vrot.slane %v3942, %v3949
    %v3952 = vunpack.c.l.s4 1983009808
    %v3953 = vunpack.c.0.s8 %v3952
    %v3954 = vlaneseq
    %v3955 = vshrl.u32 %v3954, 7
    %v3956 = vsub.s32 %v3953, %v3955
    %v3957 = vrot.slane %v3943, %v3956
    %v3958 = vcombine.low %v3950, %v3957
    %v3959 = vcombine.low %v461, %v1998
    %v3960 = vcombine.low %v478, %v477
    %v3962 = vunpack.c.l.s4 1983009808
    %v3963 = vunpack.c.0.s8 %v3962
    %v3964 = vlaneseq
    %v3965 = vshrl.u32 %v3964, 7
    %v3966 = vsub.s32 %v3963, %v3965
    %v3967 = vrot.slane %v3959, %v3966
    %v3969 = vunpack.c.l.s4 1983009808
    %v3970 = vunpack.c.0.s8 %v3969
    %v3971 = vlaneseq
    %v3972 = vshrl.u32 %v3971, 7
    %v3973 = vsub.s32 %v3970, %v3972
    %v3974 = vrot.slane %v3960, %v3973
    %v3975 = vcombine.low %v3967, %v3974
    %v3976 = vcombine.low %v479, %v487
    %v3977 = vcombine.low %v495, %v494
    %v3979 = vunpack.c.l.s4 1983009808
    %v3980 = vunpack.c.0.s8 %v3979
    %v3981 = vlaneseq
    %v3982 = vshrl.u32 %v3981, 7
    %v3983 = vsub.s32 %v3980, %v3982
    %v3984 = vrot.slane %v3976, %v3983
    %v3986 = vunpack.c.l.s4 1983009808
    %v3987 = vunpack.c.0.s8 %v3986
    %v3988 = vlaneseq
    %v3989 = vshrl.u32 %v3988, 7
    %v3990 = vsub.s32 %v3987, %v3989
    %v3991 = vrot.slane %v3977, %v3990
    %v3992 = vcombine.low %v3984, %v3991
    %v3993 = vcombine.low %v1999, %v511
    %v3994 = vcombine.low %v510, %v512
    %v3996 = vunpack.c.l.s4 1983009808
    %v3997 = vunpack.c.0.s8 %v3996
    %v3998 = vlaneseq
    %v3999 = vshrl.u32 %v3998, 7
    %v4000 = vsub.s32 %v3997, %v3999
    %v4001 = vrot.slane %v3993, %v4000
    %v4003 = vunpack.c.l.s4 1983009808
    %v4004 = vunpack.c.0.s8 %v4003
    %v4005 = vlaneseq
    %v4006 = vshrl.u32 %v4005, 7
    %v4007 = vsub.s32 %v4004, %v4006
    %v4008 = vrot.slane %v3994, %v4007
    %v4009 = vcombine.low %v4001, %v4008
    %v4010 = vcombine.low %v520, %v528
    %v4011 = vcombine.low %v527, %v2000
    %v4013 = vunpack.c.l.s4 1983009808
    %v4014 = vunpack.c.0.s8 %v4013
    %v4015 = vlaneseq
    %v4016 = vshrl.u32 %v4015, 7
    %v4017 = vsub.s32 %v4014, %v4016
    %v4018 = vrot.slane %v4010, %v4017
    %v4020 = vunpack.c.l.s4 1983009808
    %v4021 = vunpack.c.0.s8 %v4020
    %v4022 = vlaneseq
    %v4023 = vshrl.u32 %v4022, 7
    %v4024 = vsub.s32 %v4021, %v4023
    %v4025 = vrot.slane %v4011, %v4024
    %v4026 = vcombine.low %v4018, %v4025
    %v4027 = vcombine.low %v544, %v543
    %v4028 = vcombine.low %v545, %v553
    %v4030 = vunpack.c.l.s4 1983009808
    %v4031 = vunpack.c.0.s8 %v4030
    %v4032 = vlaneseq
    %v4033 = vshrl.u32 %v4032, 7
    %v4034 = vsub.s32 %v4031, %v4033
    %v4035 = vrot.slane %v4027, %v4034
    %v4037 = vunpack.c.l.s4 1983009808
    %v4038 = vunpack.c.0.s8 %v4037
    %v4039 = vlaneseq
    %v4040 = vshrl.u32 %v4039, 7
    %v4041 = vsub.s32 %v4038, %v4040
    %v4042 = vrot.slane %v4028, %v4041
    %v4043 = vcombine.low %v4035, %v4042
    %v4044 = vcombine.low %v561, %v560
    %v4045 = vcombine.low %v2001, %v577
    %v4047 = vunpack.c.l.s4 1983009808
    %v4048 = vunpack.c.0.s8 %v4047
    %v4049 = vlaneseq
    %v4050 = vshrl.u32 %v4049, 7
    %v4051 = vsub.s32 %v4048, %v4050
    %v4052 = vrot.slane %v4044, %v4051
    %v4054 = vunpack.c.l.s4 1983009808
    %v4055 = vunpack.c.0.s8 %v4054
    %v4056 = vlaneseq
    %v4057 = vshrl.u32 %v4056, 7
    %v4058 = vsub.s32 %v4055, %v4057
    %v4059 = vrot.slane %v4045, %v4058
    %v4060 = vcombine.low %v4052, %v4059
    %v4061 = vcombine.low %v576, %v578
    %v4062 = vcombine.low %v586, %v594
    %v4064 = vunpack.c.l.s4 1983009808
    %v4065 = vunpack.c.0.s8 %v4064
    %v4066 = vlaneseq
    %v4067 = vshrl.u32 %v4066, 7
    %v4068 = vsub.s32 %v4065, %v4067
    %v4069 = vrot.slane %v4061, %v4068
    %v4071 = vunpack.c.l.s4 1983009808
    %v4072 = vunpack.c.0.s8 %v4071
    %v4073 = vlaneseq
    %v4074 = vshrl.u32 %v4073, 7
    %v4075 = vsub.s32 %v4072, %v4074
    %v4076 = vrot.slane %v4062, %v4075
    %v4077 = vcombine.low %v4069, %v4076
    %v4078 = vcombine.low %v593, %v2002
    %v4079 = vcombine.low %v610, %v609
    %v4081 = vunpack.c.l.s4 1983009808
    %v4082 = vunpack.c.0.s8 %v4081
    %v4083 = vlaneseq
    %v4084 = vshrl.u32 %v4083, 7
    %v4085 = vsub.s32 %v4082, %v4084
    %v4086 = vrot.slane %v4078, %v4085
    %v4088 = vunpack.c.l.s4 1983009808
    %v4089 = vunpack.c.0.s8 %v4088
    %v4090 = vlaneseq
    %v4091 = vshrl.u32 %v4090, 7
    %v4092 = vsub.s32 %v4089, %v4091
    %v4093 = vrot.slane %v4079, %v4092
    %v4094 = vcombine.low %v4086, %v4093
    %v4095 = vcombine.low %v611, %v619
    %v4096 = vcombine.low %v627, %v626
    %v4098 = vunpack.c.l.s4 1983009808
    %v4099 = vunpack.c.0.s8 %v4098
    %v4100 = vlaneseq
    %v4101 = vshrl.u32 %v4100, 7
    %v4102 = vsub.s32 %v4099, %v4101
    %v4103 = vrot.slane %v4095, %v4102
    %v4105 = vunpack.c.l.s4 1983009808
    %v4106 = vunpack.c.0.s8 %v4105
    %v4107 = vlaneseq
    %v4108 = vshrl.u32 %v4107, 7
    %v4109 = vsub.s32 %v4106, %v4108
    %v4110 = vrot.slane %v4096, %v4109
    %v4111 = vcombine.low %v4103, %v4110
    %v4112 = vcombine.low %v2003, %v643
    %v4113 = vcombine.low %v642, %v644
    %v4115 = vunpack.c.l.s4 1983009808
    %v4116 = vunpack.c.0.s8 %v4115
    %v4117 = vlaneseq
    %v4118 = vshrl.u32 %v4117, 7
    %v4119 = vsub.s32 %v4116, %v4118
    %v4120 = vrot.slane %v4112, %v4119
    %v4122 = vunpack.c.l.s4 1983009808
    %v4123 = vunpack.c.0.s8 %v4122
    %v4124 = vlaneseq
    %v4125 = vshrl.u32 %v4124, 7
    %v4126 = vsub.s32 %v4123, %v4125
    %v4127 = vrot.slane %v4113, %v4126
    %v4128 = vcombine.low %v4120, %v4127
    %v4129 = vcombine.low %v652, %v660
    %v4130 = vcombine.low %v659, %v2004
    %v4132 = vunpack.c.l.s4 1983009808
    %v4133 = vunpack.c.0.s8 %v4132
    %v4134 = vlaneseq
    %v4135 = vshrl.u32 %v4134, 7
    %v4136 = vsub.s32 %v4133, %v4135
    %v4137 = vrot.slane %v4129, %v4136
    %v4139 = vunpack.c.l.s4 1983009808
    %v4140 = vunpack.c.0.s8 %v4139
    %v4141 = vlaneseq
    %v4142 = vshrl.u32 %v4141, 7
    %v4143 = vsub.s32 %v4140, %v4142
    %v4144 = vrot.slane %v4130, %v4143
    %v4145 = vcombine.low %v4137, %v4144
    %v4146 = vcombine.low %v676, %v675
    %v4147 = vcombine.low %v677, %v685
    %v4149 = vunpack.c.l.s4 1983009808
    %v4150 = vunpack.c.0.s8 %v4149
    %v4151 = vlaneseq
    %v4152 = vshrl.u32 %v4151, 7
    %v4153 = vsub.s32 %v4150, %v4152
    %v4154 = vrot.slane %v4146, %v4153
    %v4156 = vunpack.c.l.s4 1983009808
    %v4157 = vunpack.c.0.s8 %v4156
    %v4158 = vlaneseq
    %v4159 = vshrl.u32 %v4158, 7
    %v4160 = vsub.s32 %v4157, %v4159
    %v4161 = vrot.slane %v4147, %v4160
    %v4162 = vcombine.low %v4154, %v4161
    %v4163 = vcombine.low %v693, %v692
    %v4164 = vcombine.low %v2005, %v709
    %v4166 = vunpack.c.l.s4 1983009808
    %v4167 = vunpack.c.0.s8 %v4166
    %v4168 = vlaneseq
    %v4169 = vshrl.u32 %v4168, 7
    %v4170 = vsub.s32 %v4167, %v4169
    %v4171 = vrot.slane %v4163, %v4170
    %v4173 = vunpack.c.l.s4 1983009808
    %v4174 = vunpack.c.0.s8 %v4173
    %v4175 = vlaneseq
    %v4176 = vshrl.u32 %v4175, 7
    %v4177 = vsub.s32 %v4174, %v4176
    %v4178 = vrot.slane %v4164, %v4177
    %v4179 = vcombine.low %v4171, %v4178
    %v4180 = vcombine.low %v708, %v710
    %v4181 = vcombine.low %v718, %v726
    %v4183 = vunpack.c.l.s4 1983009808
    %v4184 = vunpack.c.0.s8 %v4183
    %v4185 = vlaneseq
    %v4186 = vshrl.u32 %v4185, 7
    %v4187 = vsub.s32 %v4184, %v4186
    %v4188 = vrot.slane %v4180, %v4187
    %v4190 = vunpack.c.l.s4 1983009808
    %v4191 = vunpack.c.0.s8 %v4190
    %v4192 = vlaneseq
    %v4193 = vshrl.u32 %v4192, 7
    %v4194 = vsub.s32 %v4191, %v4193
    %v4195 = vrot.slane %v4181, %v4194
    %v4196 = vcombine.low %v4188, %v4195
    %v4197 = vcombine.low %v725, %v2006
    %v4198 = vcombine.low %v742, %v741
    %v4200 = vunpack.c.l.s4 1983009808
    %v4201 = vunpack.c.0.s8 %v4200
    %v4202 = vlaneseq
    %v4203 = vshrl.u32 %v4202, 7
    %v4204 = vsub.s32 %v4201, %v4203
    %v4205 = vrot.slane %v4197, %v4204
    %v4207 = vunpack.c.l.s4 1983009808
    %v4208 = vunpack.c.0.s8 %v4207
    %v4209 = vlaneseq
    %v4210 = vshrl.u32 %v4209, 7
    %v4211 = vsub.s32 %v4208, %v4210
    %v4212 = vrot.slane %v4198, %v4211
    %v4213 = vcombine.low %v4205, %v4212
    %v4214 = vcombine.low %v743, %v751
    %v4215 = vcombine.low %v759, %v758
    %v4217 = vunpack.c.l.s4 1983009808
    %v4218 = vunpack.c.0.s8 %v4217
    %v4219 = vlaneseq
    %v4220 = vshrl.u32 %v4219, 7
    %v4221 = vsub.s32 %v4218, %v4220
    %v4222 = vrot.slane %v4214, %v4221
    %v4224 = vunpack.c.l.s4 1983009808
    %v4225 = vunpack.c.0.s8 %v4224
    %v4226 = vlaneseq
    %v4227 = vshrl.u32 %v4226, 7
    %v4228 = vsub.s32 %v4225, %v4227
    %v4229 = vrot.slane %v4215, %v4228
    %v4230 = vcombine.low %v4222, %v4229
    %v4231 = vcombine.low %v2007, %v775
    %v4232 = vcombine.low %v774, %v776
    %v4234 = vunpack.c.l.s4 1983009808
    %v4235 = vunpack.c.0.s8 %v4234
    %v4236 = vlaneseq
    %v4237 = vshrl.u32 %v4236, 7
    %v4238 = vsub.s32 %v4235, %v4237
    %v4239 = vrot.slane %v4231, %v4238
    %v4241 = vunpack.c.l.s4 1983009808
    %v4242 = vunpack.c.0.s8 %v4241
    %v4243 = vlaneseq
    %v4244 = vshrl.u32 %v4243, 7
    %v4245 = vsub.s32 %v4242, %v4244
    %v4246 = vrot.slane %v4232, %v4245
    %v4247 = vcombine.low %v4239, %v4246
    %v4248 = vcombine.low %v784, %v792
    %v4249 = vcombine.low %v791, %v2008
    %v4251 = vunpack.c.l.s4 1983009808
    %v4252 = vunpack.c.0.s8 %v4251
    %v4253 = vlaneseq
    %v4254 = vshrl.u32 %v4253, 7
    %v4255 = vsub.s32 %v4252, %v4254
    %v4256 = vrot.slane %v4248, %v4255
    %v4258 = vunpack.c.l.s4 1983009808
    %v4259 = vunpack.c.0.s8 %v4258
    %v4260 = vlaneseq
    %v4261 = vshrl.u32 %v4260, 7
    %v4262 = vsub.s32 %v4259, %v4261
    %v4263 = vrot.slane %v4249, %v4262
    %v4264 = vcombine.low %v4256, %v4263
    %v4265 = vcombine.low %v808, %v807
    %v4266 = vcombine.low %v809, %v817
    %v4268 = vunpack.c.l.s4 1983009808
    %v4269 = vunpack.c.0.s8 %v4268
    %v4270 = vlaneseq
    %v4271 = vshrl.u32 %v4270, 7
    %v4272 = vsub.s32 %v4269, %v4271
    %v4273 = vrot.slane %v4265, %v4272
    %v4275 = vunpack.c.l.s4 1983009808
    %v4276 = vunpack.c.0.s8 %v4275
    %v4277 = vlaneseq
    %v4278 = vshrl.u32 %v4277, 7
    %v4279 = vsub.s32 %v4276, %v4278
    %v4280 = vrot.slane %v4266, %v4279
    %v4281 = vcombine.low %v4273, %v4280
    %v4282 = vcombine.low %v825, %v824
    %v4283 = vcombine.low %v2009, %v841
    %v4285 = vunpack.c.l.s4 1983009808
    %v4286 = vunpack.c.0.s8 %v4285
    %v4287 = vlaneseq
    %v4288 = vshrl.u32 %v4287, 7
    %v4289 = vsub.s32 %v4286, %v4288
    %v4290 = vrot.slane %v4282, %v4289
    %v4292 = vunpack.c.l.s4 1983009808
    %v4293 = vunpack.c.0.s8 %v4292
    %v4294 = vlaneseq
    %v4295 = vshrl.u32 %v4294, 7
    %v4296 = vsub.s32 %v4293, %v4295
    %v4297 = vrot.slane %v4283, %v4296
    %v4298 = vcombine.low %v4290, %v4297
    %v4299 = vcombine.low %v840, %v842
    %v4300 = vcombine.low %v850, %v858
    %v4302 = vunpack.c.l.s4 1983009808
    %v4303 = vunpack.c.0.s8 %v4302
    %v4304 = vlaneseq
    %v4305 = vshrl.u32 %v4304, 7
    %v4306 = vsub.s32 %v4303, %v4305
    %v4307 = vrot.slane %v4299, %v4306
    %v4309 = vunpack.c.l.s4 1983009808
    %v4310 = vunpack.c.0.s8 %v4309
    %v4311 = vlaneseq
    %v4312 = vshrl.u32 %v4311, 7
    %v4313 = vsub.s32 %v4310, %v4312
    %v4314 = vrot.slane %v4300, %v4313
    %v4315 = vcombine.low %v4307, %v4314
    %v4316 = vcombine.low %v857, %v2010
    %v4317 = vcombine.low %v874, %v873
    %v4319 = vunpack.c.l.s4 1983009808
    %v4320 = vunpack.c.0.s8 %v4319
    %v4321 = vlaneseq
    %v4322 = vshrl.u32 %v4321, 7
    %v4323 = vsub.s32 %v4320, %v4322
    %v4324 = vrot.slane %v4316, %v4323
    %v4326 = vunpack.c.l.s4 1983009808
    %v4327 = vunpack.c.0.s8 %v4326
    %v4328 = vlaneseq
    %v4329 = vshrl.u32 %v4328, 7
    %v4330 = vsub.s32 %v4327, %v4329
    %v4331 = vrot.slane %v4317, %v4330
    %v4332 = vcombine.low %v4324, %v4331
    %v4333 = vcombine.low %v875, %v883
    %v4334 = vcombine.low %v891, %v890
    %v4336 = vunpack.c.l.s4 1983009808
    %v4337 = vunpack.c.0.s8 %v4336
    %v4338 = vlaneseq
    %v4339 = vshrl.u32 %v4338, 7
    %v4340 = vsub.s32 %v4337, %v4339
    %v4341 = vrot.slane %v4333, %v4340
    %v4343 = vunpack.c.l.s4 1983009808
    %v4344 = vunpack.c.0.s8 %v4343
    %v4345 = vlaneseq
    %v4346 = vshrl.u32 %v4345, 7
    %v4347 = vsub.s32 %v4344, %v4346
    %v4348 = vrot.slane %v4334, %v4347
    %v4349 = vcombine.low %v4341, %v4348
    %v4350 = vcombine.low %v2011, %v907
    %v4351 = vcombine.low %v906, %v908
    %v4353 = vunpack.c.l.s4 1983009808
    %v4354 = vunpack.c.0.s8 %v4353
    %v4355 = vlaneseq
    %v4356 = vshrl.u32 %v4355, 7
    %v4357 = vsub.s32 %v4354, %v4356
    %v4358 = vrot.slane %v4350, %v4357
    %v4360 = vunpack.c.l.s4 1983009808
    %v4361 = vunpack.c.0.s8 %v4360
    %v4362 = vlaneseq
    %v4363 = vshrl.u32 %v4362, 7
    %v4364 = vsub.s32 %v4361, %v4363
    %v4365 = vrot.slane %v4351, %v4364
    %v4366 = vcombine.low %v4358, %v4365
    %v4367 = vcombine.low %v916, %v924
    %v4368 = vcombine.low %v923, %v2012
    %v4370 = vunpack.c.l.s4 1983009808
    %v4371 = vunpack.c.0.s8 %v4370
    %v4372 = vlaneseq
    %v4373 = vshrl.u32 %v4372, 7
    %v4374 = vsub.s32 %v4371, %v4373
    %v4375 = vrot.slane %v4367, %v4374
    %v4377 = vunpack.c.l.s4 1983009808
    %v4378 = vunpack.c.0.s8 %v4377
    %v4379 = vlaneseq
    %v4380 = vshrl.u32 %v4379, 7
    %v4381 = vsub.s32 %v4378, %v4380
    %v4382 = vrot.slane %v4368, %v4381
    %v4383 = vcombine.low %v4375, %v4382
    %v4384 = vcombine.low %v940, %v939
    %v4385 = vcombine.low %v941, %v949
    %v4387 = vunpack.c.l.s4 1983009808
    %v4388 = vunpack.c.0.s8 %v4387
    %v4389 = vlaneseq
    %v4390 = vshrl.u32 %v4389, 7
    %v4391 = vsub.s32 %v4388, %v4390
    %v4392 = vrot.slane %v4384, %v4391
    %v4394 = vunpack.c.l.s4 1983009808
    %v4395 = vunpack.c.0.s8 %v4394
    %v4396 = vlaneseq
    %v4397 = vshrl.u32 %v4396, 7
    %v4398 = vsub.s32 %v4395, %v4397
    %v4399 = vrot.slane %v4385, %v4398
    %v4400 = vcombine.low %v4392, %v4399
    %v4401 = vcombine.low %v957, %v956
    %v4402 = vcombine.low %v2013, %v973
    %v4404 = vunpack.c.l.s4 1983009808
    %v4405 = vunpack.c.0.s8 %v4404
    %v4406 = vlaneseq
    %v4407 = vshrl.u32 %v4406, 7
    %v4408 = vsub.s32 %v4405, %v4407
    %v4409 = vrot.slane %v4401, %v4408
    %v4411 = vunpack.c.l.s4 1983009808
    %v4412 = vunpack.c.0.s8 %v4411
    %v4413 = vlaneseq
    %v4414 = vshrl.u32 %v4413, 7
    %v4415 = vsub.s32 %v4412, %v4414
    %v4416 = vrot.slane %v4402, %v4415
    %v4417 = vcombine.low %v4409, %v4416
    %v4418 = vcombine.low %v972, %v974
    %v4419 = vcombine.low %v982, %v990
    %v4421 = vunpack.c.l.s4 1983009808
    %v4422 = vunpack.c.0.s8 %v4421
    %v4423 = vlaneseq
    %v4424 = vshrl.u32 %v4423, 7
    %v4425 = vsub.s32 %v4422, %v4424
    %v4426 = vrot.slane %v4418, %v4425
    %v4428 = vunpack.c.l.s4 1983009808
    %v4429 = vunpack.c.0.s8 %v4428
    %v4430 = vlaneseq
    %v4431 = vshrl.u32 %v4430, 7
    %v4432 = vsub.s32 %v4429, %v4431
    %v4433 = vrot.slane %v4419, %v4432
    %v4434 = vcombine.low %v4426, %v4433
    %v4435 = vcombine.low %v989, %v2014
    %v4436 = vcombine.low %v1006, %v1005
    %v4438 = vunpack.c.l.s4 1983009808
    %v4439 = vunpack.c.0.s8 %v4438
    %v4440 = vlaneseq
    %v4441 = vshrl.u32 %v4440, 7
    %v4442 = vsub.s32 %v4439, %v4441
    %v4443 = vrot.slane %v4435, %v4442
    %v4445 = vunpack.c.l.s4 1983009808
    %v4446 = vunpack.c.0.s8 %v4445
    %v4447 = vlaneseq
    %v4448 = vshrl.u32 %v4447, 7
    %v4449 = vsub.s32 %v4446, %v4448
    %v4450 = vrot.slane %v4436, %v4449
    %v4451 = vcombine.low %v4443, %v4450
    %v4452 = vcombine.low %v1007, %v1015
    %v4453 = vcombine.low %v1023, %v1022
    %v4455 = vunpack.c.l.s4 1983009808
    %v4456 = vunpack.c.0.s8 %v4455
    %v4457 = vlaneseq
    %v4458 = vshrl.u32 %v4457, 7
    %v4459 = vsub.s32 %v4456, %v4458
    %v4460 = vrot.slane %v4452, %v4459
    %v4462 = vunpack.c.l.s4 1983009808
    %v4463 = vunpack.c.0.s8 %v4462
    %v4464 = vlaneseq
    %v4465 = vshrl.u32 %v4464, 7
    %v4466 = vsub.s32 %v4463, %v4465
    %v4467 = vrot.slane %v4453, %v4466
    %v4468 = vcombine.low %v4460, %v4467
    %v4469 = vcombine.low %v2015, %v1039
    %v4470 = vcombine.low %v1038, %v1040
    %v4472 = vunpack.c.l.s4 1983009808
    %v4473 = vunpack.c.0.s8 %v4472
    %v4474 = vlaneseq
    %v4475 = vshrl.u32 %v4474, 7
    %v4476 = vsub.s32 %v4473, %v4475
    %v4477 = vrot.slane %v4469, %v4476
    %v4479 = vunpack.c.l.s4 1983009808
    %v4480 = vunpack.c.0.s8 %v4479
    %v4481 = vlaneseq
    %v4482 = vshrl.u32 %v4481, 7
    %v4483 = vsub.s32 %v4480, %v4482
    %v4484 = vrot.slane %v4470, %v4483
    %v4485 = vcombine.low %v4477, %v4484
    %v4486 = vcombine.low %v1048, %v1056
    %v4487 = vcombine.low %v1055, %v2016
    %v4489 = vunpack.c.l.s4 1983009808
    %v4490 = vunpack.c.0.s8 %v4489
    %v4491 = vlaneseq
    %v4492 = vshrl.u32 %v4491, 7
    %v4493 = vsub.s32 %v4490, %v4492
    %v4494 = vrot.slane %v4486, %v4493
    %v4496 = vunpack.c.l.s4 1983009808
    %v4497 = vunpack.c.0.s8 %v4496
    %v4498 = vlaneseq
    %v4499 = vshrl.u32 %v4498, 7
    %v4500 = vsub.s32 %v4497, %v4499
    %v4501 = vrot.slane %v4487, %v4500
    %v4502 = vcombine.low %v4494, %v4501
    %4503 = vrot.lane.b32.xlu0 %v3686, 2
    %v4504 = vpop.permute.xlu0 %4503
    %4505 = vrot.lane.b32.xlu0 %v3703, 2
    %v4506 = vpop.permute.xlu0 %4505
    %4507 = vrot.lane.b32.xlu0 %v3720, 2
    %v4508 = vpop.permute.xlu0 %4507
    %4509 = vrot.lane.b32.xlu0 %v3737, 2
    %v4510 = vpop.permute.xlu0 %4509
    %4511 = vrot.lane.b32.xlu0 %v3754, 2
    %v4512 = vpop.permute.xlu0 %4511
    %4513 = vrot.lane.b32.xlu0 %v3771, 2
    %v4514 = vpop.permute.xlu0 %4513
    %4515 = vrot.lane.b32.xlu0 %v3788, 2
    %v4516 = vpop.permute.xlu0 %4515
    %4517 = vrot.lane.b32.xlu0 %v3805, 2
    %v4518 = vpop.permute.xlu0 %4517
    %4519 = vrot.lane.b32.xlu0 %v3822, 2
    %v4520 = vpop.permute.xlu0 %4519
    %4521 = vrot.lane.b32.xlu0 %v3839, 2
    %v4522 = vpop.permute.xlu0 %4521
    %4523 = vrot.lane.b32.xlu0 %v3856, 2
    %v4524 = vpop.permute.xlu0 %4523
    %4525 = vrot.lane.b32.xlu0 %v3873, 2
    %v4526 = vpop.permute.xlu0 %4525
    %4527 = vrot.lane.b32.xlu0 %v3890, 2
    %v4528 = vpop.permute.xlu0 %4527
    %4529 = vrot.lane.b32.xlu0 %v3907, 2
    %v4530 = vpop.permute.xlu0 %4529
    %4531 = vrot.lane.b32.xlu0 %v3924, 2
    %v4532 = vpop.permute.xlu0 %4531
    %4533 = vrot.lane.b32.xlu0 %v3941, 2
    %v4534 = vpop.permute.xlu0 %4533
    %4535 = vrot.lane.b32.xlu0 %v3958, 2
    %v4536 = vpop.permute.xlu0 %4535
    %4537 = vrot.lane.b32.xlu0 %v3975, 2
    %v4538 = vpop.permute.xlu0 %4537
    %4539 = vrot.lane.b32.xlu0 %v3992, 2
    %v4540 = vpop.permute.xlu0 %4539
    %4541 = vrot.lane.b32.xlu0 %v4009, 2
    %v4542 = vpop.permute.xlu0 %4541
    %4543 = vrot.lane.b32.xlu0 %v4026, 2
    %v4544 = vpop.permute.xlu0 %4543
    %4545 = vrot.lane.b32.xlu0 %v4043, 2
    %v4546 = vpop.permute.xlu0 %4545
    %4547 = vrot.lane.b32.xlu0 %v4060, 2
    %v4548 = vpop.permute.xlu0 %4547
    %4549 = vrot.lane.b32.xlu0 %v4077, 2
    %v4550 = vpop.permute.xlu0 %4549
    %4551 = vrot.lane.b32.xlu0 %v4094, 2
    %v4552 = vpop.permute.xlu0 %4551
    %4553 = vrot.lane.b32.xlu0 %v4111, 2
    %v4554 = vpop.permute.xlu0 %4553
    %4555 = vrot.lane.b32.xlu0 %v4128, 2
    %v4556 = vpop.permute.xlu0 %4555
    %4557 = vrot.lane.b32.xlu0 %v4145, 2
    %v4558 = vpop.permute.xlu0 %4557
    %4559 = vrot.lane.b32.xlu0 %v4162, 2
    %v4560 = vpop.permute.xlu0 %4559
    %4561 = vrot.lane.b32.xlu0 %v4179, 2
    %v4562 = vpop.permute.xlu0 %4561
    %4563 = vrot.lane.b32.xlu0 %v4196, 2
    %v4564 = vpop.permute.xlu0 %4563
    %4565 = vrot.lane.b32.xlu0 %v4213, 2
    %v4566 = vpop.permute.xlu0 %4565
    %4567 = vrot.lane.b32.xlu0 %v4230, 2
    %v4568 = vpop.permute.xlu0 %4567
    %4569 = vrot.lane.b32.xlu0 %v4247, 2
    %v4570 = vpop.permute.xlu0 %4569
    %4571 = vrot.lane.b32.xlu0 %v4264, 2
    %v4572 = vpop.permute.xlu0 %4571
    %4573 = vrot.lane.b32.xlu0 %v4281, 2
    %v4574 = vpop.permute.xlu0 %4573
    %4575 = vrot.lane.b32.xlu0 %v4298, 2
    %v4576 = vpop.permute.xlu0 %4575
    %4577 = vrot.lane.b32.xlu0 %v4315, 2
    %v4578 = vpop.permute.xlu0 %4577
    %4579 = vrot.lane.b32.xlu0 %v4332, 2
    %v4580 = vpop.permute.xlu0 %4579
    %4581 = vrot.lane.b32.xlu0 %v4349, 2
    %v4582 = vpop.permute.xlu0 %4581
    %4583 = vrot.lane.b32.xlu0 %v4366, 2
    %v4584 = vpop.permute.xlu0 %4583
    %4585 = vrot.lane.b32.xlu0 %v4383, 2
    %v4586 = vpop.permute.xlu0 %4585
    %4587 = vrot.lane.b32.xlu0 %v4400, 2
    %v4588 = vpop.permute.xlu0 %4587
    %4589 = vrot.lane.b32.xlu0 %v4417, 2
    %v4590 = vpop.permute.xlu0 %4589
    %4591 = vrot.lane.b32.xlu0 %v4434, 2
    %v4592 = vpop.permute.xlu0 %4591
    %4593 = vrot.lane.b32.xlu0 %v4451, 2
    %v4594 = vpop.permute.xlu0 %4593
    %4595 = vrot.lane.b32.xlu0 %v4468, 2
    %v4596 = vpop.permute.xlu0 %4595
    %4597 = vrot.lane.b32.xlu0 %v4485, 2
    %v4598 = vpop.permute.xlu0 %4597
    %4599 = vrot.lane.b32.xlu0 %v4502, 2
    %v4600 = vpop.permute.xlu0 %4599
    %vm4650 = vcmask 23568
    %4651 = vst.msk [vmem:[#allocation2] sm:$0xff] %vm4650, %v4504
    %4652 = vst.msk [vmem:[#allocation2 + $0x8] sm:$0xff] %vm4650, %v4506
    %4653 = vst.msk [vmem:[#allocation2 + $0x10] sm:$0xff] %vm4650, %v4508
    %4654 = vst.msk [vmem:[#allocation2 + $0x18] sm:$0xff] %vm4650, %v4510
    %4655 = vst.msk [vmem:[#allocation2 + $0x20] sm:$0xff] %vm4650, %v4512
    %4656 = vst.msk [vmem:[#allocation2 + $0x28] sm:$0xff] %vm4650, %v4514
    %4657 = vst.msk [vmem:[#allocation2 + $0x30] sm:$0xff] %vm4650, %v4516
    %4658 = vst.msk [vmem:[#allocation2 + $0x38] sm:$0xff] %vm4650, %v4518
    %4659 = vst.msk [vmem:[#allocation2 + $0x40] sm:$0xff] %vm4650, %v4520
    %4660 = vst.msk [vmem:[#allocation2 + $0x48] sm:$0xff] %vm4650, %v4522
    %4661 = vst.msk [vmem:[#allocation2 + $0x50] sm:$0xff] %vm4650, %v4524
    %4662 = vst.msk [vmem:[#allocation2 + $0x58] sm:$0xff] %vm4650, %v4526
    %4663 = vst.msk [vmem:[#allocation2 + $0x60] sm:$0xff] %vm4650, %v4528
    %4664 = vst.msk [vmem:[#allocation2 + $0x68] sm:$0xff] %vm4650, %v4530
    %4665 = vst.msk [vmem:[#allocation2 + $0x70] sm:$0xff] %vm4650, %v4532
    %4666 = vst.msk [vmem:[#allocation2 + $0x78] sm:$0xff] %vm4650, %v4534
    %4667 = vst.msk [vmem:[#allocation2 + $0x80] sm:$0xff] %vm4650, %v4536
    %4668 = vst.msk [vmem:[#allocation2 + $0x88] sm:$0xff] %vm4650, %v4538
    %4669 = vst.msk [vmem:[#allocation2 + $0x90] sm:$0xff] %vm4650, %v4540
    %4670 = vst.msk [vmem:[#allocation2 + $0x98] sm:$0xff] %vm4650, %v4542
    %4671 = vst.msk [vmem:[#allocation2 + $0xa0] sm:$0xff] %vm4650, %v4544
    %4672 = vst.msk [vmem:[#allocation2 + $0xa8] sm:$0xff] %vm4650, %v4546
    %4673 = vst.msk [vmem:[#allocation2 + $0xb0] sm:$0xff] %vm4650, %v4548
    %4674 = vst.msk [vmem:[#allocation2 + $0xb8] sm:$0xff] %vm4650, %v4550
    %4675 = vst.msk [vmem:[#allocation2 + $0xc0] sm:$0xff] %vm4650, %v4552
    %4676 = vst.msk [vmem:[#allocation2 + $0xc8] sm:$0xff] %vm4650, %v4554
    %4677 = vst.msk [vmem:[#allocation2 + $0xd0] sm:$0xff] %vm4650, %v4556
    %4678 = vst.msk [vmem:[#allocation2 + $0xd8] sm:$0xff] %vm4650, %v4558
    %4679 = vst.msk [vmem:[#allocation2 + $0xe0] sm:$0xff] %vm4650, %v4560
    %4680 = vst.msk [vmem:[#allocation2 + $0xe8] sm:$0xff] %vm4650, %v4562
    %4681 = vst.msk [vmem:[#allocation2 + $0xf0] sm:$0xff] %vm4650, %v4564
    %4682 = vst.msk [vmem:[#allocation2 + $0xf8] sm:$0xff] %vm4650, %v4566
    %4683 = vst.msk [vmem:[#allocation2 + $0x100] sm:$0xff] %vm4650, %v4568
    %4684 = vst.msk [vmem:[#allocation2 + $0x108] sm:$0xff] %vm4650, %v4570
    %4685 = vst.msk [vmem:[#allocation2 + $0x110] sm:$0xff] %vm4650, %v4572
    %4686 = vst.msk [vmem:[#allocation2 + $0x118] sm:$0xff] %vm4650, %v4574
    %4687 = vst.msk [vmem:[#allocation2 + $0x120] sm:$0xff] %vm4650, %v4576
    %4688 = vst.msk [vmem:[#allocation2 + $0x128] sm:$0xff] %vm4650, %v4578
    %4689 = vst.msk [vmem:[#allocation2 + $0x130] sm:$0xff] %vm4650, %v4580
    %4690 = vst.msk [vmem:[#allocation2 + $0x138] sm:$0xff] %vm4650, %v4582
    %4691 = vst.msk [vmem:[#allocation2 + $0x140] sm:$0xff] %vm4650, %v4584
    %4692 = vst.msk [vmem:[#allocation2 + $0x148] sm:$0xff] %vm4650, %v4586
    %4693 = vst.msk [vmem:[#allocation2 + $0x150] sm:$0xff] %vm4650, %v4588
    %4694 = vst.msk [vmem:[#allocation2 + $0x158] sm:$0xff] %vm4650, %v4590
    %4695 = vst.msk [vmem:[#allocation2 + $0x160] sm:$0xff] %vm4650, %v4592
    %4696 = vst.msk [vmem:[#allocation2 + $0x168] sm:$0xff] %vm4650, %v4594
    %4697 = vst.msk [vmem:[#allocation2 + $0x170] sm:$0xff] %vm4650, %v4596
    %4698 = vst.msk [vmem:[#allocation2 + $0x178] sm:$0xff] %vm4650, %v4598
    %4699 = vst.msk [vmem:[#allocation2 + $0x180] sm:$0xff] %vm4650, %v4600
    %v4704 = vcombine.high %v41, %v41
    %v4706 = vunpack.c.l.s4 1983009808
    %v4707 = vunpack.c.0.s8 %v4706
    %v4708 = vlaneseq
    %v4709 = vshrl.u32 %v4708, 7
    %v4710 = vsub.s32 %v4707, %v4709
    %v4711 = vrot.slane %v41, %v4710
    %v4713 = vunpack.c.l.s4 1983009808
    %v4714 = vunpack.c.0.s8 %v4713
    %v4715 = vlaneseq
    %v4716 = vshrl.u32 %v4715, 7
    %v4717 = vsub.s32 %v4714, %v4716
    %v4718 = vrot.slane %v4704, %v4717
    %v4719 = vcombine.high %v4711, %v4711
    %v4720 = vcombine.high %v4718, %v4718
    %v4721 = vcombine.high %v42, %v42
    %v4723 = vunpack.c.l.s4 1983009808
    %v4724 = vunpack.c.0.s8 %v4723
    %v4725 = vlaneseq
    %v4726 = vshrl.u32 %v4725, 7
    %v4727 = vsub.s32 %v4724, %v4726
    %v4728 = vrot.slane %v42, %v4727
    %v4730 = vunpack.c.l.s4 1983009808
    %v4731 = vunpack.c.0.s8 %v4730
    %v4732 = vlaneseq
    %v4733 = vshrl.u32 %v4732, 7
    %v4734 = vsub.s32 %v4731, %v4733
    %v4735 = vrot.slane %v4721, %v4734
    %v4736 = vcombine.high %v4728, %v4728
    %v4737 = vcombine.high %v73, %v73
    %v4739 = vunpack.c.l.s4 1983009808
    %v4740 = vunpack.c.0.s8 %v4739
    %v4741 = vlaneseq
    %v4742 = vshrl.u32 %v4741, 7
    %v4743 = vsub.s32 %v4740, %v4742
    %v4744 = vrot.slane %v73, %v4743
    %v4746 = vunpack.c.l.s4 1983009808
    %v4747 = vunpack.c.0.s8 %v4746
    %v4748 = vlaneseq
    %v4749 = vshrl.u32 %v4748, 7
    %v4750 = vsub.s32 %v4747, %v4749
    %v4751 = vrot.slane %v4737, %v4750
    %v4752 = vcombine.high %v4744, %v4744
    %v4753 = vcombine.high %v4751, %v4751
    %v4754 = vcombine.high %v74, %v74
    %v4756 = vunpack.c.l.s4 1983009808
    %v4757 = vunpack.c.0.s8 %v4756
    %v4758 = vlaneseq
    %v4759 = vshrl.u32 %v4758, 7
    %v4760 = vsub.s32 %v4757, %v4759
    %v4761 = vrot.slane %v74, %v4760
    %v4763 = vunpack.c.l.s4 1983009808
    %v4764 = vunpack.c.0.s8 %v4763
    %v4765 = vlaneseq
    %v4766 = vshrl.u32 %v4765, 7
    %v4767 = vsub.s32 %v4764, %v4766
    %v4768 = vrot.slane %v4754, %v4767
    %v4769 = vcombine.high %v4761, %v4761
    %v4770 = vcombine.low %v173, %v181
    %v4772 = vunpack.c.l.s4 1983009808
    %v4773 = vunpack.c.0.s8 %v4772
    %v4774 = vlaneseq
    %v4775 = vshrl.u32 %v4774, 7
    %v4776 = vsub.s32 %v4773, %v4775
    %v4777 = vrot.slane %v4770, %v4776
    %v4778 = vcombine.low %v4777, %v3712
    %v4779 = vcombine.low %v197, %v206
    %v4781 = vunpack.c.l.s4 1983009808
    %v4782 = vunpack.c.0.s8 %v4781
    %v4783 = vlaneseq
    %v4784 = vshrl.u32 %v4783, 7
    %v4785 = vsub.s32 %v4782, %v4784
    %v4786 = vrot.slane %v4779, %v4785
    %v4787 = vcombine.low %v3719, %v4786
    %v4788 = vcombine.low %v3736, %v3746
    %v4789 = vcombine.low %v239, %v247
    %v4791 = vunpack.c.l.s4 1983009808
    %v4792 = vunpack.c.0.s8 %v4791
    %v4793 = vlaneseq
    %v4794 = vshrl.u32 %v4793, 7
    %v4795 = vsub.s32 %v4792, %v4794
    %v4796 = vrot.slane %v4789, %v4795
    %v4797 = vcombine.low %v3753, %v4796
    %v4798 = vcombine.low %v3770, %v3780
    %v4799 = vcombine.low %v263, %v272
    %v4801 = vunpack.c.l.s4 1983009808
    %v4802 = vunpack.c.0.s8 %v4801
    %v4803 = vlaneseq
    %v4804 = vshrl.u32 %v4803, 7
    %v4805 = vsub.s32 %v4802, %v4804
    %v4806 = vrot.slane %v4799, %v4805
    %v4807 = vcombine.low %v4806, %v3797
    %v4808 = vcombine.low %v3804, %v3814
    %v4809 = vcombine.low %v305, %v313
    %v4811 = vunpack.c.l.s4 1983009808
    %v4812 = vunpack.c.0.s8 %v4811
    %v4813 = vlaneseq
    %v4814 = vshrl.u32 %v4813, 7
    %v4815 = vsub.s32 %v4812, %v4814
    %v4816 = vrot.slane %v4809, %v4815
    %v4817 = vcombine.low %v4816, %v3831
    %v4818 = vcombine.low %v329, %v338
    %v4820 = vunpack.c.l.s4 1983009808
    %v4821 = vunpack.c.0.s8 %v4820
    %v4822 = vlaneseq
    %v4823 = vshrl.u32 %v4822, 7
    %v4824 = vsub.s32 %v4821, %v4823
    %v4825 = vrot.slane %v4818, %v4824
    %v4826 = vcombine.low %v3838, %v4825
    %v4827 = vcombine.low %v3855, %v3865
    %v4828 = vcombine.low %v371, %v379
    %v4830 = vunpack.c.l.s4 1983009808
    %v4831 = vunpack.c.0.s8 %v4830
    %v4832 = vlaneseq
    %v4833 = vshrl.u32 %v4832, 7
    %v4834 = vsub.s32 %v4831, %v4833
    %v4835 = vrot.slane %v4828, %v4834
    %v4836 = vcombine.low %v3872, %v4835
    %v4837 = vcombine.low %v3889, %v3899
    %v4838 = vcombine.low %v395, %v404
    %v4840 = vunpack.c.l.s4 1983009808
    %v4841 = vunpack.c.0.s8 %v4840
    %v4842 = vlaneseq
    %v4843 = vshrl.u32 %v4842, 7
    %v4844 = vsub.s32 %v4841, %v4843
    %v4845 = vrot.slane %v4838, %v4844
    %v4846 = vcombine.low %v4845, %v3916
    %v4847 = vcombine.low %v3923, %v3933
    %v4848 = vcombine.low %v437, %v445
    %v4850 = vunpack.c.l.s4 1983009808
    %v4851 = vunpack.c.0.s8 %v4850
    %v4852 = vlaneseq
    %v4853 = vshrl.u32 %v4852, 7
    %v4854 = vsub.s32 %v4851, %v4853
    %v4855 = vrot.slane %v4848, %v4854
    %v4856 = vcombine.low %v4855, %v3950
    %v4857 = vcombine.low %v461, %v470
    %v4859 = vunpack.c.l.s4 1983009808
    %v4860 = vunpack.c.0.s8 %v4859
    %v4861 = vlaneseq
    %v4862 = vshrl.u32 %v4861, 7
    %v4863 = vsub.s32 %v4860, %v4862
    %v4864 = vrot.slane %v4857, %v4863
    %v4865 = vcombine.low %v3957, %v4864
    %v4866 = vcombine.low %v3974, %v3984
    %v4867 = vcombine.low %v503, %v511
    %v4869 = vunpack.c.l.s4 1983009808
    %v4870 = vunpack.c.0.s8 %v4869
    %v4871 = vlaneseq
    %v4872 = vshrl.u32 %v4871, 7
    %v4873 = vsub.s32 %v4870, %v4872
    %v4874 = vrot.slane %v4867, %v4873
    %v4875 = vcombine.low %v3991, %v4874
    %v4876 = vcombine.low %v4008, %v4018
    %v4877 = vcombine.low %v527, %v536
    %v4879 = vunpack.c.l.s4 1983009808
    %v4880 = vunpack.c.0.s8 %v4879
    %v4881 = vlaneseq
    %v4882 = vshrl.u32 %v4881, 7
    %v4883 = vsub.s32 %v4880, %v4882
    %v4884 = vrot.slane %v4877, %v4883
    %v4885 = vcombine.low %v4884, %v4035
    %v4886 = vcombine.low %v4042, %v4052
    %v4887 = vcombine.low %v569, %v577
    %v4889 = vunpack.c.l.s4 1983009808
    %v4890 = vunpack.c.0.s8 %v4889
    %v4891 = vlaneseq
    %v4892 = vshrl.u32 %v4891, 7
    %v4893 = vsub.s32 %v4890, %v4892
    %v4894 = vrot.slane %v4887, %v4893
    %v4895 = vcombine.low %v4894, %v4069
    %v4896 = vcombine.low %v593, %v4711
    %v4898 = vunpack.c.l.s4 1983009808
    %v4899 = vunpack.c.0.s8 %v4898
    %v4900 = vlaneseq
    %v4901 = vshrl.u32 %v4900, 7
    %v4902 = vsub.s32 %v4899, %v4901
    %v4903 = vrot.slane %v4896, %v4902
    %v4904 = vcombine.low %v4076, %v4903
    %v4905 = vcombine.low %v4719, %v4718
    %v4906 = vcombine.low %v4720, %v4728
    %v4908 = vunpack.c.l.s4 1983009808
    %v4909 = vunpack.c.0.s8 %v4908
    %v4910 = vlaneseq
    %v4911 = vshrl.u32 %v4910, 7
    %v4912 = vsub.s32 %v4909, %v4911
    %v4913 = vrot.slane %v4905, %v4912
    %v4915 = vunpack.c.l.s4 1983009808
    %v4916 = vunpack.c.0.s8 %v4915
    %v4917 = vlaneseq
    %v4918 = vshrl.u32 %v4917, 7
    %v4919 = vsub.s32 %v4916, %v4918
    %v4920 = vrot.slane %v4906, %v4919
    %v4921 = vcombine.low %v4913, %v4920
    %v4922 = vcombine.low %v4736, %v4735
    %v4923 = vcombine.low %v635, %v643
    %v4925 = vunpack.c.l.s4 1983009808
    %v4926 = vunpack.c.0.s8 %v4925
    %v4927 = vlaneseq
    %v4928 = vshrl.u32 %v4927, 7
    %v4929 = vsub.s32 %v4926, %v4928
    %v4930 = vrot.slane %v4922, %v4929
    %v4932 = vunpack.c.l.s4 1983009808
    %v4933 = vunpack.c.0.s8 %v4932
    %v4934 = vlaneseq
    %v4935 = vshrl.u32 %v4934, 7
    %v4936 = vsub.s32 %v4933, %v4935
    %v4937 = vrot.slane %v4923, %v4936
    %v4938 = vcombine.low %v4930, %v4937
    %v4939 = vcombine.low %v4127, %v4137
    %v4940 = vcombine.low %v659, %v668
    %v4942 = vunpack.c.l.s4 1983009808
    %v4943 = vunpack.c.0.s8 %v4942
    %v4944 = vlaneseq
    %v4945 = vshrl.u32 %v4944, 7
    %v4946 = vsub.s32 %v4943, %v4945
    %v4947 = vrot.slane %v4940, %v4946
    %v4948 = vcombine.low %v4947, %v4154
    %v4949 = vcombine.low %v4161, %v4171
    %v4950 = vcombine.low %v701, %v709
    %v4952 = vunpack.c.l.s4 1983009808
    %v4953 = vunpack.c.0.s8 %v4952
    %v4954 = vlaneseq
    %v4955 = vshrl.u32 %v4954, 7
    %v4956 = vsub.s32 %v4953, %v4955
    %v4957 = vrot.slane %v4950, %v4956
    %v4958 = vcombine.low %v4957, %v4188
    %v4959 = vcombine.low %v725, %v734
    %v4961 = vunpack.c.l.s4 1983009808
    %v4962 = vunpack.c.0.s8 %v4961
    %v4963 = vlaneseq
    %v4964 = vshrl.u32 %v4963, 7
    %v4965 = vsub.s32 %v4962, %v4964
    %v4966 = vrot.slane %v4959, %v4965
    %v4967 = vcombine.low %v4195, %v4966
    %v4968 = vcombine.low %v4212, %v4222
    %v4969 = vcombine.low %v767, %v775
    %v4971 = vunpack.c.l.s4 1983009808
    %v4972 = vunpack.c.0.s8 %v4971
    %v4973 = vlaneseq
    %v4974 = vshrl.u32 %v4973, 7
    %v4975 = vsub.s32 %v4972, %v4974
    %v4976 = vrot.slane %v4969, %v4975
    %v4977 = vcombine.low %v4229, %v4976
    %v4978 = vcombine.low %v4246, %v4256
    %v4979 = vcombine.low %v791, %v800
    %v4981 = vunpack.c.l.s4 1983009808
    %v4982 = vunpack.c.0.s8 %v4981
    %v4983 = vlaneseq
    %v4984 = vshrl.u32 %v4983, 7
    %v4985 = vsub.s32 %v4982, %v4984
    %v4986 = vrot.slane %v4979, %v4985
    %v4987 = vcombine.low %v4986, %v4273
    %v4988 = vcombine.low %v4280, %v4290
    %v4989 = vcombine.low %v833, %v841
    %v4991 = vunpack.c.l.s4 1983009808
    %v4992 = vunpack.c.0.s8 %v4991
    %v4993 = vlaneseq
    %v4994 = vshrl.u32 %v4993, 7
    %v4995 = vsub.s32 %v4992, %v4994
    %v4996 = vrot.slane %v4989, %v4995
    %v4997 = vcombine.low %v4996, %v4307
    %v4998 = vcombine.low %v857, %v866
    %v5000 = vunpack.c.l.s4 1983009808
    %v5001 = vunpack.c.0.s8 %v5000
    %v5002 = vlaneseq
    %v5003 = vshrl.u32 %v5002, 7
    %v5004 = vsub.s32 %v5001, %v5003
    %v5005 = vrot.slane %v4998, %v5004
    %v5006 = vcombine.low %v4314, %v5005
    %v5007 = vcombine.low %v4331, %v4341
    %v5008 = vcombine.low %v899, %v907
    %v5010 = vunpack.c.l.s4 1983009808
    %v5011 = vunpack.c.0.s8 %v5010
    %v5012 = vlaneseq
    %v5013 = vshrl.u32 %v5012, 7
    %v5014 = vsub.s32 %v5011, %v5013
    %v5015 = vrot.slane %v5008, %v5014
    %v5016 = vcombine.low %v4348, %v5015
    %v5017 = vcombine.low %v4365, %v4375
    %v5018 = vcombine.low %v923, %v932
    %v5020 = vunpack.c.l.s4 1983009808
    %v5021 = vunpack.c.0.s8 %v5020
    %v5022 = vlaneseq
    %v5023 = vshrl.u32 %v5022, 7
    %v5024 = vsub.s32 %v5021, %v5023
    %v5025 = vrot.slane %v5018, %v5024
    %v5026 = vcombine.low %v5025, %v4392
    %v5027 = vcombine.low %v4399, %v4409
    %v5028 = vcombine.low %v965, %v973
    %v5030 = vunpack.c.l.s4 1983009808
    %v5031 = vunpack.c.0.s8 %v5030
    %v5032 = vlaneseq
    %v5033 = vshrl.u32 %v5032, 7
    %v5034 = vsub.s32 %v5031, %v5033
    %v5035 = vrot.slane %v5028, %v5034
    %v5036 = vcombine.low %v5035, %v4426
    %v5037 = vcombine.low %v989, %v998
    %v5039 = vunpack.c.l.s4 1983009808
    %v5040 = vunpack.c.0.s8 %v5039
    %v5041 = vlaneseq
    %v5042 = vshrl.u32 %v5041, 7
    %v5043 = vsub.s32 %v5040, %v5042
    %v5044 = vrot.slane %v5037, %v5043
    %v5045 = vcombine.low %v4433, %v5044
    %v5046 = vcombine.low %v4450, %v4460
    %v5047 = vcombine.low %v1031, %v1039
    %v5049 = vunpack.c.l.s4 1983009808
    %v5050 = vunpack.c.0.s8 %v5049
    %v5051 = vlaneseq
    %v5052 = vshrl.u32 %v5051, 7
    %v5053 = vsub.s32 %v5050, %v5052
    %v5054 = vrot.slane %v5047, %v5053
    %v5055 = vcombine.low %v4467, %v5054
    %v5056 = vcombine.low %v4484, %v4494
    %v5057 = vcombine.low %v1055, %v4744
    %v5058 = vcombine.low %v4752, %v4751
    %v5060 = vunpack.c.l.s4 1983009808
    %v5061 = vunpack.c.0.s8 %v5060
    %v5062 = vlaneseq
    %v5063 = vshrl.u32 %v5062, 7
    %v5064 = vsub.s32 %v5061, %v5063
    %v5065 = vrot.slane %v5057, %v5064
    %v5067 = vunpack.c.l.s4 1983009808
    %v5068 = vunpack.c.0.s8 %v5067
    %v5069 = vlaneseq
    %v5070 = vshrl.u32 %v5069, 7
    %v5071 = vsub.s32 %v5068, %v5070
    %v5072 = vrot.slane %v5058, %v5071
    %v5073 = vcombine.low %v5065, %v5072
    %v5074 = vcombine.low %v4753, %v4761
    %v5075 = vcombine.low %v4769, %v4768
    %v5077 = vunpack.c.l.s4 1983009808
    %v5078 = vunpack.c.0.s8 %v5077
    %v5079 = vlaneseq
    %v5080 = vshrl.u32 %v5079, 7
    %v5081 = vsub.s32 %v5078, %v5080
    %v5082 = vrot.slane %v5074, %v5081
    %v5084 = vunpack.c.l.s4 1983009808
    %v5085 = vunpack.c.0.s8 %v5084
    %v5086 = vlaneseq
    %v5087 = vshrl.u32 %v5086, 7
    %v5088 = vsub.s32 %v5085, %v5087
    %v5089 = vrot.slane %v5075, %v5088
    %v5090 = vcombine.low %v5082, %v5089
    %5091 = vrot.lane.b32.xlu0 %v4778, 3
    %v5092 = vpop.permute.xlu0 %5091
    %5093 = vrot.lane.b32.xlu0 %v4787, 3
    %v5094 = vpop.permute.xlu0 %5093
    %5095 = vrot.lane.b32.xlu0 %v4788, 3
    %v5096 = vpop.permute.xlu0 %5095
    %5097 = vrot.lane.b32.xlu0 %v4797, 3
    %v5098 = vpop.permute.xlu0 %5097
    %5099 = vrot.lane.b32.xlu0 %v4798, 3
    %v5100 = vpop.permute.xlu0 %5099
    %5101 = vrot.lane.b32.xlu0 %v4807, 3
    %v5102 = vpop.permute.xlu0 %5101
    %5103 = vrot.lane.b32.xlu0 %v4808, 3
    %v5104 = vpop.permute.xlu0 %5103
    %5105 = vrot.lane.b32.xlu0 %v4817, 3
    %v5106 = vpop.permute.xlu0 %5105
    %5107 = vrot.lane.b32.xlu0 %v4826, 3
    %v5108 = vpop.permute.xlu0 %5107
    %5109 = vrot.lane.b32.xlu0 %v4827, 3
    %v5110 = vpop.permute.xlu0 %5109
    %5111 = vrot.lane.b32.xlu0 %v4836, 3
    %v5112 = vpop.permute.xlu0 %5111
    %5113 = vrot.lane.b32.xlu0 %v4837, 3
    %v5114 = vpop.permute.xlu0 %5113
    %5115 = vrot.lane.b32.xlu0 %v4846, 3
    %v5116 = vpop.permute.xlu0 %5115
    %5117 = vrot.lane.b32.xlu0 %v4847, 3
    %v5118 = vpop.permute.xlu0 %5117
    %5119 = vrot.lane.b32.xlu0 %v4856, 3
    %v5120 = vpop.permute.xlu0 %5119
    %5121 = vrot.lane.b32.xlu0 %v4865, 3
    %v5122 = vpop.permute.xlu0 %5121
    %5123 = vrot.lane.b32.xlu0 %v4866, 3
    %v5124 = vpop.permute.xlu0 %5123
    %5125 = vrot.lane.b32.xlu0 %v4875, 3
    %v5126 = vpop.permute.xlu0 %5125
    %5127 = vrot.lane.b32.xlu0 %v4876, 3
    %v5128 = vpop.permute.xlu0 %5127
    %5129 = vrot.lane.b32.xlu0 %v4885, 3
    %v5130 = vpop.permute.xlu0 %5129
    %5131 = vrot.lane.b32.xlu0 %v4886, 3
    %v5132 = vpop.permute.xlu0 %5131
    %5133 = vrot.lane.b32.xlu0 %v4895, 3
    %v5134 = vpop.permute.xlu0 %5133
    %5135 = vrot.lane.b32.xlu0 %v4904, 3
    %v5136 = vpop.permute.xlu0 %5135
    %5137 = vrot.lane.b32.xlu0 %v4921, 3
    %v5138 = vpop.permute.xlu0 %5137
    %5139 = vrot.lane.b32.xlu0 %v4938, 3
    %v5140 = vpop.permute.xlu0 %5139
    %5141 = vrot.lane.b32.xlu0 %v4939, 3
    %v5142 = vpop.permute.xlu0 %5141
    %5143 = vrot.lane.b32.xlu0 %v4948, 3
    %v5144 = vpop.permute.xlu0 %5143
    %5145 = vrot.lane.b32.xlu0 %v4949, 3
    %v5146 = vpop.permute.xlu0 %5145
    %5147 = vrot.lane.b32.xlu0 %v4958, 3
    %v5148 = vpop.permute.xlu0 %5147
    %5149 = vrot.lane.b32.xlu0 %v4967, 3
    %v5150 = vpop.permute.xlu0 %5149
    %5151 = vrot.lane.b32.xlu0 %v4968, 3
    %v5152 = vpop.permute.xlu0 %5151
    %5153 = vrot.lane.b32.xlu0 %v4977, 3
    %v5154 = vpop.permute.xlu0 %5153
    %5155 = vrot.lane.b32.xlu0 %v4978, 3
    %v5156 = vpop.permute.xlu0 %5155
    %5157 = vrot.lane.b32.xlu0 %v4987, 3
    %v5158 = vpop.permute.xlu0 %5157
    %5159 = vrot.lane.b32.xlu0 %v4988, 3
    %v5160 = vpop.permute.xlu0 %5159
    %5161 = vrot.lane.b32.xlu0 %v4997, 3
    %v5162 = vpop.permute.xlu0 %5161
    %5163 = vrot.lane.b32.xlu0 %v5006, 3
    %v5164 = vpop.permute.xlu0 %5163
    %5165 = vrot.lane.b32.xlu0 %v5007, 3
    %v5166 = vpop.permute.xlu0 %5165
    %5167 = vrot.lane.b32.xlu0 %v5016, 3
    %v5168 = vpop.permute.xlu0 %5167
    %5169 = vrot.lane.b32.xlu0 %v5017, 3
    %v5170 = vpop.permute.xlu0 %5169
    %5171 = vrot.lane.b32.xlu0 %v5026, 3
    %v5172 = vpop.permute.xlu0 %5171
    %5173 = vrot.lane.b32.xlu0 %v5027, 3
    %v5174 = vpop.permute.xlu0 %5173
    %5175 = vrot.lane.b32.xlu0 %v5036, 3
    %v5176 = vpop.permute.xlu0 %5175
    %5177 = vrot.lane.b32.xlu0 %v5045, 3
    %v5178 = vpop.permute.xlu0 %5177
    %5179 = vrot.lane.b32.xlu0 %v5046, 3
    %v5180 = vpop.permute.xlu0 %5179
    %5181 = vrot.lane.b32.xlu0 %v5055, 3
    %v5182 = vpop.permute.xlu0 %5181
    %5183 = vrot.lane.b32.xlu0 %v5056, 3
    %v5184 = vpop.permute.xlu0 %5183
    %5185 = vrot.lane.b32.xlu0 %v5073, 3
    %v5186 = vpop.permute.xlu0 %5185
    %5187 = vrot.lane.b32.xlu0 %v5090, 3
    %v5188 = vpop.permute.xlu0 %5187
    %vm5238 = vcmask 31768
    %5239 = vst.msk [vmem:[#allocation2] sm:$0xff] %vm5238, %v5092
    %5240 = vst.msk [vmem:[#allocation2 + $0x8] sm:$0xff] %vm5238, %v5094
    %5241 = vst.msk [vmem:[#allocation2 + $0x10] sm:$0xff] %vm5238, %v5096
    %5242 = vst.msk [vmem:[#allocation2 + $0x18] sm:$0xff] %vm5238, %v5098
    %5243 = vst.msk [vmem:[#allocation2 + $0x20] sm:$0xff] %vm5238, %v5100
    %5244 = vst.msk [vmem:[#allocation2 + $0x28] sm:$0xff] %vm5238, %v5102
    %5245 = vst.msk [vmem:[#allocation2 + $0x30] sm:$0xff] %vm5238, %v5104
    %5246 = vst.msk [vmem:[#allocation2 + $0x38] sm:$0xff] %vm5238, %v5106
    %5247 = vst.msk [vmem:[#allocation2 + $0x40] sm:$0xff] %vm5238, %v5108
    %5248 = vst.msk [vmem:[#allocation2 + $0x48] sm:$0xff] %vm5238, %v5110
    %5249 = vst.msk [vmem:[#allocation2 + $0x50] sm:$0xff] %vm5238, %v5112
    %5250 = vst.msk [vmem:[#allocation2 + $0x58] sm:$0xff] %vm5238, %v5114
    %5251 = vst.msk [vmem:[#allocation2 + $0x60] sm:$0xff] %vm5238, %v5116
    %5252 = vst.msk [vmem:[#allocation2 + $0x68] sm:$0xff] %vm5238, %v5118
    %5253 = vst.msk [vmem:[#allocation2 + $0x70] sm:$0xff] %vm5238, %v5120
    %5254 = vst.msk [vmem:[#allocation2 + $0x78] sm:$0xff] %vm5238, %v5122
    %5255 = vst.msk [vmem:[#allocation2 + $0x80] sm:$0xff] %vm5238, %v5124
    %5256 = vst.msk [vmem:[#allocation2 + $0x88] sm:$0xff] %vm5238, %v5126
    %5257 = vst.msk [vmem:[#allocation2 + $0x90] sm:$0xff] %vm5238, %v5128
    %5258 = vst.msk [vmem:[#allocation2 + $0x98] sm:$0xff] %vm5238, %v5130
    %5259 = vst.msk [vmem:[#allocation2 + $0xa0] sm:$0xff] %vm5238, %v5132
    %5260 = vst.msk [vmem:[#allocation2 + $0xa8] sm:$0xff] %vm5238, %v5134
    %5261 = vst.msk [vmem:[#allocation2 + $0xb0] sm:$0xff] %vm5238, %v5136
    %5262 = vst.msk [vmem:[#allocation2 + $0xb8] sm:$0xff] %vm5238, %v5138
    %5263 = vst.msk [vmem:[#allocation2 + $0xc0] sm:$0xff] %vm5238, %v5140
    %5264 = vst.msk [vmem:[#allocation2 + $0xc8] sm:$0xff] %vm5238, %v5142
    %5265 = vst.msk [vmem:[#allocation2 + $0xd0] sm:$0xff] %vm5238, %v5144
    %5266 = vst.msk [vmem:[#allocation2 + $0xd8] sm:$0xff] %vm5238, %v5146
    %5267 = vst.msk [vmem:[#allocation2 + $0xe0] sm:$0xff] %vm5238, %v5148
    %5268 = vst.msk [vmem:[#allocation2 + $0xe8] sm:$0xff] %vm5238, %v5150
    %5269 = vst.msk [vmem:[#allocation2 + $0xf0] sm:$0xff] %vm5238, %v5152
    %5270 = vst.msk [vmem:[#allocation2 + $0xf8] sm:$0xff] %vm5238, %v5154
    %5271 = vst.msk [vmem:[#allocation2 + $0x100] sm:$0xff] %vm5238, %v5156
    %5272 = vst.msk [vmem:[#allocation2 + $0x108] sm:$0xff] %vm5238, %v5158
    %5273 = vst.msk [vmem:[#allocation2 + $0x110] sm:$0xff] %vm5238, %v5160
    %5274 = vst.msk [vmem:[#allocation2 + $0x118] sm:$0xff] %vm5238, %v5162
    %5275 = vst.msk [vmem:[#allocation2 + $0x120] sm:$0xff] %vm5238, %v5164
    %5276 = vst.msk [vmem:[#allocation2 + $0x128] sm:$0xff] %vm5238, %v5166
    %5277 = vst.msk [vmem:[#allocation2 + $0x130] sm:$0xff] %vm5238, %v5168
    %5278 = vst.msk [vmem:[#allocation2 + $0x138] sm:$0xff] %vm5238, %v5170
    %5279 = vst.msk [vmem:[#allocation2 + $0x140] sm:$0xff] %vm5238, %v5172
    %5280 = vst.msk [vmem:[#allocation2 + $0x148] sm:$0xff] %vm5238, %v5174
    %5281 = vst.msk [vmem:[#allocation2 + $0x150] sm:$0xff] %vm5238, %v5176
    %5282 = vst.msk [vmem:[#allocation2 + $0x158] sm:$0xff] %vm5238, %v5178
    %5283 = vst.msk [vmem:[#allocation2 + $0x160] sm:$0xff] %vm5238, %v5180
    %5284 = vst.msk [vmem:[#allocation2 + $0x168] sm:$0xff] %vm5238, %v5182
    %5285 = vst.msk [vmem:[#allocation2 + $0x170] sm:$0xff] %vm5238, %v5184
    %5286 = vst.msk [vmem:[#allocation2 + $0x178] sm:$0xff] %vm5238, %v5186
    %5287 = vst.msk [vmem:[#allocation2 + $0x180] sm:$0xff] %vm5238, %v5188
    %v5288 = vcombine.high %v4735, %v4735
    %v5289 = vcombine.high %v4768, %v4768
    %v5290 = vrot.slane %v4711, 7
    %v5291 = vrot.slane %v5290, 2
    %v5292 = vrot.slane %v4719, 7
    %v5293 = vsel %vm2023, %v5291, %v5292
    %v5294 = vrot.slane %v5292, 2
    %v5295 = vrot.slane %v4718, 7
    %v5296 = vsel %vm2023, %v5294, %v5295
    %v5297 = vrot.slane %v5295, 2
    %v5298 = vrot.slane %v4720, 7
    %v5299 = vsel %vm2023, %v5297, %v5298
    %v5300 = vrot.slane %v5298, 2
    %v5301 = vrot.slane %v4728, 7
    %v5302 = vsel %vm2023, %v5300, %v5301
    %v5303 = vrot.slane %v5301, 2
    %v5304 = vrot.slane %v4736, 7
    %v5305 = vsel %vm2023, %v5303, %v5304
    %v5306 = vrot.slane %v5304, 2
    %v5307 = vrot.slane %v4735, 7
    %v5308 = vsel %vm2023, %v5306, %v5307
    %v5309 = vrot.slane %v5307, 2
    %v5310 = vrot.slane %v5288, 7
    %v5311 = vsel %vm2023, %v5309, %v5310
    %v5312 = vrot.slane %v4744, 7
    %v5313 = vrot.slane %v5312, 2
    %v5314 = vrot.slane %v4752, 7
    %v5315 = vsel %vm2023, %v5313, %v5314
    %v5316 = vrot.slane %v5314, 2
    %v5317 = vrot.slane %v4751, 7
    %v5318 = vsel %vm2023, %v5316, %v5317
    %v5319 = vrot.slane %v5317, 2
    %v5320 = vrot.slane %v4753, 7
    %v5321 = vsel %vm2023, %v5319, %v5320
    %v5322 = vrot.slane %v5320, 2
    %v5323 = vrot.slane %v4761, 7
    %v5324 = vsel %vm2023, %v5322, %v5323
    %v5325 = vrot.slane %v5323, 2
    %v5326 = vrot.slane %v4769, 7
    %v5327 = vsel %vm2023, %v5325, %v5326
    %v5328 = vrot.slane %v5326, 2
    %v5329 = vrot.slane %v4768, 7
    %v5330 = vsel %vm2023, %v5328, %v5329
    %v5331 = vrot.slane %v5329, 2
    %v5332 = vrot.slane %v5289, 7
    %v5333 = vsel %vm2023, %v5331, %v5332
    %v5334 = vcombine.low %v2049, %v2052
    %v5335 = vcombine.low %v2055, %v2058
    %v5337 = vunpack.c.l.s4 1983009808
    %v5338 = vunpack.c.0.s8 %v5337
    %v5339 = vlaneseq
    %v5340 = vshrl.u32 %v5339, 7
    %v5341 = vsub.s32 %v5338, %v5340
    %v5342 = vrot.slane %v5334, %v5341
    %v5344 = vunpack.c.l.s4 1983009808
    %v5345 = vunpack.c.0.s8 %v5344
    %v5346 = vlaneseq
    %v5347 = vshrl.u32 %v5346, 7
    %v5348 = vsub.s32 %v5345, %v5347
    %v5349 = vrot.slane %v5335, %v5348
    %v5350 = vcombine.low %v5342, %v5349
    %v5351 = vcombine.low %v2061, %v2064
    %v5352 = vcombine.low %v2067, %v2071
    %v5354 = vunpack.c.l.s4 1983009808
    %v5355 = vunpack.c.0.s8 %v5354
    %v5356 = vlaneseq
    %v5357 = vshrl.u32 %v5356, 7
    %v5358 = vsub.s32 %v5355, %v5357
    %v5359 = vrot.slane %v5351, %v5358
    %v5361 = vunpack.c.l.s4 1983009808
    %v5362 = vunpack.c.0.s8 %v5361
    %v5363 = vlaneseq
    %v5364 = vshrl.u32 %v5363, 7
    %v5365 = vsub.s32 %v5362, %v5364
    %v5366 = vrot.slane %v5352, %v5365
    %v5367 = vcombine.low %v5359, %v5366
    %v5368 = vcombine.low %v2074, %v2077
    %v5369 = vcombine.low %v2080, %v2083
    %v5371 = vunpack.c.l.s4 1983009808
    %v5372 = vunpack.c.0.s8 %v5371
    %v5373 = vlaneseq
    %v5374 = vshrl.u32 %v5373, 7
    %v5375 = vsub.s32 %v5372, %v5374
    %v5376 = vrot.slane %v5368, %v5375
    %v5378 = vunpack.c.l.s4 1983009808
    %v5379 = vunpack.c.0.s8 %v5378
    %v5380 = vlaneseq
    %v5381 = vshrl.u32 %v5380, 7
    %v5382 = vsub.s32 %v5379, %v5381
    %v5383 = vrot.slane %v5369, %v5382
    %v5384 = vcombine.low %v5376, %v5383
    %v5385 = vcombine.low %v2086, %v2089
    %v5386 = vcombine.low %v2093, %v2096
    %v5388 = vunpack.c.l.s4 1983009808
    %v5389 = vunpack.c.0.s8 %v5388
    %v5390 = vlaneseq
    %v5391 = vshrl.u32 %v5390, 7
    %v5392 = vsub.s32 %v5389, %v5391
    %v5393 = vrot.slane %v5385, %v5392
    %v5395 = vunpack.c.l.s4 1983009808
    %v5396 = vunpack.c.0.s8 %v5395
    %v5397 = vlaneseq
    %v5398 = vshrl.u32 %v5397, 7
    %v5399 = vsub.s32 %v5396, %v5398
    %v5400 = vrot.slane %v5386, %v5399
    %v5401 = vcombine.low %v5393, %v5400
    %v5402 = vcombine.low %v2099, %v2102
    %v5403 = vcombine.low %v2105, %v2108
    %v5405 = vunpack.c.l.s4 1983009808
    %v5406 = vunpack.c.0.s8 %v5405
    %v5407 = vlaneseq
    %v5408 = vshrl.u32 %v5407, 7
    %v5409 = vsub.s32 %v5406, %v5408
    %v5410 = vrot.slane %v5402, %v5409
    %v5412 = vunpack.c.l.s4 1983009808
    %v5413 = vunpack.c.0.s8 %v5412
    %v5414 = vlaneseq
    %v5415 = vshrl.u32 %v5414, 7
    %v5416 = vsub.s32 %v5413, %v5415
    %v5417 = vrot.slane %v5403, %v5416
    %v5418 = vcombine.low %v5410, %v5417
    %v5419 = vcombine.low %v2111, %v2115
    %v5420 = vcombine.low %v2118, %v2121
    %v5422 = vunpack.c.l.s4 1983009808
    %v5423 = vunpack.c.0.s8 %v5422
    %v5424 = vlaneseq
    %v5425 = vshrl.u32 %v5424, 7
    %v5426 = vsub.s32 %v5423, %v5425
    %v5427 = vrot.slane %v5419, %v5426
    %v5429 = vunpack.c.l.s4 1983009808
    %v5430 = vunpack.c.0.s8 %v5429
    %v5431 = vlaneseq
    %v5432 = vshrl.u32 %v5431, 7
    %v5433 = vsub.s32 %v5430, %v5432
    %v5434 = vrot.slane %v5420, %v5433
    %v5435 = vcombine.low %v5427, %v5434
    %v5436 = vcombine.low %v2124, %v2127
    %v5437 = vcombine.low %v2130, %v2133
    %v5439 = vunpack.c.l.s4 1983009808
    %v5440 = vunpack.c.0.s8 %v5439
    %v5441 = vlaneseq
    %v5442 = vshrl.u32 %v5441, 7
    %v5443 = vsub.s32 %v5440, %v5442
    %v5444 = vrot.slane %v5436, %v5443
    %v5446 = vunpack.c.l.s4 1983009808
    %v5447 = vunpack.c.0.s8 %v5446
    %v5448 = vlaneseq
    %v5449 = vshrl.u32 %v5448, 7
    %v5450 = vsub.s32 %v5447, %v5449
    %v5451 = vrot.slane %v5437, %v5450
    %v5452 = vcombine.low %v5444, %v5451
    %v5453 = vcombine.low %v2137, %v2140
    %v5454 = vcombine.low %v2143, %v2146
    %v5456 = vunpack.c.l.s4 1983009808
    %v5457 = vunpack.c.0.s8 %v5456
    %v5458 = vlaneseq
    %v5459 = vshrl.u32 %v5458, 7
    %v5460 = vsub.s32 %v5457, %v5459
    %v5461 = vrot.slane %v5453, %v5460
    %v5463 = vunpack.c.l.s4 1983009808
    %v5464 = vunpack.c.0.s8 %v5463
    %v5465 = vlaneseq
    %v5466 = vshrl.u32 %v5465, 7
    %v5467 = vsub.s32 %v5464, %v5466
    %v5468 = vrot.slane %v5454, %v5467
    %v5469 = vcombine.low %v5461, %v5468
    %v5470 = vcombine.low %v2149, %v2152
    %v5471 = vcombine.low %v2155, %v2159
    %v5473 = vunpack.c.l.s4 1983009808
    %v5474 = vunpack.c.0.s8 %v5473
    %v5475 = vlaneseq
    %v5476 = vshrl.u32 %v5475, 7
    %v5477 = vsub.s32 %v5474, %v5476
    %v5478 = vrot.slane %v5470, %v5477
    %v5480 = vunpack.c.l.s4 1983009808
    %v5481 = vunpack.c.0.s8 %v5480
    %v5482 = vlaneseq
    %v5483 = vshrl.u32 %v5482, 7
    %v5484 = vsub.s32 %v5481, %v5483
    %v5485 = vrot.slane %v5471, %v5484
    %v5486 = vcombine.low %v5478, %v5485
    %v5487 = vcombine.low %v2162, %v2165
    %v5488 = vcombine.low %v2168, %v2171
    %v5490 = vunpack.c.l.s4 1983009808
    %v5491 = vunpack.c.0.s8 %v5490
    %v5492 = vlaneseq
    %v5493 = vshrl.u32 %v5492, 7
    %v5494 = vsub.s32 %v5491, %v5493
    %v5495 = vrot.slane %v5487, %v5494
    %v5497 = vunpack.c.l.s4 1983009808
    %v5498 = vunpack.c.0.s8 %v5497
    %v5499 = vlaneseq
    %v5500 = vshrl.u32 %v5499, 7
    %v5501 = vsub.s32 %v5498, %v5500
    %v5502 = vrot.slane %v5488, %v5501
    %v5503 = vcombine.low %v5495, %v5502
    %v5504 = vcombine.low %v2174, %v2177
    %v5505 = vcombine.low %v2181, %v2184
    %v5507 = vunpack.c.l.s4 1983009808
    %v5508 = vunpack.c.0.s8 %v5507
    %v5509 = vlaneseq
    %v5510 = vshrl.u32 %v5509, 7
    %v5511 = vsub.s32 %v5508, %v5510
    %v5512 = vrot.slane %v5504, %v5511
    %v5514 = vunpack.c.l.s4 1983009808
    %v5515 = vunpack.c.0.s8 %v5514
    %v5516 = vlaneseq
    %v5517 = vshrl.u32 %v5516, 7
    %v5518 = vsub.s32 %v5515, %v5517
    %v5519 = vrot.slane %v5505, %v5518
    %v5520 = vcombine.low %v5512, %v5519
    %v5521 = vcombine.low %v2187, %v2190
    %v5522 = vcombine.low %v2193, %v2196
    %v5524 = vunpack.c.l.s4 1983009808
    %v5525 = vunpack.c.0.s8 %v5524
    %v5526 = vlaneseq
    %v5527 = vshrl.u32 %v5526, 7
    %v5528 = vsub.s32 %v5525, %v5527
    %v5529 = vrot.slane %v5521, %v5528
    %v5531 = vunpack.c.l.s4 1983009808
    %v5532 = vunpack.c.0.s8 %v5531
    %v5533 = vlaneseq
    %v5534 = vshrl.u32 %v5533, 7
    %v5535 = vsub.s32 %v5532, %v5534
    %v5536 = vrot.slane %v5522, %v5535
    %v5537 = vcombine.low %v5529, %v5536
    %v5538 = vcombine.low %v2199, %v2203
    %v5539 = vcombine.low %v2206, %v2209
    %v5541 = vunpack.c.l.s4 1983009808
    %v5542 = vunpack.c.0.s8 %v5541
    %v5543 = vlaneseq
    %v5544 = vshrl.u32 %v5543, 7
    %v5545 = vsub.s32 %v5542, %v5544
    %v5546 = vrot.slane %v5538, %v5545
    %v5548 = vunpack.c.l.s4 1983009808
    %v5549 = vunpack.c.0.s8 %v5548
    %v5550 = vlaneseq
    %v5551 = vshrl.u32 %v5550, 7
    %v5552 = vsub.s32 %v5549, %v5551
    %v5553 = vrot.slane %v5539, %v5552
    %v5554 = vcombine.low %v5546, %v5553
    %v5555 = vcombine.low %v2212, %v2215
    %v5556 = vcombine.low %v2218, %v2221
    %v5558 = vunpack.c.l.s4 1983009808
    %v5559 = vunpack.c.0.s8 %v5558
    %v5560 = vlaneseq
    %v5561 = vshrl.u32 %v5560, 7
    %v5562 = vsub.s32 %v5559, %v5561
    %v5563 = vrot.slane %v5555, %v5562
    %v5565 = vunpack.c.l.s4 1983009808
    %v5566 = vunpack.c.0.s8 %v5565
    %v5567 = vlaneseq
    %v5568 = vshrl.u32 %v5567, 7
    %v5569 = vsub.s32 %v5566, %v5568
    %v5570 = vrot.slane %v5556, %v5569
    %v5571 = vcombine.low %v5563, %v5570
    %v5572 = vcombine.low %v2225, %v2228
    %v5573 = vcombine.low %v2231, %v2234
    %v5575 = vunpack.c.l.s4 1983009808
    %v5576 = vunpack.c.0.s8 %v5575
    %v5577 = vlaneseq
    %v5578 = vshrl.u32 %v5577, 7
    %v5579 = vsub.s32 %v5576, %v5578
    %v5580 = vrot.slane %v5572, %v5579
    %v5582 = vunpack.c.l.s4 1983009808
    %v5583 = vunpack.c.0.s8 %v5582
    %v5584 = vlaneseq
    %v5585 = vshrl.u32 %v5584, 7
    %v5586 = vsub.s32 %v5583, %v5585
    %v5587 = vrot.slane %v5573, %v5586
    %v5588 = vcombine.low %v5580, %v5587
    %v5589 = vcombine.low %v2237, %v2240
    %v5590 = vcombine.low %v2243, %v2247
    %v5592 = vunpack.c.l.s4 1983009808
    %v5593 = vunpack.c.0.s8 %v5592
    %v5594 = vlaneseq
    %v5595 = vshrl.u32 %v5594, 7
    %v5596 = vsub.s32 %v5593, %v5595
    %v5597 = vrot.slane %v5589, %v5596
    %v5599 = vunpack.c.l.s4 1983009808
    %v5600 = vunpack.c.0.s8 %v5599
    %v5601 = vlaneseq
    %v5602 = vshrl.u32 %v5601, 7
    %v5603 = vsub.s32 %v5600, %v5602
    %v5604 = vrot.slane %v5590, %v5603
    %v5605 = vcombine.low %v5597, %v5604
    %v5606 = vcombine.low %v2250, %v2253
    %v5607 = vcombine.low %v2256, %v2259
    %v5609 = vunpack.c.l.s4 1983009808
    %v5610 = vunpack.c.0.s8 %v5609
    %v5611 = vlaneseq
    %v5612 = vshrl.u32 %v5611, 7
    %v5613 = vsub.s32 %v5610, %v5612
    %v5614 = vrot.slane %v5606, %v5613
    %v5616 = vunpack.c.l.s4 1983009808
    %v5617 = vunpack.c.0.s8 %v5616
    %v5618 = vlaneseq
    %v5619 = vshrl.u32 %v5618, 7
    %v5620 = vsub.s32 %v5617, %v5619
    %v5621 = vrot.slane %v5607, %v5620
    %v5622 = vcombine.low %v5614, %v5621
    %v5623 = vcombine.low %v2262, %v2265
    %v5624 = vcombine.low %v2269, %v2272
    %v5626 = vunpack.c.l.s4 1983009808
    %v5627 = vunpack.c.0.s8 %v5626
    %v5628 = vlaneseq
    %v5629 = vshrl.u32 %v5628, 7
    %v5630 = vsub.s32 %v5627, %v5629
    %v5631 = vrot.slane %v5623, %v5630
    %v5633 = vunpack.c.l.s4 1983009808
    %v5634 = vunpack.c.0.s8 %v5633
    %v5635 = vlaneseq
    %v5636 = vshrl.u32 %v5635, 7
    %v5637 = vsub.s32 %v5634, %v5636
    %v5638 = vrot.slane %v5624, %v5637
    %v5639 = vcombine.low %v5631, %v5638
    %v5640 = vcombine.low %v2275, %v2278
    %v5641 = vcombine.low %v2281, %v2284
    %v5643 = vunpack.c.l.s4 1983009808
    %v5644 = vunpack.c.0.s8 %v5643
    %v5645 = vlaneseq
    %v5646 = vshrl.u32 %v5645, 7
    %v5647 = vsub.s32 %v5644, %v5646
    %v5648 = vrot.slane %v5640, %v5647
    %v5650 = vunpack.c.l.s4 1983009808
    %v5651 = vunpack.c.0.s8 %v5650
    %v5652 = vlaneseq
    %v5653 = vshrl.u32 %v5652, 7
    %v5654 = vsub.s32 %v5651, %v5653
    %v5655 = vrot.slane %v5641, %v5654
    %v5656 = vcombine.low %v5648, %v5655
    %v5657 = vcombine.low %v2287, %v2291
    %v5658 = vcombine.low %v2294, %v2297
    %v5660 = vunpack.c.l.s4 1983009808
    %v5661 = vunpack.c.0.s8 %v5660
    %v5662 = vlaneseq
    %v5663 = vshrl.u32 %v5662, 7
    %v5664 = vsub.s32 %v5661, %v5663
    %v5665 = vrot.slane %v5657, %v5664
    %v5667 = vunpack.c.l.s4 1983009808
    %v5668 = vunpack.c.0.s8 %v5667
    %v5669 = vlaneseq
    %v5670 = vshrl.u32 %v5669, 7
    %v5671 = vsub.s32 %v5668, %v5670
    %v5672 = vrot.slane %v5658, %v5671
    %v5673 = vcombine.low %v5665, %v5672
    %v5674 = vcombine.low %v2300, %v2303
    %v5675 = vcombine.low %v2306, %v2309
    %v5677 = vunpack.c.l.s4 1983009808
    %v5678 = vunpack.c.0.s8 %v5677
    %v5679 = vlaneseq
    %v5680 = vshrl.u32 %v5679, 7
    %v5681 = vsub.s32 %v5678, %v5680
    %v5682 = vrot.slane %v5674, %v5681
    %v5684 = vunpack.c.l.s4 1983009808
    %v5685 = vunpack.c.0.s8 %v5684
    %v5686 = vlaneseq
    %v5687 = vshrl.u32 %v5686, 7
    %v5688 = vsub.s32 %v5685, %v5687
    %v5689 = vrot.slane %v5675, %v5688
    %v5690 = vcombine.low %v5682, %v5689
    %v5691 = vcombine.low %v2313, %v2316
    %v5692 = vcombine.low %v2319, %v2322
    %v5694 = vunpack.c.l.s4 1983009808
    %v5695 = vunpack.c.0.s8 %v5694
    %v5696 = vlaneseq
    %v5697 = vshrl.u32 %v5696, 7
    %v5698 = vsub.s32 %v5695, %v5697
    %v5699 = vrot.slane %v5691, %v5698
    %v5701 = vunpack.c.l.s4 1983009808
    %v5702 = vunpack.c.0.s8 %v5701
    %v5703 = vlaneseq
    %v5704 = vshrl.u32 %v5703, 7
    %v5705 = vsub.s32 %v5702, %v5704
    %v5706 = vrot.slane %v5692, %v5705
    %v5707 = vcombine.low %v5699, %v5706
    %v5708 = vcombine.low %v2325, %v2328
    %v5709 = vcombine.low %v2331, %v5293
    %v5711 = vunpack.c.l.s4 1983009808
    %v5712 = vunpack.c.0.s8 %v5711
    %v5713 = vlaneseq
    %v5714 = vshrl.u32 %v5713, 7
    %v5715 = vsub.s32 %v5712, %v5714
    %v5716 = vrot.slane %v5708, %v5715
    %v5718 = vunpack.c.l.s4 1983009808
    %v5719 = vunpack.c.0.s8 %v5718
    %v5720 = vlaneseq
    %v5721 = vshrl.u32 %v5720, 7
    %v5722 = vsub.s32 %v5719, %v5721
    %v5723 = vrot.slane %v5709, %v5722
    %v5724 = vcombine.low %v5716, %v5723
    %v5725 = vcombine.low %v5296, %v5299
    %v5726 = vcombine.low %v5302, %v5305
    %v5728 = vunpack.c.l.s4 1983009808
    %v5729 = vunpack.c.0.s8 %v5728
    %v5730 = vlaneseq
    %v5731 = vshrl.u32 %v5730, 7
    %v5732 = vsub.s32 %v5729, %v5731
    %v5733 = vrot.slane %v5725, %v5732
    %v5735 = vunpack.c.l.s4 1983009808
    %v5736 = vunpack.c.0.s8 %v5735
    %v5737 = vlaneseq
    %v5738 = vshrl.u32 %v5737, 7
    %v5739 = vsub.s32 %v5736, %v5738
    %v5740 = vrot.slane %v5726, %v5739
    %v5741 = vcombine.low %v5733, %v5740
    %v5742 = vcombine.low %v5308, %v5311
    %v5743 = vcombine.low %v2357, %v2360
    %v5745 = vunpack.c.l.s4 1983009808
    %v5746 = vunpack.c.0.s8 %v5745
    %v5747 = vlaneseq
    %v5748 = vshrl.u32 %v5747, 7
    %v5749 = vsub.s32 %v5746, %v5748
    %v5750 = vrot.slane %v5742, %v5749
    %v5752 = vunpack.c.l.s4 1983009808
    %v5753 = vunpack.c.0.s8 %v5752
    %v5754 = vlaneseq
    %v5755 = vshrl.u32 %v5754, 7
    %v5756 = vsub.s32 %v5753, %v5755
    %v5757 = vrot.slane %v5743, %v5756
    %v5758 = vcombine.low %v5750, %v5757
    %v5759 = vcombine.low %v2363, %v2366
    %v5760 = vcombine.low %v2369, %v2372
    %v5762 = vunpack.c.l.s4 1983009808
    %v5763 = vunpack.c.0.s8 %v5762
    %v5764 = vlaneseq
    %v5765 = vshrl.u32 %v5764, 7
    %v5766 = vsub.s32 %v5763, %v5765
    %v5767 = vrot.slane %v5759, %v5766
    %v5769 = vunpack.c.l.s4 1983009808
    %v5770 = vunpack.c.0.s8 %v5769
    %v5771 = vlaneseq
    %v5772 = vshrl.u32 %v5771, 7
    %v5773 = vsub.s32 %v5770, %v5772
    %v5774 = vrot.slane %v5760, %v5773
    %v5775 = vcombine.low %v5767, %v5774
    %v5776 = vcombine.low %v2375, %v2379
    %v5777 = vcombine.low %v2382, %v2385
    %v5779 = vunpack.c.l.s4 1983009808
    %v5780 = vunpack.c.0.s8 %v5779
    %v5781 = vlaneseq
    %v5782 = vshrl.u32 %v5781, 7
    %v5783 = vsub.s32 %v5780, %v5782
    %v5784 = vrot.slane %v5776, %v5783
    %v5786 = vunpack.c.l.s4 1983009808
    %v5787 = vunpack.c.0.s8 %v5786
    %v5788 = vlaneseq
    %v5789 = vshrl.u32 %v5788, 7
    %v5790 = vsub.s32 %v5787, %v5789
    %v5791 = vrot.slane %v5777, %v5790
    %v5792 = vcombine.low %v5784, %v5791
    %v5793 = vcombine.low %v2388, %v2391
    %v5794 = vcombine.low %v2394, %v2397
    %v5796 = vunpack.c.l.s4 1983009808
    %v5797 = vunpack.c.0.s8 %v5796
    %v5798 = vlaneseq
    %v5799 = vshrl.u32 %v5798, 7
    %v5800 = vsub.s32 %v5797, %v5799
    %v5801 = vrot.slane %v5793, %v5800
    %v5803 = vunpack.c.l.s4 1983009808
    %v5804 = vunpack.c.0.s8 %v5803
    %v5805 = vlaneseq
    %v5806 = vshrl.u32 %v5805, 7
    %v5807 = vsub.s32 %v5804, %v5806
    %v5808 = vrot.slane %v5794, %v5807
    %v5809 = vcombine.low %v5801, %v5808
    %v5810 = vcombine.low %v2401, %v2404
    %v5811 = vcombine.low %v2407, %v2410
    %v5813 = vunpack.c.l.s4 1983009808
    %v5814 = vunpack.c.0.s8 %v5813
    %v5815 = vlaneseq
    %v5816 = vshrl.u32 %v5815, 7
    %v5817 = vsub.s32 %v5814, %v5816
    %v5818 = vrot.slane %v5810, %v5817
    %v5820 = vunpack.c.l.s4 1983009808
    %v5821 = vunpack.c.0.s8 %v5820
    %v5822 = vlaneseq
    %v5823 = vshrl.u32 %v5822, 7
    %v5824 = vsub.s32 %v5821, %v5823
    %v5825 = vrot.slane %v5811, %v5824
    %v5826 = vcombine.low %v5818, %v5825
    %v5827 = vcombine.low %v2413, %v2416
    %v5828 = vcombine.low %v2419, %v2423
    %v5830 = vunpack.c.l.s4 1983009808
    %v5831 = vunpack.c.0.s8 %v5830
    %v5832 = vlaneseq
    %v5833 = vshrl.u32 %v5832, 7
    %v5834 = vsub.s32 %v5831, %v5833
    %v5835 = vrot.slane %v5827, %v5834
    %v5837 = vunpack.c.l.s4 1983009808
    %v5838 = vunpack.c.0.s8 %v5837
    %v5839 = vlaneseq
    %v5840 = vshrl.u32 %v5839, 7
    %v5841 = vsub.s32 %v5838, %v5840
    %v5842 = vrot.slane %v5828, %v5841
    %v5843 = vcombine.low %v5835, %v5842
    %v5844 = vcombine.low %v2426, %v2429
    %v5845 = vcombine.low %v2432, %v2435
    %v5847 = vunpack.c.l.s4 1983009808
    %v5848 = vunpack.c.0.s8 %v5847
    %v5849 = vlaneseq
    %v5850 = vshrl.u32 %v5849, 7
    %v5851 = vsub.s32 %v5848, %v5850
    %v5852 = vrot.slane %v5844, %v5851
    %v5854 = vunpack.c.l.s4 1983009808
    %v5855 = vunpack.c.0.s8 %v5854
    %v5856 = vlaneseq
    %v5857 = vshrl.u32 %v5856, 7
    %v5858 = vsub.s32 %v5855, %v5857
    %v5859 = vrot.slane %v5845, %v5858
    %v5860 = vcombine.low %v5852, %v5859
    %v5861 = vcombine.low %v2438, %v2441
    %v5862 = vcombine.low %v2445, %v2448
    %v5864 = vunpack.c.l.s4 1983009808
    %v5865 = vunpack.c.0.s8 %v5864
    %v5866 = vlaneseq
    %v5867 = vshrl.u32 %v5866, 7
    %v5868 = vsub.s32 %v5865, %v5867
    %v5869 = vrot.slane %v5861, %v5868
    %v5871 = vunpack.c.l.s4 1983009808
    %v5872 = vunpack.c.0.s8 %v5871
    %v5873 = vlaneseq
    %v5874 = vshrl.u32 %v5873, 7
    %v5875 = vsub.s32 %v5872, %v5874
    %v5876 = vrot.slane %v5862, %v5875
    %v5877 = vcombine.low %v5869, %v5876
    %v5878 = vcombine.low %v2451, %v2454
    %v5879 = vcombine.low %v2457, %v2460
    %v5881 = vunpack.c.l.s4 1983009808
    %v5882 = vunpack.c.0.s8 %v5881
    %v5883 = vlaneseq
    %v5884 = vshrl.u32 %v5883, 7
    %v5885 = vsub.s32 %v5882, %v5884
    %v5886 = vrot.slane %v5878, %v5885
    %v5888 = vunpack.c.l.s4 1983009808
    %v5889 = vunpack.c.0.s8 %v5888
    %v5890 = vlaneseq
    %v5891 = vshrl.u32 %v5890, 7
    %v5892 = vsub.s32 %v5889, %v5891
    %v5893 = vrot.slane %v5879, %v5892
    %v5894 = vcombine.low %v5886, %v5893
    %v5895 = vcombine.low %v2463, %v2467
    %v5896 = vcombine.low %v2470, %v2473
    %v5898 = vunpack.c.l.s4 1983009808
    %v5899 = vunpack.c.0.s8 %v5898
    %v5900 = vlaneseq
    %v5901 = vshrl.u32 %v5900, 7
    %v5902 = vsub.s32 %v5899, %v5901
    %v5903 = vrot.slane %v5895, %v5902
    %v5905 = vunpack.c.l.s4 1983009808
    %v5906 = vunpack.c.0.s8 %v5905
    %v5907 = vlaneseq
    %v5908 = vshrl.u32 %v5907, 7
    %v5909 = vsub.s32 %v5906, %v5908
    %v5910 = vrot.slane %v5896, %v5909
    %v5911 = vcombine.low %v5903, %v5910
    %v5912 = vcombine.low %v2476, %v2479
    %v5913 = vcombine.low %v2482, %v2485
    %v5915 = vunpack.c.l.s4 1983009808
    %v5916 = vunpack.c.0.s8 %v5915
    %v5917 = vlaneseq
    %v5918 = vshrl.u32 %v5917, 7
    %v5919 = vsub.s32 %v5916, %v5918
    %v5920 = vrot.slane %v5912, %v5919
    %v5922 = vunpack.c.l.s4 1983009808
    %v5923 = vunpack.c.0.s8 %v5922
    %v5924 = vlaneseq
    %v5925 = vshrl.u32 %v5924, 7
    %v5926 = vsub.s32 %v5923, %v5925
    %v5927 = vrot.slane %v5913, %v5926
    %v5928 = vcombine.low %v5920, %v5927
    %v5929 = vcombine.low %v2489, %v2492
    %v5930 = vcombine.low %v2495, %v2498
    %v5932 = vunpack.c.l.s4 1983009808
    %v5933 = vunpack.c.0.s8 %v5932
    %v5934 = vlaneseq
    %v5935 = vshrl.u32 %v5934, 7
    %v5936 = vsub.s32 %v5933, %v5935
    %v5937 = vrot.slane %v5929, %v5936
    %v5939 = vunpack.c.l.s4 1983009808
    %v5940 = vunpack.c.0.s8 %v5939
    %v5941 = vlaneseq
    %v5942 = vshrl.u32 %v5941, 7
    %v5943 = vsub.s32 %v5940, %v5942
    %v5944 = vrot.slane %v5930, %v5943
    %v5945 = vcombine.low %v5937, %v5944
    %v5946 = vcombine.low %v2501, %v2504
    %v5947 = vcombine.low %v2507, %v2511
    %v5949 = vunpack.c.l.s4 1983009808
    %v5950 = vunpack.c.0.s8 %v5949
    %v5951 = vlaneseq
    %v5952 = vshrl.u32 %v5951, 7
    %v5953 = vsub.s32 %v5950, %v5952
    %v5954 = vrot.slane %v5946, %v5953
    %v5956 = vunpack.c.l.s4 1983009808
    %v5957 = vunpack.c.0.s8 %v5956
    %v5958 = vlaneseq
    %v5959 = vshrl.u32 %v5958, 7
    %v5960 = vsub.s32 %v5957, %v5959
    %v5961 = vrot.slane %v5947, %v5960
    %v5962 = vcombine.low %v5954, %v5961
    %v5963 = vcombine.low %v2514, %v2517
    %v5964 = vcombine.low %v2520, %v2523
    %v5966 = vunpack.c.l.s4 1983009808
    %v5967 = vunpack.c.0.s8 %v5966
    %v5968 = vlaneseq
    %v5969 = vshrl.u32 %v5968, 7
    %v5970 = vsub.s32 %v5967, %v5969
    %v5971 = vrot.slane %v5963, %v5970
    %v5973 = vunpack.c.l.s4 1983009808
    %v5974 = vunpack.c.0.s8 %v5973
    %v5975 = vlaneseq
    %v5976 = vshrl.u32 %v5975, 7
    %v5977 = vsub.s32 %v5974, %v5976
    %v5978 = vrot.slane %v5964, %v5977
    %v5979 = vcombine.low %v5971, %v5978
    %v5980 = vcombine.low %v2526, %v2529
    %v5981 = vcombine.low %v2533, %v2536
    %v5983 = vunpack.c.l.s4 1983009808
    %v5984 = vunpack.c.0.s8 %v5983
    %v5985 = vlaneseq
    %v5986 = vshrl.u32 %v5985, 7
    %v5987 = vsub.s32 %v5984, %v5986
    %v5988 = vrot.slane %v5980, %v5987
    %v5990 = vunpack.c.l.s4 1983009808
    %v5991 = vunpack.c.0.s8 %v5990
    %v5992 = vlaneseq
    %v5993 = vshrl.u32 %v5992, 7
    %v5994 = vsub.s32 %v5991, %v5993
    %v5995 = vrot.slane %v5981, %v5994
    %v5996 = vcombine.low %v5988, %v5995
    %v5997 = vcombine.low %v2539, %v2542
    %v5998 = vcombine.low %v2545, %v2548
    %v6000 = vunpack.c.l.s4 1983009808
    %v6001 = vunpack.c.0.s8 %v6000
    %v6002 = vlaneseq
    %v6003 = vshrl.u32 %v6002, 7
    %v6004 = vsub.s32 %v6001, %v6003
    %v6005 = vrot.slane %v5997, %v6004
    %v6007 = vunpack.c.l.s4 1983009808
    %v6008 = vunpack.c.0.s8 %v6007
    %v6009 = vlaneseq
    %v6010 = vshrl.u32 %v6009, 7
    %v6011 = vsub.s32 %v6008, %v6010
    %v6012 = vrot.slane %v5998, %v6011
    %v6013 = vcombine.low %v6005, %v6012
    %v6014 = vcombine.low %v2551, %v2555
    %v6015 = vcombine.low %v2558, %v2561
    %v6017 = vunpack.c.l.s4 1983009808
    %v6018 = vunpack.c.0.s8 %v6017
    %v6019 = vlaneseq
    %v6020 = vshrl.u32 %v6019, 7
    %v6021 = vsub.s32 %v6018, %v6020
    %v6022 = vrot.slane %v6014, %v6021
    %v6024 = vunpack.c.l.s4 1983009808
    %v6025 = vunpack.c.0.s8 %v6024
    %v6026 = vlaneseq
    %v6027 = vshrl.u32 %v6026, 7
    %v6028 = vsub.s32 %v6025, %v6027
    %v6029 = vrot.slane %v6015, %v6028
    %v6030 = vcombine.low %v6022, %v6029
    %v6031 = vcombine.low %v2564, %v2567
    %v6032 = vcombine.low %v2570, %v2573
    %v6034 = vunpack.c.l.s4 1983009808
    %v6035 = vunpack.c.0.s8 %v6034
    %v6036 = vlaneseq
    %v6037 = vshrl.u32 %v6036, 7
    %v6038 = vsub.s32 %v6035, %v6037
    %v6039 = vrot.slane %v6031, %v6038
    %v6041 = vunpack.c.l.s4 1983009808
    %v6042 = vunpack.c.0.s8 %v6041
    %v6043 = vlaneseq
    %v6044 = vshrl.u32 %v6043, 7
    %v6045 = vsub.s32 %v6042, %v6044
    %v6046 = vrot.slane %v6032, %v6045
    %v6047 = vcombine.low %v6039, %v6046
    %v6048 = vcombine.low %v2577, %v2580
    %v6049 = vcombine.low %v2583, %v2586
    %v6051 = vunpack.c.l.s4 1983009808
    %v6052 = vunpack.c.0.s8 %v6051
    %v6053 = vlaneseq
    %v6054 = vshrl.u32 %v6053, 7
    %v6055 = vsub.s32 %v6052, %v6054
    %v6056 = vrot.slane %v6048, %v6055
    %v6058 = vunpack.c.l.s4 1983009808
    %v6059 = vunpack.c.0.s8 %v6058
    %v6060 = vlaneseq
    %v6061 = vshrl.u32 %v6060, 7
    %v6062 = vsub.s32 %v6059, %v6061
    %v6063 = vrot.slane %v6049, %v6062
    %v6064 = vcombine.low %v6056, %v6063
    %v6065 = vcombine.low %v2589, %v2592
    %v6066 = vcombine.low %v2595, %v2599
    %v6068 = vunpack.c.l.s4 1983009808
    %v6069 = vunpack.c.0.s8 %v6068
    %v6070 = vlaneseq
    %v6071 = vshrl.u32 %v6070, 7
    %v6072 = vsub.s32 %v6069, %v6071
    %v6073 = vrot.slane %v6065, %v6072
    %v6075 = vunpack.c.l.s4 1983009808
    %v6076 = vunpack.c.0.s8 %v6075
    %v6077 = vlaneseq
    %v6078 = vshrl.u32 %v6077, 7
    %v6079 = vsub.s32 %v6076, %v6078
    %v6080 = vrot.slane %v6066, %v6079
    %v6081 = vcombine.low %v6073, %v6080
    %v6082 = vcombine.low %v2602, %v2605
    %v6083 = vcombine.low %v2608, %v2611
    %v6085 = vunpack.c.l.s4 1983009808
    %v6086 = vunpack.c.0.s8 %v6085
    %v6087 = vlaneseq
    %v6088 = vshrl.u32 %v6087, 7
    %v6089 = vsub.s32 %v6086, %v6088
    %v6090 = vrot.slane %v6082, %v6089
    %v6092 = vunpack.c.l.s4 1983009808
    %v6093 = vunpack.c.0.s8 %v6092
    %v6094 = vlaneseq
    %v6095 = vshrl.u32 %v6094, 7
    %v6096 = vsub.s32 %v6093, %v6095
    %v6097 = vrot.slane %v6083, %v6096
    %v6098 = vcombine.low %v6090, %v6097
    %v6099 = vcombine.low %v2614, %v2617
    %v6100 = vcombine.low %v2621, %v2624
    %v6102 = vunpack.c.l.s4 1983009808
    %v6103 = vunpack.c.0.s8 %v6102
    %v6104 = vlaneseq
    %v6105 = vshrl.u32 %v6104, 7
    %v6106 = vsub.s32 %v6103, %v6105
    %v6107 = vrot.slane %v6099, %v6106
    %v6109 = vunpack.c.l.s4 1983009808
    %v6110 = vunpack.c.0.s8 %v6109
    %v6111 = vlaneseq
    %v6112 = vshrl.u32 %v6111, 7
    %v6113 = vsub.s32 %v6110, %v6112
    %v6114 = vrot.slane %v6100, %v6113
    %v6115 = vcombine.low %v6107, %v6114
    %v6116 = vcombine.low %v2627, %v2630
    %v6117 = vcombine.low %v2633, %v2636
    %v6119 = vunpack.c.l.s4 1983009808
    %v6120 = vunpack.c.0.s8 %v6119
    %v6121 = vlaneseq
    %v6122 = vshrl.u32 %v6121, 7
    %v6123 = vsub.s32 %v6120, %v6122
    %v6124 = vrot.slane %v6116, %v6123
    %v6126 = vunpack.c.l.s4 1983009808
    %v6127 = vunpack.c.0.s8 %v6126
    %v6128 = vlaneseq
    %v6129 = vshrl.u32 %v6128, 7
    %v6130 = vsub.s32 %v6127, %v6129
    %v6131 = vrot.slane %v6117, %v6130
    %v6132 = vcombine.low %v6124, %v6131
    %v6133 = vcombine.low %v2639, %v5315
    %v6134 = vcombine.low %v5318, %v5321
    %v6136 = vunpack.c.l.s4 1983009808
    %v6137 = vunpack.c.0.s8 %v6136
    %v6138 = vlaneseq
    %v6139 = vshrl.u32 %v6138, 7
    %v6140 = vsub.s32 %v6137, %v6139
    %v6141 = vrot.slane %v6133, %v6140
    %v6143 = vunpack.c.l.s4 1983009808
    %v6144 = vunpack.c.0.s8 %v6143
    %v6145 = vlaneseq
    %v6146 = vshrl.u32 %v6145, 7
    %v6147 = vsub.s32 %v6144, %v6146
    %v6148 = vrot.slane %v6134, %v6147
    %v6149 = vcombine.low %v6141, %v6148
    %v6150 = vcombine.low %v5324, %v5327
    %v6151 = vcombine.low %v5330, %v5333
    %v6153 = vunpack.c.l.s4 1983009808
    %v6154 = vunpack.c.0.s8 %v6153
    %v6155 = vlaneseq
    %v6156 = vshrl.u32 %v6155, 7
    %v6157 = vsub.s32 %v6154, %v6156
    %v6158 = vrot.slane %v6150, %v6157
    %v6160 = vunpack.c.l.s4 1983009808
    %v6161 = vunpack.c.0.s8 %v6160
    %v6162 = vlaneseq
    %v6163 = vshrl.u32 %v6162, 7
    %v6164 = vsub.s32 %v6161, %v6163
    %v6165 = vrot.slane %v6151, %v6164
    %v6166 = vcombine.low %v6158, %v6165
    %6167 = vrot.lane.b32.xlu0 %v5350, 4
    %v6168 = vpop.permute.xlu0 %6167
    %6169 = vrot.lane.b32.xlu0 %v5367, 4
    %v6170 = vpop.permute.xlu0 %6169
    %6171 = vrot.lane.b32.xlu0 %v5384, 4
    %v6172 = vpop.permute.xlu0 %6171
    %6173 = vrot.lane.b32.xlu0 %v5401, 4
    %v6174 = vpop.permute.xlu0 %6173
    %6175 = vrot.lane.b32.xlu0 %v5418, 4
    %v6176 = vpop.permute.xlu0 %6175
    %6177 = vrot.lane.b32.xlu0 %v5435, 4
    %v6178 = vpop.permute.xlu0 %6177
    %6179 = vrot.lane.b32.xlu0 %v5452, 4
    %v6180 = vpop.permute.xlu0 %6179
    %6181 = vrot.lane.b32.xlu0 %v5469, 4
    %v6182 = vpop.permute.xlu0 %6181
    %6183 = vrot.lane.b32.xlu0 %v5486, 4
    %v6184 = vpop.permute.xlu0 %6183
    %6185 = vrot.lane.b32.xlu0 %v5503, 4
    %v6186 = vpop.permute.xlu0 %6185
    %6187 = vrot.lane.b32.xlu0 %v5520, 4
    %v6188 = vpop.permute.xlu0 %6187
    %6189 = vrot.lane.b32.xlu0 %v5537, 4
    %v6190 = vpop.permute.xlu0 %6189
    %6191 = vrot.lane.b32.xlu0 %v5554, 4
    %v6192 = vpop.permute.xlu0 %6191
    %6193 = vrot.lane.b32.xlu0 %v5571, 4
    %v6194 = vpop.permute.xlu0 %6193
    %6195 = vrot.lane.b32.xlu0 %v5588, 4
    %v6196 = vpop.permute.xlu0 %6195
    %6197 = vrot.lane.b32.xlu0 %v5605, 4
    %v6198 = vpop.permute.xlu0 %6197
    %6199 = vrot.lane.b32.xlu0 %v5622, 4
    %v6200 = vpop.permute.xlu0 %6199
    %6201 = vrot.lane.b32.xlu0 %v5639, 4
    %v6202 = vpop.permute.xlu0 %6201
    %6203 = vrot.lane.b32.xlu0 %v5656, 4
    %v6204 = vpop.permute.xlu0 %6203
    %6205 = vrot.lane.b32.xlu0 %v5673, 4
    %v6206 = vpop.permute.xlu0 %6205
    %6207 = vrot.lane.b32.xlu0 %v5690, 4
    %v6208 = vpop.permute.xlu0 %6207
    %6209 = vrot.lane.b32.xlu0 %v5707, 4
    %v6210 = vpop.permute.xlu0 %6209
    %6211 = vrot.lane.b32.xlu0 %v5724, 4
    %v6212 = vpop.permute.xlu0 %6211
    %6213 = vrot.lane.b32.xlu0 %v5741, 4
    %v6214 = vpop.permute.xlu0 %6213
    %6215 = vrot.lane.b32.xlu0 %v5758, 4
    %v6216 = vpop.permute.xlu0 %6215
    %6217 = vrot.lane.b32.xlu0 %v5775, 4
    %v6218 = vpop.permute.xlu0 %6217
    %6219 = vrot.lane.b32.xlu0 %v5792, 4
    %v6220 = vpop.permute.xlu0 %6219
    %6221 = vrot.lane.b32.xlu0 %v5809, 4
    %v6222 = vpop.permute.xlu0 %6221
    %6223 = vrot.lane.b32.xlu0 %v5826, 4
    %v6224 = vpop.permute.xlu0 %6223
    %6225 = vrot.lane.b32.xlu0 %v5843, 4
    %v6226 = vpop.permute.xlu0 %6225
    %6227 = vrot.lane.b32.xlu0 %v5860, 4
    %v6228 = vpop.permute.xlu0 %6227
    %6229 = vrot.lane.b32.xlu0 %v5877, 4
    %v6230 = vpop.permute.xlu0 %6229
    %6231 = vrot.lane.b32.xlu0 %v5894, 4
    %v6232 = vpop.permute.xlu0 %6231
    %6233 = vrot.lane.b32.xlu0 %v5911, 4
    %v6234 = vpop.permute.xlu0 %6233
    %6235 = vrot.lane.b32.xlu0 %v5928, 4
    %v6236 = vpop.permute.xlu0 %6235
    %6237 = vrot.lane.b32.xlu0 %v5945, 4
    %v6238 = vpop.permute.xlu0 %6237
    %6239 = vrot.lane.b32.xlu0 %v5962, 4
    %v6240 = vpop.permute.xlu0 %6239
    %6241 = vrot.lane.b32.xlu0 %v5979, 4
    %v6242 = vpop.permute.xlu0 %6241
    %6243 = vrot.lane.b32.xlu0 %v5996, 4
    %v6244 = vpop.permute.xlu0 %6243
    %6245 = vrot.lane.b32.xlu0 %v6013, 4
    %v6246 = vpop.permute.xlu0 %6245
    %6247 = vrot.lane.b32.xlu0 %v6030, 4
    %v6248 = vpop.permute.xlu0 %6247
    %6249 = vrot.lane.b32.xlu0 %v6047, 4
    %v6250 = vpop.permute.xlu0 %6249
    %6251 = vrot.lane.b32.xlu0 %v6064, 4
    %v6252 = vpop.permute.xlu0 %6251
    %6253 = vrot.lane.b32.xlu0 %v6081, 4
    %v6254 = vpop.permute.xlu0 %6253
    %6255 = vrot.lane.b32.xlu0 %v6098, 4
    %v6256 = vpop.permute.xlu0 %6255
    %6257 = vrot.lane.b32.xlu0 %v6115, 4
    %v6258 = vpop.permute.xlu0 %6257
    %6259 = vrot.lane.b32.xlu0 %v6132, 4
    %v6260 = vpop.permute.xlu0 %6259
    %6261 = vrot.lane.b32.xlu0 %v6149, 4
    %v6262 = vpop.permute.xlu0 %6261
    %6263 = vrot.lane.b32.xlu0 %v6166, 4
    %v6264 = vpop.permute.xlu0 %6263
    %vm6314 = vcmask 39968
    %6315 = vst.msk [vmem:[#allocation2] sm:$0xff] %vm6314, %v6168
    %6316 = vst.msk [vmem:[#allocation2 + $0x8] sm:$0xff] %vm6314, %v6170
    %6317 = vst.msk [vmem:[#allocation2 + $0x10] sm:$0xff] %vm6314, %v6172
    %6318 = vst.msk [vmem:[#allocation2 + $0x18] sm:$0xff] %vm6314, %v6174
    %6319 = vst.msk [vmem:[#allocation2 + $0x20] sm:$0xff] %vm6314, %v6176
    %6320 = vst.msk [vmem:[#allocation2 + $0x28] sm:$0xff] %vm6314, %v6178
    %6321 = vst.msk [vmem:[#allocation2 + $0x30] sm:$0xff] %vm6314, %v6180
    %6322 = vst.msk [vmem:[#allocation2 + $0x38] sm:$0xff] %vm6314, %v6182
    %6323 = vst.msk [vmem:[#allocation2 + $0x40] sm:$0xff] %vm6314, %v6184
    %6324 = vst.msk [vmem:[#allocation2 + $0x48] sm:$0xff] %vm6314, %v6186
    %6325 = vst.msk [vmem:[#allocation2 + $0x50] sm:$0xff] %vm6314, %v6188
    %6326 = vst.msk [vmem:[#allocation2 + $0x58] sm:$0xff] %vm6314, %v6190
    %6327 = vst.msk [vmem:[#allocation2 + $0x60] sm:$0xff] %vm6314, %v6192
    %6328 = vst.msk [vmem:[#allocation2 + $0x68] sm:$0xff] %vm6314, %v6194
    %6329 = vst.msk [vmem:[#allocation2 + $0x70] sm:$0xff] %vm6314, %v6196
    %6330 = vst.msk [vmem:[#allocation2 + $0x78] sm:$0xff] %vm6314, %v6198
    %6331 = vst.msk [vmem:[#allocation2 + $0x80] sm:$0xff] %vm6314, %v6200
    %6332 = vst.msk [vmem:[#allocation2 + $0x88] sm:$0xff] %vm6314, %v6202
    %6333 = vst.msk [vmem:[#allocation2 + $0x90] sm:$0xff] %vm6314, %v6204
    %6334 = vst.msk [vmem:[#allocation2 + $0x98] sm:$0xff] %vm6314, %v6206
    %6335 = vst.msk [vmem:[#allocation2 + $0xa0] sm:$0xff] %vm6314, %v6208
    %6336 = vst.msk [vmem:[#allocation2 + $0xa8] sm:$0xff] %vm6314, %v6210
    %6337 = vst.msk [vmem:[#allocation2 + $0xb0] sm:$0xff] %vm6314, %v6212
    %6338 = vst.msk [vmem:[#allocation2 + $0xb8] sm:$0xff] %vm6314, %v6214
    %6339 = vst.msk [vmem:[#allocation2 + $0xc0] sm:$0xff] %vm6314, %v6216
    %6340 = vst.msk [vmem:[#allocation2 + $0xc8] sm:$0xff] %vm6314, %v6218
    %6341 = vst.msk [vmem:[#allocation2 + $0xd0] sm:$0xff] %vm6314, %v6220
    %6342 = vst.msk [vmem:[#allocation2 + $0xd8] sm:$0xff] %vm6314, %v6222
    %6343 = vst.msk [vmem:[#allocation2 + $0xe0] sm:$0xff] %vm6314, %v6224
    %6344 = vst.msk [vmem:[#allocation2 + $0xe8] sm:$0xff] %vm6314, %v6226
    %6345 = vst.msk [vmem:[#allocation2 + $0xf0] sm:$0xff] %vm6314, %v6228
    %6346 = vst.msk [vmem:[#allocation2 + $0xf8] sm:$0xff] %vm6314, %v6230
    %6347 = vst.msk [vmem:[#allocation2 + $0x100] sm:$0xff] %vm6314, %v6232
    %6348 = vst.msk [vmem:[#allocation2 + $0x108] sm:$0xff] %vm6314, %v6234
    %6349 = vst.msk [vmem:[#allocation2 + $0x110] sm:$0xff] %vm6314, %v6236
    %6350 = vst.msk [vmem:[#allocation2 + $0x118] sm:$0xff] %vm6314, %v6238
    %6351 = vst.msk [vmem:[#allocation2 + $0x120] sm:$0xff] %vm6314, %v6240
    %6352 = vst.msk [vmem:[#allocation2 + $0x128] sm:$0xff] %vm6314, %v6242
    %6353 = vst.msk [vmem:[#allocation2 + $0x130] sm:$0xff] %vm6314, %v6244
    %6354 = vst.msk [vmem:[#allocation2 + $0x138] sm:$0xff] %vm6314, %v6246
    %6355 = vst.msk [vmem:[#allocation2 + $0x140] sm:$0xff] %vm6314, %v6248
    %6356 = vst.msk [vmem:[#allocation2 + $0x148] sm:$0xff] %vm6314, %v6250
    %6357 = vst.msk [vmem:[#allocation2 + $0x150] sm:$0xff] %vm6314, %v6252
    %6358 = vst.msk [vmem:[#allocation2 + $0x158] sm:$0xff] %vm6314, %v6254
    %6359 = vst.msk [vmem:[#allocation2 + $0x160] sm:$0xff] %vm6314, %v6256
    %6360 = vst.msk [vmem:[#allocation2 + $0x168] sm:$0xff] %vm6314, %v6258
    %6361 = vst.msk [vmem:[#allocation2 + $0x170] sm:$0xff] %vm6314, %v6260
    %6362 = vst.msk [vmem:[#allocation2 + $0x178] sm:$0xff] %vm6314, %v6262
    %6363 = vst.msk [vmem:[#allocation2 + $0x180] sm:$0xff] %vm6314, %v6264
    %v6364 = vcombine.low %v1990, %v214
    %v6366 = vunpack.c.l.s4 1983009808
    %v6367 = vunpack.c.0.s8 %v6366
    %v6368 = vlaneseq
    %v6369 = vshrl.u32 %v6368, 7
    %v6370 = vsub.s32 %v6367, %v6369
    %v6371 = vrot.slane %v6364, %v6370
    %v6372 = vcombine.low %v1116, %v6371
    %v6373 = vcombine.low %v230, %v1991
    %v6375 = vunpack.c.l.s4 1983009808
    %v6376 = vunpack.c.0.s8 %v6375
    %v6377 = vlaneseq
    %v6378 = vshrl.u32 %v6377, 7
    %v6379 = vsub.s32 %v6376, %v6378
    %v6380 = vrot.slane %v6373, %v6379
    %v6381 = vcombine.low %v6380, %v1157
    %v6382 = vcombine.low %v1992, %v280
    %v6384 = vunpack.c.l.s4 1983009808
    %v6385 = vunpack.c.0.s8 %v6384
    %v6386 = vlaneseq
    %v6387 = vshrl.u32 %v6386, 7
    %v6388 = vsub.s32 %v6385, %v6387
    %v6389 = vrot.slane %v6382, %v6388
    %v6390 = vcombine.low %v6389, %v1191
    %v6391 = vcombine.low %v296, %v1993
    %v6393 = vunpack.c.l.s4 1983009808
    %v6394 = vunpack.c.0.s8 %v6393
    %v6395 = vlaneseq
    %v6396 = vshrl.u32 %v6395, 7
    %v6397 = vsub.s32 %v6394, %v6396
    %v6398 = vrot.slane %v6391, %v6397
    %v6399 = vcombine.low %v1201, %v6398
    %v6400 = vcombine.low %v1994, %v346
    %v6402 = vunpack.c.l.s4 1983009808
    %v6403 = vunpack.c.0.s8 %v6402
    %v6404 = vlaneseq
    %v6405 = vshrl.u32 %v6404, 7
    %v6406 = vsub.s32 %v6403, %v6405
    %v6407 = vrot.slane %v6400, %v6406
    %v6408 = vcombine.low %v1235, %v6407
    %v6409 = vcombine.low %v362, %v1995
    %v6411 = vunpack.c.l.s4 1983009808
    %v6412 = vunpack.c.0.s8 %v6411
    %v6413 = vlaneseq
    %v6414 = vshrl.u32 %v6413, 7
    %v6415 = vsub.s32 %v6412, %v6414
    %v6416 = vrot.slane %v6409, %v6415
    %v6417 = vcombine.low %v6416, %v1276
    %v6418 = vcombine.low %v1996, %v412
    %v6420 = vunpack.c.l.s4 1983009808
    %v6421 = vunpack.c.0.s8 %v6420
    %v6422 = vlaneseq
    %v6423 = vshrl.u32 %v6422, 7
    %v6424 = vsub.s32 %v6421, %v6423
    %v6425 = vrot.slane %v6418, %v6424
    %v6426 = vcombine.low %v6425, %v1310
    %v6427 = vcombine.low %v428, %v1997
    %v6429 = vunpack.c.l.s4 1983009808
    %v6430 = vunpack.c.0.s8 %v6429
    %v6431 = vlaneseq
    %v6432 = vshrl.u32 %v6431, 7
    %v6433 = vsub.s32 %v6430, %v6432
    %v6434 = vrot.slane %v6427, %v6433
    %v6435 = vcombine.low %v1320, %v6434
    %v6436 = vcombine.low %v1998, %v478
    %v6438 = vunpack.c.l.s4 1983009808
    %v6439 = vunpack.c.0.s8 %v6438
    %v6440 = vlaneseq
    %v6441 = vshrl.u32 %v6440, 7
    %v6442 = vsub.s32 %v6439, %v6441
    %v6443 = vrot.slane %v6436, %v6442
    %v6444 = vcombine.low %v1354, %v6443
    %v6445 = vcombine.low %v494, %v1999
    %v6447 = vunpack.c.l.s4 1983009808
    %v6448 = vunpack.c.0.s8 %v6447
    %v6449 = vlaneseq
    %v6450 = vshrl.u32 %v6449, 7
    %v6451 = vsub.s32 %v6448, %v6450
    %v6452 = vrot.slane %v6445, %v6451
    %v6453 = vcombine.low %v6452, %v1395
    %v6454 = vcombine.low %v2000, %v544
    %v6456 = vunpack.c.l.s4 1983009808
    %v6457 = vunpack.c.0.s8 %v6456
    %v6458 = vlaneseq
    %v6459 = vshrl.u32 %v6458, 7
    %v6460 = vsub.s32 %v6457, %v6459
    %v6461 = vrot.slane %v6454, %v6460
    %v6462 = vcombine.low %v6461, %v1429
    %v6463 = vcombine.low %v560, %v2001
    %v6465 = vunpack.c.l.s4 1983009808
    %v6466 = vunpack.c.0.s8 %v6465
    %v6467 = vlaneseq
    %v6468 = vshrl.u32 %v6467, 7
    %v6469 = vsub.s32 %v6466, %v6468
    %v6470 = vrot.slane %v6463, %v6469
    %v6471 = vcombine.low %v1439, %v6470
    %v6472 = vcombine.low %v2002, %v4719
    %v6474 = vunpack.c.l.s4 1983009808
    %v6475 = vunpack.c.0.s8 %v6474
    %v6476 = vlaneseq
    %v6477 = vshrl.u32 %v6476, 7
    %v6478 = vsub.s32 %v6475, %v6477
    %v6479 = vrot.slane %v6472, %v6478
    %v6480 = vcombine.low %v1473, %v6479
    %v6481 = vcombine.low %v4718, %v4720
    %v6482 = vcombine.low %v4728, %v4736
    %v6484 = vunpack.c.l.s4 1983009808
    %v6485 = vunpack.c.0.s8 %v6484
    %v6486 = vlaneseq
    %v6487 = vshrl.u32 %v6486, 7
    %v6488 = vsub.s32 %v6485, %v6487
    %v6489 = vrot.slane %v6481, %v6488
    %v6491 = vunpack.c.l.s4 1983009808
    %v6492 = vunpack.c.0.s8 %v6491
    %v6493 = vlaneseq
    %v6494 = vshrl.u32 %v6493, 7
    %v6495 = vsub.s32 %v6492, %v6494
    %v6496 = vrot.slane %v6482, %v6495
    %v6497 = vcombine.low %v6489, %v6496
    %v6498 = vcombine.low %v4735, %v5288
    %v6500 = vunpack.c.l.s4 1983009808
    %v6501 = vunpack.c.0.s8 %v6500
    %v6502 = vlaneseq
    %v6503 = vshrl.u32 %v6502, 7
    %v6504 = vsub.s32 %v6501, %v6503
    %v6505 = vrot.slane %v6498, %v6504
    %v6506 = vcombine.low %v6505, %v1514
    %v6507 = vcombine.low %v2004, %v676
    %v6509 = vunpack.c.l.s4 1983009808
    %v6510 = vunpack.c.0.s8 %v6509
    %v6511 = vlaneseq
    %v6512 = vshrl.u32 %v6511, 7
    %v6513 = vsub.s32 %v6510, %v6512
    %v6514 = vrot.slane %v6507, %v6513
    %v6515 = vcombine.low %v6514, %v1548
    %v6516 = vcombine.low %v692, %v2005
    %v6518 = vunpack.c.l.s4 1983009808
    %v6519 = vunpack.c.0.s8 %v6518
    %v6520 = vlaneseq
    %v6521 = vshrl.u32 %v6520, 7
    %v6522 = vsub.s32 %v6519, %v6521
    %v6523 = vrot.slane %v6516, %v6522
    %v6524 = vcombine.low %v1558, %v6523
    %v6525 = vcombine.low %v2006, %v742
    %v6527 = vunpack.c.l.s4 1983009808
    %v6528 = vunpack.c.0.s8 %v6527
    %v6529 = vlaneseq
    %v6530 = vshrl.u32 %v6529, 7
    %v6531 = vsub.s32 %v6528, %v6530
    %v6532 = vrot.slane %v6525, %v6531
    %v6533 = vcombine.low %v1592, %v6532
    %v6534 = vcombine.low %v758, %v2007
    %v6536 = vunpack.c.l.s4 1983009808
    %v6537 = vunpack.c.0.s8 %v6536
    %v6538 = vlaneseq
    %v6539 = vshrl.u32 %v6538, 7
    %v6540 = vsub.s32 %v6537, %v6539
    %v6541 = vrot.slane %v6534, %v6540
    %v6542 = vcombine.low %v6541, %v1633
    %v6543 = vcombine.low %v2008, %v808
    %v6545 = vunpack.c.l.s4 1983009808
    %v6546 = vunpack.c.0.s8 %v6545
    %v6547 = vlaneseq
    %v6548 = vshrl.u32 %v6547, 7
    %v6549 = vsub.s32 %v6546, %v6548
    %v6550 = vrot.slane %v6543, %v6549
    %v6551 = vcombine.low %v6550, %v1667
    %v6552 = vcombine.low %v824, %v2009
    %v6554 = vunpack.c.l.s4 1983009808
    %v6555 = vunpack.c.0.s8 %v6554
    %v6556 = vlaneseq
    %v6557 = vshrl.u32 %v6556, 7
    %v6558 = vsub.s32 %v6555, %v6557
    %v6559 = vrot.slane %v6552, %v6558
    %v6560 = vcombine.low %v1677, %v6559
    %v6561 = vcombine.low %v2010, %v874
    %v6563 = vunpack.c.l.s4 1983009808
    %v6564 = vunpack.c.0.s8 %v6563
    %v6565 = vlaneseq
    %v6566 = vshrl.u32 %v6565, 7
    %v6567 = vsub.s32 %v6564, %v6566
    %v6568 = vrot.slane %v6561, %v6567
    %v6569 = vcombine.low %v1711, %v6568
    %v6570 = vcombine.low %v890, %v2011
    %v6572 = vunpack.c.l.s4 1983009808
    %v6573 = vunpack.c.0.s8 %v6572
    %v6574 = vlaneseq
    %v6575 = vshrl.u32 %v6574, 7
    %v6576 = vsub.s32 %v6573, %v6575
    %v6577 = vrot.slane %v6570, %v6576
    %v6578 = vcombine.low %v6577, %v1752
    %v6579 = vcombine.low %v2012, %v940
    %v6581 = vunpack.c.l.s4 1983009808
    %v6582 = vunpack.c.0.s8 %v6581
    %v6583 = vlaneseq
    %v6584 = vshrl.u32 %v6583, 7
    %v6585 = vsub.s32 %v6582, %v6584
    %v6586 = vrot.slane %v6579, %v6585
    %v6587 = vcombine.low %v6586, %v1786
    %v6588 = vcombine.low %v956, %v2013
    %v6590 = vunpack.c.l.s4 1983009808
    %v6591 = vunpack.c.0.s8 %v6590
    %v6592 = vlaneseq
    %v6593 = vshrl.u32 %v6592, 7
    %v6594 = vsub.s32 %v6591, %v6593
    %v6595 = vrot.slane %v6588, %v6594
    %v6596 = vcombine.low %v1796, %v6595
    %v6597 = vcombine.low %v2014, %v1006
    %v6599 = vunpack.c.l.s4 1983009808
    %v6600 = vunpack.c.0.s8 %v6599
    %v6601 = vlaneseq
    %v6602 = vshrl.u32 %v6601, 7
    %v6603 = vsub.s32 %v6600, %v6602
    %v6604 = vrot.slane %v6597, %v6603
    %v6605 = vcombine.low %v1830, %v6604
    %v6606 = vcombine.low %v1022, %v2015
    %v6608 = vunpack.c.l.s4 1983009808
    %v6609 = vunpack.c.0.s8 %v6608
    %v6610 = vlaneseq
    %v6611 = vshrl.u32 %v6610, 7
    %v6612 = vsub.s32 %v6609, %v6611
    %v6613 = vrot.slane %v6606, %v6612
    %v6614 = vcombine.low %v6613, %v1871
    %v6615 = vcombine.low %v2016, %v4752
    %v6616 = vcombine.low %v4751, %v4753
    %v6618 = vunpack.c.l.s4 1983009808
    %v6619 = vunpack.c.0.s8 %v6618
    %v6620 = vlaneseq
    %v6621 = vshrl.u32 %v6620, 7
    %v6622 = vsub.s32 %v6619, %v6621
    %v6623 = vrot.slane %v6615, %v6622
    %v6625 = vunpack.c.l.s4 1983009808
    %v6626 = vunpack.c.0.s8 %v6625
    %v6627 = vlaneseq
    %v6628 = vshrl.u32 %v6627, 7
    %v6629 = vsub.s32 %v6626, %v6628
    %v6630 = vrot.slane %v6616, %v6629
    %v6631 = vcombine.low %v6623, %v6630
    %v6632 = vcombine.low %v4761, %v4769
    %v6633 = vcombine.low %v4768, %v5289
    %v6635 = vunpack.c.l.s4 1983009808
    %v6636 = vunpack.c.0.s8 %v6635
    %v6637 = vlaneseq
    %v6638 = vshrl.u32 %v6637, 7
    %v6639 = vsub.s32 %v6636, %v6638
    %v6640 = vrot.slane %v6632, %v6639
    %v6642 = vunpack.c.l.s4 1983009808
    %v6643 = vunpack.c.0.s8 %v6642
    %v6644 = vlaneseq
    %v6645 = vshrl.u32 %v6644, 7
    %v6646 = vsub.s32 %v6643, %v6645
    %v6647 = vrot.slane %v6633, %v6646
    %v6648 = vcombine.low %v6640, %v6647
    %6649 = vrot.lane.b32.xlu0 %v1107, 5
    %v6650 = vpop.permute.xlu0 %6649
    %6651 = vrot.lane.b32.xlu0 %v6372, 5
    %v6652 = vpop.permute.xlu0 %6651
    %6653 = vrot.lane.b32.xlu0 %v1141, 5
    %v6654 = vpop.permute.xlu0 %6653
    %6655 = vrot.lane.b32.xlu0 %v6381, 5
    %v6656 = vpop.permute.xlu0 %6655
    %6657 = vrot.lane.b32.xlu0 %v1175, 5
    %v6658 = vpop.permute.xlu0 %6657
    %6659 = vrot.lane.b32.xlu0 %v6390, 5
    %v6660 = vpop.permute.xlu0 %6659
    %6661 = vrot.lane.b32.xlu0 %v6399, 5
    %v6662 = vpop.permute.xlu0 %6661
    %6663 = vrot.lane.b32.xlu0 %v1226, 5
    %v6664 = vpop.permute.xlu0 %6663
    %6665 = vrot.lane.b32.xlu0 %v6408, 5
    %v6666 = vpop.permute.xlu0 %6665
    %6667 = vrot.lane.b32.xlu0 %v1260, 5
    %v6668 = vpop.permute.xlu0 %6667
    %6669 = vrot.lane.b32.xlu0 %v6417, 5
    %v6670 = vpop.permute.xlu0 %6669
    %6671 = vrot.lane.b32.xlu0 %v1294, 5
    %v6672 = vpop.permute.xlu0 %6671
    %6673 = vrot.lane.b32.xlu0 %v6426, 5
    %v6674 = vpop.permute.xlu0 %6673
    %6675 = vrot.lane.b32.xlu0 %v6435, 5
    %v6676 = vpop.permute.xlu0 %6675
    %6677 = vrot.lane.b32.xlu0 %v1345, 5
    %v6678 = vpop.permute.xlu0 %6677
    %6679 = vrot.lane.b32.xlu0 %v6444, 5
    %v6680 = vpop.permute.xlu0 %6679
    %6681 = vrot.lane.b32.xlu0 %v1379, 5
    %v6682 = vpop.permute.xlu0 %6681
    %6683 = vrot.lane.b32.xlu0 %v6453, 5
    %v6684 = vpop.permute.xlu0 %6683
    %6685 = vrot.lane.b32.xlu0 %v1413, 5
    %v6686 = vpop.permute.xlu0 %6685
    %6687 = vrot.lane.b32.xlu0 %v6462, 5
    %v6688 = vpop.permute.xlu0 %6687
    %6689 = vrot.lane.b32.xlu0 %v6471, 5
    %v6690 = vpop.permute.xlu0 %6689
    %6691 = vrot.lane.b32.xlu0 %v1464, 5
    %v6692 = vpop.permute.xlu0 %6691
    %6693 = vrot.lane.b32.xlu0 %v6480, 5
    %v6694 = vpop.permute.xlu0 %6693
    %6695 = vrot.lane.b32.xlu0 %v6497, 5
    %v6696 = vpop.permute.xlu0 %6695
    %6697 = vrot.lane.b32.xlu0 %v6506, 5
    %v6698 = vpop.permute.xlu0 %6697
    %6699 = vrot.lane.b32.xlu0 %v1532, 5
    %v6700 = vpop.permute.xlu0 %6699
    %6701 = vrot.lane.b32.xlu0 %v6515, 5
    %v6702 = vpop.permute.xlu0 %6701
    %6703 = vrot.lane.b32.xlu0 %v6524, 5
    %v6704 = vpop.permute.xlu0 %6703
    %6705 = vrot.lane.b32.xlu0 %v1583, 5
    %v6706 = vpop.permute.xlu0 %6705
    %6707 = vrot.lane.b32.xlu0 %v6533, 5
    %v6708 = vpop.permute.xlu0 %6707
    %6709 = vrot.lane.b32.xlu0 %v1617, 5
    %v6710 = vpop.permute.xlu0 %6709
    %6711 = vrot.lane.b32.xlu0 %v6542, 5
    %v6712 = vpop.permute.xlu0 %6711
    %6713 = vrot.lane.b32.xlu0 %v1651, 5
    %v6714 = vpop.permute.xlu0 %6713
    %6715 = vrot.lane.b32.xlu0 %v6551, 5
    %v6716 = vpop.permute.xlu0 %6715
    %6717 = vrot.lane.b32.xlu0 %v6560, 5
    %v6718 = vpop.permute.xlu0 %6717
    %6719 = vrot.lane.b32.xlu0 %v1702, 5
    %v6720 = vpop.permute.xlu0 %6719
    %6721 = vrot.lane.b32.xlu0 %v6569, 5
    %v6722 = vpop.permute.xlu0 %6721
    %6723 = vrot.lane.b32.xlu0 %v1736, 5
    %v6724 = vpop.permute.xlu0 %6723
    %6725 = vrot.lane.b32.xlu0 %v6578, 5
    %v6726 = vpop.permute.xlu0 %6725
    %6727 = vrot.lane.b32.xlu0 %v1770, 5
    %v6728 = vpop.permute.xlu0 %6727
    %6729 = vrot.lane.b32.xlu0 %v6587, 5
    %v6730 = vpop.permute.xlu0 %6729
    %6731 = vrot.lane.b32.xlu0 %v6596, 5
    %v6732 = vpop.permute.xlu0 %6731
    %6733 = vrot.lane.b32.xlu0 %v1821, 5
    %v6734 = vpop.permute.xlu0 %6733
    %6735 = vrot.lane.b32.xlu0 %v6605, 5
    %v6736 = vpop.permute.xlu0 %6735
    %6737 = vrot.lane.b32.xlu0 %v1855, 5
    %v6738 = vpop.permute.xlu0 %6737
    %6739 = vrot.lane.b32.xlu0 %v6614, 5
    %v6740 = vpop.permute.xlu0 %6739
    %6741 = vrot.lane.b32.xlu0 %v1889, 5
    %v6742 = vpop.permute.xlu0 %6741
    %6743 = vrot.lane.b32.xlu0 %v6631, 5
    %v6744 = vpop.permute.xlu0 %6743
    %6745 = vrot.lane.b32.xlu0 %v6648, 5
    %v6746 = vpop.permute.xlu0 %6745
    %vm6796 = vcmask 48168
    %6797 = vst.msk [vmem:[#allocation2] sm:$0xff] %vm6796, %v6650
    %6798 = vst.msk [vmem:[#allocation2 + $0x8] sm:$0xff] %vm6796, %v6652
    %6799 = vst.msk [vmem:[#allocation2 + $0x10] sm:$0xff] %vm6796, %v6654
    %6800 = vst.msk [vmem:[#allocation2 + $0x18] sm:$0xff] %vm6796, %v6656
    %6801 = vst.msk [vmem:[#allocation2 + $0x20] sm:$0xff] %vm6796, %v6658
    %6802 = vst.msk [vmem:[#allocation2 + $0x28] sm:$0xff] %vm6796, %v6660
    %6803 = vst.msk [vmem:[#allocation2 + $0x30] sm:$0xff] %vm6796, %v6662
    %6804 = vst.msk [vmem:[#allocation2 + $0x38] sm:$0xff] %vm6796, %v6664
    %6805 = vst.msk [vmem:[#allocation2 + $0x40] sm:$0xff] %vm6796, %v6666
    %6806 = vst.msk [vmem:[#allocation2 + $0x48] sm:$0xff] %vm6796, %v6668
    %6807 = vst.msk [vmem:[#allocation2 + $0x50] sm:$0xff] %vm6796, %v6670
    %6808 = vst.msk [vmem:[#allocation2 + $0x58] sm:$0xff] %vm6796, %v6672
    %6809 = vst.msk [vmem:[#allocation2 + $0x60] sm:$0xff] %vm6796, %v6674
    %6810 = vst.msk [vmem:[#allocation2 + $0x68] sm:$0xff] %vm6796, %v6676
    %6811 = vst.msk [vmem:[#allocation2 + $0x70] sm:$0xff] %vm6796, %v6678
    %6812 = vst.msk [vmem:[#allocation2 + $0x78] sm:$0xff] %vm6796, %v6680
    %6813 = vst.msk [vmem:[#allocation2 + $0x80] sm:$0xff] %vm6796, %v6682
    %6814 = vst.msk [vmem:[#allocation2 + $0x88] sm:$0xff] %vm6796, %v6684
    %6815 = vst.msk [vmem:[#allocation2 + $0x90] sm:$0xff] %vm6796, %v6686
    %6816 = vst.msk [vmem:[#allocation2 + $0x98] sm:$0xff] %vm6796, %v6688
    %6817 = vst.msk [vmem:[#allocation2 + $0xa0] sm:$0xff] %vm6796, %v6690
    %6818 = vst.msk [vmem:[#allocation2 + $0xa8] sm:$0xff] %vm6796, %v6692
    %6819 = vst.msk [vmem:[#allocation2 + $0xb0] sm:$0xff] %vm6796, %v6694
    %6820 = vst.msk [vmem:[#allocation2 + $0xb8] sm:$0xff] %vm6796, %v6696
    %6821 = vst.msk [vmem:[#allocation2 + $0xc0] sm:$0xff] %vm6796, %v6698
    %6822 = vst.msk [vmem:[#allocation2 + $0xc8] sm:$0xff] %vm6796, %v6700
    %6823 = vst.msk [vmem:[#allocation2 + $0xd0] sm:$0xff] %vm6796, %v6702
    %6824 = vst.msk [vmem:[#allocation2 + $0xd8] sm:$0xff] %vm6796, %v6704
    %6825 = vst.msk [vmem:[#allocation2 + $0xe0] sm:$0xff] %vm6796, %v6706
    %6826 = vst.msk [vmem:[#allocation2 + $0xe8] sm:$0xff] %vm6796, %v6708
    %6827 = vst.msk [vmem:[#allocation2 + $0xf0] sm:$0xff] %vm6796, %v6710
    %6828 = vst.msk [vmem:[#allocation2 + $0xf8] sm:$0xff] %vm6796, %v6712
    %6829 = vst.msk [vmem:[#allocation2 + $0x100] sm:$0xff] %vm6796, %v6714
    %6830 = vst.msk [vmem:[#allocation2 + $0x108] sm:$0xff] %vm6796, %v6716
    %6831 = vst.msk [vmem:[#allocation2 + $0x110] sm:$0xff] %vm6796, %v6718
    %6832 = vst.msk [vmem:[#allocation2 + $0x118] sm:$0xff] %vm6796, %v6720
    %6833 = vst.msk [vmem:[#allocation2 + $0x120] sm:$0xff] %vm6796, %v6722
    %6834 = vst.msk [vmem:[#allocation2 + $0x128] sm:$0xff] %vm6796, %v6724
    %6835 = vst.msk [vmem:[#allocation2 + $0x130] sm:$0xff] %vm6796, %v6726
    %6836 = vst.msk [vmem:[#allocation2 + $0x138] sm:$0xff] %vm6796, %v6728
    %6837 = vst.msk [vmem:[#allocation2 + $0x140] sm:$0xff] %vm6796, %v6730
    %6838 = vst.msk [vmem:[#allocation2 + $0x148] sm:$0xff] %vm6796, %v6732
    %6839 = vst.msk [vmem:[#allocation2 + $0x150] sm:$0xff] %vm6796, %v6734
    %6840 = vst.msk [vmem:[#allocation2 + $0x158] sm:$0xff] %vm6796, %v6736
    %6841 = vst.msk [vmem:[#allocation2 + $0x160] sm:$0xff] %vm6796, %v6738
    %6842 = vst.msk [vmem:[#allocation2 + $0x168] sm:$0xff] %vm6796, %v6740
    %6843 = vst.msk [vmem:[#allocation2 + $0x170] sm:$0xff] %vm6796, %v6742
    %6844 = vst.msk [vmem:[#allocation2 + $0x178] sm:$0xff] %vm6796, %v6744
    %6845 = vst.msk [vmem:[#allocation2 + $0x180] sm:$0xff] %vm6796, %v6746
    %v6850 = vcombine.high %v43, %v43
    %v6852 = vunpack.c.l.s4 1983009808
    %v6853 = vunpack.c.0.s8 %v6852
    %v6854 = vlaneseq
    %v6855 = vshrl.u32 %v6854, 7
    %v6856 = vsub.s32 %v6853, %v6855
    %v6857 = vrot.slane %v43, %v6856
    %v6859 = vunpack.c.l.s4 1983009808
    %v6860 = vunpack.c.0.s8 %v6859
    %v6861 = vlaneseq
    %v6862 = vshrl.u32 %v6861, 7
    %v6863 = vsub.s32 %v6860, %v6862
    %v6864 = vrot.slane %v6850, %v6863
    %v6865 = vcombine.high %v6857, %v6857
    %v6866 = vcombine.high %v6864, %v6864
    %v6867 = vcombine.high %v44, %v44
    %v6869 = vunpack.c.l.s4 1983009808
    %v6870 = vunpack.c.0.s8 %v6869
    %v6871 = vlaneseq
    %v6872 = vshrl.u32 %v6871, 7
    %v6873 = vsub.s32 %v6870, %v6872
    %v6874 = vrot.slane %v44, %v6873
    %v6876 = vunpack.c.l.s4 1983009808
    %v6877 = vunpack.c.0.s8 %v6876
    %v6878 = vlaneseq
    %v6879 = vshrl.u32 %v6878, 7
    %v6880 = vsub.s32 %v6877, %v6879
    %v6881 = vrot.slane %v6867, %v6880
    %v6882 = vcombine.high %v6874, %v6874
    %v6883 = vcombine.high %v75, %v75
    %v6885 = vunpack.c.l.s4 1983009808
    %v6886 = vunpack.c.0.s8 %v6885
    %v6887 = vlaneseq
    %v6888 = vshrl.u32 %v6887, 7
    %v6889 = vsub.s32 %v6886, %v6888
    %v6890 = vrot.slane %v75, %v6889
    %v6892 = vunpack.c.l.s4 1983009808
    %v6893 = vunpack.c.0.s8 %v6892
    %v6894 = vlaneseq
    %v6895 = vshrl.u32 %v6894, 7
    %v6896 = vsub.s32 %v6893, %v6895
    %v6897 = vrot.slane %v6883, %v6896
    %v6898 = vcombine.high %v6890, %v6890
    %v6899 = vcombine.high %v6897, %v6897
    %v6900 = vcombine.high %v76, %v76
    %v6902 = vunpack.c.l.s4 1983009808
    %v6903 = vunpack.c.0.s8 %v6902
    %v6904 = vlaneseq
    %v6905 = vshrl.u32 %v6904, 7
    %v6906 = vsub.s32 %v6903, %v6905
    %v6907 = vrot.slane %v76, %v6906
    %v6909 = vunpack.c.l.s4 1983009808
    %v6910 = vunpack.c.0.s8 %v6909
    %v6911 = vlaneseq
    %v6912 = vshrl.u32 %v6911, 7
    %v6913 = vsub.s32 %v6910, %v6912
    %v6914 = vrot.slane %v6900, %v6913
    %v6915 = vcombine.high %v6907, %v6907
    %v6916 = vcombine.low %v1123, %v1133
    %v6917 = vcombine.low %v1140, %v1150
    %v6918 = vcombine.low %v1157, %v1167
    %v6919 = vcombine.low %v1174, %v1184
    %v6920 = vcombine.low %v1191, %v1201
    %v6921 = vcombine.low %v1208, %v1218
    %v6922 = vcombine.low %v1225, %v1235
    %v6923 = vcombine.low %v1242, %v1252
    %v6924 = vcombine.low %v1259, %v1269
    %v6925 = vcombine.low %v1276, %v1286
    %v6926 = vcombine.low %v1293, %v1303
    %v6927 = vcombine.low %v1310, %v1320
    %v6928 = vcombine.low %v1327, %v1337
    %v6929 = vcombine.low %v1344, %v1354
    %v6930 = vcombine.low %v1361, %v1371
    %v6931 = vcombine.low %v1378, %v1388
    %v6932 = vcombine.low %v1395, %v1405
    %v6933 = vcombine.low %v1412, %v1422
    %v6934 = vcombine.low %v1429, %v1439
    %v6935 = vcombine.low %v1446, %v1456
    %v6936 = vcombine.low %v1463, %v1473
    %v6937 = vcombine.low %v4711, %v4719
    %v6939 = vunpack.c.l.s4 1983009808
    %v6940 = vunpack.c.0.s8 %v6939
    %v6941 = vlaneseq
    %v6942 = vshrl.u32 %v6941, 7
    %v6943 = vsub.s32 %v6940, %v6942
    %v6944 = vrot.slane %v6937, %v6943
    %v6945 = vcombine.low %v6944, %v6489
    %v6946 = vcombine.low %v4735, %v6857
    %v6948 = vunpack.c.l.s4 1983009808
    %v6949 = vunpack.c.0.s8 %v6948
    %v6950 = vlaneseq
    %v6951 = vshrl.u32 %v6950, 7
    %v6952 = vsub.s32 %v6949, %v6951
    %v6953 = vrot.slane %v6946, %v6952
    %v6954 = vcombine.low %v6496, %v6953
    %v6955 = vcombine.low %v6865, %v6864
    %v6956 = vcombine.low %v6866, %v6874
    %v6958 = vunpack.c.l.s4 1983009808
    %v6959 = vunpack.c.0.s8 %v6958
    %v6960 = vlaneseq
    %v6961 = vshrl.u32 %v6960, 7
    %v6962 = vsub.s32 %v6959, %v6961
    %v6963 = vrot.slane %v6955, %v6962
    %v6965 = vunpack.c.l.s4 1983009808
    %v6966 = vunpack.c.0.s8 %v6965
    %v6967 = vlaneseq
    %v6968 = vshrl.u32 %v6967, 7
    %v6969 = vsub.s32 %v6966, %v6968
    %v6970 = vrot.slane %v6956, %v6969
    %v6971 = vcombine.low %v6963, %v6970
    %v6972 = vcombine.low %v6882, %v6881
    %v6974 = vunpack.c.l.s4 1983009808
    %v6975 = vunpack.c.0.s8 %v6974
    %v6976 = vlaneseq
    %v6977 = vshrl.u32 %v6976, 7
    %v6978 = vsub.s32 %v6975, %v6977
    %v6979 = vrot.slane %v6972, %v6978
    %v6980 = vcombine.low %v6979, %v1541
    %v6981 = vcombine.low %v1548, %v1558
    %v6982 = vcombine.low %v1565, %v1575
    %v6983 = vcombine.low %v1582, %v1592
    %v6984 = vcombine.low %v1599, %v1609
    %v6985 = vcombine.low %v1616, %v1626
    %v6986 = vcombine.low %v1633, %v1643
    %v6987 = vcombine.low %v1650, %v1660
    %v6988 = vcombine.low %v1667, %v1677
    %v6989 = vcombine.low %v1684, %v1694
    %v6990 = vcombine.low %v1701, %v1711
    %v6991 = vcombine.low %v1718, %v1728
    %v6992 = vcombine.low %v1735, %v1745
    %v6993 = vcombine.low %v1752, %v1762
    %v6994 = vcombine.low %v1769, %v1779
    %v6995 = vcombine.low %v1786, %v1796
    %v6996 = vcombine.low %v1803, %v1813
    %v6997 = vcombine.low %v1820, %v1830
    %v6998 = vcombine.low %v1837, %v1847
    %v6999 = vcombine.low %v1854, %v1864
    %v7000 = vcombine.low %v1871, %v1881
    %v7001 = vcombine.low %v4744, %v4752
    %v7003 = vunpack.c.l.s4 1983009808
    %v7004 = vunpack.c.0.s8 %v7003
    %v7005 = vlaneseq
    %v7006 = vshrl.u32 %v7005, 7
    %v7007 = vsub.s32 %v7004, %v7006
    %v7008 = vrot.slane %v7001, %v7007
    %v7009 = vcombine.low %v1888, %v7008
    %v7010 = vcombine.low %v6630, %v6640
    %v7011 = vcombine.low %v4768, %v6890
    %v7012 = vcombine.low %v6898, %v6897
    %v7014 = vunpack.c.l.s4 1983009808
    %v7015 = vunpack.c.0.s8 %v7014
    %v7016 = vlaneseq
    %v7017 = vshrl.u32 %v7016, 7
    %v7018 = vsub.s32 %v7015, %v7017
    %v7019 = vrot.slane %v7011, %v7018
    %v7021 = vunpack.c.l.s4 1983009808
    %v7022 = vunpack.c.0.s8 %v7021
    %v7023 = vlaneseq
    %v7024 = vshrl.u32 %v7023, 7
    %v7025 = vsub.s32 %v7022, %v7024
    %v7026 = vrot.slane %v7012, %v7025
    %v7027 = vcombine.low %v7019, %v7026
    %v7028 = vcombine.low %v6899, %v6907
    %v7029 = vcombine.low %v6915, %v6914
    %v7031 = vunpack.c.l.s4 1983009808
    %v7032 = vunpack.c.0.s8 %v7031
    %v7033 = vlaneseq
    %v7034 = vshrl.u32 %v7033, 7
    %v7035 = vsub.s32 %v7032, %v7034
    %v7036 = vrot.slane %v7028, %v7035
    %v7038 = vunpack.c.l.s4 1983009808
    %v7039 = vunpack.c.0.s8 %v7038
    %v7040 = vlaneseq
    %v7041 = vshrl.u32 %v7040, 7
    %v7042 = vsub.s32 %v7039, %v7041
    %v7043 = vrot.slane %v7029, %v7042
    %v7044 = vcombine.low %v7036, %v7043
    %7045 = vrot.lane.b32.xlu0 %v6916, 6
    %v7046 = vpop.permute.xlu0 %7045
    %7047 = vrot.lane.b32.xlu0 %v6917, 6
    %v7048 = vpop.permute.xlu0 %7047
    %7049 = vrot.lane.b32.xlu0 %v6918, 6
    %v7050 = vpop.permute.xlu0 %7049
    %7051 = vrot.lane.b32.xlu0 %v6919, 6
    %v7052 = vpop.permute.xlu0 %7051
    %7053 = vrot.lane.b32.xlu0 %v6920, 6
    %v7054 = vpop.permute.xlu0 %7053
    %7055 = vrot.lane.b32.xlu0 %v6921, 6
    %v7056 = vpop.permute.xlu0 %7055
    %7057 = vrot.lane.b32.xlu0 %v6922, 6
    %v7058 = vpop.permute.xlu0 %7057
    %7059 = vrot.lane.b32.xlu0 %v6923, 6
    %v7060 = vpop.permute.xlu0 %7059
    %7061 = vrot.lane.b32.xlu0 %v6924, 6
    %v7062 = vpop.permute.xlu0 %7061
    %7063 = vrot.lane.b32.xlu0 %v6925, 6
    %v7064 = vpop.permute.xlu0 %7063
    %7065 = vrot.lane.b32.xlu0 %v6926, 6
    %v7066 = vpop.permute.xlu0 %7065
    %7067 = vrot.lane.b32.xlu0 %v6927, 6
    %v7068 = vpop.permute.xlu0 %7067
    %7069 = vrot.lane.b32.xlu0 %v6928, 6
    %v7070 = vpop.permute.xlu0 %7069
    %7071 = vrot.lane.b32.xlu0 %v6929, 6
    %v7072 = vpop.permute.xlu0 %7071
    %7073 = vrot.lane.b32.xlu0 %v6930, 6
    %v7074 = vpop.permute.xlu0 %7073
    %7075 = vrot.lane.b32.xlu0 %v6931, 6
    %v7076 = vpop.permute.xlu0 %7075
    %7077 = vrot.lane.b32.xlu0 %v6932, 6
    %v7078 = vpop.permute.xlu0 %7077
    %7079 = vrot.lane.b32.xlu0 %v6933, 6
    %v7080 = vpop.permute.xlu0 %7079
    %7081 = vrot.lane.b32.xlu0 %v6934, 6
    %v7082 = vpop.permute.xlu0 %7081
    %7083 = vrot.lane.b32.xlu0 %v6935, 6
    %v7084 = vpop.permute.xlu0 %7083
    %7085 = vrot.lane.b32.xlu0 %v6936, 6
    %v7086 = vpop.permute.xlu0 %7085
    %7087 = vrot.lane.b32.xlu0 %v6945, 6
    %v7088 = vpop.permute.xlu0 %7087
    %7089 = vrot.lane.b32.xlu0 %v6954, 6
    %v7090 = vpop.permute.xlu0 %7089
    %7091 = vrot.lane.b32.xlu0 %v6971, 6
    %v7092 = vpop.permute.xlu0 %7091
    %7093 = vrot.lane.b32.xlu0 %v6980, 6
    %v7094 = vpop.permute.xlu0 %7093
    %7095 = vrot.lane.b32.xlu0 %v6981, 6
    %v7096 = vpop.permute.xlu0 %7095
    %7097 = vrot.lane.b32.xlu0 %v6982, 6
    %v7098 = vpop.permute.xlu0 %7097
    %7099 = vrot.lane.b32.xlu0 %v6983, 6
    %v7100 = vpop.permute.xlu0 %7099
    %7101 = vrot.lane.b32.xlu0 %v6984, 6
    %v7102 = vpop.permute.xlu0 %7101
    %7103 = vrot.lane.b32.xlu0 %v6985, 6
    %v7104 = vpop.permute.xlu0 %7103
    %7105 = vrot.lane.b32.xlu0 %v6986, 6
    %v7106 = vpop.permute.xlu0 %7105
    %7107 = vrot.lane.b32.xlu0 %v6987, 6
    %v7108 = vpop.permute.xlu0 %7107
    %7109 = vrot.lane.b32.xlu0 %v6988, 6
    %v7110 = vpop.permute.xlu0 %7109
    %7111 = vrot.lane.b32.xlu0 %v6989, 6
    %v7112 = vpop.permute.xlu0 %7111
    %7113 = vrot.lane.b32.xlu0 %v6990, 6
    %v7114 = vpop.permute.xlu0 %7113
    %7115 = vrot.lane.b32.xlu0 %v6991, 6
    %v7116 = vpop.permute.xlu0 %7115
    %7117 = vrot.lane.b32.xlu0 %v6992, 6
    %v7118 = vpop.permute.xlu0 %7117
    %7119 = vrot.lane.b32.xlu0 %v6993, 6
    %v7120 = vpop.permute.xlu0 %7119
    %7121 = vrot.lane.b32.xlu0 %v6994, 6
    %v7122 = vpop.permute.xlu0 %7121
    %7123 = vrot.lane.b32.xlu0 %v6995, 6
    %v7124 = vpop.permute.xlu0 %7123
    %7125 = vrot.lane.b32.xlu0 %v6996, 6
    %v7126 = vpop.permute.xlu0 %7125
    %7127 = vrot.lane.b32.xlu0 %v6997, 6
    %v7128 = vpop.permute.xlu0 %7127
    %7129 = vrot.lane.b32.xlu0 %v6998, 6
    %v7130 = vpop.permute.xlu0 %7129
    %7131 = vrot.lane.b32.xlu0 %v6999, 6
    %v7132 = vpop.permute.xlu0 %7131
    %7133 = vrot.lane.b32.xlu0 %v7000, 6
    %v7134 = vpop.permute.xlu0 %7133
    %7135 = vrot.lane.b32.xlu0 %v7009, 6
    %v7136 = vpop.permute.xlu0 %7135
    %7137 = vrot.lane.b32.xlu0 %v7010, 6
    %v7138 = vpop.permute.xlu0 %7137
    %7139 = vrot.lane.b32.xlu0 %v7027, 6
    %v7140 = vpop.permute.xlu0 %7139
    %7141 = vrot.lane.b32.xlu0 %v7044, 6
    %v7142 = vpop.permute.xlu0 %7141
    %vm7192 = vcmask 56368
    %7193 = vst.msk [vmem:[#allocation2] sm:$0xff] %vm7192, %v7046
    %7194 = vst.msk [vmem:[#allocation2 + $0x8] sm:$0xff] %vm7192, %v7048
    %7195 = vst.msk [vmem:[#allocation2 + $0x10] sm:$0xff] %vm7192, %v7050
    %7196 = vst.msk [vmem:[#allocation2 + $0x18] sm:$0xff] %vm7192, %v7052
    %7197 = vst.msk [vmem:[#allocation2 + $0x20] sm:$0xff] %vm7192, %v7054
    %7198 = vst.msk [vmem:[#allocation2 + $0x28] sm:$0xff] %vm7192, %v7056
    %7199 = vst.msk [vmem:[#allocation2 + $0x30] sm:$0xff] %vm7192, %v7058
    %7200 = vst.msk [vmem:[#allocation2 + $0x38] sm:$0xff] %vm7192, %v7060
    %7201 = vst.msk [vmem:[#allocation2 + $0x40] sm:$0xff] %vm7192, %v7062
    %7202 = vst.msk [vmem:[#allocation2 + $0x48] sm:$0xff] %vm7192, %v7064
    %7203 = vst.msk [vmem:[#allocation2 + $0x50] sm:$0xff] %vm7192, %v7066
    %7204 = vst.msk [vmem:[#allocation2 + $0x58] sm:$0xff] %vm7192, %v7068
    %7205 = vst.msk [vmem:[#allocation2 + $0x60] sm:$0xff] %vm7192, %v7070
    %7206 = vst.msk [vmem:[#allocation2 + $0x68] sm:$0xff] %vm7192, %v7072
    %7207 = vst.msk [vmem:[#allocation2 + $0x70] sm:$0xff] %vm7192, %v7074
    %7208 = vst.msk [vmem:[#allocation2 + $0x78] sm:$0xff] %vm7192, %v7076
    %7209 = vst.msk [vmem:[#allocation2 + $0x80] sm:$0xff] %vm7192, %v7078
    %7210 = vst.msk [vmem:[#allocation2 + $0x88] sm:$0xff] %vm7192, %v7080
    %7211 = vst.msk [vmem:[#allocation2 + $0x90] sm:$0xff] %vm7192, %v7082
    %7212 = vst.msk [vmem:[#allocation2 + $0x98] sm:$0xff] %vm7192, %v7084
    %7213 = vst.msk [vmem:[#allocation2 + $0xa0] sm:$0xff] %vm7192, %v7086
    %7214 = vst.msk [vmem:[#allocation2 + $0xa8] sm:$0xff] %vm7192, %v7088
    %7215 = vst.msk [vmem:[#allocation2 + $0xb0] sm:$0xff] %vm7192, %v7090
    %7216 = vst.msk [vmem:[#allocation2 + $0xb8] sm:$0xff] %vm7192, %v7092
    %7217 = vst.msk [vmem:[#allocation2 + $0xc0] sm:$0xff] %vm7192, %v7094
    %7218 = vst.msk [vmem:[#allocation2 + $0xc8] sm:$0xff] %vm7192, %v7096
    %7219 = vst.msk [vmem:[#allocation2 + $0xd0] sm:$0xff] %vm7192, %v7098
    %7220 = vst.msk [vmem:[#allocation2 + $0xd8] sm:$0xff] %vm7192, %v7100
    %7221 = vst.msk [vmem:[#allocation2 + $0xe0] sm:$0xff] %vm7192, %v7102
    %7222 = vst.msk [vmem:[#allocation2 + $0xe8] sm:$0xff] %vm7192, %v7104
    %7223 = vst.msk [vmem:[#allocation2 + $0xf0] sm:$0xff] %vm7192, %v7106
    %7224 = vst.msk [vmem:[#allocation2 + $0xf8] sm:$0xff] %vm7192, %v7108
    %7225 = vst.msk [vmem:[#allocation2 + $0x100] sm:$0xff] %vm7192, %v7110
    %7226 = vst.msk [vmem:[#allocation2 + $0x108] sm:$0xff] %vm7192, %v7112
    %7227 = vst.msk [vmem:[#allocation2 + $0x110] sm:$0xff] %vm7192, %v7114
    %7228 = vst.msk [vmem:[#allocation2 + $0x118] sm:$0xff] %vm7192, %v7116
    %7229 = vst.msk [vmem:[#allocation2 + $0x120] sm:$0xff] %vm7192, %v7118
    %7230 = vst.msk [vmem:[#allocation2 + $0x128] sm:$0xff] %vm7192, %v7120
    %7231 = vst.msk [vmem:[#allocation2 + $0x130] sm:$0xff] %vm7192, %v7122
    %7232 = vst.msk [vmem:[#allocation2 + $0x138] sm:$0xff] %vm7192, %v7124
    %7233 = vst.msk [vmem:[#allocation2 + $0x140] sm:$0xff] %vm7192, %v7126
    %7234 = vst.msk [vmem:[#allocation2 + $0x148] sm:$0xff] %vm7192, %v7128
    %7235 = vst.msk [vmem:[#allocation2 + $0x150] sm:$0xff] %vm7192, %v7130
    %7236 = vst.msk [vmem:[#allocation2 + $0x158] sm:$0xff] %vm7192, %v7132
    %7237 = vst.msk [vmem:[#allocation2 + $0x160] sm:$0xff] %vm7192, %v7134
    %7238 = vst.msk [vmem:[#allocation2 + $0x168] sm:$0xff] %vm7192, %v7136
    %7239 = vst.msk [vmem:[#allocation2 + $0x170] sm:$0xff] %vm7192, %v7138
    %7240 = vst.msk [vmem:[#allocation2 + $0x178] sm:$0xff] %vm7192, %v7140
    %7241 = vst.msk [vmem:[#allocation2 + $0x180] sm:$0xff] %vm7192, %v7142
    %v7242 = vcombine.high %v6881, %v6881
    %v7243 = vcombine.high %v6914, %v6914
    %v7244 = vrot.slane %v6857, 7
    %v7245 = vrot.slane %v7244, 2
    %v7246 = vrot.slane %v6865, 7
    %v7247 = vsel %vm2023, %v7245, %v7246
    %v7248 = vrot.slane %v7246, 2
    %v7249 = vrot.slane %v6864, 7
    %v7250 = vsel %vm2023, %v7248, %v7249
    %v7251 = vrot.slane %v7249, 2
    %v7252 = vrot.slane %v6866, 7
    %v7253 = vsel %vm2023, %v7251, %v7252
    %v7254 = vrot.slane %v7252, 2
    %v7255 = vrot.slane %v6874, 7
    %v7256 = vsel %vm2023, %v7254, %v7255
    %v7257 = vrot.slane %v7255, 2
    %v7258 = vrot.slane %v6882, 7
    %v7259 = vsel %vm2023, %v7257, %v7258
    %v7260 = vrot.slane %v7258, 2
    %v7261 = vrot.slane %v6881, 7
    %v7262 = vsel %vm2023, %v7260, %v7261
    %v7263 = vrot.slane %v7261, 2
    %v7264 = vrot.slane %v7242, 7
    %v7265 = vsel %vm2023, %v7263, %v7264
    %v7266 = vrot.slane %v6890, 7
    %v7267 = vrot.slane %v7266, 2
    %v7268 = vrot.slane %v6898, 7
    %v7269 = vsel %vm2023, %v7267, %v7268
    %v7270 = vrot.slane %v7268, 2
    %v7271 = vrot.slane %v6897, 7
    %v7272 = vsel %vm2023, %v7270, %v7271
    %v7273 = vrot.slane %v7271, 2
    %v7274 = vrot.slane %v6899, 7
    %v7275 = vsel %vm2023, %v7273, %v7274
    %v7276 = vrot.slane %v7274, 2
    %v7277 = vrot.slane %v6907, 7
    %v7278 = vsel %vm2023, %v7276, %v7277
    %v7279 = vrot.slane %v7277, 2
    %v7280 = vrot.slane %v6915, 7
    %v7281 = vsel %vm2023, %v7279, %v7280
    %v7282 = vrot.slane %v7280, 2
    %v7283 = vrot.slane %v6914, 7
    %v7284 = vsel %vm2023, %v7282, %v7283
    %v7285 = vrot.slane %v7283, 2
    %v7286 = vrot.slane %v7243, 7
    %v7287 = vsel %vm2023, %v7285, %v7286
    %v7288 = vcombine.low %v2706, %v2716
    %v7289 = vcombine.low %v2723, %v2733
    %v7290 = vcombine.low %v2740, %v2750
    %v7291 = vcombine.low %v2757, %v2767
    %v7292 = vcombine.low %v2774, %v2784
    %v7293 = vcombine.low %v2791, %v2801
    %v7294 = vcombine.low %v2808, %v2818
    %v7295 = vcombine.low %v2825, %v2835
    %v7296 = vcombine.low %v2842, %v2852
    %v7297 = vcombine.low %v2859, %v2869
    %v7298 = vcombine.low %v2876, %v2886
    %v7299 = vcombine.low %v2893, %v2903
    %v7300 = vcombine.low %v2910, %v2920
    %v7301 = vcombine.low %v2927, %v2937
    %v7302 = vcombine.low %v2944, %v2954
    %v7303 = vcombine.low %v2961, %v2971
    %v7304 = vcombine.low %v2978, %v2988
    %v7305 = vcombine.low %v2995, %v3005
    %v7306 = vcombine.low %v3012, %v3022
    %v7307 = vcombine.low %v3029, %v3039
    %v7308 = vcombine.low %v3046, %v3056
    %v7309 = vcombine.low %v5293, %v5296
    %v7310 = vcombine.low %v5299, %v5302
    %v7312 = vunpack.c.l.s4 1983009808
    %v7313 = vunpack.c.0.s8 %v7312
    %v7314 = vlaneseq
    %v7315 = vshrl.u32 %v7314, 7
    %v7316 = vsub.s32 %v7313, %v7315
    %v7317 = vrot.slane %v7309, %v7316
    %v7319 = vunpack.c.l.s4 1983009808
    %v7320 = vunpack.c.0.s8 %v7319
    %v7321 = vlaneseq
    %v7322 = vshrl.u32 %v7321, 7
    %v7323 = vsub.s32 %v7320, %v7322
    %v7324 = vrot.slane %v7310, %v7323
    %v7325 = vcombine.low %v7317, %v7324
    %v7326 = vcombine.low %v5305, %v5308
    %v7327 = vcombine.low %v5311, %v7247
    %v7329 = vunpack.c.l.s4 1983009808
    %v7330 = vunpack.c.0.s8 %v7329
    %v7331 = vlaneseq
    %v7332 = vshrl.u32 %v7331, 7
    %v7333 = vsub.s32 %v7330, %v7332
    %v7334 = vrot.slane %v7326, %v7333
    %v7336 = vunpack.c.l.s4 1983009808
    %v7337 = vunpack.c.0.s8 %v7336
    %v7338 = vlaneseq
    %v7339 = vshrl.u32 %v7338, 7
    %v7340 = vsub.s32 %v7337, %v7339
    %v7341 = vrot.slane %v7327, %v7340
    %v7342 = vcombine.low %v7334, %v7341
    %v7343 = vcombine.low %v7250, %v7253
    %v7344 = vcombine.low %v7256, %v7259
    %v7346 = vunpack.c.l.s4 1983009808
    %v7347 = vunpack.c.0.s8 %v7346
    %v7348 = vlaneseq
    %v7349 = vshrl.u32 %v7348, 7
    %v7350 = vsub.s32 %v7347, %v7349
    %v7351 = vrot.slane %v7343, %v7350
    %v7353 = vunpack.c.l.s4 1983009808
    %v7354 = vunpack.c.0.s8 %v7353
    %v7355 = vlaneseq
    %v7356 = vshrl.u32 %v7355, 7
    %v7357 = vsub.s32 %v7354, %v7356
    %v7358 = vrot.slane %v7344, %v7357
    %v7359 = vcombine.low %v7351, %v7358
    %v7360 = vcombine.low %v7262, %v7265
    %v7362 = vunpack.c.l.s4 1983009808
    %v7363 = vunpack.c.0.s8 %v7362
    %v7364 = vlaneseq
    %v7365 = vshrl.u32 %v7364, 7
    %v7366 = vsub.s32 %v7363, %v7365
    %v7367 = vrot.slane %v7360, %v7366
    %v7368 = vcombine.low %v7367, %v3124
    %v7369 = vcombine.low %v3131, %v3141
    %v7370 = vcombine.low %v3148, %v3158
    %v7371 = vcombine.low %v3165, %v3175
    %v7372 = vcombine.low %v3182, %v3192
    %v7373 = vcombine.low %v3199, %v3209
    %v7374 = vcombine.low %v3216, %v3226
    %v7375 = vcombine.low %v3233, %v3243
    %v7376 = vcombine.low %v3250, %v3260
    %v7377 = vcombine.low %v3267, %v3277
    %v7378 = vcombine.low %v3284, %v3294
    %v7379 = vcombine.low %v3301, %v3311
    %v7380 = vcombine.low %v3318, %v3328
    %v7381 = vcombine.low %v3335, %v3345
    %v7382 = vcombine.low %v3352, %v3362
    %v7383 = vcombine.low %v3369, %v3379
    %v7384 = vcombine.low %v3386, %v3396
    %v7385 = vcombine.low %v3403, %v3413
    %v7386 = vcombine.low %v3420, %v3430
    %v7387 = vcombine.low %v3437, %v3447
    %v7388 = vcombine.low %v3454, %v3464
    %v7389 = vcombine.low %v5315, %v5318
    %v7391 = vunpack.c.l.s4 1983009808
    %v7392 = vunpack.c.0.s8 %v7391
    %v7393 = vlaneseq
    %v7394 = vshrl.u32 %v7393, 7
    %v7395 = vsub.s32 %v7392, %v7394
    %v7396 = vrot.slane %v7389, %v7395
    %v7397 = vcombine.low %v3471, %v7396
    %v7398 = vcombine.low %v5321, %v5324
    %v7399 = vcombine.low %v5327, %v5330
    %v7401 = vunpack.c.l.s4 1983009808
    %v7402 = vunpack.c.0.s8 %v7401
    %v7403 = vlaneseq
    %v7404 = vshrl.u32 %v7403, 7
    %v7405 = vsub.s32 %v7402, %v7404
    %v7406 = vrot.slane %v7398, %v7405
    %v7408 = vunpack.c.l.s4 1983009808
    %v7409 = vunpack.c.0.s8 %v7408
    %v7410 = vlaneseq
    %v7411 = vshrl.u32 %v7410, 7
    %v7412 = vsub.s32 %v7409, %v7411
    %v7413 = vrot.slane %v7399, %v7412
    %v7414 = vcombine.low %v7406, %v7413
    %v7415 = vcombine.low %v5333, %v7269
    %v7416 = vcombine.low %v7272, %v7275
    %v7418 = vunpack.c.l.s4 1983009808
    %v7419 = vunpack.c.0.s8 %v7418
    %v7420 = vlaneseq
    %v7421 = vshrl.u32 %v7420, 7
    %v7422 = vsub.s32 %v7419, %v7421
    %v7423 = vrot.slane %v7415, %v7422
    %v7425 = vunpack.c.l.s4 1983009808
    %v7426 = vunpack.c.0.s8 %v7425
    %v7427 = vlaneseq
    %v7428 = vshrl.u32 %v7427, 7
    %v7429 = vsub.s32 %v7426, %v7428
    %v7430 = vrot.slane %v7416, %v7429
    %v7431 = vcombine.low %v7423, %v7430
    %v7432 = vcombine.low %v7278, %v7281
    %v7433 = vcombine.low %v7284, %v7287
    %v7435 = vunpack.c.l.s4 1983009808
    %v7436 = vunpack.c.0.s8 %v7435
    %v7437 = vlaneseq
    %v7438 = vshrl.u32 %v7437, 7
    %v7439 = vsub.s32 %v7436, %v7438
    %v7440 = vrot.slane %v7432, %v7439
    %v7442 = vunpack.c.l.s4 1983009808
    %v7443 = vunpack.c.0.s8 %v7442
    %v7444 = vlaneseq
    %v7445 = vshrl.u32 %v7444, 7
    %v7446 = vsub.s32 %v7443, %v7445
    %v7447 = vrot.slane %v7433, %v7446
    %v7448 = vcombine.low %v7440, %v7447
    %7449 = vrot.lane.b32.xlu0 %v7288, 7
    %v7450 = vpop.permute.xlu0 %7449
    %7451 = vrot.lane.b32.xlu0 %v7289, 7
    %v7452 = vpop.permute.xlu0 %7451
    %7453 = vrot.lane.b32.xlu0 %v7290, 7
    %v7454 = vpop.permute.xlu0 %7453
    %7455 = vrot.lane.b32.xlu0 %v7291, 7
    %v7456 = vpop.permute.xlu0 %7455
    %7457 = vrot.lane.b32.xlu0 %v7292, 7
    %v7458 = vpop.permute.xlu0 %7457
    %7459 = vrot.lane.b32.xlu0 %v7293, 7
    %v7460 = vpop.permute.xlu0 %7459
    %7461 = vrot.lane.b32.xlu0 %v7294, 7
    %v7462 = vpop.permute.xlu0 %7461
    %7463 = vrot.lane.b32.xlu0 %v7295, 7
    %v7464 = vpop.permute.xlu0 %7463
    %7465 = vrot.lane.b32.xlu0 %v7296, 7
    %v7466 = vpop.permute.xlu0 %7465
    %7467 = vrot.lane.b32.xlu0 %v7297, 7
    %v7468 = vpop.permute.xlu0 %7467
    %7469 = vrot.lane.b32.xlu0 %v7298, 7
    %v7470 = vpop.permute.xlu0 %7469
    %7471 = vrot.lane.b32.xlu0 %v7299, 7
    %v7472 = vpop.permute.xlu0 %7471
    %7473 = vrot.lane.b32.xlu0 %v7300, 7
    %v7474 = vpop.permute.xlu0 %7473
    %7475 = vrot.lane.b32.xlu0 %v7301, 7
    %v7476 = vpop.permute.xlu0 %7475
    %7477 = vrot.lane.b32.xlu0 %v7302, 7
    %v7478 = vpop.permute.xlu0 %7477
    %7479 = vrot.lane.b32.xlu0 %v7303, 7
    %v7480 = vpop.permute.xlu0 %7479
    %7481 = vrot.lane.b32.xlu0 %v7304, 7
    %v7482 = vpop.permute.xlu0 %7481
    %7483 = vrot.lane.b32.xlu0 %v7305, 7
    %v7484 = vpop.permute.xlu0 %7483
    %7485 = vrot.lane.b32.xlu0 %v7306, 7
    %v7486 = vpop.permute.xlu0 %7485
    %7487 = vrot.lane.b32.xlu0 %v7307, 7
    %v7488 = vpop.permute.xlu0 %7487
    %7489 = vrot.lane.b32.xlu0 %v7308, 7
    %v7490 = vpop.permute.xlu0 %7489
    %7491 = vrot.lane.b32.xlu0 %v7325, 7
    %v7492 = vpop.permute.xlu0 %7491
    %7493 = vrot.lane.b32.xlu0 %v7342, 7
    %v7494 = vpop.permute.xlu0 %7493
    %7495 = vrot.lane.b32.xlu0 %v7359, 7
    %v7496 = vpop.permute.xlu0 %7495
    %7497 = vrot.lane.b32.xlu0 %v7368, 7
    %v7498 = vpop.permute.xlu0 %7497
    %7499 = vrot.lane.b32.xlu0 %v7369, 7
    %v7500 = vpop.permute.xlu0 %7499
    %7501 = vrot.lane.b32.xlu0 %v7370, 7
    %v7502 = vpop.permute.xlu0 %7501
    %7503 = vrot.lane.b32.xlu0 %v7371, 7
    %v7504 = vpop.permute.xlu0 %7503
    %7505 = vrot.lane.b32.xlu0 %v7372, 7
    %v7506 = vpop.permute.xlu0 %7505
    %7507 = vrot.lane.b32.xlu0 %v7373, 7
    %v7508 = vpop.permute.xlu0 %7507
    %7509 = vrot.lane.b32.xlu0 %v7374, 7
    %v7510 = vpop.permute.xlu0 %7509
    %7511 = vrot.lane.b32.xlu0 %v7375, 7
    %v7512 = vpop.permute.xlu0 %7511
    %7513 = vrot.lane.b32.xlu0 %v7376, 7
    %v7514 = vpop.permute.xlu0 %7513
    %7515 = vrot.lane.b32.xlu0 %v7377, 7
    %v7516 = vpop.permute.xlu0 %7515
    %7517 = vrot.lane.b32.xlu0 %v7378, 7
    %v7518 = vpop.permute.xlu0 %7517
    %7519 = vrot.lane.b32.xlu0 %v7379, 7
    %v7520 = vpop.permute.xlu0 %7519
    %7521 = vrot.lane.b32.xlu0 %v7380, 7
    %v7522 = vpop.permute.xlu0 %7521
    %7523 = vrot.lane.b32.xlu0 %v7381, 7
    %v7524 = vpop.permute.xlu0 %7523
    %7525 = vrot.lane.b32.xlu0 %v7382, 7
    %v7526 = vpop.permute.xlu0 %7525
    %7527 = vrot.lane.b32.xlu0 %v7383, 7
    %v7528 = vpop.permute.xlu0 %7527
    %7529 = vrot.lane.b32.xlu0 %v7384, 7
    %v7530 = vpop.permute.xlu0 %7529
    %7531 = vrot.lane.b32.xlu0 %v7385, 7
    %v7532 = vpop.permute.xlu0 %7531
    %7533 = vrot.lane.b32.xlu0 %v7386, 7
    %v7534 = vpop.permute.xlu0 %7533
    %7535 = vrot.lane.b32.xlu0 %v7387, 7
    %v7536 = vpop.permute.xlu0 %7535
    %7537 = vrot.lane.b32.xlu0 %v7388, 7
    %v7538 = vpop.permute.xlu0 %7537
    %7539 = vrot.lane.b32.xlu0 %v7397, 7
    %v7540 = vpop.permute.xlu0 %7539
    %7541 = vrot.lane.b32.xlu0 %v7414, 7
    %v7542 = vpop.permute.xlu0 %7541
    %7543 = vrot.lane.b32.xlu0 %v7431, 7
    %v7544 = vpop.permute.xlu0 %7543
    %7545 = vrot.lane.b32.xlu0 %v7448, 7
    %v7546 = vpop.permute.xlu0 %7545
    %vm7596 = vcmask 64568
    %7597 = vst.msk [vmem:[#allocation2] sm:$0xff] %vm7596, %v7450
    %7598 = vst.msk [vmem:[#allocation2 + $0x8] sm:$0xff] %vm7596, %v7452
    %7599 = vst.msk [vmem:[#allocation2 + $0x10] sm:$0xff] %vm7596, %v7454
    %7600 = vst.msk [vmem:[#allocation2 + $0x18] sm:$0xff] %vm7596, %v7456
    %7601 = vst.msk [vmem:[#allocation2 + $0x20] sm:$0xff] %vm7596, %v7458
    %7602 = vst.msk [vmem:[#allocation2 + $0x28] sm:$0xff] %vm7596, %v7460
    %7603 = vst.msk [vmem:[#allocation2 + $0x30] sm:$0xff] %vm7596, %v7462
    %7604 = vst.msk [vmem:[#allocation2 + $0x38] sm:$0xff] %vm7596, %v7464
    %7605 = vst.msk [vmem:[#allocation2 + $0x40] sm:$0xff] %vm7596, %v7466
    %7606 = vst.msk [vmem:[#allocation2 + $0x48] sm:$0xff] %vm7596, %v7468
    %7607 = vst.msk [vmem:[#allocation2 + $0x50] sm:$0xff] %vm7596, %v7470
    %7608 = vst.msk [vmem:[#allocation2 + $0x58] sm:$0xff] %vm7596, %v7472
    %7609 = vst.msk [vmem:[#allocation2 + $0x60] sm:$0xff] %vm7596, %v7474
    %7610 = vst.msk [vmem:[#allocation2 + $0x68] sm:$0xff] %vm7596, %v7476
    %7611 = vst.msk [vmem:[#allocation2 + $0x70] sm:$0xff] %vm7596, %v7478
    %7612 = vst.msk [vmem:[#allocation2 + $0x78] sm:$0xff] %vm7596, %v7480
    %7613 = vst.msk [vmem:[#allocation2 + $0x80] sm:$0xff] %vm7596, %v7482
    %7614 = vst.msk [vmem:[#allocation2 + $0x88] sm:$0xff] %vm7596, %v7484
    %7615 = vst.msk [vmem:[#allocation2 + $0x90] sm:$0xff] %vm7596, %v7486
    %7616 = vst.msk [vmem:[#allocation2 + $0x98] sm:$0xff] %vm7596, %v7488
    %7617 = vst.msk [vmem:[#allocation2 + $0xa0] sm:$0xff] %vm7596, %v7490
    %7618 = vst.msk [vmem:[#allocation2 + $0xa8] sm:$0xff] %vm7596, %v7492
    %7619 = vst.msk [vmem:[#allocation2 + $0xb0] sm:$0xff] %vm7596, %v7494
    %7620 = vst.msk [vmem:[#allocation2 + $0xb8] sm:$0xff] %vm7596, %v7496
    %7621 = vst.msk [vmem:[#allocation2 + $0xc0] sm:$0xff] %vm7596, %v7498
    %7622 = vst.msk [vmem:[#allocation2 + $0xc8] sm:$0xff] %vm7596, %v7500
    %7623 = vst.msk [vmem:[#allocation2 + $0xd0] sm:$0xff] %vm7596, %v7502
    %7624 = vst.msk [vmem:[#allocation2 + $0xd8] sm:$0xff] %vm7596, %v7504
    %7625 = vst.msk [vmem:[#allocation2 + $0xe0] sm:$0xff] %vm7596, %v7506
    %7626 = vst.msk [vmem:[#allocation2 + $0xe8] sm:$0xff] %vm7596, %v7508
    %7627 = vst.msk [vmem:[#allocation2 + $0xf0] sm:$0xff] %vm7596, %v7510
    %7628 = vst.msk [vmem:[#allocation2 + $0xf8] sm:$0xff] %vm7596, %v7512
    %7629 = vst.msk [vmem:[#allocation2 + $0x100] sm:$0xff] %vm7596, %v7514
    %7630 = vst.msk [vmem:[#allocation2 + $0x108] sm:$0xff] %vm7596, %v7516
    %7631 = vst.msk [vmem:[#allocation2 + $0x110] sm:$0xff] %vm7596, %v7518
    %7632 = vst.msk [vmem:[#allocation2 + $0x118] sm:$0xff] %vm7596, %v7520
    %7633 = vst.msk [vmem:[#allocation2 + $0x120] sm:$0xff] %vm7596, %v7522
    %7634 = vst.msk [vmem:[#allocation2 + $0x128] sm:$0xff] %vm7596, %v7524
    %7635 = vst.msk [vmem:[#allocation2 + $0x130] sm:$0xff] %vm7596, %v7526
    %7636 = vst.msk [vmem:[#allocation2 + $0x138] sm:$0xff] %vm7596, %v7528
    %7637 = vst.msk [vmem:[#allocation2 + $0x140] sm:$0xff] %vm7596, %v7530
    %7638 = vst.msk [vmem:[#allocation2 + $0x148] sm:$0xff] %vm7596, %v7532
    %7639 = vst.msk [vmem:[#allocation2 + $0x150] sm:$0xff] %vm7596, %v7534
    %7640 = vst.msk [vmem:[#allocation2 + $0x158] sm:$0xff] %vm7596, %v7536
    %7641 = vst.msk [vmem:[#allocation2 + $0x160] sm:$0xff] %vm7596, %v7538
    %7642 = vst.msk [vmem:[#allocation2 + $0x168] sm:$0xff] %vm7596, %v7540
    %7643 = vst.msk [vmem:[#allocation2 + $0x170] sm:$0xff] %vm7596, %v7542
    %7644 = vst.msk [vmem:[#allocation2 + $0x178] sm:$0xff] %vm7596, %v7544
    %7645 = vst.msk [vmem:[#allocation2 + $0x180] sm:$0xff] %vm7596, %v7546
    %v7646 = vcombine.low %v3753, %v3763
    %v7647 = vcombine.low %v3787, %v3797
    %v7648 = vcombine.low %v3821, %v3831
    %v7649 = vcombine.low %v3838, %v3848
    %v7650 = vcombine.low %v3872, %v3882
    %v7651 = vcombine.low %v3906, %v3916
    %v7652 = vcombine.low %v3940, %v3950
    %v7653 = vcombine.low %v3957, %v3967
    %v7654 = vcombine.low %v3991, %v4001
    %v7655 = vcombine.low %v4025, %v4035
    %v7656 = vcombine.low %v4059, %v4069
    %v7657 = vcombine.low %v4076, %v4086
    %v7658 = vcombine.low %v5288, %v6865
    %v7660 = vunpack.c.l.s4 1983009808
    %v7661 = vunpack.c.0.s8 %v7660
    %v7662 = vlaneseq
    %v7663 = vshrl.u32 %v7662, 7
    %v7664 = vsub.s32 %v7661, %v7663
    %v7665 = vrot.slane %v7658, %v7664
    %v7666 = vcombine.low %v4930, %v7665
    %v7667 = vcombine.low %v6864, %v6866
    %v7668 = vcombine.low %v6874, %v6882
    %v7670 = vunpack.c.l.s4 1983009808
    %v7671 = vunpack.c.0.s8 %v7670
    %v7672 = vlaneseq
    %v7673 = vshrl.u32 %v7672, 7
    %v7674 = vsub.s32 %v7671, %v7673
    %v7675 = vrot.slane %v7667, %v7674
    %v7677 = vunpack.c.l.s4 1983009808
    %v7678 = vunpack.c.0.s8 %v7677
    %v7679 = vlaneseq
    %v7680 = vshrl.u32 %v7679, 7
    %v7681 = vsub.s32 %v7678, %v7680
    %v7682 = vrot.slane %v7668, %v7681
    %v7683 = vcombine.low %v7675, %v7682
    %v7684 = vcombine.low %v6881, %v7242
    %v7686 = vunpack.c.l.s4 1983009808
    %v7687 = vunpack.c.0.s8 %v7686
    %v7688 = vlaneseq
    %v7689 = vshrl.u32 %v7688, 7
    %v7690 = vsub.s32 %v7687, %v7689
    %v7691 = vrot.slane %v7684, %v7690
    %v7692 = vcombine.low %v7691, %v4154
    %v7693 = vcombine.low %v4178, %v4188
    %v7694 = vcombine.low %v4195, %v4205
    %v7695 = vcombine.low %v4229, %v4239
    %v7696 = vcombine.low %v4263, %v4273
    %v7697 = vcombine.low %v4297, %v4307
    %v7698 = vcombine.low %v4314, %v4324
    %v7699 = vcombine.low %v4348, %v4358
    %v7700 = vcombine.low %v4382, %v4392
    %v7701 = vcombine.low %v4416, %v4426
    %v7702 = vcombine.low %v4433, %v4443
    %v7703 = vcombine.low %v4467, %v4477
    %v7704 = vcombine.low %v4501, %v5072
    %v7705 = vcombine.low %v5289, %v6898
    %v7706 = vcombine.low %v6897, %v6899
    %v7708 = vunpack.c.l.s4 1983009808
    %v7709 = vunpack.c.0.s8 %v7708
    %v7710 = vlaneseq
    %v7711 = vshrl.u32 %v7710, 7
    %v7712 = vsub.s32 %v7709, %v7711
    %v7713 = vrot.slane %v7705, %v7712
    %v7715 = vunpack.c.l.s4 1983009808
    %v7716 = vunpack.c.0.s8 %v7715
    %v7717 = vlaneseq
    %v7718 = vshrl.u32 %v7717, 7
    %v7719 = vsub.s32 %v7716, %v7718
    %v7720 = vrot.slane %v7706, %v7719
    %v7721 = vcombine.low %v7713, %v7720
    %v7722 = vcombine.low %v6907, %v6915
    %v7723 = vcombine.low %v6914, %v7243
    %v7725 = vunpack.c.l.s4 1983009808
    %v7726 = vunpack.c.0.s8 %v7725
    %v7727 = vlaneseq
    %v7728 = vshrl.u32 %v7727, 7
    %v7729 = vsub.s32 %v7726, %v7728
    %v7730 = vrot.slane %v7722, %v7729
    %v7732 = vunpack.c.l.s4 1983009808
    %v7733 = vunpack.c.0.s8 %v7732
    %v7734 = vlaneseq
    %v7735 = vshrl.u32 %v7734, 7
    %v7736 = vsub.s32 %v7733, %v7735
    %v7737 = vrot.slane %v7723, %v7736
    %v7738 = vcombine.low %v7730, %v7737
    %7739 = vrot.lane.b32.xlu0 %v4788, 8
    %v7740 = vpop.permute.xlu0 %7739
    %7741 = vrot.lane.b32.xlu0 %v7646, 8
    %v7742 = vpop.permute.xlu0 %7741
    %7743 = vrot.lane.b32.xlu0 %v4798, 8
    %v7744 = vpop.permute.xlu0 %7743
    %7745 = vrot.lane.b32.xlu0 %v7647, 8
    %v7746 = vpop.permute.xlu0 %7745
    %7747 = vrot.lane.b32.xlu0 %v4808, 8
    %v7748 = vpop.permute.xlu0 %7747
    %7749 = vrot.lane.b32.xlu0 %v7648, 8
    %v7750 = vpop.permute.xlu0 %7749
    %7751 = vrot.lane.b32.xlu0 %v7649, 8
    %v7752 = vpop.permute.xlu0 %7751
    %7753 = vrot.lane.b32.xlu0 %v4827, 8
    %v7754 = vpop.permute.xlu0 %7753
    %7755 = vrot.lane.b32.xlu0 %v7650, 8
    %v7756 = vpop.permute.xlu0 %7755
    %7757 = vrot.lane.b32.xlu0 %v4837, 8
    %v7758 = vpop.permute.xlu0 %7757
    %7759 = vrot.lane.b32.xlu0 %v7651, 8
    %v7760 = vpop.permute.xlu0 %7759
    %7761 = vrot.lane.b32.xlu0 %v4847, 8
    %v7762 = vpop.permute.xlu0 %7761
    %7763 = vrot.lane.b32.xlu0 %v7652, 8
    %v7764 = vpop.permute.xlu0 %7763
    %7765 = vrot.lane.b32.xlu0 %v7653, 8
    %v7766 = vpop.permute.xlu0 %7765
    %7767 = vrot.lane.b32.xlu0 %v4866, 8
    %v7768 = vpop.permute.xlu0 %7767
    %7769 = vrot.lane.b32.xlu0 %v7654, 8
    %v7770 = vpop.permute.xlu0 %7769
    %7771 = vrot.lane.b32.xlu0 %v4876, 8
    %v7772 = vpop.permute.xlu0 %7771
    %7773 = vrot.lane.b32.xlu0 %v7655, 8
    %v7774 = vpop.permute.xlu0 %7773
    %7775 = vrot.lane.b32.xlu0 %v4886, 8
    %v7776 = vpop.permute.xlu0 %7775
    %7777 = vrot.lane.b32.xlu0 %v7656, 8
    %v7778 = vpop.permute.xlu0 %7777
    %7779 = vrot.lane.b32.xlu0 %v7657, 8
    %v7780 = vpop.permute.xlu0 %7779
    %7781 = vrot.lane.b32.xlu0 %v4921, 8
    %v7782 = vpop.permute.xlu0 %7781
    %7783 = vrot.lane.b32.xlu0 %v7666, 8
    %v7784 = vpop.permute.xlu0 %7783
    %7785 = vrot.lane.b32.xlu0 %v7683, 8
    %v7786 = vpop.permute.xlu0 %7785
    %7787 = vrot.lane.b32.xlu0 %v7692, 8
    %v7788 = vpop.permute.xlu0 %7787
    %7789 = vrot.lane.b32.xlu0 %v4949, 8
    %v7790 = vpop.permute.xlu0 %7789
    %7791 = vrot.lane.b32.xlu0 %v7693, 8
    %v7792 = vpop.permute.xlu0 %7791
    %7793 = vrot.lane.b32.xlu0 %v7694, 8
    %v7794 = vpop.permute.xlu0 %7793
    %7795 = vrot.lane.b32.xlu0 %v4968, 8
    %v7796 = vpop.permute.xlu0 %7795
    %7797 = vrot.lane.b32.xlu0 %v7695, 8
    %v7798 = vpop.permute.xlu0 %7797
    %7799 = vrot.lane.b32.xlu0 %v4978, 8
    %v7800 = vpop.permute.xlu0 %7799
    %7801 = vrot.lane.b32.xlu0 %v7696, 8
    %v7802 = vpop.permute.xlu0 %7801
    %7803 = vrot.lane.b32.xlu0 %v4988, 8
    %v7804 = vpop.permute.xlu0 %7803
    %7805 = vrot.lane.b32.xlu0 %v7697, 8
    %v7806 = vpop.permute.xlu0 %7805
    %7807 = vrot.lane.b32.xlu0 %v7698, 8
    %v7808 = vpop.permute.xlu0 %7807
    %7809 = vrot.lane.b32.xlu0 %v5007, 8
    %v7810 = vpop.permute.xlu0 %7809
    %7811 = vrot.lane.b32.xlu0 %v7699, 8
    %v7812 = vpop.permute.xlu0 %7811
    %7813 = vrot.lane.b32.xlu0 %v5017, 8
    %v7814 = vpop.permute.xlu0 %7813
    %7815 = vrot.lane.b32.xlu0 %v7700, 8
    %v7816 = vpop.permute.xlu0 %7815
    %7817 = vrot.lane.b32.xlu0 %v5027, 8
    %v7818 = vpop.permute.xlu0 %7817
    %7819 = vrot.lane.b32.xlu0 %v7701, 8
    %v7820 = vpop.permute.xlu0 %7819
    %7821 = vrot.lane.b32.xlu0 %v7702, 8
    %v7822 = vpop.permute.xlu0 %7821
    %7823 = vrot.lane.b32.xlu0 %v5046, 8
    %v7824 = vpop.permute.xlu0 %7823
    %7825 = vrot.lane.b32.xlu0 %v7703, 8
    %v7826 = vpop.permute.xlu0 %7825
    %7827 = vrot.lane.b32.xlu0 %v5056, 8
    %v7828 = vpop.permute.xlu0 %7827
    %7829 = vrot.lane.b32.xlu0 %v7704, 8
    %v7830 = vpop.permute.xlu0 %7829
    %7831 = vrot.lane.b32.xlu0 %v5090, 8
    %v7832 = vpop.permute.xlu0 %7831
    %7833 = vrot.lane.b32.xlu0 %v7721, 8
    %v7834 = vpop.permute.xlu0 %7833
    %7835 = vrot.lane.b32.xlu0 %v7738, 8
    %v7836 = vpop.permute.xlu0 %7835
    %vm7886 = vcmask 72768
    %7887 = vst.msk [vmem:[#allocation2] sm:$0xff] %vm7886, %v7740
    %7888 = vst.msk [vmem:[#allocation2 + $0x8] sm:$0xff] %vm7886, %v7742
    %7889 = vst.msk [vmem:[#allocation2 + $0x10] sm:$0xff] %vm7886, %v7744
    %7890 = vst.msk [vmem:[#allocation2 + $0x18] sm:$0xff] %vm7886, %v7746
    %7891 = vst.msk [vmem:[#allocation2 + $0x20] sm:$0xff] %vm7886, %v7748
    %7892 = vst.msk [vmem:[#allocation2 + $0x28] sm:$0xff] %vm7886, %v7750
    %7893 = vst.msk [vmem:[#allocation2 + $0x30] sm:$0xff] %vm7886, %v7752
    %7894 = vst.msk [vmem:[#allocation2 + $0x38] sm:$0xff] %vm7886, %v7754
    %7895 = vst.msk [vmem:[#allocation2 + $0x40] sm:$0xff] %vm7886, %v7756
    %7896 = vst.msk [vmem:[#allocation2 + $0x48] sm:$0xff] %vm7886, %v7758
    %7897 = vst.msk [vmem:[#allocation2 + $0x50] sm:$0xff] %vm7886, %v7760
    %7898 = vst.msk [vmem:[#allocation2 + $0x58] sm:$0xff] %vm7886, %v7762
    %7899 = vst.msk [vmem:[#allocation2 + $0x60] sm:$0xff] %vm7886, %v7764
    %7900 = vst.msk [vmem:[#allocation2 + $0x68] sm:$0xff] %vm7886, %v7766
    %7901 = vst.msk [vmem:[#allocation2 + $0x70] sm:$0xff] %vm7886, %v7768
    %7902 = vst.msk [vmem:[#allocation2 + $0x78] sm:$0xff] %vm7886, %v7770
    %7903 = vst.msk [vmem:[#allocation2 + $0x80] sm:$0xff] %vm7886, %v7772
    %7904 = vst.msk [vmem:[#allocation2 + $0x88] sm:$0xff] %vm7886, %v7774
    %7905 = vst.msk [vmem:[#allocation2 + $0x90] sm:$0xff] %vm7886, %v7776
    %7906 = vst.msk [vmem:[#allocation2 + $0x98] sm:$0xff] %vm7886, %v7778
    %7907 = vst.msk [vmem:[#allocation2 + $0xa0] sm:$0xff] %vm7886, %v7780
    %7908 = vst.msk [vmem:[#allocation2 + $0xa8] sm:$0xff] %vm7886, %v7782
    %7909 = vst.msk [vmem:[#allocation2 + $0xb0] sm:$0xff] %vm7886, %v7784
    %7910 = vst.msk [vmem:[#allocation2 + $0xb8] sm:$0xff] %vm7886, %v7786
    %7911 = vst.msk [vmem:[#allocation2 + $0xc0] sm:$0xff] %vm7886, %v7788
    %7912 = vst.msk [vmem:[#allocation2 + $0xc8] sm:$0xff] %vm7886, %v7790
    %7913 = vst.msk [vmem:[#allocation2 + $0xd0] sm:$0xff] %vm7886, %v7792
    %7914 = vst.msk [vmem:[#allocation2 + $0xd8] sm:$0xff] %vm7886, %v7794
    %7915 = vst.msk [vmem:[#allocation2 + $0xe0] sm:$0xff] %vm7886, %v7796
    %7916 = vst.msk [vmem:[#allocation2 + $0xe8] sm:$0xff] %vm7886, %v7798
    %7917 = vst.msk [vmem:[#allocation2 + $0xf0] sm:$0xff] %vm7886, %v7800
    %7918 = vst.msk [vmem:[#allocation2 + $0xf8] sm:$0xff] %vm7886, %v7802
    %7919 = vst.msk [vmem:[#allocation2 + $0x100] sm:$0xff] %vm7886, %v7804
    %7920 = vst.msk [vmem:[#allocation2 + $0x108] sm:$0xff] %vm7886, %v7806
    %7921 = vst.msk [vmem:[#allocation2 + $0x110] sm:$0xff] %vm7886, %v7808
    %7922 = vst.msk [vmem:[#allocation2 + $0x118] sm:$0xff] %vm7886, %v7810
    %7923 = vst.msk [vmem:[#allocation2 + $0x120] sm:$0xff] %vm7886, %v7812
    %7924 = vst.msk [vmem:[#allocation2 + $0x128] sm:$0xff] %vm7886, %v7814
    %7925 = vst.msk [vmem:[#allocation2 + $0x130] sm:$0xff] %vm7886, %v7816
    %7926 = vst.msk [vmem:[#allocation2 + $0x138] sm:$0xff] %vm7886, %v7818
    %7927 = vst.msk [vmem:[#allocation2 + $0x140] sm:$0xff] %vm7886, %v7820
    %7928 = vst.msk [vmem:[#allocation2 + $0x148] sm:$0xff] %vm7886, %v7822
    %7929 = vst.msk [vmem:[#allocation2 + $0x150] sm:$0xff] %vm7886, %v7824
    %7930 = vst.msk [vmem:[#allocation2 + $0x158] sm:$0xff] %vm7886, %v7826
    %7931 = vst.msk [vmem:[#allocation2 + $0x160] sm:$0xff] %vm7886, %v7828
    %7932 = vst.msk [vmem:[#allocation2 + $0x168] sm:$0xff] %vm7886, %v7830
    %7933 = vst.msk [vmem:[#allocation2 + $0x170] sm:$0xff] %vm7886, %v7832
    %7934 = vst.msk [vmem:[#allocation2 + $0x178] sm:$0xff] %vm7886, %v7834
    %7935 = vst.msk [vmem:[#allocation2 + $0x180] sm:$0xff] %vm7886, %v7836
    %vm7936 = vcmask 80968
    %7937 = vst.msk [vmem:[#allocation2] sm:$0xff] %vm7936, 1.0
    %7938 = vst.msk [vmem:[#allocation2 + $0x8] sm:$0xff] %vm7936, 1.0
    %7939 = vst.msk [vmem:[#allocation2 + $0x10] sm:$0xff] %vm7936, 1.0
    %7940 = vst.msk [vmem:[#allocation2 + $0x18] sm:$0xff] %vm7936, 1.0
    %7941 = vst.msk [vmem:[#allocation2 + $0x20] sm:$0xff] %vm7936, 1.0
    %7942 = vst.msk [vmem:[#allocation2 + $0x28] sm:$0xff] %vm7936, 1.0
    %7943 = vst.msk [vmem:[#allocation2 + $0x30] sm:$0xff] %vm7936, 1.0
    %7944 = vst.msk [vmem:[#allocation2 + $0x38] sm:$0xff] %vm7936, 1.0
    %7945 = vst.msk [vmem:[#allocation2 + $0x40] sm:$0xff] %vm7936, 1.0
    %7946 = vst.msk [vmem:[#allocation2 + $0x48] sm:$0xff] %vm7936, 1.0
    %7947 = vst.msk [vmem:[#allocation2 + $0x50] sm:$0xff] %vm7936, 1.0
    %7948 = vst.msk [vmem:[#allocation2 + $0x58] sm:$0xff] %vm7936, 1.0
    %7949 = vst.msk [vmem:[#allocation2 + $0x60] sm:$0xff] %vm7936, 1.0
    %7950 = vst.msk [vmem:[#allocation2 + $0x68] sm:$0xff] %vm7936, 1.0
    %7951 = vst.msk [vmem:[#allocation2 + $0x70] sm:$0xff] %vm7936, 1.0
    %7952 = vst.msk [vmem:[#allocation2 + $0x78] sm:$0xff] %vm7936, 1.0
    %7953 = vst.msk [vmem:[#allocation2 + $0x80] sm:$0xff] %vm7936, 1.0
    %7954 = vst.msk [vmem:[#allocation2 + $0x88] sm:$0xff] %vm7936, 1.0
    %7955 = vst.msk [vmem:[#allocation2 + $0x90] sm:$0xff] %vm7936, 1.0
    %7956 = vst.msk [vmem:[#allocation2 + $0x98] sm:$0xff] %vm7936, 1.0
    %7957 = vst.msk [vmem:[#allocation2 + $0xa0] sm:$0xff] %vm7936, 1.0
    %7958 = vst.msk [vmem:[#allocation2 + $0xa8] sm:$0xff] %vm7936, 1.0
    %7959 = vst.msk [vmem:[#allocation2 + $0xb0] sm:$0xff] %vm7936, 1.0
    %7960 = vst.msk [vmem:[#allocation2 + $0xb8] sm:$0xff] %vm7936, 1.0
    %7961 = vst.msk [vmem:[#allocation2 + $0xc0] sm:$0xff] %vm7936, 1.0
    %7962 = vst.msk [vmem:[#allocation2 + $0xc8] sm:$0xff] %vm7936, 1.0
    %7963 = vst.msk [vmem:[#allocation2 + $0xd0] sm:$0xff] %vm7936, 1.0
    %7964 = vst.msk [vmem:[#allocation2 + $0xd8] sm:$0xff] %vm7936, 1.0
    %7965 = vst.msk [vmem:[#allocation2 + $0xe0] sm:$0xff] %vm7936, 1.0
    %7966 = vst.msk [vmem:[#allocation2 + $0xe8] sm:$0xff] %vm7936, 1.0
    %7967 = vst.msk [vmem:[#allocation2 + $0xf0] sm:$0xff] %vm7936, 1.0
    %7968 = vst.msk [vmem:[#allocation2 + $0xf8] sm:$0xff] %vm7936, 1.0
    %7969 = vst.msk [vmem:[#allocation2 + $0x100] sm:$0xff] %vm7936, 1.0
    %7970 = vst.msk [vmem:[#allocation2 + $0x108] sm:$0xff] %vm7936, 1.0
    %7971 = vst.msk [vmem:[#allocation2 + $0x110] sm:$0xff] %vm7936, 1.0
    %7972 = vst.msk [vmem:[#allocation2 + $0x118] sm:$0xff] %vm7936, 1.0
    %7973 = vst.msk [vmem:[#allocation2 + $0x120] sm:$0xff] %vm7936, 1.0
    %7974 = vst.msk [vmem:[#allocation2 + $0x128] sm:$0xff] %vm7936, 1.0
    %7975 = vst.msk [vmem:[#allocation2 + $0x130] sm:$0xff] %vm7936, 1.0
    %7976 = vst.msk [vmem:[#allocation2 + $0x138] sm:$0xff] %vm7936, 1.0
    %7977 = vst.msk [vmem:[#allocation2 + $0x140] sm:$0xff] %vm7936, 1.0
    %7978 = vst.msk [vmem:[#allocation2 + $0x148] sm:$0xff] %vm7936, 1.0
    %7979 = vst.msk [vmem:[#allocation2 + $0x150] sm:$0xff] %vm7936, 1.0
    %7980 = vst.msk [vmem:[#allocation2 + $0x158] sm:$0xff] %vm7936, 1.0
    %7981 = vst.msk [vmem:[#allocation2 + $0x160] sm:$0xff] %vm7936, 1.0
    %7982 = vst.msk [vmem:[#allocation2 + $0x168] sm:$0xff] %vm7936, 1.0
    %7983 = vst.msk [vmem:[#allocation2 + $0x170] sm:$0xff] %vm7936, 1.0
    %7984 = vst.msk [vmem:[#allocation2 + $0x178] sm:$0xff] %vm7936, 1.0
    %7985 = vst.msk [vmem:[#allocation2 + $0x180] sm:$0xff] %vm7936, 1.0
    %v7986 = vld [vmem:[#allocation2] sm:$0xff]
    %v7987 = vld [vmem:[#allocation2 + $0x8] sm:$0xff]
    %v7988 = vld [vmem:[#allocation2 + $0x10] sm:$0xff]
    %v7989 = vld [vmem:[#allocation2 + $0x18] sm:$0xff]
    %v7990 = vld [vmem:[#allocation2 + $0x20] sm:$0xff]
    %v7991 = vld [vmem:[#allocation2 + $0x28] sm:$0xff]
    %v7992 = vld [vmem:[#allocation2 + $0x30] sm:$0xff]
    %v7993 = vld [vmem:[#allocation2 + $0x38] sm:$0xff]
    %v7994 = vld [vmem:[#allocation2 + $0x40] sm:$0xff]
    %v7995 = vld [vmem:[#allocation2 + $0x48] sm:$0xff]
    %v7996 = vld [vmem:[#allocation2 + $0x50] sm:$0xff]
    %v7997 = vld [vmem:[#allocation2 + $0x58] sm:$0xff]
    %v7998 = vld [vmem:[#allocation2 + $0x60] sm:$0xff]
    %v7999 = vld [vmem:[#allocation2 + $0x68] sm:$0xff]
    %v8000 = vld [vmem:[#allocation2 + $0x70] sm:$0xff]
    %v8001 = vld [vmem:[#allocation2 + $0x78] sm:$0xff]
    %v8002 = vld [vmem:[#allocation2 + $0x80] sm:$0xff]
    %v8003 = vld [vmem:[#allocation2 + $0x88] sm:$0xff]
    %v8004 = vld [vmem:[#allocation2 + $0x90] sm:$0xff]
    %v8005 = vld [vmem:[#allocation2 + $0x98] sm:$0xff]
    %v8006 = vld [vmem:[#allocation2 + $0xa0] sm:$0xff]
    %v8007 = vld [vmem:[#allocation2 + $0xa8] sm:$0xff]
    %v8008 = vld [vmem:[#allocation2 + $0xb0] sm:$0xff]
    %v8009 = vld [vmem:[#allocation2 + $0xb8] sm:$0xff]
    %v8010 = vld [vmem:[#allocation2 + $0xc0] sm:$0xff]
    %v8011 = vld [vmem:[#allocation2 + $0xc8] sm:$0xff]
    %v8012 = vld [vmem:[#allocation2 + $0xd0] sm:$0xff]
    %v8013 = vld [vmem:[#allocation2 + $0xd8] sm:$0xff]
    %v8014 = vld [vmem:[#allocation2 + $0xe0] sm:$0xff]
    %v8015 = vld [vmem:[#allocation2 + $0xe8] sm:$0xff]
    %v8016 = vld [vmem:[#allocation2 + $0xf0] sm:$0xff]
    %v8017 = vld [vmem:[#allocation2 + $0xf8] sm:$0xff]
    %v8018 = vld [vmem:[#allocation2 + $0x100] sm:$0xff]
    %v8019 = vld [vmem:[#allocation2 + $0x108] sm:$0xff]
    %v8020 = vld [vmem:[#allocation2 + $0x110] sm:$0xff]
    %v8021 = vld [vmem:[#allocation2 + $0x118] sm:$0xff]
    %v8022 = vld [vmem:[#allocation2 + $0x120] sm:$0xff]
    %v8023 = vld [vmem:[#allocation2 + $0x128] sm:$0xff]
    %v8024 = vld [vmem:[#allocation2 + $0x130] sm:$0xff]
    %v8025 = vld [vmem:[#allocation2 + $0x138] sm:$0xff]
    %v8026 = vld [vmem:[#allocation2 + $0x140] sm:$0xff]
    %v8027 = vld [vmem:[#allocation2 + $0x148] sm:$0xff]
    %v8028 = vld [vmem:[#allocation2 + $0x150] sm:$0xff]
    %v8029 = vld [vmem:[#allocation2 + $0x158] sm:$0xff]
    %v8030 = vld [vmem:[#allocation2 + $0x160] sm:$0xff]
    %v8031 = vld [vmem:[#allocation2 + $0x168] sm:$0xff]
    %v8032 = vld [vmem:[#allocation2 + $0x170] sm:$0xff]
    %v8033 = vld [vmem:[#allocation2 + $0x178] sm:$0xff]
    %v8034 = vld [vmem:[#allocation2 + $0x180] sm:$0xff]
    %v8035 = vpack.c.bf16 %v7987, %v7986
    %v8036 = vpack.c.bf16 %v7989, %v7988
    %v8037 = vpack.c.bf16 %v7991, %v7990
    %v8038 = vpack.c.bf16 %v7993, %v7992
    %v8039 = vpack.c.bf16 %v7995, %v7994
    %v8040 = vpack.c.bf16 %v7997, %v7996
    %v8041 = vpack.c.bf16 %v7999, %v7998
    %v8042 = vpack.c.bf16 %v8001, %v8000
    %v8043 = vpack.c.bf16 %v8003, %v8002
    %v8044 = vpack.c.bf16 %v8005, %v8004
    %v8045 = vpack.c.bf16 %v8007, %v8006
    %v8046 = vpack.c.bf16 %v8009, %v8008
    %v8047 = vpack.c.bf16 %v8011, %v8010
    %v8048 = vpack.c.bf16 %v8013, %v8012
    %v8049 = vpack.c.bf16 %v8015, %v8014
    %v8050 = vpack.c.bf16 %v8017, %v8016
    %v8051 = vpack.c.bf16 %v8019, %v8018
    %v8052 = vpack.c.bf16 %v8021, %v8020
    %v8053 = vpack.c.bf16 %v8023, %v8022
    %v8054 = vpack.c.bf16 %v8025, %v8024
    %v8055 = vpack.c.bf16 %v8027, %v8026
    %v8056 = vpack.c.bf16 %v8029, %v8028
    %v8057 = vpack.c.bf16 %v8031, %v8030
    %v8058 = vpack.c.bf16 %v8033, %v8032
    %v8059 = vpack.c.bf16 %v8034, %v8034
    %v8060 = vld [vmem:[%s1] sm:$0xf]
    %v8061 = vld [vmem:[%s1 + $0x4] sm:$0x1]
    %v8064 = vunpack.c.l.b16 %v8060
    %v8065 = vunpack.c.l.b16 %v8061
    %v8066 = vpack.c.b16 %v8065, %v8064
    %vm8067 = vcmask 80896
    %v8069 = vsel %vm8067, %v8035, 0
    %v8072 = vsel %vm8067, %v8036, 0
    %v8075 = vsel %vm8067, %v8037, 0
    %v8078 = vsel %vm8067, %v8038, 0
    %v8081 = vsel %vm8067, %v8039, 0
    %v8084 = vsel %vm8067, %v8040, 0
    %v8087 = vsel %vm8067, %v8041, 0
    %v8090 = vsel %vm8067, %v8042, 0
    %v8093 = vsel %vm8067, %v8043, 0
    %v8096 = vsel %vm8067, %v8044, 0
    %v8099 = vsel %vm8067, %v8045, 0
    %v8102 = vsel %vm8067, %v8046, 0
    %v8105 = vsel %vm8067, %v8047, 0
    %v8108 = vsel %vm8067, %v8048, 0
    %v8111 = vsel %vm8067, %v8049, 0
    %v8114 = vsel %vm8067, %v8050, 0
    %v8117 = vsel %vm8067, %v8051, 0
    %v8120 = vsel %vm8067, %v8052, 0
    %v8123 = vsel %vm8067, %v8053, 0
    %v8126 = vsel %vm8067, %v8054, 0
    %v8129 = vsel %vm8067, %v8055, 0
    %v8132 = vsel %vm8067, %v8056, 0
    %v8135 = vsel %vm8067, %v8057, 0
    %v8138 = vsel %vm8067, %v8058, 0
    %v8141 = vsel %vm8067, %v8059, 0
    %vm8143 = vcmask 1044480
    %v8145 = vsel %vm8143, %v8066, 0
    %8147 = vmatprep.subr.bf16.mxu0 0
    %8148 = vmatpush1.bf16.msra.mxu0 %v8145
    %8149 = vmatprep.subr.bf16.mxu0 0
    %8150 = vmatpush1.bf16.msra.mxu0 0
    %8151 = vmatprep.subr.bf16.mxu0 0
    %8152 = vmatpush1.bf16.msra.mxu0 0
    %8153 = vmatprep.subr.bf16.mxu0 0
    %8154 = vmatpush1.bf16.msra.mxu0 0
    %8155 = vmatprep.subr.bf16.mxu0 0
    %8156 = vmatpush1.bf16.msra.mxu0 0
    %8157 = vmatprep.subr.bf16.mxu0 0
    %8158 = vmatpush1.bf16.msra.mxu0 0
    %8159 = vmatprep.subr.bf16.mxu0 0
    %8160 = vmatpush1.bf16.msra.mxu0 0
    %8161 = vmatprep.subr.bf16.mxu0 0
    %8162 = vmatpush1.bf16.msra.mxu0 0
    %8163 = vmatprep.subr.bf16.mxu0 0
    %8164 = vmatpush1.bf16.msra.mxu0 0
    %8165 = vmatprep.subr.bf16.mxu0 0
    %8166 = vmatpush1.bf16.msra.mxu0 0
    %8167 = vmatprep.subr.bf16.mxu0 0
    %8168 = vmatpush1.bf16.msra.mxu0 0
    %8169 = vmatprep.subr.bf16.mxu0 0
    %8170 = vmatpush1.bf16.msra.mxu0 0
    %8171 = vmatprep.subr.bf16.mxu0 0
    %8172 = vmatpush1.bf16.msra.mxu0 0
    %8173 = vmatprep.subr.bf16.mxu0 0
    %8174 = vmatpush1.bf16.msra.mxu0 0
    %8175 = vmatprep.subr.bf16.mxu0 0
    %8176 = vmatpush1.bf16.msra.mxu0 0
    %8177 = vmatprep.subr.bf16.mxu0 0
    %8178 = vmatpush1.bf16.msra.mxu0 0
    %8179 = vmatprep.mubr.bf16.mxu0 0
    %8180 = vmatmul.mubr.bf16.gmra.mrb[0].mxu0 %v8069
    %v8181 = vpop.f32.mrb[0].mxu0
    %v8182 = vadd.f32 0.0, %v8181
    %v8183 = vpop.f32.mrb[0].mxu0
    %v8184 = vpop.f32.mrb[0].mxu0
    %v8185 = vadd.f32 0.0, %v8184
    %v8186 = vpop.f32.mrb[0].mxu0
    %8187 = vmatprep.mubr.bf16.mxu0 0
    %8188 = vmatmul.mubr.bf16.gmra.mrb[0].mxu0 %v8072
    %v8189 = vpop.f32.mrb[0].mxu0
    %v8190 = vadd.f32 0.0, %v8189
    %v8191 = vpop.f32.mrb[0].mxu0
    %v8192 = vpop.f32.mrb[0].mxu0
    %v8193 = vadd.f32 0.0, %v8192
    %v8194 = vpop.f32.mrb[0].mxu0
    %8195 = vmatprep.mubr.bf16.mxu0 0
    %8196 = vmatmul.mubr.bf16.gmra.mrb[0].mxu0 %v8075
    %v8197 = vpop.f32.mrb[0].mxu0
    %v8198 = vadd.f32 0.0, %v8197
    %v8199 = vpop.f32.mrb[0].mxu0
    %v8200 = vpop.f32.mrb[0].mxu0
    %v8201 = vadd.f32 0.0, %v8200
    %v8202 = vpop.f32.mrb[0].mxu0
    %8203 = vmatprep.mubr.bf16.mxu0 0
    %8204 = vmatmul.mubr.bf16.gmra.mrb[0].mxu0 %v8078
    %v8205 = vpop.f32.mrb[0].mxu0
    %v8206 = vadd.f32 0.0, %v8205
    %v8207 = vpop.f32.mrb[0].mxu0
    %v8208 = vpop.f32.mrb[0].mxu0
    %v8209 = vadd.f32 0.0, %v8208
    %v8210 = vpop.f32.mrb[0].mxu0
    %8211 = vmatprep.mubr.bf16.mxu0 0
    %8212 = vmatmul.mubr.bf16.gmra.mrb[0].mxu0 %v8081
    %v8213 = vpop.f32.mrb[0].mxu0
    %v8214 = vadd.f32 0.0, %v8213
    %v8215 = vpop.f32.mrb[0].mxu0
    %v8216 = vpop.f32.mrb[0].mxu0
    %v8217 = vadd.f32 0.0, %v8216
    %v8218 = vpop.f32.mrb[0].mxu0
    %8219 = vmatprep.mubr.bf16.mxu0 0
    %8220 = vmatmul.mubr.bf16.gmra.mrb[0].mxu0 %v8084
    %v8221 = vpop.f32.mrb[0].mxu0
    %v8222 = vadd.f32 0.0, %v8221
    %v8223 = vpop.f32.mrb[0].mxu0
    %v8224 = vpop.f32.mrb[0].mxu0
    %v8225 = vadd.f32 0.0, %v8224
    %v8226 = vpop.f32.mrb[0].mxu0
    %8227 = vmatprep.mubr.bf16.mxu0 0
    %8228 = vmatmul.mubr.bf16.gmra.mrb[0].mxu0 %v8087
    %v8229 = vpop.f32.mrb[0].mxu0
    %v8230 = vadd.f32 0.0, %v8229
    %v8231 = vpop.f32.mrb[0].mxu0
    %v8232 = vpop.f32.mrb[0].mxu0
    %v8233 = vadd.f32 0.0, %v8232
    %v8234 = vpop.f32.mrb[0].mxu0
    %8235 = vmatprep.mubr.bf16.mxu0 0
    %8236 = vmatmul.mubr.bf16.gmra.mrb[0].mxu0 %v8090
    %v8237 = vpop.f32.mrb[0].mxu0
    %v8238 = vadd.f32 0.0, %v8237
    %v8239 = vpop.f32.mrb[0].mxu0
    %v8240 = vpop.f32.mrb[0].mxu0
    %v8241 = vadd.f32 0.0, %v8240
    %v8242 = vpop.f32.mrb[0].mxu0
    %8243 = vmatprep.mubr.bf16.mxu0 0
    %8244 = vmatmul.mubr.bf16.gmra.mrb[0].mxu0 %v8093
    %v8245 = vpop.f32.mrb[0].mxu0
    %v8246 = vadd.f32 0.0, %v8245
    %v8247 = vpop.f32.mrb[0].mxu0
    %v8248 = vpop.f32.mrb[0].mxu0
    %v8249 = vadd.f32 0.0, %v8248
    %v8250 = vpop.f32.mrb[0].mxu0
    %8251 = vmatprep.mubr.bf16.mxu0 0
    %8252 = vmatmul.mubr.bf16.gmra.mrb[0].mxu0 %v8096
    %v8253 = vpop.f32.mrb[0].mxu0
    %v8254 = vadd.f32 0.0, %v8253
    %v8255 = vpop.f32.mrb[0].mxu0
    %v8256 = vpop.f32.mrb[0].mxu0
    %v8257 = vadd.f32 0.0, %v8256
    %v8258 = vpop.f32.mrb[0].mxu0
    %8259 = vmatprep.mubr.bf16.mxu0 0
    %8260 = vmatmul.mubr.bf16.gmra.mrb[0].mxu0 %v8099
    %v8261 = vpop.f32.mrb[0].mxu0
    %v8262 = vadd.f32 0.0, %v8261
    %v8263 = vpop.f32.mrb[0].mxu0
    %v8264 = vpop.f32.mrb[0].mxu0
    %v8265 = vadd.f32 0.0, %v8264
    %v8266 = vpop.f32.mrb[0].mxu0
    %8267 = vmatprep.mubr.bf16.mxu0 0
    %8268 = vmatmul.mubr.bf16.gmra.mrb[0].mxu0 %v8102
    %v8269 = vpop.f32.mrb[0].mxu0
    %v8270 = vadd.f32 0.0, %v8269
    %v8271 = vpop.f32.mrb[0].mxu0
    %v8272 = vpop.f32.mrb[0].mxu0
    %v8273 = vadd.f32 0.0, %v8272
    %v8274 = vpop.f32.mrb[0].mxu0
    %8275 = vmatprep.mubr.bf16.mxu0 0
    %8276 = vmatmul.mubr.bf16.gmra.mrb[0].mxu0 %v8105
    %v8277 = vpop.f32.mrb[0].mxu0
    %v8278 = vadd.f32 0.0, %v8277
    %v8279 = vpop.f32.mrb[0].mxu0
    %v8280 = vpop.f32.mrb[0].mxu0
    %v8281 = vadd.f32 0.0, %v8280
    %v8282 = vpop.f32.mrb[0].mxu0
    %8283 = vmatprep.mubr.bf16.mxu0 0
    %8284 = vmatmul.mubr.bf16.gmra.mrb[0].mxu0 %v8108
    %v8285 = vpop.f32.mrb[0].mxu0
    %v8286 = vadd.f32 0.0, %v8285
    %v8287 = vpop.f32.mrb[0].mxu0
    %v8288 = vpop.f32.mrb[0].mxu0
    %v8289 = vadd.f32 0.0, %v8288
    %v8290 = vpop.f32.mrb[0].mxu0
    %8291 = vmatprep.mubr.bf16.mxu0 0
    %8292 = vmatmul.mubr.bf16.gmra.mrb[0].mxu0 %v8111
    %v8293 = vpop.f32.mrb[0].mxu0
    %v8294 = vadd.f32 0.0, %v8293
    %v8295 = vpop.f32.mrb[0].mxu0
    %v8296 = vpop.f32.mrb[0].mxu0
    %v8297 = vadd.f32 0.0, %v8296
    %v8298 = vpop.f32.mrb[0].mxu0
    %8299 = vmatprep.mubr.bf16.mxu0 0
    %8300 = vmatmul.mubr.bf16.gmra.mrb[0].mxu0 %v8114
    %v8301 = vpop.f32.mrb[0].mxu0
    %v8302 = vadd.f32 0.0, %v8301
    %v8303 = vpop.f32.mrb[0].mxu0
    %v8304 = vpop.f32.mrb[0].mxu0
    %v8305 = vadd.f32 0.0, %v8304
    %v8306 = vpop.f32.mrb[0].mxu0
    %8307 = vmatprep.mubr.bf16.mxu0 0
    %8308 = vmatmul.mubr.bf16.gmra.mrb[0].mxu0 %v8117
    %v8309 = vpop.f32.mrb[0].mxu0
    %v8310 = vadd.f32 0.0, %v8309
    %v8311 = vpop.f32.mrb[0].mxu0
    %v8312 = vpop.f32.mrb[0].mxu0
    %v8313 = vadd.f32 0.0, %v8312
    %v8314 = vpop.f32.mrb[0].mxu0
    %8315 = vmatprep.mubr.bf16.mxu0 0
    %8316 = vmatmul.mubr.bf16.gmra.mrb[0].mxu0 %v8120
    %v8317 = vpop.f32.mrb[0].mxu0
    %v8318 = vadd.f32 0.0, %v8317
    %v8319 = vpop.f32.mrb[0].mxu0
    %v8320 = vpop.f32.mrb[0].mxu0
    %v8321 = vadd.f32 0.0, %v8320
    %v8322 = vpop.f32.mrb[0].mxu0
    %8323 = vmatprep.mubr.bf16.mxu0 0
    %8324 = vmatmul.mubr.bf16.gmra.mrb[0].mxu0 %v8123
    %v8325 = vpop.f32.mrb[0].mxu0
    %v8326 = vadd.f32 0.0, %v8325
    %v8327 = vpop.f32.mrb[0].mxu0
    %v8328 = vpop.f32.mrb[0].mxu0
    %v8329 = vadd.f32 0.0, %v8328
    %v8330 = vpop.f32.mrb[0].mxu0
    %8331 = vmatprep.mubr.bf16.mxu0 0
    %8332 = vmatmul.mubr.bf16.gmra.mrb[0].mxu0 %v8126
    %v8333 = vpop.f32.mrb[0].mxu0
    %v8334 = vadd.f32 0.0, %v8333
    %v8335 = vpop.f32.mrb[0].mxu0
    %v8336 = vpop.f32.mrb[0].mxu0
    %v8337 = vadd.f32 0.0, %v8336
    %v8338 = vpop.f32.mrb[0].mxu0
    %8339 = vmatprep.mubr.bf16.mxu0 0
    %8340 = vmatmul.mubr.bf16.gmra.mrb[0].mxu0 %v8129
    %v8341 = vpop.f32.mrb[0].mxu0
    %v8342 = vadd.f32 0.0, %v8341
    %v8343 = vpop.f32.mrb[0].mxu0
    %v8344 = vpop.f32.mrb[0].mxu0
    %v8345 = vadd.f32 0.0, %v8344
    %v8346 = vpop.f32.mrb[0].mxu0
    %8347 = vmatprep.mubr.bf16.mxu0 0
    %8348 = vmatmul.mubr.bf16.gmra.mrb[0].mxu0 %v8132
    %v8349 = vpop.f32.mrb[0].mxu0
    %v8350 = vadd.f32 0.0, %v8349
    %v8351 = vpop.f32.mrb[0].mxu0
    %v8352 = vpop.f32.mrb[0].mxu0
    %v8353 = vadd.f32 0.0, %v8352
    %v8354 = vpop.f32.mrb[0].mxu0
    %8355 = vmatprep.mubr.bf16.mxu0 0
    %8356 = vmatmul.mubr.bf16.gmra.mrb[0].mxu0 %v8135
    %v8357 = vpop.f32.mrb[0].mxu0
    %v8358 = vadd.f32 0.0, %v8357
    %v8359 = vpop.f32.mrb[0].mxu0
    %v8360 = vpop.f32.mrb[0].mxu0
    %v8361 = vadd.f32 0.0, %v8360
    %v8362 = vpop.f32.mrb[0].mxu0
    %8363 = vmatprep.mubr.bf16.mxu0 0
    %8364 = vmatmul.mubr.bf16.gmra.mrb[0].mxu0 %v8138
    %v8365 = vpop.f32.mrb[0].mxu0
    %v8366 = vadd.f32 0.0, %v8365
    %v8367 = vpop.f32.mrb[0].mxu0
    %v8368 = vpop.f32.mrb[0].mxu0
    %v8369 = vadd.f32 0.0, %v8368
    %v8370 = vpop.f32.mrb[0].mxu0
    %8371 = vmatprep.mubr.bf16.mxu0 0
    %8372 = vmatmul.mubr.bf16.gmra.mrb[0].mxu0 %v8141
    %v8373 = vpop.f32.mrb[0].mxu0
    %v8374 = vadd.f32 0.0, %v8373
    %v8375 = vpop.f32.mrb[0].mxu0
    %v8376 = vpop.f32.mrb[0].mxu0
    %v8377 = vpop.f32.mrb[0].mxu0
    %8378 = vdwg.mxu0
    %v8379 = vmax.f32 %v8182, 0.0
    %v8380 = vmax.f32 %v8185, 0.0
    %v8381 = vmax.f32 %v8190, 0.0
    %v8382 = vmax.f32 %v8193, 0.0
    %v8383 = vmax.f32 %v8198, 0.0
    %v8384 = vmax.f32 %v8201, 0.0
    %v8385 = vmax.f32 %v8206, 0.0
    %v8386 = vmax.f32 %v8209, 0.0
    %v8387 = vmax.f32 %v8214, 0.0
    %v8388 = vmax.f32 %v8217, 0.0
    %v8389 = vmax.f32 %v8222, 0.0
    %v8390 = vmax.f32 %v8225, 0.0
    %v8391 = vmax.f32 %v8230, 0.0
    %v8392 = vmax.f32 %v8233, 0.0
    %v8393 = vmax.f32 %v8238, 0.0
    %v8394 = vmax.f32 %v8241, 0.0
    %v8395 = vmax.f32 %v8246, 0.0
    %v8396 = vmax.f32 %v8249, 0.0
    %v8397 = vmax.f32 %v8254, 0.0
    %v8398 = vmax.f32 %v8257, 0.0
    %v8399 = vmax.f32 %v8262, 0.0
    %v8400 = vmax.f32 %v8265, 0.0
    %v8401 = vmax.f32 %v8270, 0.0
    %v8402 = vmax.f32 %v8273, 0.0
    %v8403 = vmax.f32 %v8278, 0.0
    %v8404 = vmax.f32 %v8281, 0.0
    %v8405 = vmax.f32 %v8286, 0.0
    %v8406 = vmax.f32 %v8289, 0.0
    %v8407 = vmax.f32 %v8294, 0.0
    %v8408 = vmax.f32 %v8297, 0.0
    %v8409 = vmax.f32 %v8302, 0.0
    %v8410 = vmax.f32 %v8305, 0.0
    %v8411 = vmax.f32 %v8310, 0.0
    %v8412 = vmax.f32 %v8313, 0.0
    %v8413 = vmax.f32 %v8318, 0.0
    %v8414 = vmax.f32 %v8321, 0.0
    %v8415 = vmax.f32 %v8326, 0.0
    %v8416 = vmax.f32 %v8329, 0.0
    %v8417 = vmax.f32 %v8334, 0.0
    %v8418 = vmax.f32 %v8337, 0.0
    %v8419 = vmax.f32 %v8342, 0.0
    %v8420 = vmax.f32 %v8345, 0.0
    %v8421 = vmax.f32 %v8350, 0.0
    %v8422 = vmax.f32 %v8353, 0.0
    %v8423 = vmax.f32 %v8358, 0.0
    %v8424 = vmax.f32 %v8361, 0.0
    %v8425 = vmax.f32 %v8366, 0.0
    %v8426 = vmax.f32 %v8369, 0.0
    %v8427 = vmax.f32 %v8374, 0.0
    %v8477 = vcombine.high %v8379, %v8379
    %v8479 = vunpack.c.l.s4 1983009808
    %v8480 = vunpack.c.0.s8 %v8479
    %v8481 = vlaneseq
    %v8482 = vshrl.u32 %v8481, 7
    %v8483 = vsub.s32 %v8480, %v8482
    %v8484 = vrot.slane %v8379, %v8483
    %v8486 = vunpack.c.l.s4 1983009808
    %v8487 = vunpack.c.0.s8 %v8486
    %v8488 = vlaneseq
    %v8489 = vshrl.u32 %v8488, 7
    %v8490 = vsub.s32 %v8487, %v8489
    %v8491 = vrot.slane %v8477, %v8490
    %v8492 = vcombine.high %v8484, %v8484
    %v8493 = vcombine.high %v8491, %v8491
    %v8494 = vcombine.high %v8380, %v8380
    %v8496 = vunpack.c.l.s4 1983009808
    %v8497 = vunpack.c.0.s8 %v8496
    %v8498 = vlaneseq
    %v8499 = vshrl.u32 %v8498, 7
    %v8500 = vsub.s32 %v8497, %v8499
    %v8501 = vrot.slane %v8380, %v8500
    %v8503 = vunpack.c.l.s4 1983009808
    %v8504 = vunpack.c.0.s8 %v8503
    %v8505 = vlaneseq
    %v8506 = vshrl.u32 %v8505, 7
    %v8507 = vsub.s32 %v8504, %v8506
    %v8508 = vrot.slane %v8494, %v8507
    %v8509 = vcombine.high %v8501, %v8501
    %v8510 = vcombine.high %v8508, %v8508
    %v8511 = vcombine.high %v8381, %v8381
    %v8513 = vunpack.c.l.s4 1983009808
    %v8514 = vunpack.c.0.s8 %v8513
    %v8515 = vlaneseq
    %v8516 = vshrl.u32 %v8515, 7
    %v8517 = vsub.s32 %v8514, %v8516
    %v8518 = vrot.slane %v8381, %v8517
    %v8520 = vunpack.c.l.s4 1983009808
    %v8521 = vunpack.c.0.s8 %v8520
    %v8522 = vlaneseq
    %v8523 = vshrl.u32 %v8522, 7
    %v8524 = vsub.s32 %v8521, %v8523
    %v8525 = vrot.slane %v8511, %v8524
    %v8526 = vcombine.high %v8518, %v8518
    %v8527 = vcombine.high %v8525, %v8525
    %v8528 = vcombine.high %v8382, %v8382
    %v8530 = vunpack.c.l.s4 1983009808
    %v8531 = vunpack.c.0.s8 %v8530
    %v8532 = vlaneseq
    %v8533 = vshrl.u32 %v8532, 7
    %v8534 = vsub.s32 %v8531, %v8533
    %v8535 = vrot.slane %v8382, %v8534
    %v8537 = vunpack.c.l.s4 1983009808
    %v8538 = vunpack.c.0.s8 %v8537
    %v8539 = vlaneseq
    %v8540 = vshrl.u32 %v8539, 7
    %v8541 = vsub.s32 %v8538, %v8540
    %v8542 = vrot.slane %v8528, %v8541
    %v8543 = vcombine.high %v8535, %v8535
    %v8544 = vcombine.high %v8542, %v8542
    %v8545 = vcombine.high %v8383, %v8383
    %v8547 = vunpack.c.l.s4 1983009808
    %v8548 = vunpack.c.0.s8 %v8547
    %v8549 = vlaneseq
    %v8550 = vshrl.u32 %v8549, 7
    %v8551 = vsub.s32 %v8548, %v8550
    %v8552 = vrot.slane %v8383, %v8551
    %v8554 = vunpack.c.l.s4 1983009808
    %v8555 = vunpack.c.0.s8 %v8554
    %v8556 = vlaneseq
    %v8557 = vshrl.u32 %v8556, 7
    %v8558 = vsub.s32 %v8555, %v8557
    %v8559 = vrot.slane %v8545, %v8558
    %v8560 = vcombine.high %v8552, %v8552
    %v8561 = vcombine.high %v8559, %v8559
    %v8562 = vcombine.high %v8384, %v8384
    %v8564 = vunpack.c.l.s4 1983009808
    %v8565 = vunpack.c.0.s8 %v8564
    %v8566 = vlaneseq
    %v8567 = vshrl.u32 %v8566, 7
    %v8568 = vsub.s32 %v8565, %v8567
    %v8569 = vrot.slane %v8384, %v8568
    %v8571 = vunpack.c.l.s4 1983009808
    %v8572 = vunpack.c.0.s8 %v8571
    %v8573 = vlaneseq
    %v8574 = vshrl.u32 %v8573, 7
    %v8575 = vsub.s32 %v8572, %v8574
    %v8576 = vrot.slane %v8562, %v8575
    %v8577 = vcombine.high %v8569, %v8569
    %v8578 = vcombine.high %v8576, %v8576
    %v8579 = vcombine.high %v8385, %v8385
    %v8581 = vunpack.c.l.s4 1983009808
    %v8582 = vunpack.c.0.s8 %v8581
    %v8583 = vlaneseq
    %v8584 = vshrl.u32 %v8583, 7
    %v8585 = vsub.s32 %v8582, %v8584
    %v8586 = vrot.slane %v8385, %v8585
    %v8588 = vunpack.c.l.s4 1983009808
    %v8589 = vunpack.c.0.s8 %v8588
    %v8590 = vlaneseq
    %v8591 = vshrl.u32 %v8590, 7
    %v8592 = vsub.s32 %v8589, %v8591
    %v8593 = vrot.slane %v8579, %v8592
    %v8594 = vcombine.high %v8586, %v8586
    %v8595 = vcombine.high %v8593, %v8593
    %v8596 = vcombine.high %v8386, %v8386
    %v8598 = vunpack.c.l.s4 1983009808
    %v8599 = vunpack.c.0.s8 %v8598
    %v8600 = vlaneseq
    %v8601 = vshrl.u32 %v8600, 7
    %v8602 = vsub.s32 %v8599, %v8601
    %v8603 = vrot.slane %v8386, %v8602
    %v8605 = vunpack.c.l.s4 1983009808
    %v8606 = vunpack.c.0.s8 %v8605
    %v8607 = vlaneseq
    %v8608 = vshrl.u32 %v8607, 7
    %v8609 = vsub.s32 %v8606, %v8608
    %v8610 = vrot.slane %v8596, %v8609
    %v8611 = vcombine.high %v8603, %v8603
    %v8612 = vcombine.high %v8610, %v8610
    %v8613 = vcombine.high %v8387, %v8387
    %v8615 = vunpack.c.l.s4 1983009808
    %v8616 = vunpack.c.0.s8 %v8615
    %v8617 = vlaneseq
    %v8618 = vshrl.u32 %v8617, 7
    %v8619 = vsub.s32 %v8616, %v8618
    %v8620 = vrot.slane %v8387, %v8619
    %v8622 = vunpack.c.l.s4 1983009808
    %v8623 = vunpack.c.0.s8 %v8622
    %v8624 = vlaneseq
    %v8625 = vshrl.u32 %v8624, 7
    %v8626 = vsub.s32 %v8623, %v8625
    %v8627 = vrot.slane %v8613, %v8626
    %v8628 = vcombine.high %v8620, %v8620
    %v8629 = vcombine.high %v8627, %v8627
    %v8630 = vcombine.high %v8388, %v8388
    %v8632 = vunpack.c.l.s4 1983009808
    %v8633 = vunpack.c.0.s8 %v8632
    %v8634 = vlaneseq
    %v8635 = vshrl.u32 %v8634, 7
    %v8636 = vsub.s32 %v8633, %v8635
    %v8637 = vrot.slane %v8388, %v8636
    %v8639 = vunpack.c.l.s4 1983009808
    %v8640 = vunpack.c.0.s8 %v8639
    %v8641 = vlaneseq
    %v8642 = vshrl.u32 %v8641, 7
    %v8643 = vsub.s32 %v8640, %v8642
    %v8644 = vrot.slane %v8630, %v8643
    %v8645 = vcombine.high %v8637, %v8637
    %v8646 = vcombine.high %v8644, %v8644
    %v8647 = vcombine.high %v8389, %v8389
    %v8649 = vunpack.c.l.s4 1983009808
    %v8650 = vunpack.c.0.s8 %v8649
    %v8651 = vlaneseq
    %v8652 = vshrl.u32 %v8651, 7
    %v8653 = vsub.s32 %v8650, %v8652
    %v8654 = vrot.slane %v8389, %v8653
    %v8656 = vunpack.c.l.s4 1983009808
    %v8657 = vunpack.c.0.s8 %v8656
    %v8658 = vlaneseq
    %v8659 = vshrl.u32 %v8658, 7
    %v8660 = vsub.s32 %v8657, %v8659
    %v8661 = vrot.slane %v8647, %v8660
    %v8662 = vcombine.high %v8654, %v8654
    %v8663 = vcombine.high %v8661, %v8661
    %v8664 = vcombine.high %v8390, %v8390
    %v8666 = vunpack.c.l.s4 1983009808
    %v8667 = vunpack.c.0.s8 %v8666
    %v8668 = vlaneseq
    %v8669 = vshrl.u32 %v8668, 7
    %v8670 = vsub.s32 %v8667, %v8669
    %v8671 = vrot.slane %v8390, %v8670
    %v8673 = vunpack.c.l.s4 1983009808
    %v8674 = vunpack.c.0.s8 %v8673
    %v8675 = vlaneseq
    %v8676 = vshrl.u32 %v8675, 7
    %v8677 = vsub.s32 %v8674, %v8676
    %v8678 = vrot.slane %v8664, %v8677
    %v8679 = vcombine.high %v8671, %v8671
    %v8680 = vcombine.high %v8678, %v8678
    %v8681 = vcombine.high %v8391, %v8391
    %v8683 = vunpack.c.l.s4 1983009808
    %v8684 = vunpack.c.0.s8 %v8683
    %v8685 = vlaneseq
    %v8686 = vshrl.u32 %v8685, 7
    %v8687 = vsub.s32 %v8684, %v8686
    %v8688 = vrot.slane %v8391, %v8687
    %v8690 = vunpack.c.l.s4 1983009808
    %v8691 = vunpack.c.0.s8 %v8690
    %v8692 = vlaneseq
    %v8693 = vshrl.u32 %v8692, 7
    %v8694 = vsub.s32 %v8691, %v8693
    %v8695 = vrot.slane %v8681, %v8694
    %v8696 = vcombine.high %v8688, %v8688
    %v8697 = vcombine.high %v8695, %v8695
    %v8698 = vcombine.high %v8392, %v8392
    %v8700 = vunpack.c.l.s4 1983009808
    %v8701 = vunpack.c.0.s8 %v8700
    %v8702 = vlaneseq
    %v8703 = vshrl.u32 %v8702, 7
    %v8704 = vsub.s32 %v8701, %v8703
    %v8705 = vrot.slane %v8392, %v8704
    %v8707 = vunpack.c.l.s4 1983009808
    %v8708 = vunpack.c.0.s8 %v8707
    %v8709 = vlaneseq
    %v8710 = vshrl.u32 %v8709, 7
    %v8711 = vsub.s32 %v8708, %v8710
    %v8712 = vrot.slane %v8698, %v8711
    %v8713 = vcombine.high %v8705, %v8705
    %v8714 = vcombine.high %v8712, %v8712
    %v8715 = vcombine.high %v8393, %v8393
    %v8717 = vunpack.c.l.s4 1983009808
    %v8718 = vunpack.c.0.s8 %v8717
    %v8719 = vlaneseq
    %v8720 = vshrl.u32 %v8719, 7
    %v8721 = vsub.s32 %v8718, %v8720
    %v8722 = vrot.slane %v8393, %v8721
    %v8724 = vunpack.c.l.s4 1983009808
    %v8725 = vunpack.c.0.s8 %v8724
    %v8726 = vlaneseq
    %v8727 = vshrl.u32 %v8726, 7
    %v8728 = vsub.s32 %v8725, %v8727
    %v8729 = vrot.slane %v8715, %v8728
    %v8730 = vcombine.high %v8722, %v8722
    %v8731 = vcombine.high %v8729, %v8729
    %v8732 = vcombine.high %v8394, %v8394
    %v8734 = vunpack.c.l.s4 1983009808
    %v8735 = vunpack.c.0.s8 %v8734
    %v8736 = vlaneseq
    %v8737 = vshrl.u32 %v8736, 7
    %v8738 = vsub.s32 %v8735, %v8737
    %v8739 = vrot.slane %v8394, %v8738
    %v8741 = vunpack.c.l.s4 1983009808
    %v8742 = vunpack.c.0.s8 %v8741
    %v8743 = vlaneseq
    %v8744 = vshrl.u32 %v8743, 7
    %v8745 = vsub.s32 %v8742, %v8744
    %v8746 = vrot.slane %v8732, %v8745
    %v8747 = vcombine.high %v8739, %v8739
    %v8748 = vcombine.high %v8746, %v8746
    %v8749 = vcombine.high %v8395, %v8395
    %v8751 = vunpack.c.l.s4 1983009808
    %v8752 = vunpack.c.0.s8 %v8751
    %v8753 = vlaneseq
    %v8754 = vshrl.u32 %v8753, 7
    %v8755 = vsub.s32 %v8752, %v8754
    %v8756 = vrot.slane %v8395, %v8755
    %v8758 = vunpack.c.l.s4 1983009808
    %v8759 = vunpack.c.0.s8 %v8758
    %v8760 = vlaneseq
    %v8761 = vshrl.u32 %v8760, 7
    %v8762 = vsub.s32 %v8759, %v8761
    %v8763 = vrot.slane %v8749, %v8762
    %v8764 = vcombine.high %v8756, %v8756
    %v8765 = vcombine.high %v8763, %v8763
    %v8766 = vcombine.high %v8396, %v8396
    %v8768 = vunpack.c.l.s4 1983009808
    %v8769 = vunpack.c.0.s8 %v8768
    %v8770 = vlaneseq
    %v8771 = vshrl.u32 %v8770, 7
    %v8772 = vsub.s32 %v8769, %v8771
    %v8773 = vrot.slane %v8396, %v8772
    %v8775 = vunpack.c.l.s4 1983009808
    %v8776 = vunpack.c.0.s8 %v8775
    %v8777 = vlaneseq
    %v8778 = vshrl.u32 %v8777, 7
    %v8779 = vsub.s32 %v8776, %v8778
    %v8780 = vrot.slane %v8766, %v8779
    %v8781 = vcombine.high %v8773, %v8773
    %v8782 = vcombine.high %v8780, %v8780
    %v8783 = vcombine.high %v8397, %v8397
    %v8785 = vunpack.c.l.s4 1983009808
    %v8786 = vunpack.c.0.s8 %v8785
    %v8787 = vlaneseq
    %v8788 = vshrl.u32 %v8787, 7
    %v8789 = vsub.s32 %v8786, %v8788
    %v8790 = vrot.slane %v8397, %v8789
    %v8792 = vunpack.c.l.s4 1983009808
    %v8793 = vunpack.c.0.s8 %v8792
    %v8794 = vlaneseq
    %v8795 = vshrl.u32 %v8794, 7
    %v8796 = vsub.s32 %v8793, %v8795
    %v8797 = vrot.slane %v8783, %v8796
    %v8798 = vcombine.high %v8790, %v8790
    %v8799 = vcombine.high %v8797, %v8797
    %v8800 = vcombine.high %v8398, %v8398
    %v8802 = vunpack.c.l.s4 1983009808
    %v8803 = vunpack.c.0.s8 %v8802
    %v8804 = vlaneseq
    %v8805 = vshrl.u32 %v8804, 7
    %v8806 = vsub.s32 %v8803, %v8805
    %v8807 = vrot.slane %v8398, %v8806
    %v8809 = vunpack.c.l.s4 1983009808
    %v8810 = vunpack.c.0.s8 %v8809
    %v8811 = vlaneseq
    %v8812 = vshrl.u32 %v8811, 7
    %v8813 = vsub.s32 %v8810, %v8812
    %v8814 = vrot.slane %v8800, %v8813
    %v8815 = vcombine.high %v8807, %v8807
    %v8816 = vcombine.high %v8814, %v8814
    %v8817 = vcombine.high %v8399, %v8399
    %v8819 = vunpack.c.l.s4 1983009808
    %v8820 = vunpack.c.0.s8 %v8819
    %v8821 = vlaneseq
    %v8822 = vshrl.u32 %v8821, 7
    %v8823 = vsub.s32 %v8820, %v8822
    %v8824 = vrot.slane %v8399, %v8823
    %v8826 = vunpack.c.l.s4 1983009808
    %v8827 = vunpack.c.0.s8 %v8826
    %v8828 = vlaneseq
    %v8829 = vshrl.u32 %v8828, 7
    %v8830 = vsub.s32 %v8827, %v8829
    %v8831 = vrot.slane %v8817, %v8830
    %v8832 = vcombine.high %v8824, %v8824
    %v8833 = vcombine.high %v8831, %v8831
    %v8834 = vcombine.high %v8400, %v8400
    %v8836 = vunpack.c.l.s4 1983009808
    %v8837 = vunpack.c.0.s8 %v8836
    %v8838 = vlaneseq
    %v8839 = vshrl.u32 %v8838, 7
    %v8840 = vsub.s32 %v8837, %v8839
    %v8841 = vrot.slane %v8400, %v8840
    %v8843 = vunpack.c.l.s4 1983009808
    %v8844 = vunpack.c.0.s8 %v8843
    %v8845 = vlaneseq
    %v8846 = vshrl.u32 %v8845, 7
    %v8847 = vsub.s32 %v8844, %v8846
    %v8848 = vrot.slane %v8834, %v8847
    %v8849 = vcombine.high %v8841, %v8841
    %v8850 = vcombine.high %v8848, %v8848
    %v8851 = vcombine.high %v8401, %v8401
    %v8853 = vunpack.c.l.s4 1983009808
    %v8854 = vunpack.c.0.s8 %v8853
    %v8855 = vlaneseq
    %v8856 = vshrl.u32 %v8855, 7
    %v8857 = vsub.s32 %v8854, %v8856
    %v8858 = vrot.slane %v8401, %v8857
    %v8860 = vunpack.c.l.s4 1983009808
    %v8861 = vunpack.c.0.s8 %v8860
    %v8862 = vlaneseq
    %v8863 = vshrl.u32 %v8862, 7
    %v8864 = vsub.s32 %v8861, %v8863
    %v8865 = vrot.slane %v8851, %v8864
    %v8866 = vcombine.high %v8858, %v8858
    %v8867 = vcombine.high %v8865, %v8865
    %v8868 = vcombine.high %v8402, %v8402
    %v8870 = vunpack.c.l.s4 1983009808
    %v8871 = vunpack.c.0.s8 %v8870
    %v8872 = vlaneseq
    %v8873 = vshrl.u32 %v8872, 7
    %v8874 = vsub.s32 %v8871, %v8873
    %v8875 = vrot.slane %v8402, %v8874
    %v8877 = vunpack.c.l.s4 1983009808
    %v8878 = vunpack.c.0.s8 %v8877
    %v8879 = vlaneseq
    %v8880 = vshrl.u32 %v8879, 7
    %v8881 = vsub.s32 %v8878, %v8880
    %v8882 = vrot.slane %v8868, %v8881
    %v8883 = vcombine.high %v8875, %v8875
    %v8884 = vcombine.high %v8882, %v8882
    %v8885 = vcombine.high %v8403, %v8403
    %v8887 = vunpack.c.l.s4 1983009808
    %v8888 = vunpack.c.0.s8 %v8887
    %v8889 = vlaneseq
    %v8890 = vshrl.u32 %v8889, 7
    %v8891 = vsub.s32 %v8888, %v8890
    %v8892 = vrot.slane %v8403, %v8891
    %v8894 = vunpack.c.l.s4 1983009808
    %v8895 = vunpack.c.0.s8 %v8894
    %v8896 = vlaneseq
    %v8897 = vshrl.u32 %v8896, 7
    %v8898 = vsub.s32 %v8895, %v8897
    %v8899 = vrot.slane %v8885, %v8898
    %v8900 = vcombine.high %v8892, %v8892
    %v8901 = vcombine.high %v8899, %v8899
    %v8902 = vcombine.high %v8404, %v8404
    %v8904 = vunpack.c.l.s4 1983009808
    %v8905 = vunpack.c.0.s8 %v8904
    %v8906 = vlaneseq
    %v8907 = vshrl.u32 %v8906, 7
    %v8908 = vsub.s32 %v8905, %v8907
    %v8909 = vrot.slane %v8404, %v8908
    %v8911 = vunpack.c.l.s4 1983009808
    %v8912 = vunpack.c.0.s8 %v8911
    %v8913 = vlaneseq
    %v8914 = vshrl.u32 %v8913, 7
    %v8915 = vsub.s32 %v8912, %v8914
    %v8916 = vrot.slane %v8902, %v8915
    %v8917 = vcombine.high %v8909, %v8909
    %v8918 = vcombine.high %v8916, %v8916
    %v8919 = vcombine.high %v8405, %v8405
    %v8921 = vunpack.c.l.s4 1983009808
    %v8922 = vunpack.c.0.s8 %v8921
    %v8923 = vlaneseq
    %v8924 = vshrl.u32 %v8923, 7
    %v8925 = vsub.s32 %v8922, %v8924
    %v8926 = vrot.slane %v8405, %v8925
    %v8928 = vunpack.c.l.s4 1983009808
    %v8929 = vunpack.c.0.s8 %v8928
    %v8930 = vlaneseq
    %v8931 = vshrl.u32 %v8930, 7
    %v8932 = vsub.s32 %v8929, %v8931
    %v8933 = vrot.slane %v8919, %v8932
    %v8934 = vcombine.high %v8926, %v8926
    %v8935 = vcombine.high %v8933, %v8933
    %v8936 = vcombine.high %v8406, %v8406
    %v8938 = vunpack.c.l.s4 1983009808
    %v8939 = vunpack.c.0.s8 %v8938
    %v8940 = vlaneseq
    %v8941 = vshrl.u32 %v8940, 7
    %v8942 = vsub.s32 %v8939, %v8941
    %v8943 = vrot.slane %v8406, %v8942
    %v8945 = vunpack.c.l.s4 1983009808
    %v8946 = vunpack.c.0.s8 %v8945
    %v8947 = vlaneseq
    %v8948 = vshrl.u32 %v8947, 7
    %v8949 = vsub.s32 %v8946, %v8948
    %v8950 = vrot.slane %v8936, %v8949
    %v8951 = vcombine.high %v8943, %v8943
    %v8952 = vcombine.high %v8950, %v8950
    %v8953 = vcombine.high %v8407, %v8407
    %v8955 = vunpack.c.l.s4 1983009808
    %v8956 = vunpack.c.0.s8 %v8955
    %v8957 = vlaneseq
    %v8958 = vshrl.u32 %v8957, 7
    %v8959 = vsub.s32 %v8956, %v8958
    %v8960 = vrot.slane %v8407, %v8959
    %v8962 = vunpack.c.l.s4 1983009808
    %v8963 = vunpack.c.0.s8 %v8962
    %v8964 = vlaneseq
    %v8965 = vshrl.u32 %v8964, 7
    %v8966 = vsub.s32 %v8963, %v8965
    %v8967 = vrot.slane %v8953, %v8966
    %v8968 = vcombine.high %v8960, %v8960
    %v8969 = vcombine.high %v8967, %v8967
    %v8970 = vcombine.high %v8408, %v8408
    %v8972 = vunpack.c.l.s4 1983009808
    %v8973 = vunpack.c.0.s8 %v8972
    %v8974 = vlaneseq
    %v8975 = vshrl.u32 %v8974, 7
    %v8976 = vsub.s32 %v8973, %v8975
    %v8977 = vrot.slane %v8408, %v8976
    %v8979 = vunpack.c.l.s4 1983009808
    %v8980 = vunpack.c.0.s8 %v8979
    %v8981 = vlaneseq
    %v8982 = vshrl.u32 %v8981, 7
    %v8983 = vsub.s32 %v8980, %v8982
    %v8984 = vrot.slane %v8970, %v8983
    %v8985 = vcombine.high %v8977, %v8977
    %v8986 = vcombine.high %v8984, %v8984
    %v8987 = vcombine.high %v8409, %v8409
    %v8989 = vunpack.c.l.s4 1983009808
    %v8990 = vunpack.c.0.s8 %v8989
    %v8991 = vlaneseq
    %v8992 = vshrl.u32 %v8991, 7
    %v8993 = vsub.s32 %v8990, %v8992
    %v8994 = vrot.slane %v8409, %v8993
    %v8996 = vunpack.c.l.s4 1983009808
    %v8997 = vunpack.c.0.s8 %v8996
    %v8998 = vlaneseq
    %v8999 = vshrl.u32 %v8998, 7
    %v9000 = vsub.s32 %v8997, %v8999
    %v9001 = vrot.slane %v8987, %v9000
    %v9002 = vcombine.high %v8994, %v8994
    %v9003 = vcombine.high %v9001, %v9001
    %v9004 = vcombine.high %v8410, %v8410
    %v9006 = vunpack.c.l.s4 1983009808
    %v9007 = vunpack.c.0.s8 %v9006
    %v9008 = vlaneseq
    %v9009 = vshrl.u32 %v9008, 7
    %v9010 = vsub.s32 %v9007, %v9009
    %v9011 = vrot.slane %v8410, %v9010
    %v9013 = vunpack.c.l.s4 1983009808
    %v9014 = vunpack.c.0.s8 %v9013
    %v9015 = vlaneseq
    %v9016 = vshrl.u32 %v9015, 7
    %v9017 = vsub.s32 %v9014, %v9016
    %v9018 = vrot.slane %v9004, %v9017
    %v9019 = vcombine.high %v9011, %v9011
    %v9020 = vcombine.high %v9018, %v9018
    %v9021 = vcombine.high %v8411, %v8411
    %v9023 = vunpack.c.l.s4 1983009808
    %v9024 = vunpack.c.0.s8 %v9023
    %v9025 = vlaneseq
    %v9026 = vshrl.u32 %v9025, 7
    %v9027 = vsub.s32 %v9024, %v9026
    %v9028 = vrot.slane %v8411, %v9027
    %v9030 = vunpack.c.l.s4 1983009808
    %v9031 = vunpack.c.0.s8 %v9030
    %v9032 = vlaneseq
    %v9033 = vshrl.u32 %v9032, 7
    %v9034 = vsub.s32 %v9031, %v9033
    %v9035 = vrot.slane %v9021, %v9034
    %v9036 = vcombine.high %v9028, %v9028
    %v9037 = vcombine.high %v9035, %v9035
    %v9038 = vcombine.high %v8412, %v8412
    %v9040 = vunpack.c.l.s4 1983009808
    %v9041 = vunpack.c.0.s8 %v9040
    %v9042 = vlaneseq
    %v9043 = vshrl.u32 %v9042, 7
    %v9044 = vsub.s32 %v9041, %v9043
    %v9045 = vrot.slane %v8412, %v9044
    %v9047 = vunpack.c.l.s4 1983009808
    %v9048 = vunpack.c.0.s8 %v9047
    %v9049 = vlaneseq
    %v9050 = vshrl.u32 %v9049, 7
    %v9051 = vsub.s32 %v9048, %v9050
    %v9052 = vrot.slane %v9038, %v9051
    %v9053 = vcombine.high %v9045, %v9045
    %v9054 = vcombine.high %v9052, %v9052
    %v9055 = vcombine.high %v8413, %v8413
    %v9057 = vunpack.c.l.s4 1983009808
    %v9058 = vunpack.c.0.s8 %v9057
    %v9059 = vlaneseq
    %v9060 = vshrl.u32 %v9059, 7
    %v9061 = vsub.s32 %v9058, %v9060
    %v9062 = vrot.slane %v8413, %v9061
    %v9064 = vunpack.c.l.s4 1983009808
    %v9065 = vunpack.c.0.s8 %v9064
    %v9066 = vlaneseq
    %v9067 = vshrl.u32 %v9066, 7
    %v9068 = vsub.s32 %v9065, %v9067
    %v9069 = vrot.slane %v9055, %v9068
    %v9070 = vcombine.high %v9062, %v9062
    %v9071 = vcombine.high %v9069, %v9069
    %v9072 = vcombine.high %v8414, %v8414
    %v9074 = vunpack.c.l.s4 1983009808
    %v9075 = vunpack.c.0.s8 %v9074
    %v9076 = vlaneseq
    %v9077 = vshrl.u32 %v9076, 7
    %v9078 = vsub.s32 %v9075, %v9077
    %v9079 = vrot.slane %v8414, %v9078
    %v9081 = vunpack.c.l.s4 1983009808
    %v9082 = vunpack.c.0.s8 %v9081
    %v9083 = vlaneseq
    %v9084 = vshrl.u32 %v9083, 7
    %v9085 = vsub.s32 %v9082, %v9084
    %v9086 = vrot.slane %v9072, %v9085
    %v9087 = vcombine.high %v9079, %v9079
    %v9088 = vcombine.high %v9086, %v9086
    %v9089 = vcombine.high %v8415, %v8415
    %v9091 = vunpack.c.l.s4 1983009808
    %v9092 = vunpack.c.0.s8 %v9091
    %v9093 = vlaneseq
    %v9094 = vshrl.u32 %v9093, 7
    %v9095 = vsub.s32 %v9092, %v9094
    %v9096 = vrot.slane %v8415, %v9095
    %v9098 = vunpack.c.l.s4 1983009808
    %v9099 = vunpack.c.0.s8 %v9098
    %v9100 = vlaneseq
    %v9101 = vshrl.u32 %v9100, 7
    %v9102 = vsub.s32 %v9099, %v9101
    %v9103 = vrot.slane %v9089, %v9102
    %v9104 = vcombine.high %v9096, %v9096
    %v9105 = vcombine.high %v9103, %v9103
    %v9106 = vcombine.high %v8416, %v8416
    %v9108 = vunpack.c.l.s4 1983009808
    %v9109 = vunpack.c.0.s8 %v9108
    %v9110 = vlaneseq
    %v9111 = vshrl.u32 %v9110, 7
    %v9112 = vsub.s32 %v9109, %v9111
    %v9113 = vrot.slane %v8416, %v9112
    %v9115 = vunpack.c.l.s4 1983009808
    %v9116 = vunpack.c.0.s8 %v9115
    %v9117 = vlaneseq
    %v9118 = vshrl.u32 %v9117, 7
    %v9119 = vsub.s32 %v9116, %v9118
    %v9120 = vrot.slane %v9106, %v9119
    %v9121 = vcombine.high %v9113, %v9113
    %v9122 = vcombine.high %v9120, %v9120
    %v9123 = vcombine.high %v8417, %v8417
    %v9125 = vunpack.c.l.s4 1983009808
    %v9126 = vunpack.c.0.s8 %v9125
    %v9127 = vlaneseq
    %v9128 = vshrl.u32 %v9127, 7
    %v9129 = vsub.s32 %v9126, %v9128
    %v9130 = vrot.slane %v8417, %v9129
    %v9132 = vunpack.c.l.s4 1983009808
    %v9133 = vunpack.c.0.s8 %v9132
    %v9134 = vlaneseq
    %v9135 = vshrl.u32 %v9134, 7
    %v9136 = vsub.s32 %v9133, %v9135
    %v9137 = vrot.slane %v9123, %v9136
    %v9138 = vcombine.high %v9130, %v9130
    %v9139 = vcombine.high %v9137, %v9137
    %v9140 = vcombine.high %v8418, %v8418
    %v9142 = vunpack.c.l.s4 1983009808
    %v9143 = vunpack.c.0.s8 %v9142
    %v9144 = vlaneseq
    %v9145 = vshrl.u32 %v9144, 7
    %v9146 = vsub.s32 %v9143, %v9145
    %v9147 = vrot.slane %v8418, %v9146
    %v9149 = vunpack.c.l.s4 1983009808
    %v9150 = vunpack.c.0.s8 %v9149
    %v9151 = vlaneseq
    %v9152 = vshrl.u32 %v9151, 7
    %v9153 = vsub.s32 %v9150, %v9152
    %v9154 = vrot.slane %v9140, %v9153
    %v9155 = vcombine.high %v9147, %v9147
    %v9156 = vcombine.high %v9154, %v9154
    %v9157 = vcombine.high %v8419, %v8419
    %v9159 = vunpack.c.l.s4 1983009808
    %v9160 = vunpack.c.0.s8 %v9159
    %v9161 = vlaneseq
    %v9162 = vshrl.u32 %v9161, 7
    %v9163 = vsub.s32 %v9160, %v9162
    %v9164 = vrot.slane %v8419, %v9163
    %v9166 = vunpack.c.l.s4 1983009808
    %v9167 = vunpack.c.0.s8 %v9166
    %v9168 = vlaneseq
    %v9169 = vshrl.u32 %v9168, 7
    %v9170 = vsub.s32 %v9167, %v9169
    %v9171 = vrot.slane %v9157, %v9170
    %v9172 = vcombine.high %v9164, %v9164
    %v9173 = vcombine.high %v9171, %v9171
    %v9174 = vcombine.high %v8420, %v8420
    %v9176 = vunpack.c.l.s4 1983009808
    %v9177 = vunpack.c.0.s8 %v9176
    %v9178 = vlaneseq
    %v9179 = vshrl.u32 %v9178, 7
    %v9180 = vsub.s32 %v9177, %v9179
    %v9181 = vrot.slane %v8420, %v9180
    %v9183 = vunpack.c.l.s4 1983009808
    %v9184 = vunpack.c.0.s8 %v9183
    %v9185 = vlaneseq
    %v9186 = vshrl.u32 %v9185, 7
    %v9187 = vsub.s32 %v9184, %v9186
    %v9188 = vrot.slane %v9174, %v9187
    %v9189 = vcombine.high %v9181, %v9181
    %v9190 = vcombine.high %v9188, %v9188
    %v9191 = vcombine.high %v8421, %v8421
    %v9193 = vunpack.c.l.s4 1983009808
    %v9194 = vunpack.c.0.s8 %v9193
    %v9195 = vlaneseq
    %v9196 = vshrl.u32 %v9195, 7
    %v9197 = vsub.s32 %v9194, %v9196
    %v9198 = vrot.slane %v8421, %v9197
    %v9200 = vunpack.c.l.s4 1983009808
    %v9201 = vunpack.c.0.s8 %v9200
    %v9202 = vlaneseq
    %v9203 = vshrl.u32 %v9202, 7
    %v9204 = vsub.s32 %v9201, %v9203
    %v9205 = vrot.slane %v9191, %v9204
    %v9206 = vcombine.high %v9198, %v9198
    %v9207 = vcombine.high %v9205, %v9205
    %v9208 = vcombine.high %v8422, %v8422
    %v9210 = vunpack.c.l.s4 1983009808
    %v9211 = vunpack.c.0.s8 %v9210
    %v9212 = vlaneseq
    %v9213 = vshrl.u32 %v9212, 7
    %v9214 = vsub.s32 %v9211, %v9213
    %v9215 = vrot.slane %v8422, %v9214
    %v9217 = vunpack.c.l.s4 1983009808
    %v9218 = vunpack.c.0.s8 %v9217
    %v9219 = vlaneseq
    %v9220 = vshrl.u32 %v9219, 7
    %v9221 = vsub.s32 %v9218, %v9220
    %v9222 = vrot.slane %v9208, %v9221
    %v9223 = vcombine.high %v9215, %v9215
    %v9224 = vcombine.high %v9222, %v9222
    %v9225 = vcombine.high %v8423, %v8423
    %v9227 = vunpack.c.l.s4 1983009808
    %v9228 = vunpack.c.0.s8 %v9227
    %v9229 = vlaneseq
    %v9230 = vshrl.u32 %v9229, 7
    %v9231 = vsub.s32 %v9228, %v9230
    %v9232 = vrot.slane %v8423, %v9231
    %v9234 = vunpack.c.l.s4 1983009808
    %v9235 = vunpack.c.0.s8 %v9234
    %v9236 = vlaneseq
    %v9237 = vshrl.u32 %v9236, 7
    %v9238 = vsub.s32 %v9235, %v9237
    %v9239 = vrot.slane %v9225, %v9238
    %v9240 = vcombine.high %v9232, %v9232
    %v9241 = vcombine.high %v9239, %v9239
    %v9242 = vcombine.high %v8424, %v8424
    %v9244 = vunpack.c.l.s4 1983009808
    %v9245 = vunpack.c.0.s8 %v9244
    %v9246 = vlaneseq
    %v9247 = vshrl.u32 %v9246, 7
    %v9248 = vsub.s32 %v9245, %v9247
    %v9249 = vrot.slane %v8424, %v9248
    %v9251 = vunpack.c.l.s4 1983009808
    %v9252 = vunpack.c.0.s8 %v9251
    %v9253 = vlaneseq
    %v9254 = vshrl.u32 %v9253, 7
    %v9255 = vsub.s32 %v9252, %v9254
    %v9256 = vrot.slane %v9242, %v9255
    %v9257 = vcombine.high %v9249, %v9249
    %v9258 = vcombine.high %v9256, %v9256
    %v9259 = vcombine.high %v8425, %v8425
    %v9261 = vunpack.c.l.s4 1983009808
    %v9262 = vunpack.c.0.s8 %v9261
    %v9263 = vlaneseq
    %v9264 = vshrl.u32 %v9263, 7
    %v9265 = vsub.s32 %v9262, %v9264
    %v9266 = vrot.slane %v8425, %v9265
    %v9268 = vunpack.c.l.s4 1983009808
    %v9269 = vunpack.c.0.s8 %v9268
    %v9270 = vlaneseq
    %v9271 = vshrl.u32 %v9270, 7
    %v9272 = vsub.s32 %v9269, %v9271
    %v9273 = vrot.slane %v9259, %v9272
    %v9274 = vcombine.high %v9266, %v9266
    %v9275 = vcombine.high %v9273, %v9273
    %v9276 = vcombine.high %v8426, %v8426
    %v9278 = vunpack.c.l.s4 1983009808
    %v9279 = vunpack.c.0.s8 %v9278
    %v9280 = vlaneseq
    %v9281 = vshrl.u32 %v9280, 7
    %v9282 = vsub.s32 %v9279, %v9281
    %v9283 = vrot.slane %v8426, %v9282
    %v9285 = vunpack.c.l.s4 1983009808
    %v9286 = vunpack.c.0.s8 %v9285
    %v9287 = vlaneseq
    %v9288 = vshrl.u32 %v9287, 7
    %v9289 = vsub.s32 %v9286, %v9288
    %v9290 = vrot.slane %v9276, %v9289
    %v9291 = vcombine.high %v9283, %v9283
    %v9292 = vcombine.high %v9290, %v9290
    %v9293 = vcombine.high %v8427, %v8427
    %v9295 = vunpack.c.l.s4 1983009808
    %v9296 = vunpack.c.0.s8 %v9295
    %v9297 = vlaneseq
    %v9298 = vshrl.u32 %v9297, 7
    %v9299 = vsub.s32 %v9296, %v9298
    %v9300 = vrot.slane %v8427, %v9299
    %v9302 = vunpack.c.l.s4 1983009808
    %v9303 = vunpack.c.0.s8 %v9302
    %v9304 = vlaneseq
    %v9305 = vshrl.u32 %v9304, 7
    %v9306 = vsub.s32 %v9303, %v9305
    %v9307 = vrot.slane %v9293, %v9306
    %v9308 = vcombine.high %v9300, %v9300
    %v9309 = vcombine.high %v9307, %v9307
    %v9506 = vrot.slane %v8484, 7
    %v9507 = vrot.slane %v9506, 2
    %v9508 = vrot.slane %v8492, 7
    %v9509 = vrot.slane %v9508, 2
    %v9510 = vrot.slane %v8491, 7
    %v9511 = vrot.slane %v9510, 2
    %v9512 = vrot.slane %v8493, 7
    %v9513 = vrot.slane %v9512, 2
    %v9514 = vrot.slane %v8501, 7
    %v9515 = vrot.slane %v9514, 2
    %v9516 = vrot.slane %v8509, 7
    %v9517 = vrot.slane %v9516, 2
    %v9518 = vrot.slane %v8508, 7
    %v9519 = vrot.slane %v9518, 2
    %v9520 = vrot.slane %v8542, 7
    %v9521 = vrot.slane %v9520, 2
    %v9522 = vrot.slane %v8544, 7
    %v9523 = vrot.slane %v9522, 2
    %v9524 = vrot.slane %v8552, 7
    %v9525 = vrot.slane %v9524, 2
    %v9526 = vrot.slane %v8560, 7
    %v9527 = vrot.slane %v9526, 2
    %v9528 = vrot.slane %v8559, 7
    %v9529 = vrot.slane %v9528, 2
    %v9530 = vrot.slane %v8561, 7
    %v9531 = vrot.slane %v9530, 2
    %v9532 = vrot.slane %v8569, 7
    %v9533 = vrot.slane %v9532, 2
    %v9534 = vrot.slane %v8603, 7
    %v9535 = vrot.slane %v9534, 2
    %v9536 = vrot.slane %v8611, 7
    %v9537 = vrot.slane %v9536, 2
    %v9538 = vrot.slane %v8610, 7
    %v9539 = vrot.slane %v9538, 2
    %v9540 = vrot.slane %v8612, 7
    %v9541 = vrot.slane %v9540, 2
    %v9542 = vrot.slane %v8620, 7
    %v9543 = vrot.slane %v9542, 2
    %v9544 = vrot.slane %v8628, 7
    %v9545 = vrot.slane %v9544, 2
    %v9546 = vrot.slane %v8627, 7
    %v9547 = vrot.slane %v9546, 2
    %v9548 = vrot.slane %v8661, 7
    %v9549 = vrot.slane %v9548, 2
    %v9550 = vrot.slane %v8663, 7
    %v9551 = vrot.slane %v9550, 2
    %v9552 = vrot.slane %v8671, 7
    %v9553 = vrot.slane %v9552, 2
    %v9554 = vrot.slane %v8679, 7
    %v9555 = vrot.slane %v9554, 2
    %v9556 = vrot.slane %v8678, 7
    %v9557 = vrot.slane %v9556, 2
    %v9558 = vrot.slane %v8680, 7
    %v9559 = vrot.slane %v9558, 2
    %v9560 = vrot.slane %v8688, 7
    %v9561 = vrot.slane %v9560, 2
    %v9562 = vrot.slane %v8722, 7
    %v9563 = vrot.slane %v9562, 2
    %v9564 = vrot.slane %v8730, 7
    %v9565 = vrot.slane %v9564, 2
    %v9566 = vrot.slane %v8729, 7
    %v9567 = vrot.slane %v9566, 2
    %v9568 = vrot.slane %v8731, 7
    %v9569 = vrot.slane %v9568, 2
    %v9570 = vrot.slane %v8739, 7
    %v9571 = vrot.slane %v9570, 2
    %v9572 = vrot.slane %v8747, 7
    %v9573 = vrot.slane %v9572, 2
    %v9574 = vrot.slane %v8746, 7
    %v9575 = vrot.slane %v9574, 2
    %v9576 = vrot.slane %v8780, 7
    %v9577 = vrot.slane %v9576, 2
    %v9578 = vrot.slane %v8782, 7
    %v9579 = vrot.slane %v9578, 2
    %v9580 = vrot.slane %v8790, 7
    %v9581 = vrot.slane %v9580, 2
    %v9582 = vrot.slane %v8798, 7
    %v9583 = vrot.slane %v9582, 2
    %v9584 = vrot.slane %v8797, 7
    %v9585 = vrot.slane %v9584, 2
    %v9586 = vrot.slane %v8799, 7
    %v9587 = vrot.slane %v9586, 2
    %v9588 = vrot.slane %v8807, 7
    %v9589 = vrot.slane %v9588, 2
    %v9590 = vrot.slane %v8841, 7
    %v9591 = vrot.slane %v9590, 2
    %v9592 = vrot.slane %v8849, 7
    %v9593 = vrot.slane %v9592, 2
    %v9594 = vrot.slane %v8848, 7
    %v9595 = vrot.slane %v9594, 2
    %v9596 = vrot.slane %v8850, 7
    %v9597 = vrot.slane %v9596, 2
    %v9598 = vrot.slane %v8858, 7
    %v9599 = vrot.slane %v9598, 2
    %v9600 = vrot.slane %v8866, 7
    %v9601 = vrot.slane %v9600, 2
    %v9602 = vrot.slane %v8865, 7
    %v9603 = vrot.slane %v9602, 2
    %v9604 = vrot.slane %v8899, 7
    %v9605 = vrot.slane %v9604, 2
    %v9606 = vrot.slane %v8901, 7
    %v9607 = vrot.slane %v9606, 2
    %v9608 = vrot.slane %v8909, 7
    %v9609 = vrot.slane %v9608, 2
    %v9610 = vrot.slane %v8917, 7
    %v9611 = vrot.slane %v9610, 2
    %v9612 = vrot.slane %v8916, 7
    %v9613 = vrot.slane %v9612, 2
    %v9614 = vrot.slane %v8918, 7
    %v9615 = vrot.slane %v9614, 2
    %v9616 = vrot.slane %v8926, 7
    %v9617 = vrot.slane %v9616, 2
    %v9618 = vrot.slane %v8960, 7
    %v9619 = vrot.slane %v9618, 2
    %v9620 = vrot.slane %v8968, 7
    %v9621 = vrot.slane %v9620, 2
    %v9622 = vrot.slane %v8967, 7
    %v9623 = vrot.slane %v9622, 2
    %v9624 = vrot.slane %v8969, 7
    %v9625 = vrot.slane %v9624, 2
    %v9626 = vrot.slane %v8977, 7
    %v9627 = vrot.slane %v9626, 2
    %v9628 = vrot.slane %v8985, 7
    %v9629 = vrot.slane %v9628, 2
    %v9630 = vrot.slane %v8984, 7
    %v9631 = vrot.slane %v9630, 2
    %v9632 = vrot.slane %v9018, 7
    %v9633 = vrot.slane %v9632, 2
    %v9634 = vrot.slane %v9020, 7
    %v9635 = vrot.slane %v9634, 2
    %v9636 = vrot.slane %v9028, 7
    %v9637 = vrot.slane %v9636, 2
    %v9638 = vrot.slane %v9036, 7
    %v9639 = vrot.slane %v9638, 2
    %v9640 = vrot.slane %v9035, 7
    %v9641 = vrot.slane %v9640, 2
    %v9642 = vrot.slane %v9037, 7
    %v9643 = vrot.slane %v9642, 2
    %v9644 = vrot.slane %v9045, 7
    %v9645 = vrot.slane %v9644, 2
    %v9646 = vrot.slane %v9079, 7
    %v9647 = vrot.slane %v9646, 2
    %v9648 = vrot.slane %v9087, 7
    %v9649 = vrot.slane %v9648, 2
    %v9650 = vrot.slane %v9086, 7
    %v9651 = vrot.slane %v9650, 2
    %v9652 = vrot.slane %v9088, 7
    %v9653 = vrot.slane %v9652, 2
    %v9654 = vrot.slane %v9096, 7
    %v9655 = vrot.slane %v9654, 2
    %v9656 = vrot.slane %v9104, 7
    %v9657 = vrot.slane %v9656, 2
    %v9658 = vrot.slane %v9103, 7
    %v9659 = vrot.slane %v9658, 2
    %v9660 = vrot.slane %v9137, 7
    %v9661 = vrot.slane %v9660, 2
    %v9662 = vrot.slane %v9139, 7
    %v9663 = vrot.slane %v9662, 2
    %v9664 = vrot.slane %v9147, 7
    %v9665 = vrot.slane %v9664, 2
    %v9666 = vrot.slane %v9155, 7
    %v9667 = vrot.slane %v9666, 2
    %v9668 = vrot.slane %v9154, 7
    %v9669 = vrot.slane %v9668, 2
    %v9670 = vrot.slane %v9156, 7
    %v9671 = vrot.slane %v9670, 2
    %v9672 = vrot.slane %v9164, 7
    %v9673 = vrot.slane %v9672, 2
    %v9674 = vrot.slane %v9198, 7
    %v9675 = vrot.slane %v9674, 2
    %v9676 = vrot.slane %v9206, 7
    %v9677 = vrot.slane %v9676, 2
    %v9678 = vrot.slane %v9205, 7
    %v9679 = vrot.slane %v9678, 2
    %v9680 = vrot.slane %v9207, 7
    %v9681 = vrot.slane %v9680, 2
    %v9682 = vrot.slane %v9215, 7
    %v9683 = vrot.slane %v9682, 2
    %v9684 = vrot.slane %v9223, 7
    %v9685 = vrot.slane %v9684, 2
    %v9686 = vrot.slane %v9222, 7
    %v9687 = vrot.slane %v9686, 2
    %v9688 = vrot.slane %v9256, 7
    %v9689 = vrot.slane %v9688, 2
    %v9690 = vrot.slane %v9258, 7
    %v9691 = vrot.slane %v9690, 2
    %v9692 = vrot.slane %v9266, 7
    %v9693 = vrot.slane %v9692, 2
    %v9694 = vrot.slane %v9274, 7
    %v9695 = vrot.slane %v9694, 2
    %v9696 = vrot.slane %v9273, 7
    %v9697 = vrot.slane %v9696, 2
    %v9698 = vrot.slane %v9275, 7
    %v9699 = vrot.slane %v9698, 2
    %v9700 = vrot.slane %v9283, 7
    %v9701 = vrot.slane %v9700, 2
    %v9800 = vmax.f32 %v8484, %v9507
    %v9801 = vmax.f32 %v8492, %v9509
    %v9802 = vmax.f32 %v8491, %v9511
    %v9803 = vmax.f32 %v8493, %v9513
    %v9804 = vmax.f32 %v8501, %v9515
    %v9805 = vmax.f32 %v8509, %v9517
    %v9806 = vmax.f32 %v8508, %v9519
    %v9807 = vmax.f32 %v8542, %v9521
    %v9808 = vmax.f32 %v8544, %v9523
    %v9809 = vmax.f32 %v8552, %v9525
    %v9810 = vmax.f32 %v8560, %v9527
    %v9811 = vmax.f32 %v8559, %v9529
    %v9812 = vmax.f32 %v8561, %v9531
    %v9813 = vmax.f32 %v8569, %v9533
    %v9814 = vmax.f32 %v8603, %v9535
    %v9815 = vmax.f32 %v8611, %v9537
    %v9816 = vmax.f32 %v8610, %v9539
    %v9817 = vmax.f32 %v8612, %v9541
    %v9818 = vmax.f32 %v8620, %v9543
    %v9819 = vmax.f32 %v8628, %v9545
    %v9820 = vmax.f32 %v8627, %v9547
    %v9821 = vmax.f32 %v8661, %v9549
    %v9822 = vmax.f32 %v8663, %v9551
    %v9823 = vmax.f32 %v8671, %v9553
    %v9824 = vmax.f32 %v8679, %v9555
    %v9825 = vmax.f32 %v8678, %v9557
    %v9826 = vmax.f32 %v8680, %v9559
    %v9827 = vmax.f32 %v8688, %v9561
    %v9828 = vmax.f32 %v8722, %v9563
    %v9829 = vmax.f32 %v8730, %v9565
    %v9830 = vmax.f32 %v8729, %v9567
    %v9831 = vmax.f32 %v8731, %v9569
    %v9832 = vmax.f32 %v8739, %v9571
    %v9833 = vmax.f32 %v8747, %v9573
    %v9834 = vmax.f32 %v8746, %v9575
    %v9835 = vmax.f32 %v8780, %v9577
    %v9836 = vmax.f32 %v8782, %v9579
    %v9837 = vmax.f32 %v8790, %v9581
    %v9838 = vmax.f32 %v8798, %v9583
    %v9839 = vmax.f32 %v8797, %v9585
    %v9840 = vmax.f32 %v8799, %v9587
    %v9841 = vmax.f32 %v8807, %v9589
    %v9842 = vmax.f32 %v8841, %v9591
    %v9843 = vmax.f32 %v8849, %v9593
    %v9844 = vmax.f32 %v8848, %v9595
    %v9845 = vmax.f32 %v8850, %v9597
    %v9846 = vmax.f32 %v8858, %v9599
    %v9847 = vmax.f32 %v8866, %v9601
    %v9848 = vmax.f32 %v8865, %v9603
    %v9849 = vmax.f32 %v8899, %v9605
    %v9850 = vmax.f32 %v8901, %v9607
    %v9851 = vmax.f32 %v8909, %v9609
    %v9852 = vmax.f32 %v8917, %v9611
    %v9853 = vmax.f32 %v8916, %v9613
    %v9854 = vmax.f32 %v8918, %v9615
    %v9855 = vmax.f32 %v8926, %v9617
    %v9856 = vmax.f32 %v8960, %v9619
    %v9857 = vmax.f32 %v8968, %v9621
    %v9858 = vmax.f32 %v8967, %v9623
    %v9859 = vmax.f32 %v8969, %v9625
    %v9860 = vmax.f32 %v8977, %v9627
    %v9861 = vmax.f32 %v8985, %v9629
    %v9862 = vmax.f32 %v8984, %v9631
    %v9863 = vmax.f32 %v9018, %v9633
    %v9864 = vmax.f32 %v9020, %v9635
    %v9865 = vmax.f32 %v9028, %v9637
    %v9866 = vmax.f32 %v9036, %v9639
    %v9867 = vmax.f32 %v9035, %v9641
    %v9868 = vmax.f32 %v9037, %v9643
    %v9869 = vmax.f32 %v9045, %v9645
    %v9870 = vmax.f32 %v9079, %v9647
    %v9871 = vmax.f32 %v9087, %v9649
    %v9872 = vmax.f32 %v9086, %v9651
    %v9873 = vmax.f32 %v9088, %v9653
    %v9874 = vmax.f32 %v9096, %v9655
    %v9875 = vmax.f32 %v9104, %v9657
    %v9876 = vmax.f32 %v9103, %v9659
    %v9877 = vmax.f32 %v9137, %v9661
    %v9878 = vmax.f32 %v9139, %v9663
    %v9879 = vmax.f32 %v9147, %v9665
    %v9880 = vmax.f32 %v9155, %v9667
    %v9881 = vmax.f32 %v9154, %v9669
    %v9882 = vmax.f32 %v9156, %v9671
    %v9883 = vmax.f32 %v9164, %v9673
    %v9884 = vmax.f32 %v9198, %v9675
    %v9885 = vmax.f32 %v9206, %v9677
    %v9886 = vmax.f32 %v9205, %v9679
    %v9887 = vmax.f32 %v9207, %v9681
    %v9888 = vmax.f32 %v9215, %v9683
    %v9889 = vmax.f32 %v9223, %v9685
    %v9890 = vmax.f32 %v9222, %v9687
    %v9891 = vmax.f32 %v9256, %v9689
    %v9892 = vmax.f32 %v9258, %v9691
    %v9893 = vmax.f32 %v9266, %v9693
    %v9894 = vmax.f32 %v9274, %v9695
    %v9895 = vmax.f32 %v9273, %v9697
    %v9896 = vmax.f32 %v9275, %v9699
    %v9897 = vmax.f32 %v9283, %v9701
    %v9898 = vmax.f32 %v9800, %v8510
    %v9899 = vmax.f32 %v9801, %v8518
    %v9900 = vmax.f32 %v9802, %v8526
    %v9901 = vmax.f32 %v9803, %v8525
    %v9902 = vmax.f32 %v9804, %v8527
    %v9903 = vmax.f32 %v9805, %v8535
    %v9904 = vmax.f32 %v9806, %v8543
    %v9905 = vmax.f32 %v9807, %v8577
    %v9906 = vmax.f32 %v9808, %v8576
    %v9907 = vmax.f32 %v9809, %v8578
    %v9908 = vmax.f32 %v9810, %v8586
    %v9909 = vmax.f32 %v9811, %v8594
    %v9910 = vmax.f32 %v9812, %v8593
    %v9911 = vmax.f32 %v9813, %v8595
    %v9912 = vmax.f32 %v9814, %v8629
    %v9913 = vmax.f32 %v9815, %v8637
    %v9914 = vmax.f32 %v9816, %v8645
    %v9915 = vmax.f32 %v9817, %v8644
    %v9916 = vmax.f32 %v9818, %v8646
    %v9917 = vmax.f32 %v9819, %v8654
    %v9918 = vmax.f32 %v9820, %v8662
    %v9919 = vmax.f32 %v9821, %v8696
    %v9920 = vmax.f32 %v9822, %v8695
    %v9921 = vmax.f32 %v9823, %v8697
    %v9922 = vmax.f32 %v9824, %v8705
    %v9923 = vmax.f32 %v9825, %v8713
    %v9924 = vmax.f32 %v9826, %v8712
    %v9925 = vmax.f32 %v9827, %v8714
    %v9926 = vmax.f32 %v9828, %v8748
    %v9927 = vmax.f32 %v9829, %v8756
    %v9928 = vmax.f32 %v9830, %v8764
    %v9929 = vmax.f32 %v9831, %v8763
    %v9930 = vmax.f32 %v9832, %v8765
    %v9931 = vmax.f32 %v9833, %v8773
    %v9932 = vmax.f32 %v9834, %v8781
    %v9933 = vmax.f32 %v9835, %v8815
    %v9934 = vmax.f32 %v9836, %v8814
    %v9935 = vmax.f32 %v9837, %v8816
    %v9936 = vmax.f32 %v9838, %v8824
    %v9937 = vmax.f32 %v9839, %v8832
    %v9938 = vmax.f32 %v9840, %v8831
    %v9939 = vmax.f32 %v9841, %v8833
    %v9940 = vmax.f32 %v9842, %v8867
    %v9941 = vmax.f32 %v9843, %v8875
    %v9942 = vmax.f32 %v9844, %v8883
    %v9943 = vmax.f32 %v9845, %v8882
    %v9944 = vmax.f32 %v9846, %v8884
    %v9945 = vmax.f32 %v9847, %v8892
    %v9946 = vmax.f32 %v9848, %v8900
    %v9947 = vmax.f32 %v9849, %v8934
    %v9948 = vmax.f32 %v9850, %v8933
    %v9949 = vmax.f32 %v9851, %v8935
    %v9950 = vmax.f32 %v9852, %v8943
    %v9951 = vmax.f32 %v9853, %v8951
    %v9952 = vmax.f32 %v9854, %v8950
    %v9953 = vmax.f32 %v9855, %v8952
    %v9954 = vmax.f32 %v9856, %v8986
    %v9955 = vmax.f32 %v9857, %v8994
    %v9956 = vmax.f32 %v9858, %v9002
    %v9957 = vmax.f32 %v9859, %v9001
    %v9958 = vmax.f32 %v9860, %v9003
    %v9959 = vmax.f32 %v9861, %v9011
    %v9960 = vmax.f32 %v9862, %v9019
    %v9961 = vmax.f32 %v9863, %v9053
    %v9962 = vmax.f32 %v9864, %v9052
    %v9963 = vmax.f32 %v9865, %v9054
    %v9964 = vmax.f32 %v9866, %v9062
    %v9965 = vmax.f32 %v9867, %v9070
    %v9966 = vmax.f32 %v9868, %v9069
    %v9967 = vmax.f32 %v9869, %v9071
    %v9968 = vmax.f32 %v9870, %v9105
    %v9969 = vmax.f32 %v9871, %v9113
    %v9970 = vmax.f32 %v9872, %v9121
    %v9971 = vmax.f32 %v9873, %v9120
    %v9972 = vmax.f32 %v9874, %v9122
    %v9973 = vmax.f32 %v9875, %v9130
    %v9974 = vmax.f32 %v9876, %v9138
    %v9975 = vmax.f32 %v9877, %v9172
    %v9976 = vmax.f32 %v9878, %v9171
    %v9977 = vmax.f32 %v9879, %v9173
    %v9978 = vmax.f32 %v9880, %v9181
    %v9979 = vmax.f32 %v9881, %v9189
    %v9980 = vmax.f32 %v9882, %v9188
    %v9981 = vmax.f32 %v9883, %v9190
    %v9982 = vmax.f32 %v9884, %v9224
    %v9983 = vmax.f32 %v9885, %v9232
    %v9984 = vmax.f32 %v9886, %v9240
    %v9985 = vmax.f32 %v9887, %v9239
    %v9986 = vmax.f32 %v9888, %v9241
    %v9987 = vmax.f32 %v9889, %v9249
    %v9988 = vmax.f32 %v9890, %v9257
    %v9989 = vmax.f32 %v9891, %v9291
    %v9990 = vmax.f32 %v9892, %v9290
    %v9991 = vmax.f32 %v9893, %v9292
    %v9992 = vmax.f32 %v9894, %v9300
    %v9993 = vmax.f32 %v9895, %v9308
    %v9994 = vmax.f32 %v9896, %v9307
    %v9995 = vmax.f32 %v9897, %v9309
    %v9996 = vrot.slane %v8510, 7
    %v9997 = vrot.slane %v9996, 2
    %v9998 = vrot.slane %v8518, 7
    %v9999 = vrot.slane %v9998, 2
    %v10000 = vrot.slane %v8526, 7
    %v10001 = vrot.slane %v10000, 2
    %v10002 = vrot.slane %v8525, 7
    %v10003 = vrot.slane %v10002, 2
    %v10004 = vrot.slane %v8527, 7
    %v10005 = vrot.slane %v10004, 2
    %v10006 = vrot.slane %v8535, 7
    %v10007 = vrot.slane %v10006, 2
    %v10008 = vrot.slane %v8543, 7
    %v10009 = vrot.slane %v10008, 2
    %v10010 = vrot.slane %v8577, 7
    %v10011 = vrot.slane %v10010, 2
    %v10012 = vrot.slane %v8576, 7
    %v10013 = vrot.slane %v10012, 2
    %v10014 = vrot.slane %v8578, 7
    %v10015 = vrot.slane %v10014, 2
    %v10016 = vrot.slane %v8586, 7
    %v10017 = vrot.slane %v10016, 2
    %v10018 = vrot.slane %v8594, 7
    %v10019 = vrot.slane %v10018, 2
    %v10020 = vrot.slane %v8593, 7
    %v10021 = vrot.slane %v10020, 2
    %v10022 = vrot.slane %v8595, 7
    %v10023 = vrot.slane %v10022, 2
    %v10024 = vrot.slane %v8629, 7
    %v10025 = vrot.slane %v10024, 2
    %v10026 = vrot.slane %v8637, 7
    %v10027 = vrot.slane %v10026, 2
    %v10028 = vrot.slane %v8645, 7
    %v10029 = vrot.slane %v10028, 2
    %v10030 = vrot.slane %v8644, 7
    %v10031 = vrot.slane %v10030, 2
    %v10032 = vrot.slane %v8646, 7
    %v10033 = vrot.slane %v10032, 2
    %v10034 = vrot.slane %v8654, 7
    %v10035 = vrot.slane %v10034, 2
    %v10036 = vrot.slane %v8662, 7
    %v10037 = vrot.slane %v10036, 2
    %v10038 = vrot.slane %v8696, 7
    %v10039 = vrot.slane %v10038, 2
    %v10040 = vrot.slane %v8695, 7
    %v10041 = vrot.slane %v10040, 2
    %v10042 = vrot.slane %v8697, 7
    %v10043 = vrot.slane %v10042, 2
    %v10044 = vrot.slane %v8705, 7
    %v10045 = vrot.slane %v10044, 2
    %v10046 = vrot.slane %v8713, 7
    %v10047 = vrot.slane %v10046, 2
    %v10048 = vrot.slane %v8712, 7
    %v10049 = vrot.slane %v10048, 2
    %v10050 = vrot.slane %v8714, 7
    %v10051 = vrot.slane %v10050, 2
    %v10052 = vrot.slane %v8748, 7
    %v10053 = vrot.slane %v10052, 2
    %v10054 = vrot.slane %v8756, 7
    %v10055 = vrot.slane %v10054, 2
    %v10056 = vrot.slane %v8764, 7
    %v10057 = vrot.slane %v10056, 2
    %v10058 = vrot.slane %v8763, 7
    %v10059 = vrot.slane %v10058, 2
    %v10060 = vrot.slane %v8765, 7
    %v10061 = vrot.slane %v10060, 2
    %v10062 = vrot.slane %v8773, 7
    %v10063 = vrot.slane %v10062, 2
    %v10064 = vrot.slane %v8781, 7
    %v10065 = vrot.slane %v10064, 2
    %v10066 = vrot.slane %v8815, 7
    %v10067 = vrot.slane %v10066, 2
    %v10068 = vrot.slane %v8814, 7
    %v10069 = vrot.slane %v10068, 2
    %v10070 = vrot.slane %v8816, 7
    %v10071 = vrot.slane %v10070, 2
    %v10072 = vrot.slane %v8824, 7
    %v10073 = vrot.slane %v10072, 2
    %v10074 = vrot.slane %v8832, 7
    %v10075 = vrot.slane %v10074, 2
    %v10076 = vrot.slane %v8831, 7
    %v10077 = vrot.slane %v10076, 2
    %v10078 = vrot.slane %v8833, 7
    %v10079 = vrot.slane %v10078, 2
    %v10080 = vrot.slane %v8867, 7
    %v10081 = vrot.slane %v10080, 2
    %v10082 = vrot.slane %v8875, 7
    %v10083 = vrot.slane %v10082, 2
    %v10084 = vrot.slane %v8883, 7
    %v10085 = vrot.slane %v10084, 2
    %v10086 = vrot.slane %v8882, 7
    %v10087 = vrot.slane %v10086, 2
    %v10088 = vrot.slane %v8884, 7
    %v10089 = vrot.slane %v10088, 2
    %v10090 = vrot.slane %v8892, 7
    %v10091 = vrot.slane %v10090, 2
    %v10092 = vrot.slane %v8900, 7
    %v10093 = vrot.slane %v10092, 2
    %v10094 = vrot.slane %v8934, 7
    %v10095 = vrot.slane %v10094, 2
    %v10096 = vrot.slane %v8933, 7
    %v10097 = vrot.slane %v10096, 2
    %v10098 = vrot.slane %v8935, 7
    %v10099 = vrot.slane %v10098, 2
    %v10100 = vrot.slane %v8943, 7
    %v10101 = vrot.slane %v10100, 2
    %v10102 = vrot.slane %v8951, 7
    %v10103 = vrot.slane %v10102, 2
    %v10104 = vrot.slane %v8950, 7
    %v10105 = vrot.slane %v10104, 2
    %v10106 = vrot.slane %v8952, 7
    %v10107 = vrot.slane %v10106, 2
    %v10108 = vrot.slane %v8986, 7
    %v10109 = vrot.slane %v10108, 2
    %v10110 = vrot.slane %v8994, 7
    %v10111 = vrot.slane %v10110, 2
    %v10112 = vrot.slane %v9002, 7
    %v10113 = vrot.slane %v10112, 2
    %v10114 = vrot.slane %v9001, 7
    %v10115 = vrot.slane %v10114, 2
    %v10116 = vrot.slane %v9003, 7
    %v10117 = vrot.slane %v10116, 2
    %v10118 = vrot.slane %v9011, 7
    %v10119 = vrot.slane %v10118, 2
    %v10120 = vrot.slane %v9019, 7
    %v10121 = vrot.slane %v10120, 2
    %v10122 = vrot.slane %v9053, 7
    %v10123 = vrot.slane %v10122, 2
    %v10124 = vrot.slane %v9052, 7
    %v10125 = vrot.slane %v10124, 2
    %v10126 = vrot.slane %v9054, 7
    %v10127 = vrot.slane %v10126, 2
    %v10128 = vrot.slane %v9062, 7
    %v10129 = vrot.slane %v10128, 2
    %v10130 = vrot.slane %v9070, 7
    %v10131 = vrot.slane %v10130, 2
    %v10132 = vrot.slane %v9069, 7
    %v10133 = vrot.slane %v10132, 2
    %v10134 = vrot.slane %v9071, 7
    %v10135 = vrot.slane %v10134, 2
    %v10136 = vrot.slane %v9105, 7
    %v10137 = vrot.slane %v10136, 2
    %v10138 = vrot.slane %v9113, 7
    %v10139 = vrot.slane %v10138, 2
    %v10140 = vrot.slane %v9121, 7
    %v10141 = vrot.slane %v10140, 2
    %v10142 = vrot.slane %v9120, 7
    %v10143 = vrot.slane %v10142, 2
    %v10144 = vrot.slane %v9122, 7
    %v10145 = vrot.slane %v10144, 2
    %v10146 = vrot.slane %v9130, 7
    %v10147 = vrot.slane %v10146, 2
    %v10148 = vrot.slane %v9138, 7
    %v10149 = vrot.slane %v10148, 2
    %v10150 = vrot.slane %v9172, 7
    %v10151 = vrot.slane %v10150, 2
    %v10152 = vrot.slane %v9171, 7
    %v10153 = vrot.slane %v10152, 2
    %v10154 = vrot.slane %v9173, 7
    %v10155 = vrot.slane %v10154, 2
    %v10156 = vrot.slane %v9181, 7
    %v10157 = vrot.slane %v10156, 2
    %v10158 = vrot.slane %v9189, 7
    %v10159 = vrot.slane %v10158, 2
    %v10160 = vrot.slane %v9188, 7
    %v10161 = vrot.slane %v10160, 2
    %v10162 = vrot.slane %v9190, 7
    %v10163 = vrot.slane %v10162, 2
    %v10164 = vrot.slane %v9224, 7
    %v10165 = vrot.slane %v10164, 2
    %v10166 = vrot.slane %v9232, 7
    %v10167 = vrot.slane %v10166, 2
    %v10168 = vrot.slane %v9240, 7
    %v10169 = vrot.slane %v10168, 2
    %v10170 = vrot.slane %v9239, 7
    %v10171 = vrot.slane %v10170, 2
    %v10172 = vrot.slane %v9241, 7
    %v10173 = vrot.slane %v10172, 2
    %v10174 = vrot.slane %v9249, 7
    %v10175 = vrot.slane %v10174, 2
    %v10176 = vrot.slane %v9257, 7
    %v10177 = vrot.slane %v10176, 2
    %v10178 = vrot.slane %v9291, 7
    %v10179 = vrot.slane %v10178, 2
    %v10180 = vrot.slane %v9290, 7
    %v10181 = vrot.slane %v10180, 2
    %v10182 = vrot.slane %v9292, 7
    %v10183 = vrot.slane %v10182, 2
    %v10184 = vrot.slane %v9300, 7
    %v10185 = vrot.slane %v10184, 2
    %v10186 = vrot.slane %v9308, 7
    %v10187 = vrot.slane %v10186, 2
    %v10188 = vrot.slane %v9307, 7
    %v10189 = vrot.slane %v10188, 2
    %v10190 = vrot.slane %v9309, 7
    %v10191 = vrot.slane %v10190, 2
    %v10290 = vmax.f32 %v9898, %v9997
    %v10291 = vmax.f32 %v9899, %v9999
    %v10292 = vmax.f32 %v9900, %v10001
    %v10293 = vmax.f32 %v9901, %v10003
    %v10294 = vmax.f32 %v9902, %v10005
    %v10295 = vmax.f32 %v9903, %v10007
    %v10296 = vmax.f32 %v9904, %v10009
    %v10297 = vmax.f32 %v9905, %v10011
    %v10298 = vmax.f32 %v9906, %v10013
    %v10299 = vmax.f32 %v9907, %v10015
    %v10300 = vmax.f32 %v9908, %v10017
    %v10301 = vmax.f32 %v9909, %v10019
    %v10302 = vmax.f32 %v9910, %v10021
    %v10303 = vmax.f32 %v9911, %v10023
    %v10304 = vmax.f32 %v9912, %v10025
    %v10305 = vmax.f32 %v9913, %v10027
    %v10306 = vmax.f32 %v9914, %v10029
    %v10307 = vmax.f32 %v9915, %v10031
    %v10308 = vmax.f32 %v9916, %v10033
    %v10309 = vmax.f32 %v9917, %v10035
    %v10310 = vmax.f32 %v9918, %v10037
    %v10311 = vmax.f32 %v9919, %v10039
    %v10312 = vmax.f32 %v9920, %v10041
    %v10313 = vmax.f32 %v9921, %v10043
    %v10314 = vmax.f32 %v9922, %v10045
    %v10315 = vmax.f32 %v9923, %v10047
    %v10316 = vmax.f32 %v9924, %v10049
    %v10317 = vmax.f32 %v9925, %v10051
    %v10318 = vmax.f32 %v9926, %v10053
    %v10319 = vmax.f32 %v9927, %v10055
    %v10320 = vmax.f32 %v9928, %v10057
    %v10321 = vmax.f32 %v9929, %v10059
    %v10322 = vmax.f32 %v9930, %v10061
    %v10323 = vmax.f32 %v9931, %v10063
    %v10324 = vmax.f32 %v9932, %v10065
    %v10325 = vmax.f32 %v9933, %v10067
    %v10326 = vmax.f32 %v9934, %v10069
    %v10327 = vmax.f32 %v9935, %v10071
    %v10328 = vmax.f32 %v9936, %v10073
    %v10329 = vmax.f32 %v9937, %v10075
    %v10330 = vmax.f32 %v9938, %v10077
    %v10331 = vmax.f32 %v9939, %v10079
    %v10332 = vmax.f32 %v9940, %v10081
    %v10333 = vmax.f32 %v9941, %v10083
    %v10334 = vmax.f32 %v9942, %v10085
    %v10335 = vmax.f32 %v9943, %v10087
    %v10336 = vmax.f32 %v9944, %v10089
    %v10337 = vmax.f32 %v9945, %v10091
    %v10338 = vmax.f32 %v9946, %v10093
    %v10339 = vmax.f32 %v9947, %v10095
    %v10340 = vmax.f32 %v9948, %v10097
    %v10341 = vmax.f32 %v9949, %v10099
    %v10342 = vmax.f32 %v9950, %v10101
    %v10343 = vmax.f32 %v9951, %v10103
    %v10344 = vmax.f32 %v9952, %v10105
    %v10345 = vmax.f32 %v9953, %v10107
    %v10346 = vmax.f32 %v9954, %v10109
    %v10347 = vmax.f32 %v9955, %v10111
    %v10348 = vmax.f32 %v9956, %v10113
    %v10349 = vmax.f32 %v9957, %v10115
    %v10350 = vmax.f32 %v9958, %v10117
    %v10351 = vmax.f32 %v9959, %v10119
    %v10352 = vmax.f32 %v9960, %v10121
    %v10353 = vmax.f32 %v9961, %v10123
    %v10354 = vmax.f32 %v9962, %v10125
    %v10355 = vmax.f32 %v9963, %v10127
    %v10356 = vmax.f32 %v9964, %v10129
    %v10357 = vmax.f32 %v9965, %v10131
    %v10358 = vmax.f32 %v9966, %v10133
    %v10359 = vmax.f32 %v9967, %v10135
    %v10360 = vmax.f32 %v9968, %v10137
    %v10361 = vmax.f32 %v9969, %v10139
    %v10362 = vmax.f32 %v9970, %v10141
    %v10363 = vmax.f32 %v9971, %v10143
    %v10364 = vmax.f32 %v9972, %v10145
    %v10365 = vmax.f32 %v9973, %v10147
    %v10366 = vmax.f32 %v9974, %v10149
    %v10367 = vmax.f32 %v9975, %v10151
    %v10368 = vmax.f32 %v9976, %v10153
    %v10369 = vmax.f32 %v9977, %v10155
    %v10370 = vmax.f32 %v9978, %v10157
    %v10371 = vmax.f32 %v9979, %v10159
    %v10372 = vmax.f32 %v9980, %v10161
    %v10373 = vmax.f32 %v9981, %v10163
    %v10374 = vmax.f32 %v9982, %v10165
    %v10375 = vmax.f32 %v9983, %v10167
    %v10376 = vmax.f32 %v9984, %v10169
    %v10377 = vmax.f32 %v9985, %v10171
    %v10378 = vmax.f32 %v9986, %v10173
    %v10379 = vmax.f32 %v9987, %v10175
    %v10380 = vmax.f32 %v9988, %v10177
    %v10381 = vmax.f32 %v9989, %v10179
    %v10382 = vmax.f32 %v9990, %v10181
    %v10383 = vmax.f32 %v9991, %v10183
    %v10384 = vmax.f32 %v9992, %v10185
    %v10385 = vmax.f32 %v9993, %v10187
    %v10386 = vmax.f32 %v9994, %v10189
    %v10387 = vmax.f32 %v9995, %v10191
    %v10388 = vlaneseq
    %vm10389 = vcmp.ge.s32.totalorder %v10388, 0
    %vm10390 = vcmp.lt.s32.totalorder %v10388, 4
    %vm10391 = vmand %vm10389, %vm10390
    %10392 = vst.msk [vmem:[#allocation3] sm:$0x1] %vm10391, %v10290
    %10393 = vst.msk [vmem:[#allocation3 + $0x2] sm:$0x1] %vm10391, %v10339
    %v10397 = vunpack.c.l.s4 1966171168
    %v10398 = vunpack.c.0.s8 %v10397
    %v10399 = vlaneseq
    %v10400 = vshrl.u32 %v10399, 7
    %v10401 = vsub.s32 %v10398, %v10400
    %v10402 = vrot.slane %v10291, %v10401
    %v10404 = vunpack.c.l.s4 1966171168
    %v10405 = vunpack.c.0.s8 %v10404
    %v10406 = vlaneseq
    %v10407 = vshrl.u32 %v10406, 7
    %v10408 = vsub.s32 %v10405, %v10407
    %v10409 = vrot.slane %v10340, %v10408
    %10410 = vrot.lane.b32.xlu0 %v10402, 4
    %v10411 = vpop.permute.xlu0 %10410
    %10412 = vrot.lane.b32.xlu0 %v10409, 4
    %v10413 = vpop.permute.xlu0 %10412
    %vm10416 = vcmp.ge.s32.totalorder %v10388, 4
    %vm10417 = vcmp.lt.s32.totalorder %v10388, 8
    %vm10418 = vmand %vm10416, %vm10417
    %10419 = vst.msk [vmem:[#allocation3] sm:$0x1] %vm10418, %v10411
    %10420 = vst.msk [vmem:[#allocation3 + $0x2] sm:$0x1] %vm10418, %v10413
    %v10424 = vunpack.c.l.s4 1966171168
    %v10425 = vunpack.c.0.s8 %v10424
    %v10426 = vlaneseq
    %v10427 = vshrl.u32 %v10426, 7
    %v10428 = vsub.s32 %v10425, %v10427
    %v10429 = vrot.slane %v10292, %v10428
    %v10431 = vunpack.c.l.s4 1966171168
    %v10432 = vunpack.c.0.s8 %v10431
    %v10433 = vlaneseq
    %v10434 = vshrl.u32 %v10433, 7
    %v10435 = vsub.s32 %v10432, %v10434
    %v10436 = vrot.slane %v10341, %v10435
    %10437 = vrot.lane.b32.xlu0 %v10429, 8
    %v10438 = vpop.permute.xlu0 %10437
    %10439 = vrot.lane.b32.xlu0 %v10436, 8
    %v10440 = vpop.permute.xlu0 %10439
    %vm10443 = vcmp.ge.s32.totalorder %v10388, 8
    %vm10444 = vcmp.lt.s32.totalorder %v10388, 12
    %vm10445 = vmand %vm10443, %vm10444
    %10446 = vst.msk [vmem:[#allocation3] sm:$0x1] %vm10445, %v10438
    %10447 = vst.msk [vmem:[#allocation3 + $0x2] sm:$0x1] %vm10445, %v10440
    %v10451 = vunpack.c.l.s4 1966171168
    %v10452 = vunpack.c.0.s8 %v10451
    %v10453 = vlaneseq
    %v10454 = vshrl.u32 %v10453, 7
    %v10455 = vsub.s32 %v10452, %v10454
    %v10456 = vrot.slane %v10293, %v10455
    %v10458 = vunpack.c.l.s4 1966171168
    %v10459 = vunpack.c.0.s8 %v10458
    %v10460 = vlaneseq
    %v10461 = vshrl.u32 %v10460, 7
    %v10462 = vsub.s32 %v10459, %v10461
    %v10463 = vrot.slane %v10342, %v10462
    %10464 = vrot.lane.b32.xlu0 %v10456, 12
    %v10465 = vpop.permute.xlu0 %10464
    %10466 = vrot.lane.b32.xlu0 %v10463, 12
    %v10467 = vpop.permute.xlu0 %10466
    %vm10470 = vcmp.ge.s32.totalorder %v10388, 12
    %vm10471 = vcmp.lt.s32.totalorder %v10388, 16
    %vm10472 = vmand %vm10470, %vm10471
    %10473 = vst.msk [vmem:[#allocation3] sm:$0x1] %vm10472, %v10465
    %10474 = vst.msk [vmem:[#allocation3 + $0x2] sm:$0x1] %vm10472, %v10467
    %v10478 = vunpack.c.l.s4 1966171168
    %v10479 = vunpack.c.0.s8 %v10478
    %v10480 = vlaneseq
    %v10481 = vshrl.u32 %v10480, 7
    %v10482 = vsub.s32 %v10479, %v10481
    %v10483 = vrot.slane %v10294, %v10482
    %v10485 = vunpack.c.l.s4 1966171168
    %v10486 = vunpack.c.0.s8 %v10485
    %v10487 = vlaneseq
    %v10488 = vshrl.u32 %v10487, 7
    %v10489 = vsub.s32 %v10486, %v10488
    %v10490 = vrot.slane %v10343, %v10489
    %10491 = vrot.lane.b32.xlu0 %v10483, 16
    %v10492 = vpop.permute.xlu0 %10491
    %10493 = vrot.lane.b32.xlu0 %v10490, 16
    %v10494 = vpop.permute.xlu0 %10493
    %vm10497 = vcmp.ge.s32.totalorder %v10388, 16
    %vm10498 = vcmp.lt.s32.totalorder %v10388, 20
    %vm10499 = vmand %vm10497, %vm10498
    %10500 = vst.msk [vmem:[#allocation3] sm:$0x1] %vm10499, %v10492
    %10501 = vst.msk [vmem:[#allocation3 + $0x2] sm:$0x1] %vm10499, %v10494
    %v10505 = vunpack.c.l.s4 1966171168
    %v10506 = vunpack.c.0.s8 %v10505
    %v10507 = vlaneseq
    %v10508 = vshrl.u32 %v10507, 7
    %v10509 = vsub.s32 %v10506, %v10508
    %v10510 = vrot.slane %v10295, %v10509
    %v10512 = vunpack.c.l.s4 1966171168
    %v10513 = vunpack.c.0.s8 %v10512
    %v10514 = vlaneseq
    %v10515 = vshrl.u32 %v10514, 7
    %v10516 = vsub.s32 %v10513, %v10515
    %v10517 = vrot.slane %v10344, %v10516
    %10518 = vrot.lane.b32.xlu0 %v10510, 20
    %v10519 = vpop.permute.xlu0 %10518
    %10520 = vrot.lane.b32.xlu0 %v10517, 20
    %v10521 = vpop.permute.xlu0 %10520
    %vm10524 = vcmp.ge.s32.totalorder %v10388, 20
    %vm10525 = vcmp.lt.s32.totalorder %v10388, 24
    %vm10526 = vmand %vm10524, %vm10525
    %10527 = vst.msk [vmem:[#allocation3] sm:$0x1] %vm10526, %v10519
    %10528 = vst.msk [vmem:[#allocation3 + $0x2] sm:$0x1] %vm10526, %v10521
    %v10532 = vunpack.c.l.s4 1966171168
    %v10533 = vunpack.c.0.s8 %v10532
    %v10534 = vlaneseq
    %v10535 = vshrl.u32 %v10534, 7
    %v10536 = vsub.s32 %v10533, %v10535
    %v10537 = vrot.slane %v10296, %v10536
    %v10539 = vunpack.c.l.s4 1966171168
    %v10540 = vunpack.c.0.s8 %v10539
    %v10541 = vlaneseq
    %v10542 = vshrl.u32 %v10541, 7
    %v10543 = vsub.s32 %v10540, %v10542
    %v10544 = vrot.slane %v10345, %v10543
    %10545 = vrot.lane.b32.xlu0 %v10537, 24
    %v10546 = vpop.permute.xlu0 %10545
    %10547 = vrot.lane.b32.xlu0 %v10544, 24
    %v10548 = vpop.permute.xlu0 %10547
    %vm10551 = vcmp.ge.s32.totalorder %v10388, 24
    %vm10552 = vcmp.lt.s32.totalorder %v10388, 28
    %vm10553 = vmand %vm10551, %vm10552
    %10554 = vst.msk [vmem:[#allocation3] sm:$0x1] %vm10553, %v10546
    %10555 = vst.msk [vmem:[#allocation3 + $0x2] sm:$0x1] %vm10553, %v10548
    %v10559 = vunpack.c.l.s4 1966171168
    %v10560 = vunpack.c.0.s8 %v10559
    %v10561 = vlaneseq
    %v10562 = vshrl.u32 %v10561, 7
    %v10563 = vsub.s32 %v10560, %v10562
    %v10564 = vrot.slane %v10297, %v10563
    %v10566 = vunpack.c.l.s4 1966171168
    %v10567 = vunpack.c.0.s8 %v10566
    %v10568 = vlaneseq
    %v10569 = vshrl.u32 %v10568, 7
    %v10570 = vsub.s32 %v10567, %v10569
    %v10571 = vrot.slane %v10346, %v10570
    %10572 = vrot.lane.b32.xlu0 %v10564, 28
    %v10573 = vpop.permute.xlu0 %10572
    %10574 = vrot.lane.b32.xlu0 %v10571, 28
    %v10575 = vpop.permute.xlu0 %10574
    %vm10578 = vcmp.ge.s32.totalorder %v10388, 28
    %vm10579 = vcmp.lt.s32.totalorder %v10388, 32
    %vm10580 = vmand %vm10578, %vm10579
    %10581 = vst.msk [vmem:[#allocation3] sm:$0x1] %vm10580, %v10573
    %10582 = vst.msk [vmem:[#allocation3 + $0x2] sm:$0x1] %vm10580, %v10575
    %v10586 = vunpack.c.l.s4 1966171168
    %v10587 = vunpack.c.0.s8 %v10586
    %v10588 = vlaneseq
    %v10589 = vshrl.u32 %v10588, 7
    %v10590 = vsub.s32 %v10587, %v10589
    %v10591 = vrot.slane %v10298, %v10590
    %v10593 = vunpack.c.l.s4 1966171168
    %v10594 = vunpack.c.0.s8 %v10593
    %v10595 = vlaneseq
    %v10596 = vshrl.u32 %v10595, 7
    %v10597 = vsub.s32 %v10594, %v10596
    %v10598 = vrot.slane %v10347, %v10597
    %10599 = vrot.lane.b32.xlu0 %v10591, 32
    %v10600 = vpop.permute.xlu0 %10599
    %10601 = vrot.lane.b32.xlu0 %v10598, 32
    %v10602 = vpop.permute.xlu0 %10601
    %vm10605 = vcmp.ge.s32.totalorder %v10388, 32
    %vm10606 = vcmp.lt.s32.totalorder %v10388, 36
    %vm10607 = vmand %vm10605, %vm10606
    %10608 = vst.msk [vmem:[#allocation3] sm:$0x1] %vm10607, %v10600
    %10609 = vst.msk [vmem:[#allocation3 + $0x2] sm:$0x1] %vm10607, %v10602
    %v10613 = vunpack.c.l.s4 1966171168
    %v10614 = vunpack.c.0.s8 %v10613
    %v10615 = vlaneseq
    %v10616 = vshrl.u32 %v10615, 7
    %v10617 = vsub.s32 %v10614, %v10616
    %v10618 = vrot.slane %v10299, %v10617
    %v10620 = vunpack.c.l.s4 1966171168
    %v10621 = vunpack.c.0.s8 %v10620
    %v10622 = vlaneseq
    %v10623 = vshrl.u32 %v10622, 7
    %v10624 = vsub.s32 %v10621, %v10623
    %v10625 = vrot.slane %v10348, %v10624
    %10626 = vrot.lane.b32.xlu0 %v10618, 36
    %v10627 = vpop.permute.xlu0 %10626
    %10628 = vrot.lane.b32.xlu0 %v10625, 36
    %v10629 = vpop.permute.xlu0 %10628
    %vm10632 = vcmp.ge.s32.totalorder %v10388, 36
    %vm10633 = vcmp.lt.s32.totalorder %v10388, 40
    %vm10634 = vmand %vm10632, %vm10633
    %10635 = vst.msk [vmem:[#allocation3] sm:$0x1] %vm10634, %v10627
    %10636 = vst.msk [vmem:[#allocation3 + $0x2] sm:$0x1] %vm10634, %v10629
    %v10640 = vunpack.c.l.s4 1966171168
    %v10641 = vunpack.c.0.s8 %v10640
    %v10642 = vlaneseq
    %v10643 = vshrl.u32 %v10642, 7
    %v10644 = vsub.s32 %v10641, %v10643
    %v10645 = vrot.slane %v10300, %v10644
    %v10647 = vunpack.c.l.s4 1966171168
    %v10648 = vunpack.c.0.s8 %v10647
    %v10649 = vlaneseq
    %v10650 = vshrl.u32 %v10649, 7
    %v10651 = vsub.s32 %v10648, %v10650
    %v10652 = vrot.slane %v10349, %v10651
    %10653 = vrot.lane.b32.xlu0 %v10645, 40
    %v10654 = vpop.permute.xlu0 %10653
    %10655 = vrot.lane.b32.xlu0 %v10652, 40
    %v10656 = vpop.permute.xlu0 %10655
    %vm10659 = vcmp.ge.s32.totalorder %v10388, 40
    %vm10660 = vcmp.lt.s32.totalorder %v10388, 44
    %vm10661 = vmand %vm10659, %vm10660
    %10662 = vst.msk [vmem:[#allocation3] sm:$0x1] %vm10661, %v10654
    %10663 = vst.msk [vmem:[#allocation3 + $0x2] sm:$0x1] %vm10661, %v10656
    %v10667 = vunpack.c.l.s4 1966171168
    %v10668 = vunpack.c.0.s8 %v10667
    %v10669 = vlaneseq
    %v10670 = vshrl.u32 %v10669, 7
    %v10671 = vsub.s32 %v10668, %v10670
    %v10672 = vrot.slane %v10301, %v10671
    %v10674 = vunpack.c.l.s4 1966171168
    %v10675 = vunpack.c.0.s8 %v10674
    %v10676 = vlaneseq
    %v10677 = vshrl.u32 %v10676, 7
    %v10678 = vsub.s32 %v10675, %v10677
    %v10679 = vrot.slane %v10350, %v10678
    %10680 = vrot.lane.b32.xlu0 %v10672, 44
    %v10681 = vpop.permute.xlu0 %10680
    %10682 = vrot.lane.b32.xlu0 %v10679, 44
    %v10683 = vpop.permute.xlu0 %10682
    %vm10686 = vcmp.ge.s32.totalorder %v10388, 44
    %vm10687 = vcmp.lt.s32.totalorder %v10388, 48
    %vm10688 = vmand %vm10686, %vm10687
    %10689 = vst.msk [vmem:[#allocation3] sm:$0x1] %vm10688, %v10681
    %10690 = vst.msk [vmem:[#allocation3 + $0x2] sm:$0x1] %vm10688, %v10683
    %v10694 = vunpack.c.l.s4 1966171168
    %v10695 = vunpack.c.0.s8 %v10694
    %v10696 = vlaneseq
    %v10697 = vshrl.u32 %v10696, 7
    %v10698 = vsub.s32 %v10695, %v10697
    %v10699 = vrot.slane %v10302, %v10698
    %v10701 = vunpack.c.l.s4 1966171168
    %v10702 = vunpack.c.0.s8 %v10701
    %v10703 = vlaneseq
    %v10704 = vshrl.u32 %v10703, 7
    %v10705 = vsub.s32 %v10702, %v10704
    %v10706 = vrot.slane %v10351, %v10705
    %10707 = vrot.lane.b32.xlu0 %v10699, 48
    %v10708 = vpop.permute.xlu0 %10707
    %10709 = vrot.lane.b32.xlu0 %v10706, 48
    %v10710 = vpop.permute.xlu0 %10709
    %vm10713 = vcmp.ge.s32.totalorder %v10388, 48
    %vm10714 = vcmp.lt.s32.totalorder %v10388, 52
    %vm10715 = vmand %vm10713, %vm10714
    %10716 = vst.msk [vmem:[#allocation3] sm:$0x1] %vm10715, %v10708
    %10717 = vst.msk [vmem:[#allocation3 + $0x2] sm:$0x1] %vm10715, %v10710
    %v10721 = vunpack.c.l.s4 1966171168
    %v10722 = vunpack.c.0.s8 %v10721
    %v10723 = vlaneseq
    %v10724 = vshrl.u32 %v10723, 7
    %v10725 = vsub.s32 %v10722, %v10724
    %v10726 = vrot.slane %v10303, %v10725
    %v10728 = vunpack.c.l.s4 1966171168
    %v10729 = vunpack.c.0.s8 %v10728
    %v10730 = vlaneseq
    %v10731 = vshrl.u32 %v10730, 7
    %v10732 = vsub.s32 %v10729, %v10731
    %v10733 = vrot.slane %v10352, %v10732
    %10734 = vrot.lane.b32.xlu0 %v10726, 52
    %v10735 = vpop.permute.xlu0 %10734
    %10736 = vrot.lane.b32.xlu0 %v10733, 52
    %v10737 = vpop.permute.xlu0 %10736
    %vm10740 = vcmp.ge.s32.totalorder %v10388, 52
    %vm10741 = vcmp.lt.s32.totalorder %v10388, 56
    %vm10742 = vmand %vm10740, %vm10741
    %10743 = vst.msk [vmem:[#allocation3] sm:$0x1] %vm10742, %v10735
    %10744 = vst.msk [vmem:[#allocation3 + $0x2] sm:$0x1] %vm10742, %v10737
    %v10748 = vunpack.c.l.s4 1966171168
    %v10749 = vunpack.c.0.s8 %v10748
    %v10750 = vlaneseq
    %v10751 = vshrl.u32 %v10750, 7
    %v10752 = vsub.s32 %v10749, %v10751
    %v10753 = vrot.slane %v10304, %v10752
    %v10755 = vunpack.c.l.s4 1966171168
    %v10756 = vunpack.c.0.s8 %v10755
    %v10757 = vlaneseq
    %v10758 = vshrl.u32 %v10757, 7
    %v10759 = vsub.s32 %v10756, %v10758
    %v10760 = vrot.slane %v10353, %v10759
    %10761 = vrot.lane.b32.xlu0 %v10753, 56
    %v10762 = vpop.permute.xlu0 %10761
    %10763 = vrot.lane.b32.xlu0 %v10760, 56
    %v10764 = vpop.permute.xlu0 %10763
    %vm10767 = vcmp.ge.s32.totalorder %v10388, 56
    %vm10768 = vcmp.lt.s32.totalorder %v10388, 60
    %vm10769 = vmand %vm10767, %vm10768
    %10770 = vst.msk [vmem:[#allocation3] sm:$0x1] %vm10769, %v10762
    %10771 = vst.msk [vmem:[#allocation3 + $0x2] sm:$0x1] %vm10769, %v10764
    %v10775 = vunpack.c.l.s4 1966171168
    %v10776 = vunpack.c.0.s8 %v10775
    %v10777 = vlaneseq
    %v10778 = vshrl.u32 %v10777, 7
    %v10779 = vsub.s32 %v10776, %v10778
    %v10780 = vrot.slane %v10305, %v10779
    %v10782 = vunpack.c.l.s4 1966171168
    %v10783 = vunpack.c.0.s8 %v10782
    %v10784 = vlaneseq
    %v10785 = vshrl.u32 %v10784, 7
    %v10786 = vsub.s32 %v10783, %v10785
    %v10787 = vrot.slane %v10354, %v10786
    %10788 = vrot.lane.b32.xlu0 %v10780, 60
    %v10789 = vpop.permute.xlu0 %10788
    %10790 = vrot.lane.b32.xlu0 %v10787, 60
    %v10791 = vpop.permute.xlu0 %10790
    %vm10794 = vcmp.ge.s32.totalorder %v10388, 60
    %vm10795 = vcmp.lt.s32.totalorder %v10388, 64
    %vm10796 = vmand %vm10794, %vm10795
    %10797 = vst.msk [vmem:[#allocation3] sm:$0x1] %vm10796, %v10789
    %10798 = vst.msk [vmem:[#allocation3 + $0x2] sm:$0x1] %vm10796, %v10791
    %v10802 = vunpack.c.l.s4 1966171168
    %v10803 = vunpack.c.0.s8 %v10802
    %v10804 = vlaneseq
    %v10805 = vshrl.u32 %v10804, 7
    %v10806 = vsub.s32 %v10803, %v10805
    %v10807 = vrot.slane %v10306, %v10806
    %v10809 = vunpack.c.l.s4 1966171168
    %v10810 = vunpack.c.0.s8 %v10809
    %v10811 = vlaneseq
    %v10812 = vshrl.u32 %v10811, 7
    %v10813 = vsub.s32 %v10810, %v10812
    %v10814 = vrot.slane %v10355, %v10813
    %10815 = vrot.lane.b32.xlu0 %v10807, 64
    %v10816 = vpop.permute.xlu0 %10815
    %10817 = vrot.lane.b32.xlu0 %v10814, 64
    %v10818 = vpop.permute.xlu0 %10817
    %vm10821 = vcmp.ge.s32.totalorder %v10388, 64
    %vm10822 = vcmp.lt.s32.totalorder %v10388, 68
    %vm10823 = vmand %vm10821, %vm10822
    %10824 = vst.msk [vmem:[#allocation3] sm:$0x1] %vm10823, %v10816
    %10825 = vst.msk [vmem:[#allocation3 + $0x2] sm:$0x1] %vm10823, %v10818
    %v10829 = vunpack.c.l.s4 1966171168
    %v10830 = vunpack.c.0.s8 %v10829
    %v10831 = vlaneseq
    %v10832 = vshrl.u32 %v10831, 7
    %v10833 = vsub.s32 %v10830, %v10832
    %v10834 = vrot.slane %v10307, %v10833
    %v10836 = vunpack.c.l.s4 1966171168
    %v10837 = vunpack.c.0.s8 %v10836
    %v10838 = vlaneseq
    %v10839 = vshrl.u32 %v10838, 7
    %v10840 = vsub.s32 %v10837, %v10839
    %v10841 = vrot.slane %v10356, %v10840
    %10842 = vrot.lane.b32.xlu0 %v10834, 68
    %v10843 = vpop.permute.xlu0 %10842
    %10844 = vrot.lane.b32.xlu0 %v10841, 68
    %v10845 = vpop.permute.xlu0 %10844
    %vm10848 = vcmp.ge.s32.totalorder %v10388, 68
    %vm10849 = vcmp.lt.s32.totalorder %v10388, 72
    %vm10850 = vmand %vm10848, %vm10849
    %10851 = vst.msk [vmem:[#allocation3] sm:$0x1] %vm10850, %v10843
    %10852 = vst.msk [vmem:[#allocation3 + $0x2] sm:$0x1] %vm10850, %v10845
    %v10856 = vunpack.c.l.s4 1966171168
    %v10857 = vunpack.c.0.s8 %v10856
    %v10858 = vlaneseq
    %v10859 = vshrl.u32 %v10858, 7
    %v10860 = vsub.s32 %v10857, %v10859
    %v10861 = vrot.slane %v10308, %v10860
    %v10863 = vunpack.c.l.s4 1966171168
    %v10864 = vunpack.c.0.s8 %v10863
    %v10865 = vlaneseq
    %v10866 = vshrl.u32 %v10865, 7
    %v10867 = vsub.s32 %v10864, %v10866
    %v10868 = vrot.slane %v10357, %v10867
    %10869 = vrot.lane.b32.xlu0 %v10861, 72
    %v10870 = vpop.permute.xlu0 %10869
    %10871 = vrot.lane.b32.xlu0 %v10868, 72
    %v10872 = vpop.permute.xlu0 %10871
    %vm10875 = vcmp.ge.s32.totalorder %v10388, 72
    %vm10876 = vcmp.lt.s32.totalorder %v10388, 76
    %vm10877 = vmand %vm10875, %vm10876
    %10878 = vst.msk [vmem:[#allocation3] sm:$0x1] %vm10877, %v10870
    %10879 = vst.msk [vmem:[#allocation3 + $0x2] sm:$0x1] %vm10877, %v10872
    %v10883 = vunpack.c.l.s4 1966171168
    %v10884 = vunpack.c.0.s8 %v10883
    %v10885 = vlaneseq
    %v10886 = vshrl.u32 %v10885, 7
    %v10887 = vsub.s32 %v10884, %v10886
    %v10888 = vrot.slane %v10309, %v10887
    %v10890 = vunpack.c.l.s4 1966171168
    %v10891 = vunpack.c.0.s8 %v10890
    %v10892 = vlaneseq
    %v10893 = vshrl.u32 %v10892, 7
    %v10894 = vsub.s32 %v10891, %v10893
    %v10895 = vrot.slane %v10358, %v10894
    %10896 = vrot.lane.b32.xlu0 %v10888, 76
    %v10897 = vpop.permute.xlu0 %10896
    %10898 = vrot.lane.b32.xlu0 %v10895, 76
    %v10899 = vpop.permute.xlu0 %10898
    %vm10902 = vcmp.ge.s32.totalorder %v10388, 76
    %vm10903 = vcmp.lt.s32.totalorder %v10388, 80
    %vm10904 = vmand %vm10902, %vm10903
    %10905 = vst.msk [vmem:[#allocation3] sm:$0x1] %vm10904, %v10897
    %10906 = vst.msk [vmem:[#allocation3 + $0x2] sm:$0x1] %vm10904, %v10899
    %v10910 = vunpack.c.l.s4 1966171168
    %v10911 = vunpack.c.0.s8 %v10910
    %v10912 = vlaneseq
    %v10913 = vshrl.u32 %v10912, 7
    %v10914 = vsub.s32 %v10911, %v10913
    %v10915 = vrot.slane %v10310, %v10914
    %v10917 = vunpack.c.l.s4 1966171168
    %v10918 = vunpack.c.0.s8 %v10917
    %v10919 = vlaneseq
    %v10920 = vshrl.u32 %v10919, 7
    %v10921 = vsub.s32 %v10918, %v10920
    %v10922 = vrot.slane %v10359, %v10921
    %10923 = vrot.lane.b32.xlu0 %v10915, 80
    %v10924 = vpop.permute.xlu0 %10923
    %10925 = vrot.lane.b32.xlu0 %v10922, 80
    %v10926 = vpop.permute.xlu0 %10925
    %vm10929 = vcmp.ge.s32.totalorder %v10388, 80
    %vm10930 = vcmp.lt.s32.totalorder %v10388, 84
    %vm10931 = vmand %vm10929, %vm10930
    %10932 = vst.msk [vmem:[#allocation3] sm:$0x1] %vm10931, %v10924
    %10933 = vst.msk [vmem:[#allocation3 + $0x2] sm:$0x1] %vm10931, %v10926
    %v10937 = vunpack.c.l.s4 1966171168
    %v10938 = vunpack.c.0.s8 %v10937
    %v10939 = vlaneseq
    %v10940 = vshrl.u32 %v10939, 7
    %v10941 = vsub.s32 %v10938, %v10940
    %v10942 = vrot.slane %v10311, %v10941
    %v10944 = vunpack.c.l.s4 1966171168
    %v10945 = vunpack.c.0.s8 %v10944
    %v10946 = vlaneseq
    %v10947 = vshrl.u32 %v10946, 7
    %v10948 = vsub.s32 %v10945, %v10947
    %v10949 = vrot.slane %v10360, %v10948
    %10950 = vrot.lane.b32.xlu0 %v10942, 84
    %v10951 = vpop.permute.xlu0 %10950
    %10952 = vrot.lane.b32.xlu0 %v10949, 84
    %v10953 = vpop.permute.xlu0 %10952
    %vm10956 = vcmp.ge.s32.totalorder %v10388, 84
    %vm10957 = vcmp.lt.s32.totalorder %v10388, 88
    %vm10958 = vmand %vm10956, %vm10957
    %10959 = vst.msk [vmem:[#allocation3] sm:$0x1] %vm10958, %v10951
    %10960 = vst.msk [vmem:[#allocation3 + $0x2] sm:$0x1] %vm10958, %v10953
    %v10964 = vunpack.c.l.s4 1966171168
    %v10965 = vunpack.c.0.s8 %v10964
    %v10966 = vlaneseq
    %v10967 = vshrl.u32 %v10966, 7
    %v10968 = vsub.s32 %v10965, %v10967
    %v10969 = vrot.slane %v10312, %v10968
    %v10971 = vunpack.c.l.s4 1966171168
    %v10972 = vunpack.c.0.s8 %v10971
    %v10973 = vlaneseq
    %v10974 = vshrl.u32 %v10973, 7
    %v10975 = vsub.s32 %v10972, %v10974
    %v10976 = vrot.slane %v10361, %v10975
    %10977 = vrot.lane.b32.xlu0 %v10969, 88
    %v10978 = vpop.permute.xlu0 %10977
    %10979 = vrot.lane.b32.xlu0 %v10976, 88
    %v10980 = vpop.permute.xlu0 %10979
    %vm10983 = vcmp.ge.s32.totalorder %v10388, 88
    %vm10984 = vcmp.lt.s32.totalorder %v10388, 92
    %vm10985 = vmand %vm10983, %vm10984
    %10986 = vst.msk [vmem:[#allocation3] sm:$0x1] %vm10985, %v10978
    %10987 = vst.msk [vmem:[#allocation3 + $0x2] sm:$0x1] %vm10985, %v10980
    %v10991 = vunpack.c.l.s4 1966171168
    %v10992 = vunpack.c.0.s8 %v10991
    %v10993 = vlaneseq
    %v10994 = vshrl.u32 %v10993, 7
    %v10995 = vsub.s32 %v10992, %v10994
    %v10996 = vrot.slane %v10313, %v10995
    %v10998 = vunpack.c.l.s4 1966171168
    %v10999 = vunpack.c.0.s8 %v10998
    %v11000 = vlaneseq
    %v11001 = vshrl.u32 %v11000, 7
    %v11002 = vsub.s32 %v10999, %v11001
    %v11003 = vrot.slane %v10362, %v11002
    %11004 = vrot.lane.b32.xlu0 %v10996, 92
    %v11005 = vpop.permute.xlu0 %11004
    %11006 = vrot.lane.b32.xlu0 %v11003, 92
    %v11007 = vpop.permute.xlu0 %11006
    %vm11010 = vcmp.ge.s32.totalorder %v10388, 92
    %vm11011 = vcmp.lt.s32.totalorder %v10388, 96
    %vm11012 = vmand %vm11010, %vm11011
    %11013 = vst.msk [vmem:[#allocation3] sm:$0x1] %vm11012, %v11005
    %11014 = vst.msk [vmem:[#allocation3 + $0x2] sm:$0x1] %vm11012, %v11007
    %v11018 = vunpack.c.l.s4 1966171168
    %v11019 = vunpack.c.0.s8 %v11018
    %v11020 = vlaneseq
    %v11021 = vshrl.u32 %v11020, 7
    %v11022 = vsub.s32 %v11019, %v11021
    %v11023 = vrot.slane %v10314, %v11022
    %v11025 = vunpack.c.l.s4 1966171168
    %v11026 = vunpack.c.0.s8 %v11025
    %v11027 = vlaneseq
    %v11028 = vshrl.u32 %v11027, 7
    %v11029 = vsub.s32 %v11026, %v11028
    %v11030 = vrot.slane %v10363, %v11029
    %11031 = vrot.lane.b32.xlu0 %v11023, 96
    %v11032 = vpop.permute.xlu0 %11031
    %11033 = vrot.lane.b32.xlu0 %v11030, 96
    %v11034 = vpop.permute.xlu0 %11033
    %vm11037 = vcmp.ge.s32.totalorder %v10388, 96
    %vm11038 = vcmp.lt.s32.totalorder %v10388, 100
    %vm11039 = vmand %vm11037, %vm11038
    %11040 = vst.msk [vmem:[#allocation3] sm:$0x1] %vm11039, %v11032
    %11041 = vst.msk [vmem:[#allocation3 + $0x2] sm:$0x1] %vm11039, %v11034
    %v11045 = vunpack.c.l.s4 1966171168
    %v11046 = vunpack.c.0.s8 %v11045
    %v11047 = vlaneseq
    %v11048 = vshrl.u32 %v11047, 7
    %v11049 = vsub.s32 %v11046, %v11048
    %v11050 = vrot.slane %v10315, %v11049
    %v11052 = vunpack.c.l.s4 1966171168
    %v11053 = vunpack.c.0.s8 %v11052
    %v11054 = vlaneseq
    %v11055 = vshrl.u32 %v11054, 7
    %v11056 = vsub.s32 %v11053, %v11055
    %v11057 = vrot.slane %v10364, %v11056
    %11058 = vrot.lane.b32.xlu0 %v11050, 100
    %v11059 = vpop.permute.xlu0 %11058
    %11060 = vrot.lane.b32.xlu0 %v11057, 100
    %v11061 = vpop.permute.xlu0 %11060
    %vm11064 = vcmp.ge.s32.totalorder %v10388, 100
    %vm11065 = vcmp.lt.s32.totalorder %v10388, 104
    %vm11066 = vmand %vm11064, %vm11065
    %11067 = vst.msk [vmem:[#allocation3] sm:$0x1] %vm11066, %v11059
    %11068 = vst.msk [vmem:[#allocation3 + $0x2] sm:$0x1] %vm11066, %v11061
    %v11072 = vunpack.c.l.s4 1966171168
    %v11073 = vunpack.c.0.s8 %v11072
    %v11074 = vlaneseq
    %v11075 = vshrl.u32 %v11074, 7
    %v11076 = vsub.s32 %v11073, %v11075
    %v11077 = vrot.slane %v10316, %v11076
    %v11079 = vunpack.c.l.s4 1966171168
    %v11080 = vunpack.c.0.s8 %v11079
    %v11081 = vlaneseq
    %v11082 = vshrl.u32 %v11081, 7
    %v11083 = vsub.s32 %v11080, %v11082
    %v11084 = vrot.slane %v10365, %v11083
    %11085 = vrot.lane.b32.xlu0 %v11077, 104
    %v11086 = vpop.permute.xlu0 %11085
    %11087 = vrot.lane.b32.xlu0 %v11084, 104
    %v11088 = vpop.permute.xlu0 %11087
    %vm11091 = vcmp.ge.s32.totalorder %v10388, 104
    %vm11092 = vcmp.lt.s32.totalorder %v10388, 108
    %vm11093 = vmand %vm11091, %vm11092
    %11094 = vst.msk [vmem:[#allocation3] sm:$0x1] %vm11093, %v11086
    %11095 = vst.msk [vmem:[#allocation3 + $0x2] sm:$0x1] %vm11093, %v11088
    %v11099 = vunpack.c.l.s4 1966171168
    %v11100 = vunpack.c.0.s8 %v11099
    %v11101 = vlaneseq
    %v11102 = vshrl.u32 %v11101, 7
    %v11103 = vsub.s32 %v11100, %v11102
    %v11104 = vrot.slane %v10317, %v11103
    %v11106 = vunpack.c.l.s4 1966171168
    %v11107 = vunpack.c.0.s8 %v11106
    %v11108 = vlaneseq
    %v11109 = vshrl.u32 %v11108, 7
    %v11110 = vsub.s32 %v11107, %v11109
    %v11111 = vrot.slane %v10366, %v11110
    %11112 = vrot.lane.b32.xlu0 %v11104, 108
    %v11113 = vpop.permute.xlu0 %11112
    %11114 = vrot.lane.b32.xlu0 %v11111, 108
    %v11115 = vpop.permute.xlu0 %11114
    %vm11118 = vcmp.ge.s32.totalorder %v10388, 108
    %vm11119 = vcmp.lt.s32.totalorder %v10388, 112
    %vm11120 = vmand %vm11118, %vm11119
    %11121 = vst.msk [vmem:[#allocation3] sm:$0x1] %vm11120, %v11113
    %11122 = vst.msk [vmem:[#allocation3 + $0x2] sm:$0x1] %vm11120, %v11115
    %v11126 = vunpack.c.l.s4 1966171168
    %v11127 = vunpack.c.0.s8 %v11126
    %v11128 = vlaneseq
    %v11129 = vshrl.u32 %v11128, 7
    %v11130 = vsub.s32 %v11127, %v11129
    %v11131 = vrot.slane %v10318, %v11130
    %v11133 = vunpack.c.l.s4 1966171168
    %v11134 = vunpack.c.0.s8 %v11133
    %v11135 = vlaneseq
    %v11136 = vshrl.u32 %v11135, 7
    %v11137 = vsub.s32 %v11134, %v11136
    %v11138 = vrot.slane %v10367, %v11137
    %11139 = vrot.lane.b32.xlu0 %v11131, 112
    %v11140 = vpop.permute.xlu0 %11139
    %11141 = vrot.lane.b32.xlu0 %v11138, 112
    %v11142 = vpop.permute.xlu0 %11141
    %vm11145 = vcmp.ge.s32.totalorder %v10388, 112
    %vm11146 = vcmp.lt.s32.totalorder %v10388, 116
    %vm11147 = vmand %vm11145, %vm11146
    %11148 = vst.msk [vmem:[#allocation3] sm:$0x1] %vm11147, %v11140
    %11149 = vst.msk [vmem:[#allocation3 + $0x2] sm:$0x1] %vm11147, %v11142
    %v11153 = vunpack.c.l.s4 1966171168
    %v11154 = vunpack.c.0.s8 %v11153
    %v11155 = vlaneseq
    %v11156 = vshrl.u32 %v11155, 7
    %v11157 = vsub.s32 %v11154, %v11156
    %v11158 = vrot.slane %v10319, %v11157
    %v11160 = vunpack.c.l.s4 1966171168
    %v11161 = vunpack.c.0.s8 %v11160
    %v11162 = vlaneseq
    %v11163 = vshrl.u32 %v11162, 7
    %v11164 = vsub.s32 %v11161, %v11163
    %v11165 = vrot.slane %v10368, %v11164
    %11166 = vrot.lane.b32.xlu0 %v11158, 116
    %v11167 = vpop.permute.xlu0 %11166
    %11168 = vrot.lane.b32.xlu0 %v11165, 116
    %v11169 = vpop.permute.xlu0 %11168
    %vm11172 = vcmp.ge.s32.totalorder %v10388, 116
    %vm11173 = vcmp.lt.s32.totalorder %v10388, 120
    %vm11174 = vmand %vm11172, %vm11173
    %11175 = vst.msk [vmem:[#allocation3] sm:$0x1] %vm11174, %v11167
    %11176 = vst.msk [vmem:[#allocation3 + $0x2] sm:$0x1] %vm11174, %v11169
    %v11180 = vunpack.c.l.s4 1966171168
    %v11181 = vunpack.c.0.s8 %v11180
    %v11182 = vlaneseq
    %v11183 = vshrl.u32 %v11182, 7
    %v11184 = vsub.s32 %v11181, %v11183
    %v11185 = vrot.slane %v10320, %v11184
    %v11187 = vunpack.c.l.s4 1966171168
    %v11188 = vunpack.c.0.s8 %v11187
    %v11189 = vlaneseq
    %v11190 = vshrl.u32 %v11189, 7
    %v11191 = vsub.s32 %v11188, %v11190
    %v11192 = vrot.slane %v10369, %v11191
    %11193 = vrot.lane.b32.xlu0 %v11185, 120
    %v11194 = vpop.permute.xlu0 %11193
    %11195 = vrot.lane.b32.xlu0 %v11192, 120
    %v11196 = vpop.permute.xlu0 %11195
    %vm11199 = vcmp.ge.s32.totalorder %v10388, 120
    %vm11200 = vcmp.lt.s32.totalorder %v10388, 124
    %vm11201 = vmand %vm11199, %vm11200
    %11202 = vst.msk [vmem:[#allocation3] sm:$0x1] %vm11201, %v11194
    %11203 = vst.msk [vmem:[#allocation3 + $0x2] sm:$0x1] %vm11201, %v11196
    %v11207 = vunpack.c.l.s4 1966171168
    %v11208 = vunpack.c.0.s8 %v11207
    %v11209 = vlaneseq
    %v11210 = vshrl.u32 %v11209, 7
    %v11211 = vsub.s32 %v11208, %v11210
    %v11212 = vrot.slane %v10321, %v11211
    %v11214 = vunpack.c.l.s4 1966171168
    %v11215 = vunpack.c.0.s8 %v11214
    %v11216 = vlaneseq
    %v11217 = vshrl.u32 %v11216, 7
    %v11218 = vsub.s32 %v11215, %v11217
    %v11219 = vrot.slane %v10370, %v11218
    %11220 = vrot.lane.b32.xlu0 %v11212, 124
    %v11221 = vpop.permute.xlu0 %11220
    %11222 = vrot.lane.b32.xlu0 %v11219, 124
    %v11223 = vpop.permute.xlu0 %11222
    %vm11226 = vcmp.ge.s32.totalorder %v10388, 124
    %vm11227 = vcmp.lt.s32.totalorder %v10388, 128
    %vm11228 = vmand %vm11226, %vm11227
    %11229 = vst.msk [vmem:[#allocation3] sm:$0x1] %vm11228, %v11221
    %11230 = vst.msk [vmem:[#allocation3 + $0x2] sm:$0x1] %vm11228, %v11223
    %11231 = vst.msk [vmem:[#allocation3 + $0x1] sm:$0x1] %vm10391, %v10322
    %11232 = vst.msk [vmem:[#allocation3 + $0x3] sm:$0x1] %vm10391, %v10371
    %v11236 = vunpack.c.l.s4 1966171168
    %v11237 = vunpack.c.0.s8 %v11236
    %v11238 = vlaneseq
    %v11239 = vshrl.u32 %v11238, 7
    %v11240 = vsub.s32 %v11237, %v11239
    %v11241 = vrot.slane %v10323, %v11240
    %v11243 = vunpack.c.l.s4 1966171168
    %v11244 = vunpack.c.0.s8 %v11243
    %v11245 = vlaneseq
    %v11246 = vshrl.u32 %v11245, 7
    %v11247 = vsub.s32 %v11244, %v11246
    %v11248 = vrot.slane %v10372, %v11247
    %11249 = vrot.lane.b32.xlu0 %v11241, 4
    %v11250 = vpop.permute.xlu0 %11249
    %11251 = vrot.lane.b32.xlu0 %v11248, 4
    %v11252 = vpop.permute.xlu0 %11251
    %11255 = vst.msk [vmem:[#allocation3 + $0x1] sm:$0x1] %vm10418, %v11250
    %11256 = vst.msk [vmem:[#allocation3 + $0x3] sm:$0x1] %vm10418, %v11252
    %v11260 = vunpack.c.l.s4 1966171168
    %v11261 = vunpack.c.0.s8 %v11260
    %v11262 = vlaneseq
    %v11263 = vshrl.u32 %v11262, 7
    %v11264 = vsub.s32 %v11261, %v11263
    %v11265 = vrot.slane %v10324, %v11264
    %v11267 = vunpack.c.l.s4 1966171168
    %v11268 = vunpack.c.0.s8 %v11267
    %v11269 = vlaneseq
    %v11270 = vshrl.u32 %v11269, 7
    %v11271 = vsub.s32 %v11268, %v11270
    %v11272 = vrot.slane %v10373, %v11271
    %11273 = vrot.lane.b32.xlu0 %v11265, 8
    %v11274 = vpop.permute.xlu0 %11273
    %11275 = vrot.lane.b32.xlu0 %v11272, 8
    %v11276 = vpop.permute.xlu0 %11275
    %11279 = vst.msk [vmem:[#allocation3 + $0x1] sm:$0x1] %vm10445, %v11274
    %11280 = vst.msk [vmem:[#allocation3 + $0x3] sm:$0x1] %vm10445, %v11276
    %v11284 = vunpack.c.l.s4 1966171168
    %v11285 = vunpack.c.0.s8 %v11284
    %v11286 = vlaneseq
    %v11287 = vshrl.u32 %v11286, 7
    %v11288 = vsub.s32 %v11285, %v11287
    %v11289 = vrot.slane %v10325, %v11288
    %v11291 = vunpack.c.l.s4 1966171168
    %v11292 = vunpack.c.0.s8 %v11291
    %v11293 = vlaneseq
    %v11294 = vshrl.u32 %v11293, 7
    %v11295 = vsub.s32 %v11292, %v11294
    %v11296 = vrot.slane %v10374, %v11295
    %11297 = vrot.lane.b32.xlu0 %v11289, 12
    %v11298 = vpop.permute.xlu0 %11297
    %11299 = vrot.lane.b32.xlu0 %v11296, 12
    %v11300 = vpop.permute.xlu0 %11299
    %11303 = vst.msk [vmem:[#allocation3 + $0x1] sm:$0x1] %vm10472, %v11298
    %11304 = vst.msk [vmem:[#allocation3 + $0x3] sm:$0x1] %vm10472, %v11300
    %v11308 = vunpack.c.l.s4 1966171168
    %v11309 = vunpack.c.0.s8 %v11308
    %v11310 = vlaneseq
    %v11311 = vshrl.u32 %v11310, 7
    %v11312 = vsub.s32 %v11309, %v11311
    %v11313 = vrot.slane %v10326, %v11312
    %v11315 = vunpack.c.l.s4 1966171168
    %v11316 = vunpack.c.0.s8 %v11315
    %v11317 = vlaneseq
    %v11318 = vshrl.u32 %v11317, 7
    %v11319 = vsub.s32 %v11316, %v11318
    %v11320 = vrot.slane %v10375, %v11319
    %11321 = vrot.lane.b32.xlu0 %v11313, 16
    %v11322 = vpop.permute.xlu0 %11321
    %11323 = vrot.lane.b32.xlu0 %v11320, 16
    %v11324 = vpop.permute.xlu0 %11323
    %11327 = vst.msk [vmem:[#allocation3 + $0x1] sm:$0x1] %vm10499, %v11322
    %11328 = vst.msk [vmem:[#allocation3 + $0x3] sm:$0x1] %vm10499, %v11324
    %v11332 = vunpack.c.l.s4 1966171168
    %v11333 = vunpack.c.0.s8 %v11332
    %v11334 = vlaneseq
    %v11335 = vshrl.u32 %v11334, 7
    %v11336 = vsub.s32 %v11333, %v11335
    %v11337 = vrot.slane %v10327, %v11336
    %v11339 = vunpack.c.l.s4 1966171168
    %v11340 = vunpack.c.0.s8 %v11339
    %v11341 = vlaneseq
    %v11342 = vshrl.u32 %v11341, 7
    %v11343 = vsub.s32 %v11340, %v11342
    %v11344 = vrot.slane %v10376, %v11343
    %11345 = vrot.lane.b32.xlu0 %v11337, 20
    %v11346 = vpop.permute.xlu0 %11345
    %11347 = vrot.lane.b32.xlu0 %v11344, 20
    %v11348 = vpop.permute.xlu0 %11347
    %11351 = vst.msk [vmem:[#allocation3 + $0x1] sm:$0x1] %vm10526, %v11346
    %11352 = vst.msk [vmem:[#allocation3 + $0x3] sm:$0x1] %vm10526, %v11348
    %v11356 = vunpack.c.l.s4 1966171168
    %v11357 = vunpack.c.0.s8 %v11356
    %v11358 = vlaneseq
    %v11359 = vshrl.u32 %v11358, 7
    %v11360 = vsub.s32 %v11357, %v11359
    %v11361 = vrot.slane %v10328, %v11360
    %v11363 = vunpack.c.l.s4 1966171168
    %v11364 = vunpack.c.0.s8 %v11363
    %v11365 = vlaneseq
    %v11366 = vshrl.u32 %v11365, 7
    %v11367 = vsub.s32 %v11364, %v11366
    %v11368 = vrot.slane %v10377, %v11367
    %11369 = vrot.lane.b32.xlu0 %v11361, 24
    %v11370 = vpop.permute.xlu0 %11369
    %11371 = vrot.lane.b32.xlu0 %v11368, 24
    %v11372 = vpop.permute.xlu0 %11371
    %11375 = vst.msk [vmem:[#allocation3 + $0x1] sm:$0x1] %vm10553, %v11370
    %11376 = vst.msk [vmem:[#allocation3 + $0x3] sm:$0x1] %vm10553, %v11372
    %v11380 = vunpack.c.l.s4 1966171168
    %v11381 = vunpack.c.0.s8 %v11380
    %v11382 = vlaneseq
    %v11383 = vshrl.u32 %v11382, 7
    %v11384 = vsub.s32 %v11381, %v11383
    %v11385 = vrot.slane %v10329, %v11384
    %v11387 = vunpack.c.l.s4 1966171168
    %v11388 = vunpack.c.0.s8 %v11387
    %v11389 = vlaneseq
    %v11390 = vshrl.u32 %v11389, 7
    %v11391 = vsub.s32 %v11388, %v11390
    %v11392 = vrot.slane %v10378, %v11391
    %11393 = vrot.lane.b32.xlu0 %v11385, 28
    %v11394 = vpop.permute.xlu0 %11393
    %11395 = vrot.lane.b32.xlu0 %v11392, 28
    %v11396 = vpop.permute.xlu0 %11395
    %11399 = vst.msk [vmem:[#allocation3 + $0x1] sm:$0x1] %vm10580, %v11394
    %11400 = vst.msk [vmem:[#allocation3 + $0x3] sm:$0x1] %vm10580, %v11396
    %v11404 = vunpack.c.l.s4 1966171168
    %v11405 = vunpack.c.0.s8 %v11404
    %v11406 = vlaneseq
    %v11407 = vshrl.u32 %v11406, 7
    %v11408 = vsub.s32 %v11405, %v11407
    %v11409 = vrot.slane %v10330, %v11408
    %v11411 = vunpack.c.l.s4 1966171168
    %v11412 = vunpack.c.0.s8 %v11411
    %v11413 = vlaneseq
    %v11414 = vshrl.u32 %v11413, 7
    %v11415 = vsub.s32 %v11412, %v11414
    %v11416 = vrot.slane %v10379, %v11415
    %11417 = vrot.lane.b32.xlu0 %v11409, 32
    %v11418 = vpop.permute.xlu0 %11417
    %11419 = vrot.lane.b32.xlu0 %v11416, 32
    %v11420 = vpop.permute.xlu0 %11419
    %11423 = vst.msk [vmem:[#allocation3 + $0x1] sm:$0x1] %vm10607, %v11418
    %11424 = vst.msk [vmem:[#allocation3 + $0x3] sm:$0x1] %vm10607, %v11420
    %v11428 = vunpack.c.l.s4 1966171168
    %v11429 = vunpack.c.0.s8 %v11428
    %v11430 = vlaneseq
    %v11431 = vshrl.u32 %v11430, 7
    %v11432 = vsub.s32 %v11429, %v11431
    %v11433 = vrot.slane %v10331, %v11432
    %v11435 = vunpack.c.l.s4 1966171168
    %v11436 = vunpack.c.0.s8 %v11435
    %v11437 = vlaneseq
    %v11438 = vshrl.u32 %v11437, 7
    %v11439 = vsub.s32 %v11436, %v11438
    %v11440 = vrot.slane %v10380, %v11439
    %11441 = vrot.lane.b32.xlu0 %v11433, 36
    %v11442 = vpop.permute.xlu0 %11441
    %11443 = vrot.lane.b32.xlu0 %v11440, 36
    %v11444 = vpop.permute.xlu0 %11443
    %11447 = vst.msk [vmem:[#allocation3 + $0x1] sm:$0x1] %vm10634, %v11442
    %11448 = vst.msk [vmem:[#allocation3 + $0x3] sm:$0x1] %vm10634, %v11444
    %v11452 = vunpack.c.l.s4 1966171168
    %v11453 = vunpack.c.0.s8 %v11452
    %v11454 = vlaneseq
    %v11455 = vshrl.u32 %v11454, 7
    %v11456 = vsub.s32 %v11453, %v11455
    %v11457 = vrot.slane %v10332, %v11456
    %v11459 = vunpack.c.l.s4 1966171168
    %v11460 = vunpack.c.0.s8 %v11459
    %v11461 = vlaneseq
    %v11462 = vshrl.u32 %v11461, 7
    %v11463 = vsub.s32 %v11460, %v11462
    %v11464 = vrot.slane %v10381, %v11463
    %11465 = vrot.lane.b32.xlu0 %v11457, 40
    %v11466 = vpop.permute.xlu0 %11465
    %11467 = vrot.lane.b32.xlu0 %v11464, 40
    %v11468 = vpop.permute.xlu0 %11467
    %11471 = vst.msk [vmem:[#allocation3 + $0x1] sm:$0x1] %vm10661, %v11466
    %11472 = vst.msk [vmem:[#allocation3 + $0x3] sm:$0x1] %vm10661, %v11468
    %v11476 = vunpack.c.l.s4 1966171168
    %v11477 = vunpack.c.0.s8 %v11476
    %v11478 = vlaneseq
    %v11479 = vshrl.u32 %v11478, 7
    %v11480 = vsub.s32 %v11477, %v11479
    %v11481 = vrot.slane %v10333, %v11480
    %v11483 = vunpack.c.l.s4 1966171168
    %v11484 = vunpack.c.0.s8 %v11483
    %v11485 = vlaneseq
    %v11486 = vshrl.u32 %v11485, 7
    %v11487 = vsub.s32 %v11484, %v11486
    %v11488 = vrot.slane %v10382, %v11487
    %11489 = vrot.lane.b32.xlu0 %v11481, 44
    %v11490 = vpop.permute.xlu0 %11489
    %11491 = vrot.lane.b32.xlu0 %v11488, 44
    %v11492 = vpop.permute.xlu0 %11491
    %11495 = vst.msk [vmem:[#allocation3 + $0x1] sm:$0x1] %vm10688, %v11490
    %11496 = vst.msk [vmem:[#allocation3 + $0x3] sm:$0x1] %vm10688, %v11492
    %v11500 = vunpack.c.l.s4 1966171168
    %v11501 = vunpack.c.0.s8 %v11500
    %v11502 = vlaneseq
    %v11503 = vshrl.u32 %v11502, 7
    %v11504 = vsub.s32 %v11501, %v11503
    %v11505 = vrot.slane %v10334, %v11504
    %v11507 = vunpack.c.l.s4 1966171168
    %v11508 = vunpack.c.0.s8 %v11507
    %v11509 = vlaneseq
    %v11510 = vshrl.u32 %v11509, 7
    %v11511 = vsub.s32 %v11508, %v11510
    %v11512 = vrot.slane %v10383, %v11511
    %11513 = vrot.lane.b32.xlu0 %v11505, 48
    %v11514 = vpop.permute.xlu0 %11513
    %11515 = vrot.lane.b32.xlu0 %v11512, 48
    %v11516 = vpop.permute.xlu0 %11515
    %11519 = vst.msk [vmem:[#allocation3 + $0x1] sm:$0x1] %vm10715, %v11514
    %11520 = vst.msk [vmem:[#allocation3 + $0x3] sm:$0x1] %vm10715, %v11516
    %v11524 = vunpack.c.l.s4 1966171168
    %v11525 = vunpack.c.0.s8 %v11524
    %v11526 = vlaneseq
    %v11527 = vshrl.u32 %v11526, 7
    %v11528 = vsub.s32 %v11525, %v11527
    %v11529 = vrot.slane %v10335, %v11528
    %v11531 = vunpack.c.l.s4 1966171168
    %v11532 = vunpack.c.0.s8 %v11531
    %v11533 = vlaneseq
    %v11534 = vshrl.u32 %v11533, 7
    %v11535 = vsub.s32 %v11532, %v11534
    %v11536 = vrot.slane %v10384, %v11535
    %11537 = vrot.lane.b32.xlu0 %v11529, 52
    %v11538 = vpop.permute.xlu0 %11537
    %11539 = vrot.lane.b32.xlu0 %v11536, 52
    %v11540 = vpop.permute.xlu0 %11539
    %11543 = vst.msk [vmem:[#allocation3 + $0x1] sm:$0x1] %vm10742, %v11538
    %11544 = vst.msk [vmem:[#allocation3 + $0x3] sm:$0x1] %vm10742, %v11540
    %v11548 = vunpack.c.l.s4 1966171168
    %v11549 = vunpack.c.0.s8 %v11548
    %v11550 = vlaneseq
    %v11551 = vshrl.u32 %v11550, 7
    %v11552 = vsub.s32 %v11549, %v11551
    %v11553 = vrot.slane %v10336, %v11552
    %v11555 = vunpack.c.l.s4 1966171168
    %v11556 = vunpack.c.0.s8 %v11555
    %v11557 = vlaneseq
    %v11558 = vshrl.u32 %v11557, 7
    %v11559 = vsub.s32 %v11556, %v11558
    %v11560 = vrot.slane %v10385, %v11559
    %11561 = vrot.lane.b32.xlu0 %v11553, 56
    %v11562 = vpop.permute.xlu0 %11561
    %11563 = vrot.lane.b32.xlu0 %v11560, 56
    %v11564 = vpop.permute.xlu0 %11563
    %11567 = vst.msk [vmem:[#allocation3 + $0x1] sm:$0x1] %vm10769, %v11562
    %11568 = vst.msk [vmem:[#allocation3 + $0x3] sm:$0x1] %vm10769, %v11564
    %v11572 = vunpack.c.l.s4 1966171168
    %v11573 = vunpack.c.0.s8 %v11572
    %v11574 = vlaneseq
    %v11575 = vshrl.u32 %v11574, 7
    %v11576 = vsub.s32 %v11573, %v11575
    %v11577 = vrot.slane %v10337, %v11576
    %v11579 = vunpack.c.l.s4 1966171168
    %v11580 = vunpack.c.0.s8 %v11579
    %v11581 = vlaneseq
    %v11582 = vshrl.u32 %v11581, 7
    %v11583 = vsub.s32 %v11580, %v11582
    %v11584 = vrot.slane %v10386, %v11583
    %11585 = vrot.lane.b32.xlu0 %v11577, 60
    %v11586 = vpop.permute.xlu0 %11585
    %11587 = vrot.lane.b32.xlu0 %v11584, 60
    %v11588 = vpop.permute.xlu0 %11587
    %11591 = vst.msk [vmem:[#allocation3 + $0x1] sm:$0x1] %vm10796, %v11586
    %11592 = vst.msk [vmem:[#allocation3 + $0x3] sm:$0x1] %vm10796, %v11588
    %v11596 = vunpack.c.l.s4 1966171168
    %v11597 = vunpack.c.0.s8 %v11596
    %v11598 = vlaneseq
    %v11599 = vshrl.u32 %v11598, 7
    %v11600 = vsub.s32 %v11597, %v11599
    %v11601 = vrot.slane %v10338, %v11600
    %v11603 = vunpack.c.l.s4 1966171168
    %v11604 = vunpack.c.0.s8 %v11603
    %v11605 = vlaneseq
    %v11606 = vshrl.u32 %v11605, 7
    %v11607 = vsub.s32 %v11604, %v11606
    %v11608 = vrot.slane %v10387, %v11607
    %11609 = vrot.lane.b32.xlu0 %v11601, 64
    %v11610 = vpop.permute.xlu0 %11609
    %11611 = vrot.lane.b32.xlu0 %v11608, 64
    %v11612 = vpop.permute.xlu0 %11611
    %11615 = vst.msk [vmem:[#allocation3 + $0x1] sm:$0x1] %vm10823, %v11610
    %11616 = vst.msk [vmem:[#allocation3 + $0x3] sm:$0x1] %vm10823, %v11612
    // Predicated region
    $region10: #{tpu_custom_call.1} parent=1 // pred_check
      _
    $region11: #{tpu_custom_call.1} parent=1 // pred_check_branch
      %11618 = sbr.rel (0) target = $region13
    $region12: #{tpu_custom_call.1} parent=1 // pred_region
      %s11620 = ssub.s32 64, 64
      %11621 = vsyncadd [#allocation4], %s11620
      %s11622 = sshll.u32 [#allocation3], 4
      %s11623 = int_to_ptr.vmem [resolvable:$true] %s11622
      %11628 = dma.vmem_to_hbm [thread:$0]  %s11623, 64, %s2, [#allocation4], 32, 32, 2
    $region13: #{tpu_custom_call.1} parent=1 // pred_fallthru
      _
    // Predicated region
    $region14: #{tpu_custom_call.1} parent=1 // pred_check
      _
    $region15: #{tpu_custom_call.1} parent=1 // pred_check_branch
      %11630 = sbr.rel (0) target = $region17
    $region16: #{tpu_custom_call.1} parent=1 // pred_region
      %11631 = dma.done [#allocation4], 64
    $region17: #{tpu_custom_call.1} parent=1 // pred_fallthru
      _
    %11632 = vsyncpa [#allocation4], 1

</llo_original>
